<compile_context>
chip_gen: v7x
topology: tpu7x:2x2x1
jax: 0.10.0
libtpu: 0.0.40
codegen_flags: <defaults>
</compile_context>

<pallas_src>
import functools

import jax
import jax.numpy as jnp
from jax.experimental import pallas as pl
from jax.experimental.pallas import tpu as pltpu


_VMEM_LIMIT = 48 * 1024 * 1024   # explicit scoped-VMEM budget, headroom under v7x 64 MiB


# ----------------------------------------------------------------------------
# Tile-size helpers (pad a dim and pick a block size that divides the padded dim)
# ----------------------------------------------------------------------------
def _round_up(x, m):
    return (x + m - 1) // m * m


def _pick_lane_tile(d):
    """Lane-dim (last-dim) padding/tiling: padded to a multiple of 128."""
    dp = _round_up(d, 128)
    if dp <= 512:
        return dp, dp
    for t in (512, 384, 256):
        if dp % t == 0:
            return dp, t
    dp = _round_up(dp, 512)
    return dp, 512


def _pick_row_tile(d):
    """Sublane-dim (second-to-last) padding/tiling: padded to a multiple of 8."""
    dp = _round_up(d, 8)
    if dp <= 512:
        return dp, dp
    for t in (512, 256):
        if dp % t == 0:
            return dp, t
    dp = _round_up(dp, 256)
    return dp, 256


# ----------------------------------------------------------------------------
# Pallas kernels
# ----------------------------------------------------------------------------
def _matmul_bias_relu_kernel(x_ref, w_ref, b_ref, o_ref, acc_ref):
    # x_ref: [tm, tk] bf16 patches, w_ref: [tk, tn] bf16, b_ref: [1, tn] f32,
    # o_ref: [tm, tn] f32, acc_ref: [tm, tn] f32 VMEM accumulator (K-resident).
    kk = pl.program_id(2)

    @pl.when(kk == 0)
    def _init():
        acc_ref[...] = jnp.zeros_like(acc_ref)

    acc_ref[...] += jnp.dot(x_ref[...], w_ref[...],
                            preferred_element_type=jnp.float32)

    @pl.when(kk == pl.num_programs(2) - 1)
    def _finalize():
        o_ref[...] = jnp.maximum(acc_ref[...] + b_ref[...], 0.0)   # fused bias+ReLU (f32)


def _matmul_bias_relu(patches, w2d, bias_row, *, tm, tn, tk):
    mp, kp = patches.shape
    _, np_ = w2d.shape
    grid = (mp // tm, np_ // tn, kp // tk)
    return pl.pallas_call(
        _matmul_bias_relu_kernel,
        out_shape=jax.ShapeDtypeStruct((mp, np_), jnp.float32),
        grid_spec=pltpu.PrefetchScalarGridSpec(
            num_scalar_prefetch=0,
            grid=grid,
            in_specs=[
                pl.BlockSpec((tm, tk), lambda i, j, k: (i, k)),
                pl.BlockSpec((tk, tn), lambda i, j, k: (k, j)),
                pl.BlockSpec((1, tn), lambda i, j, k: (0, j)),
            ],
            out_specs=pl.BlockSpec((tm, tn), lambda i, j, k: (i, j)),
            scratch_shapes=[pltpu.VMEM((tm, tn), jnp.float32)]),
        compiler_params=pltpu.CompilerParams(
            dimension_semantics=("parallel", "parallel", "arbitrary"),
            vmem_limit_bytes=_VMEM_LIMIT),
    )(patches, w2d, bias_row)


def _maxpool_kernel(x_ref, o_ref, *, k, s, po, pw):
    # x_ref: [H, Wq, s, N, TC] stride-split activation; o_ref: [po, pw, N, TC].
    # Tap (i, j) for output (p, q) reads input (h, w) = (p*s + i, q*s + j); with the
    # W axis split as (Wq, s) this is a scalar H index plus a contiguous length-pw
    # slice on the Wq axis at sub-index j % s -- no strided vector accesses needed.
    for p in range(po):
        acc = None
        for i in range(k):
            for j in range(k):
                tap = x_ref[p * s + i, j // s:j // s + pw, j % s]   # [pw, N, TC]
                acc = tap if acc is None else jnp.maximum(acc, tap)
        o_ref[p] = acc


# ----------------------------------------------------------------------------
# Layer wrappers
# ----------------------------------------------------------------------------
def conv_relu(x, w_hwio, b, *, stride, pad):
    # x: [H, W, N, Cin_x] f32 (Cin_x may be a lane-padded superset of the weight's
    # Cin; the extra channels are exactly zero).  Returns [Ho, Wo, N, Cout_p] f32
    # with Cout padded to a multiple of 128 (padded channels are exactly zero).
    kh, kw, cin_w, cout = w_hwio.shape
    h, w, n, cin = x.shape
    if cin > cin_w:                          # zero weights for the lane-pad channels
        w_hwio = jnp.pad(w_hwio, ((0, 0), (0, 0), (0, cin - cin_w), (0, 0)))

    xb = x.astype(jnp.bfloat16)              # bf16 MXU inputs, f32 accumulation
    if pad:
        xb = jnp.pad(xb, ((pad, pad), (pad, pad), (0, 0), (0, 0)))
    hp, wp = xb.shape[0], xb.shape[1]
    ho = (hp - kh) // stride + 1
    wo = (wp - kw) // stride + 1

    # im2col in glue; K ordering (kh, kw, cin) matches the HWIO weight reshape, rows
    # ordered (ho, wo, n) so the matmul output reshapes straight to [H, W, N, C].
    # TODO(synk): build these patches inside the kernel from a VMEM-resident block
    # (direct-conv) to remove the k^2 HBM amplification at larger batch/resolution.
    taps = []
    for i in range(kh):
        for j in range(kw):
            taps.append(xb[i:i + stride * (ho - 1) + 1:stride,
                           j:j + stride * (wo - 1) + 1:stride])
    patches = jnp.stack(taps, axis=3)                      # [Ho, Wo, N, k*k, Cin]
    m = ho * wo * n
    kdim = kh * kw * cin
    patches = patches.reshape(m, kdim)

    mp, tm = _pick_row_tile(m)
    kp, tk = _pick_lane_tile(kdim)
    np_, tn = _pick_lane_tile(cout)

    patches = jnp.pad(patches, ((0, mp - m), (0, kp - kdim)))
    w2d = w_hwio.reshape(kdim, cout).astype(jnp.bfloat16)
    w2d = jnp.pad(w2d, ((0, kp - kdim), (0, np_ - cout)))
    b_row = jnp.pad(b.astype(jnp.float32), (0, np_ - cout)).reshape(1, np_)

    out = _matmul_bias_relu(patches, w2d, b_row, tm=tm, tn=tn, tk=tk)
    return out[:m].reshape(ho, wo, n, np_)


def maxpool(x, *, k, stride):
    # x: [H, W, N, C] f32, C a multiple of 128 (guaranteed by the conv lane padding).
    h, w, n, c = x.shape
    po = (h - k) // stride + 1
    pw = (w - k) // stride + 1
    wq = -(-w // stride)

    # Pad W up to a multiple of the stride with a max-neutral value (padded cells are
    # never selected by a valid pooling window; the pad only makes the split exact).
    neg = jnp.finfo(x.dtype).min
    xp = jnp.pad(x, ((0, 0), (0, wq * stride - w), (0, 0), (0, 0)),
                 constant_values=neg)
    x5 = xp.reshape(h, wq, stride, n, c)

    tc = 128
    assert c % tc == 0, c
    kern = functools.partial(_maxpool_kernel, k=k, s=stride, po=po, pw=pw)
    return pl.pallas_call(
        kern,
        out_shape=jax.ShapeDtypeStruct((po, pw, n, c), x.dtype),
        grid_spec=pltpu.PrefetchScalarGridSpec(
            num_scalar_prefetch=0,
            grid=(c // tc,),
            in_specs=[pl.BlockSpec((h, wq, stride, n, tc),
                                   lambda ci: (0, 0, 0, 0, ci))],
            out_specs=pl.BlockSpec((po, pw, n, tc),
                                   lambda ci: (0, 0, 0, ci))),
        compiler_params=pltpu.CompilerParams(
            dimension_semantics=("parallel",),
            vmem_limit_bytes=_VMEM_LIMIT),
    )(x5)


# ----------------------------------------------------------------------------
# Encoder forward
# ----------------------------------------------------------------------------
def encoder_forward(params, x_nchw):
    x = jnp.transpose(x_nchw, (2, 3, 0, 1)).astype(jnp.float32)    # NCHW -> [H,W,N,C]
    x = conv_relu(x, params["w1"], params["b1"], stride=4, pad=0)  # C: 96 -> 128 (pad)
    x = maxpool(x, k=3, stride=2)
    x = conv_relu(x, params["w2"], params["b2"], stride=1, pad=2)
    x = maxpool(x, k=3, stride=2)
    x = conv_relu(x, params["w3"], params["b3"], stride=1, pad=1)
    x = conv_relu(x, params["w4"], params["b4"], stride=1, pad=1)
    x = conv_relu(x, params["w5"], params["b5"], stride=1, pad=1)
    x = maxpool(x, k=2, stride=2)
    return jnp.transpose(x, (2, 3, 0, 1))                          # [H,W,N,C] -> NCHW


def init_params(key):
    # Deterministic synthetic parameters (HWIO conv weights).
    shapes = {
        "w1": (11, 11, 3, 96),   "b1": (96,),
        "w2": (5, 5, 96, 256),   "b2": (256,),
        "w3": (3, 3, 256, 384),  "b3": (384,),
        "w4": (3, 3, 384, 384),  "b4": (384,),
        "w5": (3, 3, 384, 256),  "b5": (256,),
    }
    params = {}
    keys = jax.random.split(key, len(shapes))
    for (name, shp), sub in zip(sorted(shapes.items()), keys):
        if name.startswith("w"):
            fan_in = shp[0] * shp[1] * shp[2]
            params[name] = jax.random.normal(sub, shp, jnp.float32) * (1.0 / fan_in) ** 0.5
        else:
            params[name] = jax.random.normal(sub, shp, jnp.float32) * 0.01
    return params


# ----------------------------------------------------------------------------
# Pure-JAX reference (for correctness check only)
# ----------------------------------------------------------------------------
def _ref_forward(params, x_nchw):
    x = jnp.transpose(x_nchw, (0, 2, 3, 1)).astype(jnp.float32)
    dn = ("NHWC", "HWIO", "NHWC")

    def conv(x, w, b, stride, pad):
        y = jax.lax.conv_general_dilated(
            x, w, window_strides=(stride, stride),
            padding=[(pad, pad), (pad, pad)], dimension_numbers=dn)
        return jax.nn.relu(y + b)

    def pool(x, k, s):
        return jax.lax.reduce_window(
            x, -jnp.inf, jax.lax.max, (1, k, k, 1), (1, s, s, 1), "VALID")

    x = pool(conv(x, params["w1"], params["b1"], 4, 0), 3, 2)
    x = pool(conv(x, params["w2"], params["b2"], 1, 2), 3, 2)
    x = conv(x, params["w3"], params["b3"], 1, 1)
    x = conv(x, params["w4"], params["b4"], 1, 1)
    x = conv(x, params["w5"], params["b5"], 1, 1)
    x = pool(x, 2, 2)
    return jnp.transpose(x, (0, 3, 1, 2))


if __name__ == "__main__":
    key = jax.random.PRNGKey(0)
    pkey, xkey = jax.random.split(key)
    params = init_params(pkey)

    # 63x63 is the smallest "nice" input that survives the AlexNet-style
    # downsampling chain (needs >= 51): 63 -> 14 -> 6 -> 6 -> 2 -> 2 -> 1.
    x = jax.random.normal(xkey, (2, 3, 63, 63), dtype=jnp.float32)

    fwd = jax.jit(functools.partial(encoder_forward, params))
    out = jax.block_until_ready(fwd(x))
    assert out.shape == (2, 256, 1, 1), out.shape

    ref = jax.block_until_ready(jax.jit(functools.partial(_ref_forward, params))(x))
    # bf16 MXU inputs (f32 accumulation) vs. the f32 reference -> relaxed tolerance.
    max_err = float(jnp.max(jnp.abs(out - ref)))
    assert jnp.allclose(out, ref, atol=5e-2, rtol=5e-2), f"mismatch, max|diff|={max_err}"

    print("KERNEL_OK")
</pallas_src>

<mosaic_0001>
module attributes {stable_mosaic.version = 11 : i64} {
  func.func @_matmul_bias_relu_kernel(%arg0: i32, %arg1: i32, %arg2: i32, %arg3: memref<392x384xbf16, #tpu.memory_space<vmem>>, %arg4: memref<384x128xbf16, #tpu.memory_space<vmem>>, %arg5: memref<1x128xf32, #tpu.memory_space<vmem>>, %arg6: memref<392x128xf32, #tpu.memory_space<vmem>>, %arg7: memref<392x128xf32, #tpu.memory_space<vmem>>) attributes {dimension_semantics = [#tpu.dimension_semantics<parallel>, #tpu.dimension_semantics<parallel>, #tpu.dimension_semantics<arbitrary>], iteration_bounds = array<i64: 1, 1, 1>, scalar_prefetch = 0 : i64, scratch_operands = 1 : i64, tpu.core_type = #tpu.core_type<tc>, window_params = [{transform_indices = @transform_0, window_bounds = array<i64: 392, 384>}, {transform_indices = @transform_1, window_bounds = array<i64: 384, 128>}, {transform_indices = @transform_2, window_bounds = array<i64: 1, 128>}, {transform_indices = @transform_3, window_bounds = array<i64: 392, 128>}]} {
    %c0_i32 = arith.constant 0 : i32
    %0 = arith.cmpi eq, %arg2, %c0_i32 : i32
    %1 = arith.extui %0 : i1 to i32
    %c0_i32_0 = arith.constant 0 : i32
    %2 = arith.cmpi ne, %1, %c0_i32_0 : i32
    scf.if %2 {
      %cst_10 = arith.constant 0.000000e+00 : f32
      %12 = vector.broadcast %cst_10 : f32 to vector<392x128xf32>
      %c0_11 = arith.constant 0 : index
      %c0_12 = arith.constant 0 : index
      %13 = vector.load %arg7[%c0_11, %c0_12] : memref<392x128xf32, #tpu.memory_space<vmem>>, vector<392x128xf32>
      tpu.vector_store %arg7[%c0_11, %c0_12], %12 {strides = array<i32>} : memref<392x128xf32, #tpu.memory_space<vmem>>, vector<392x128xf32>,
    } else {
    }
    %c0 = arith.constant 0 : index
    %c0_1 = arith.constant 0 : index
    %3 = vector.load %arg7[%c0, %c0_1] : memref<392x128xf32, #tpu.memory_space<vmem>>, vector<392x128xf32>
    %c0_2 = arith.constant 0 : index
    %c0_3 = arith.constant 0 : index
    %4 = vector.load %arg3[%c0_2, %c0_3] : memref<392x384xbf16, #tpu.memory_space<vmem>>, vector<392x384xbf16>
    %c0_4 = arith.constant 0 : index
    %c0_5 = arith.constant 0 : index
    %5 = vector.load %arg4[%c0_4, %c0_5] : memref<384x128xbf16, #tpu.memory_space<vmem>>, vector<384x128xbf16>
    %cst = arith.constant dense<0.000000e+00> : vector<392x128xf32>
    %6 = tpu.matmul %4, %5, %cst {dimension_numbers = #tpu.dot_dimension_numbers<[1], [0], [0], [1], [0, 0, 1, 1], [], []>} : vector<392x384xbf16>, vector<384x128xbf16>, vector<392x128xf32> -> vector<392x128xf32>
    %7 = arith.addf %3, %6 : vector<392x128xf32>
    %c0_6 = arith.constant 0 : index
    %c0_7 = arith.constant 0 : index
    %8 = vector.load %arg7[%c0_6, %c0_7] : memref<392x128xf32, #tpu.memory_space<vmem>>, vector<392x128xf32>
    tpu.vector_store %arg7[%c0_6, %c0_7], %7 {strides = array<i32>} : memref<392x128xf32, #tpu.memory_space<vmem>>, vector<392x128xf32>,
    %c0_i32_8 = arith.constant 0 : i32
    %9 = arith.cmpi eq, %arg2, %c0_i32_8 : i32
    %10 = arith.extui %9 : i1 to i32
    %c0_i32_9 = arith.constant 0 : i32
    %11 = arith.cmpi ne, %10, %c0_i32_9 : i32
    scf.if %11 {
      %c0_10 = arith.constant 0 : index
      %c0_11 = arith.constant 0 : index
      %12 = vector.load %arg7[%c0_10, %c0_11] : memref<392x128xf32, #tpu.memory_space<vmem>>, vector<392x128xf32>
      %c0_12 = arith.constant 0 : index
      %c0_13 = arith.constant 0 : index
      %13 = vector.load %arg5[%c0_12, %c0_13] : memref<1x128xf32, #tpu.memory_space<vmem>>, vector<1x128xf32>
      %14 = vector.broadcast %13 : vector<1x128xf32> to vector<392x128xf32>
      %15 = arith.addf %12, %14 : vector<392x128xf32>
      %cst_14 = arith.constant 0.000000e+00 : f32
      %16 = vector.broadcast %cst_14 : f32 to vector<392x128xf32>
      %17 = arith.maximumf %15, %16 : vector<392x128xf32>
      %c0_15 = arith.constant 0 : index
      %c0_16 = arith.constant 0 : index
      %18 = vector.load %arg6[%c0_15, %c0_16] : memref<392x128xf32, #tpu.memory_space<vmem>>, vector<392x128xf32>
      tpu.vector_store %arg6[%c0_15, %c0_16], %17 {strides = array<i32>} : memref<392x128xf32, #tpu.memory_space<vmem>>, vector<392x128xf32>,
    } else {
    }
    return
  }
  func.func @transform_0(%arg0: i32, %arg1: i32, %arg2: i32) -> (i32, i32) {
    %c0_i32 = arith.constant 0 : i32
    return %arg0, %arg2 : i32, i32
  }
  func.func @transform_1(%arg0: i32, %arg1: i32, %arg2: i32) -> (i32, i32) {
    %c0_i32 = arith.constant 0 : i32
    return %arg2, %arg1 : i32, i32
  }
  func.func @transform_2(%arg0: i32, %arg1: i32, %arg2: i32) -> (i32, i32) {
    %c0_i32 = arith.constant 0 : i32
    %c0_i32_0 = arith.constant 0 : i32
    return %c0_i32, %arg1 : i32, i32
  }
  func.func @transform_3(%arg0: i32, %arg1: i32, %arg2: i32) -> (i32, i32) {
    %c0_i32 = arith.constant 0 : i32
    return %arg0, %arg1 : i32, i32
  }
}

module attributes {stable_mosaic.version = 11 : i64} {
  func.func @_maxpool_kernel(%arg0: i32, %arg1: memref<14x7x2x2x128xf32, #tpu.memory_space<vmem>>, %arg2: memref<6x6x2x128xf32, #tpu.memory_space<vmem>>) attributes {dimension_semantics = [#tpu.dimension_semantics<parallel>], iteration_bounds = array<i64: 1>, scalar_prefetch = 0 : i64, scratch_operands = 0 : i64, tpu.core_type = #tpu.core_type<tc>, window_params = [{transform_indices = @transform_0, window_bounds = array<i64: 14, 7, 2, 2, 128>}, {transform_indices = @transform_1, window_bounds = array<i64: 6, 6, 2, 128>}]} {
    %c0 = arith.constant 0 : index
    %c0_0 = arith.constant 0 : index
    %c0_1 = arith.constant 0 : index
    %c0_2 = arith.constant 0 : index
    %c0_3 = arith.constant 0 : index
    %0 = vector.load %arg1[%c0, %c0_0, %c0_1, %c0_2, %c0_3] : memref<14x7x2x2x128xf32, #tpu.memory_space<vmem>>, vector<1x6x1x2x128xf32>
    %1 = vector.shape_cast %0 : vector<1x6x1x2x128xf32> to vector<6x2x128xf32>
    %c0_4 = arith.constant 0 : index
    %c0_5 = arith.constant 0 : index
    %c1 = arith.constant 1 : index
    %c0_6 = arith.constant 0 : index
    %c0_7 = arith.constant 0 : index
    %2 = vector.load %arg1[%c0_4, %c0_5, %c1, %c0_6, %c0_7] : memref<14x7x2x2x128xf32, #tpu.memory_space<vmem>>, vector<1x6x1x2x128xf32>
    %3 = vector.shape_cast %2 : vector<1x6x1x2x128xf32> to vector<6x2x128xf32>
    %4 = arith.maximumf %1, %3 : vector<6x2x128xf32>
    %c0_8 = arith.constant 0 : index
    %c1_9 = arith.constant 1 : index
    %c0_10 = arith.constant 0 : index
    %c0_11 = arith.constant 0 : index
    %c0_12 = arith.constant 0 : index
    %5 = vector.load %arg1[%c0_8, %c1_9, %c0_10, %c0_11, %c0_12] : memref<14x7x2x2x128xf32, #tpu.memory_space<vmem>>, vector<1x6x1x2x128xf32>
    %6 = vector.shape_cast %5 : vector<1x6x1x2x128xf32> to vector<6x2x128xf32>
    %7 = arith.maximumf %4, %6 : vector<6x2x128xf32>
    %c1_13 = arith.constant 1 : index
    %c0_14 = arith.constant 0 : index
    %c0_15 = arith.constant 0 : index
    %c0_16 = arith.constant 0 : index
    %c0_17 = arith.constant 0 : index
    %8 = vector.load %arg1[%c1_13, %c0_14, %c0_15, %c0_16, %c0_17] : memref<14x7x2x2x128xf32, #tpu.memory_space<vmem>>, vector<1x6x1x2x128xf32>
    %9 = vector.shape_cast %8 : vector<1x6x1x2x128xf32> to vector<6x2x128xf32>
    %10 = arith.maximumf %7, %9 : vector<6x2x128xf32>
    %c1_18 = arith.constant 1 : index
    %c0_19 = arith.constant 0 : index
    %c1_20 = arith.constant 1 : index
    %c0_21 = arith.constant 0 : index
    %c0_22 = arith.constant 0 : index
    %11 = vector.load %arg1[%c1_18, %c0_19, %c1_20, %c0_21, %c0_22] : memref<14x7x2x2x128xf32, #tpu.memory_space<vmem>>, vector<1x6x1x2x128xf32>
    %12 = vector.shape_cast %11 : vector<1x6x1x2x128xf32> to vector<6x2x128xf32>
    %13 = arith.maximumf %10, %12 : vector<6x2x128xf32>
    %c1_23 = arith.constant 1 : index
    %c1_24 = arith.constant 1 : index
    %c0_25 = arith.constant 0 : index
    %c0_26 = arith.constant 0 : index
    %c0_27 = arith.constant 0 : index
    %14 = vector.load %arg1[%c1_23, %c1_24, %c0_25, %c0_26, %c0_27] : memref<14x7x2x2x128xf32, #tpu.memory_space<vmem>>, vector<1x6x1x2x128xf32>
    %15 = vector.shape_cast %14 : vector<1x6x1x2x128xf32> to vector<6x2x128xf32>
    %16 = arith.maximumf %13, %15 : vector<6x2x128xf32>
    %c2 = arith.constant 2 : index
    %c0_28 = arith.constant 0 : index
    %c0_29 = arith.constant 0 : index
    %c0_30 = arith.constant 0 : index
    %c0_31 = arith.constant 0 : index
    %17 = vector.load %arg1[%c2, %c0_28, %c0_29, %c0_30, %c0_31] : memref<14x7x2x2x128xf32, #tpu.memory_space<vmem>>, vector<1x6x1x2x128xf32>
    %18 = vector.shape_cast %17 : vector<1x6x1x2x128xf32> to vector<6x2x128xf32>
    %19 = arith.maximumf %16, %18 : vector<6x2x128xf32>
    %c2_32 = arith.constant 2 : index
    %c0_33 = arith.constant 0 : index
    %c1_34 = arith.constant 1 : index
    %c0_35 = arith.constant 0 : index
    %c0_36 = arith.constant 0 : index
    %20 = vector.load %arg1[%c2_32, %c0_33, %c1_34, %c0_35, %c0_36] : memref<14x7x2x2x128xf32, #tpu.memory_space<vmem>>, vector<1x6x1x2x128xf32>
    %21 = vector.shape_cast %20 : vector<1x6x1x2x128xf32> to vector<6x2x128xf32>
    %22 = arith.maximumf %19, %21 : vector<6x2x128xf32>
    %c2_37 = arith.constant 2 : index
    %c1_38 = arith.constant 1 : index
    %c0_39 = arith.constant 0 : index
    %c0_40 = arith.constant 0 : index
    %c0_41 = arith.constant 0 : index
    %23 = vector.load %arg1[%c2_37, %c1_38, %c0_39, %c0_40, %c0_41] : memref<14x7x2x2x128xf32, #tpu.memory_space<vmem>>, vector<1x6x1x2x128xf32>
    %24 = vector.shape_cast %23 : vector<1x6x1x2x128xf32> to vector<6x2x128xf32>
    %25 = arith.maximumf %22, %24 : vector<6x2x128xf32>
    %c0_42 = arith.constant 0 : index
    %c0_43 = arith.constant 0 : index
    %c0_44 = arith.constant 0 : index
    %c0_45 = arith.constant 0 : index
    %26 = vector.load %arg2[%c0_42, %c0_43, %c0_44, %c0_45] : memref<6x6x2x128xf32, #tpu.memory_space<vmem>>, vector<1x6x2x128xf32>
    %27 = vector.shape_cast %26 : vector<1x6x2x128xf32> to vector<6x2x128xf32>
    %28 = vector.shape_cast %25 : vector<6x2x128xf32> to vector<1x6x2x128xf32>
    tpu.vector_store %arg2[%c0_42, %c0_43, %c0_44, %c0_45], %28 {strides = array<i32>} : memref<6x6x2x128xf32, #tpu.memory_space<vmem>>, vector<1x6x2x128xf32>,
    %c2_46 = arith.constant 2 : index
    %c0_47 = arith.constant 0 : index
    %c0_48 = arith.constant 0 : index
    %c0_49 = arith.constant 0 : index
    %c0_50 = arith.constant 0 : index
    %29 = vector.load %arg1[%c2_46, %c0_47, %c0_48, %c0_49, %c0_50] : memref<14x7x2x2x128xf32, #tpu.memory_space<vmem>>, vector<1x6x1x2x128xf32>
    %30 = vector.shape_cast %29 : vector<1x6x1x2x128xf32> to vector<6x2x128xf32>
    %c2_51 = arith.constant 2 : index
    %c0_52 = arith.constant 0 : index
    %c1_53 = arith.constant 1 : index
    %c0_54 = arith.constant 0 : index
    %c0_55 = arith.constant 0 : index
    %31 = vector.load %arg1[%c2_51, %c0_52, %c1_53, %c0_54, %c0_55] : memref<14x7x2x2x128xf32, #tpu.memory_space<vmem>>, vector<1x6x1x2x128xf32>
    %32 = vector.shape_cast %31 : vector<1x6x1x2x128xf32> to vector<6x2x128xf32>
    %33 = arith.maximumf %30, %32 : vector<6x2x128xf32>
    %c2_56 = arith.constant 2 : index
    %c1_57 = arith.constant 1 : index
    %c0_58 = arith.constant 0 : index
    %c0_59 = arith.constant 0 : index
    %c0_60 = arith.constant 0 : index
    %34 = vector.load %arg1[%c2_56, %c1_57, %c0_58, %c0_59, %c0_60] : memref<14x7x2x2x128xf32, #tpu.memory_space<vmem>>, vector<1x6x1x2x128xf32>
    %35 = vector.shape_cast %34 : vector<1x6x1x2x128xf32> to vector<6x2x128xf32>
    %36 = arith.maximumf %33, %35 : vector<6x2x128xf32>
    %c3 = arith.constant 3 : index
    %c0_61 = arith.constant 0 : index
    %c0_62 = arith.constant 0 : index
    %c0_63 = arith.constant 0 : index
    %c0_64 = arith.constant 0 : index
    %37 = vector.load %arg1[%c3, %c0_61, %c0_62, %c0_63, %c0_64] : memref<14x7x2x2x128xf32, #tpu.memory_space<vmem>>, vector<1x6x1x2x128xf32>
    %38 = vector.shape_cast %37 : vector<1x6x1x2x128xf32> to vector<6x2x128xf32>
    %39 = arith.maximumf %36, %38 : vector<6x2x128xf32>
    %c3_65 = arith.constant 3 : index
    %c0_66 = arith.constant 0 : index
    %c1_67 = arith.constant 1 : index
    %c0_68 = arith.constant 0 : index
    %c0_69 = arith.constant 0 : index
    %40 = vector.load %arg1[%c3_65, %c0_66, %c1_67, %c0_68, %c0_69] : memref<14x7x2x2x128xf32, #tpu.memory_space<vmem>>, vector<1x6x1x2x128xf32>
    %41 = vector.shape_cast %40 : vector<1x6x1x2x128xf32> to vector<6x2x128xf32>
    %42 = arith.maximumf %39, %41 : vector<6x2x128xf32>
    %c3_70 = arith.constant 3 : index
    %c1_71 = arith.constant 1 : index
    %c0_72 = arith.constant 0 : index
    %c0_73 = arith.constant 0 : index
    %c0_74 = arith.constant 0 : index
    %43 = vector.load %arg1[%c3_70, %c1_71, %c0_72, %c0_73, %c0_74] : memref<14x7x2x2x128xf32, #tpu.memory_space<vmem>>, vector<1x6x1x2x128xf32>
    %44 = vector.shape_cast %43 : vector<1x6x1x2x128xf32> to vector<6x2x128xf32>
    %45 = arith.maximumf %42, %44 : vector<6x2x128xf32>
    %c4 = arith.constant 4 : index
    %c0_75 = arith.constant 0 : index
    %c0_76 = arith.constant 0 : index
    %c0_77 = arith.constant 0 : index
    %c0_78 = arith.constant 0 : index
    %46 = vector.load %arg1[%c4, %c0_75, %c0_76, %c0_77, %c0_78] : memref<14x7x2x2x128xf32, #tpu.memory_space<vmem>>, vector<1x6x1x2x128xf32>
    %47 = vector.shape_cast %46 : vector<1x6x1x2x128xf32> to vector<6x2x128xf32>
    %48 = arith.maximumf %45, %47 : vector<6x2x128xf32>
    %c4_79 = arith.constant 4 : index
    %c0_80 = arith.constant 0 : index
    %c1_81 = arith.constant 1 : index
    %c0_82 = arith.constant 0 : index
    %c0_83 = arith.constant 0 : index
    %49 = vector.load %arg1[%c4_79, %c0_80, %c1_81, %c0_82, %c0_83] : memref<14x7x2x2x128xf32, #tpu.memory_space<vmem>>, vector<1x6x1x2x128xf32>
    %50 = vector.shape_cast %49 : vector<1x6x1x2x128xf32> to vector<6x2x128xf32>
    %51 = arith.maximumf %48, %50 : vector<6x2x128xf32>
    %c4_84 = arith.constant 4 : index
    %c1_85 = arith.constant 1 : index
    %c0_86 = arith.constant 0 : index
    %c0_87 = arith.constant 0 : index
    %c0_88 = arith.constant 0 : index
    %52 = vector.load %arg1[%c4_84, %c1_85, %c0_86, %c0_87, %c0_88] : memref<14x7x2x2x128xf32, #tpu.memory_space<vmem>>, vector<1x6x1x2x128xf32>
    %53 = vector.shape_cast %52 : vector<1x6x1x2x128xf32> to vector<6x2x128xf32>
    %54 = arith.maximumf %51, %53 : vector<6x2x128xf32>
    %c1_89 = arith.constant 1 : index
    %c0_90 = arith.constant 0 : index
    %c0_91 = arith.constant 0 : index
    %c0_92 = arith.constant 0 : index
    %55 = vector.load %arg2[%c1_89, %c0_90, %c0_91, %c0_92] : memref<6x6x2x128xf32, #tpu.memory_space<vmem>>, vector<1x6x2x128xf32>
    %56 = vector.shape_cast %55 : vector<1x6x2x128xf32> to vector<6x2x128xf32>
    %57 = vector.shape_cast %54 : vector<6x2x128xf32> to vector<1x6x2x128xf32>
    tpu.vector_store %arg2[%c1_89, %c0_90, %c0_91, %c0_92], %57 {strides = array<i32>} : memref<6x6x2x128xf32, #tpu.memory_space<vmem>>, vector<1x6x2x128xf32>,
    %c4_93 = arith.constant 4 : index
    %c0_94 = arith.constant 0 : index
    %c0_95 = arith.constant 0 : index
    %c0_96 = arith.constant 0 : index
    %c0_97 = arith.constant 0 : index
    %58 = vector.load %arg1[%c4_93, %c0_94, %c0_95, %c0_96, %c0_97] : memref<14x7x2x2x128xf32, #tpu.memory_space<vmem>>, vector<1x6x1x2x128xf32>
    %59 = vector.shape_cast %58 : vector<1x6x1x2x128xf32> to vector<6x2x128xf32>
    %c4_98 = arith.constant 4 : index
    %c0_99 = arith.constant 0 : index
    %c1_100 = arith.constant 1 : index
    %c0_101 = arith.constant 0 : index
    %c0_102 = arith.constant 0 : index
    %60 = vector.load %arg1[%c4_98, %c0_99, %c1_100, %c0_101, %c0_102] : memref<14x7x2x2x128xf32, #tpu.memory_space<vmem>>, vector<1x6x1x2x128xf32>
    %61 = vector.shape_cast %60 : vector<1x6x1x2x128xf32> to vector<6x2x128xf32>
    %62 = arith.maximumf %59, %61 : vector<6x2x128xf32>
    %c4_103 = arith.constant 4 : index
    %c1_104 = arith.constant 1 : index
    %c0_105 = arith.constant 0 : index
    %c0_106 = arith.constant 0 : index
    %c0_107 = arith.constant 0 : index
    %63 = vector.load %arg1[%c4_103, %c1_104, %c0_105, %c0_106, %c0_107] : memref<14x7x2x2x128xf32, #tpu.memory_space<vmem>>, vector<1x6x1x2x128xf32>
    %64 = vector.shape_cast %63 : vector<1x6x1x2x128xf32> to vector<6x2x128xf32>
    %65 = arith.maximumf %62, %64 : vector<6x2x128xf32>
    %c5 = arith.constant 5 : index
    %c0_108 = arith.constant 0 : index
    %c0_109 = arith.constant 0 : index
    %c0_110 = arith.constant 0 : index
    %c0_111 = arith.constant 0 : index
    %66 = vector.load %arg1[%c5, %c0_108, %c0_109, %c0_110, %c0_111] : memref<14x7x2x2x128xf32, #tpu.memory_space<vmem>>, vector<1x6x1x2x128xf32>
    %67 = vector.shape_cast %66 : vector<1x6x1x2x128xf32> to vector<6x2x128xf32>
    %68 = arith.maximumf %65, %67 : vector<6x2x128xf32>
    %c5_112 = arith.constant 5 : index
    %c0_113 = arith.constant 0 : index
    %c1_114 = arith.constant 1 : index
    %c0_115 = arith.constant 0 : index
    %c0_116 = arith.constant 0 : index
    %69 = vector.load %arg1[%c5_112, %c0_113, %c1_114, %c0_115, %c0_116] : memref<14x7x2x2x128xf32, #tpu.memory_space<vmem>>, vector<1x6x1x2x128xf32>
    %70 = vector.shape_cast %69 : vector<1x6x1x2x128xf32> to vector<6x2x128xf32>
    %71 = arith.maximumf %68, %70 : vector<6x2x128xf32>
    %c5_117 = arith.constant 5 : index
    %c1_118 = arith.constant 1 : index
    %c0_119 = arith.constant 0 : index
    %c0_120 = arith.constant 0 : index
    %c0_121 = arith.constant 0 : index
    %72 = vector.load %arg1[%c5_117, %c1_118, %c0_119, %c0_120, %c0_121] : memref<14x7x2x2x128xf32, #tpu.memory_space<vmem>>, vector<1x6x1x2x128xf32>
    %73 = vector.shape_cast %72 : vector<1x6x1x2x128xf32> to vector<6x2x128xf32>
    %74 = arith.maximumf %71, %73 : vector<6x2x128xf32>
    %c6 = arith.constant 6 : index
    %c0_122 = arith.constant 0 : index
    %c0_123 = arith.constant 0 : index
    %c0_124 = arith.constant 0 : index
    %c0_125 = arith.constant 0 : index
    %75 = vector.load %arg1[%c6, %c0_122, %c0_123, %c0_124, %c0_125] : memref<14x7x2x2x128xf32, #tpu.memory_space<vmem>>, vector<1x6x1x2x128xf32>
    %76 = vector.shape_cast %75 : vector<1x6x1x2x128xf32> to vector<6x2x128xf32>
    %77 = arith.maximumf %74, %76 : vector<6x2x128xf32>
    %c6_126 = arith.constant 6 : index
    %c0_127 = arith.constant 0 : index
    %c1_128 = arith.constant 1 : index
    %c0_129 = arith.constant 0 : index
    %c0_130 = arith.constant 0 : index
    %78 = vector.load %arg1[%c6_126, %c0_127, %c1_128, %c0_129, %c0_130] : memref<14x7x2x2x128xf32, #tpu.memory_space<vmem>>, vector<1x6x1x2x128xf32>
    %79 = vector.shape_cast %78 : vector<1x6x1x2x128xf32> to vector<6x2x128xf32>
    %80 = arith.maximumf %77, %79 : vector<6x2x128xf32>
    %c6_131 = arith.constant 6 : index
    %c1_132 = arith.constant 1 : index
    %c0_133 = arith.constant 0 : index
    %c0_134 = arith.constant 0 : index
    %c0_135 = arith.constant 0 : index
    %81 = vector.load %arg1[%c6_131, %c1_132, %c0_133, %c0_134, %c0_135] : memref<14x7x2x2x128xf32, #tpu.memory_space<vmem>>, vector<1x6x1x2x128xf32>
    %82 = vector.shape_cast %81 : vector<1x6x1x2x128xf32> to vector<6x2x128xf32>
    %83 = arith.maximumf %80, %82 : vector<6x2x128xf32>
    %c2_136 = arith.constant 2 : index
    %c0_137 = arith.constant 0 : index
    %c0_138 = arith.constant 0 : index
    %c0_139 = arith.constant 0 : index
    %84 = vector.load %arg2[%c2_136, %c0_137, %c0_138, %c0_139] : memref<6x6x2x128xf32, #tpu.memory_space<vmem>>, vector<1x6x2x128xf32>
    %85 = vector.shape_cast %84 : vector<1x6x2x128xf32> to vector<6x2x128xf32>
    %86 = vector.shape_cast %83 : vector<6x2x128xf32> to vector<1x6x2x128xf32>
    tpu.vector_store %arg2[%c2_136, %c0_137, %c0_138, %c0_139], %86 {strides = array<i32>} : memref<6x6x2x128xf32, #tpu.memory_space<vmem>>, vector<1x6x2x128xf32>,
    %c6_140 = arith.constant 6 : index
    %c0_141 = arith.constant 0 : index
    %c0_142 = arith.constant 0 : index
    %c0_143 = arith.constant 0 : index
    %c0_144 = arith.constant 0 : index
    %87 = vector.load %arg1[%c6_140, %c0_141, %c0_142, %c0_143, %c0_144] : memref<14x7x2x2x128xf32, #tpu.memory_space<vmem>>, vector<1x6x1x2x128xf32>
    %88 = vector.shape_cast %87 : vector<1x6x1x2x128xf32> to vector<6x2x128xf32>
    %c6_145 = arith.constant 6 : index
    %c0_146 = arith.constant 0 : index
    %c1_147 = arith.constant 1 : index
    %c0_148 = arith.constant 0 : index
    %c0_149 = arith.constant 0 : index
    %89 = vector.load %arg1[%c6_145, %c0_146, %c1_147, %c0_148, %c0_149] : memref<14x7x2x2x128xf32, #tpu.memory_space<vmem>>, vector<1x6x1x2x128xf32>
    %90 = vector.shape_cast %89 : vector<1x6x1x2x128xf32> to vector<6x2x128xf32>
    %91 = arith.maximumf %88, %90 : vector<6x2x128xf32>
    %c6_150 = arith.constant 6 : index
    %c1_151 = arith.constant 1 : index
    %c0_152 = arith.constant 0 : index
    %c0_153 = arith.constant 0 : index
    %c0_154 = arith.constant 0 : index
    %92 = vector.load %arg1[%c6_150, %c1_151, %c0_152, %c0_153, %c0_154] : memref<14x7x2x2x128xf32, #tpu.memory_space<vmem>>, vector<1x6x1x2x128xf32>
    %93 = vector.shape_cast %92 : vector<1x6x1x2x128xf32> to vector<6x2x128xf32>
    %94 = arith.maximumf %91, %93 : vector<6x2x128xf32>
    %c7 = arith.constant 7 : index
    %c0_155 = arith.constant 0 : index
    %c0_156 = arith.constant 0 : index
    %c0_157 = arith.constant 0 : index
    %c0_158 = arith.constant 0 : index
    %95 = vector.load %arg1[%c7, %c0_155, %c0_156, %c0_157, %c0_158] : memref<14x7x2x2x128xf32, #tpu.memory_space<vmem>>, vector<1x6x1x2x128xf32>
    %96 = vector.shape_cast %95 : vector<1x6x1x2x128xf32> to vector<6x2x128xf32>
    %97 = arith.maximumf %94, %96 : vector<6x2x128xf32>
    %c7_159 = arith.constant 7 : index
    %c0_160 = arith.constant 0 : index
    %c1_161 = arith.constant 1 : index
    %c0_162 = arith.constant 0 : index
    %c0_163 = arith.constant 0 : index
    %98 = vector.load %arg1[%c7_159, %c0_160, %c1_161, %c0_162, %c0_163] : memref<14x7x2x2x128xf32, #tpu.memory_space<vmem>>, vector<1x6x1x2x128xf32>
    %99 = vector.shape_cast %98 : vector<1x6x1x2x128xf32> to vector<6x2x128xf32>
    %100 = arith.maximumf %97, %99 : vector<6x2x128xf32>
    %c7_164 = arith.constant 7 : index
    %c1_165 = arith.constant 1 : index
    %c0_166 = arith.constant 0 : index
    %c0_167 = arith.constant 0 : index
    %c0_168 = arith.constant 0 : index
    %101 = vector.load %arg1[%c7_164, %c1_165, %c0_166, %c0_167, %c0_168] : memref<14x7x2x2x128xf32, #tpu.memory_space<vmem>>, vector<1x6x1x2x128xf32>
    %102 = vector.shape_cast %101 : vector<1x6x1x2x128xf32> to vector<6x2x128xf32>
    %103 = arith.maximumf %100, %102 : vector<6x2x128xf32>
    %c8 = arith.constant 8 : index
    %c0_169 = arith.constant 0 : index
    %c0_170 = arith.constant 0 : index
    %c0_171 = arith.constant 0 : index
    %c0_172 = arith.constant 0 : index
    %104 = vector.load %arg1[%c8, %c0_169, %c0_170, %c0_171, %c0_172] : memref<14x7x2x2x128xf32, #tpu.memory_space<vmem>>, vector<1x6x1x2x128xf32>
    %105 = vector.shape_cast %104 : vector<1x6x1x2x128xf32> to vector<6x2x128xf32>
    %106 = arith.maximumf %103, %105 : vector<6x2x128xf32>
    %c8_173 = arith.constant 8 : index
    %c0_174 = arith.constant 0 : index
    %c1_175 = arith.constant 1 : index
    %c0_176 = arith.constant 0 : index
    %c0_177 = arith.constant 0 : index
    %107 = vector.load %arg1[%c8_173, %c0_174, %c1_175, %c0_176, %c0_177] : memref<14x7x2x2x128xf32, #tpu.memory_space<vmem>>, vector<1x6x1x2x128xf32>
    %108 = vector.shape_cast %107 : vector<1x6x1x2x128xf32> to vector<6x2x128xf32>
    %109 = arith.maximumf %106, %108 : vector<6x2x128xf32>
    %c8_178 = arith.constant 8 : index
    %c1_179 = arith.constant 1 : index
    %c0_180 = arith.constant 0 : index
    %c0_181 = arith.constant 0 : index
    %c0_182 = arith.constant 0 : index
    %110 = vector.load %arg1[%c8_178, %c1_179, %c0_180, %c0_181, %c0_182] : memref<14x7x2x2x128xf32, #tpu.memory_space<vmem>>, vector<1x6x1x2x128xf32>
    %111 = vector.shape_cast %110 : vector<1x6x1x2x128xf32> to vector<6x2x128xf32>
    %112 = arith.maximumf %109, %111 : vector<6x2x128xf32>
    %c3_183 = arith.constant 3 : index
    %c0_184 = arith.constant 0 : index
    %c0_185 = arith.constant 0 : index
    %c0_186 = arith.constant 0 : index
    %113 = vector.load %arg2[%c3_183, %c0_184, %c0_185, %c0_186] : memref<6x6x2x128xf32, #tpu.memory_space<vmem>>, vector<1x6x2x128xf32>
    %114 = vector.shape_cast %113 : vector<1x6x2x128xf32> to vector<6x2x128xf32>
    %115 = vector.shape_cast %112 : vector<6x2x128xf32> to vector<1x6x2x128xf32>
    tpu.vector_store %arg2[%c3_183, %c0_184, %c0_185, %c0_186], %115 {strides = array<i32>} : memref<6x6x2x128xf32, #tpu.memory_space<vmem>>, vector<1x6x2x128xf32>,
    %c8_187 = arith.constant 8 : index
    %c0_188 = arith.constant 0 : index
    %c0_189 = arith.constant 0 : index
    %c0_190 = arith.constant 0 : index
    %c0_191 = arith.constant 0 : index
    %116 = vector.load %arg1[%c8_187, %c0_188, %c0_189, %c0_190, %c0_191] : memref<14x7x2x2x128xf32, #tpu.memory_space<vmem>>, vector<1x6x1x2x128xf32>
    %117 = vector.shape_cast %116 : vector<1x6x1x2x128xf32> to vector<6x2x128xf32>
    %c8_192 = arith.constant 8 : index
    %c0_193 = arith.constant 0 : index
    %c1_194 = arith.constant 1 : index
    %c0_195 = arith.constant 0 : index
    %c0_196 = arith.constant 0 : index
    %118 = vector.load %arg1[%c8_192, %c0_193, %c1_194, %c0_195, %c0_196] : memref<14x7x2x2x128xf32, #tpu.memory_space<vmem>>, vector<1x6x1x2x128xf32>
    %119 = vector.shape_cast %118 : vector<1x6x1x2x128xf32> to vector<6x2x128xf32>
    %120 = arith.maximumf %117, %119 : vector<6x2x128xf32>
    %c8_197 = arith.constant 8 : index
    %c1_198 = arith.constant 1 : index
    %c0_199 = arith.constant 0 : index
    %c0_200 = arith.constant 0 : index
    %c0_201 = arith.constant 0 : index
    %121 = vector.load %arg1[%c8_197, %c1_198, %c0_199, %c0_200, %c0_201] : memref<14x7x2x2x128xf32, #tpu.memory_space<vmem>>, vector<1x6x1x2x128xf32>
    %122 = vector.shape_cast %121 : vector<1x6x1x2x128xf32> to vector<6x2x128xf32>
    %123 = arith.maximumf %120, %122 : vector<6x2x128xf32>
    %c9 = arith.constant 9 : index
    %c0_202 = arith.constant 0 : index
    %c0_203 = arith.constant 0 : index
    %c0_204 = arith.constant 0 : index
    %c0_205 = arith.constant 0 : index
    %124 = vector.load %arg1[%c9, %c0_202, %c0_203, %c0_204, %c0_205] : memref<14x7x2x2x128xf32, #tpu.memory_space<vmem>>, vector<1x6x1x2x128xf32>
    %125 = vector.shape_cast %124 : vector<1x6x1x2x128xf32> to vector<6x2x128xf32>
    %126 = arith.maximumf %123, %125 : vector<6x2x128xf32>
    %c9_206 = arith.constant 9 : index
    %c0_207 = arith.constant 0 : index
    %c1_208 = arith.constant 1 : index
    %c0_209 = arith.constant 0 : index
    %c0_210 = arith.constant 0 : index
    %127 = vector.load %arg1[%c9_206, %c0_207, %c1_208, %c0_209, %c0_210] : memref<14x7x2x2x128xf32, #tpu.memory_space<vmem>>, vector<1x6x1x2x128xf32>
    %128 = vector.shape_cast %127 : vector<1x6x1x2x128xf32> to vector<6x2x128xf32>
    %129 = arith.maximumf %126, %128 : vector<6x2x128xf32>
    %c9_211 = arith.constant 9 : index
    %c1_212 = arith.constant 1 : index
    %c0_213 = arith.constant 0 : index
    %c0_214 = arith.constant 0 : index
    %c0_215 = arith.constant 0 : index
    %130 = vector.load %arg1[%c9_211, %c1_212, %c0_213, %c0_214, %c0_215] : memref<14x7x2x2x128xf32, #tpu.memory_space<vmem>>, vector<1x6x1x2x128xf32>
    %131 = vector.shape_cast %130 : vector<1x6x1x2x128xf32> to vector<6x2x128xf32>
    %132 = arith.maximumf %129, %131 : vector<6x2x128xf32>
    %c10 = arith.constant 10 : index
    %c0_216 = arith.constant 0 : index
    %c0_217 = arith.constant 0 : index
    %c0_218 = arith.constant 0 : index
    %c0_219 = arith.constant 0 : index
    %133 = vector.load %arg1[%c10, %c0_216, %c0_217, %c0_218, %c0_219] : memref<14x7x2x2x128xf32, #tpu.memory_space<vmem>>, vector<1x6x1x2x128xf32>
    %134 = vector.shape_cast %133 : vector<1x6x1x2x128xf32> to vector<6x2x128xf32>
    %135 = arith.maximumf %132, %134 : vector<6x2x128xf32>
    %c10_220 = arith.constant 10 : index
    %c0_221 = arith.constant 0 : index
    %c1_222 = arith.constant 1 : index
    %c0_223 = arith.constant 0 : index
    %c0_224 = arith.constant 0 : index
    %136 = vector.load %arg1[%c10_220, %c0_221, %c1_222, %c0_223, %c0_224] : memref<14x7x2x2x128xf32, #tpu.memory_space<vmem>>, vector<1x6x1x2x128xf32>
    %137 = vector.shape_cast %136 : vector<1x6x1x2x128xf32> to vector<6x2x128xf32>
    %138 = arith.maximumf %135, %137 : vector<6x2x128xf32>
    %c10_225 = arith.constant 10 : index
    %c1_226 = arith.constant 1 : index
    %c0_227 = arith.constant 0 : index
    %c0_228 = arith.constant 0 : index
    %c0_229 = arith.constant 0 : index
    %139 = vector.load %arg1[%c10_225, %c1_226, %c0_227, %c0_228, %c0_229] : memref<14x7x2x2x128xf32, #tpu.memory_space<vmem>>, vector<1x6x1x2x128xf32>
    %140 = vector.shape_cast %139 : vector<1x6x1x2x128xf32> to vector<6x2x128xf32>
    %141 = arith.maximumf %138, %140 : vector<6x2x128xf32>
    %c4_230 = arith.constant 4 : index
    %c0_231 = arith.constant 0 : index
    %c0_232 = arith.constant 0 : index
    %c0_233 = arith.constant 0 : index
    %142 = vector.load %arg2[%c4_230, %c0_231, %c0_232, %c0_233] : memref<6x6x2x128xf32, #tpu.memory_space<vmem>>, vector<1x6x2x128xf32>
    %143 = vector.shape_cast %142 : vector<1x6x2x128xf32> to vector<6x2x128xf32>
    %144 = vector.shape_cast %141 : vector<6x2x128xf32> to vector<1x6x2x128xf32>
    tpu.vector_store %arg2[%c4_230, %c0_231, %c0_232, %c0_233], %144 {strides = array<i32>} : memref<6x6x2x128xf32, #tpu.memory_space<vmem>>, vector<1x6x2x128xf32>,
    %c10_234 = arith.constant 10 : index
    %c0_235 = arith.constant 0 : index
    %c0_236 = arith.constant 0 : index
    %c0_237 = arith.constant 0 : index
    %c0_238 = arith.constant 0 : index
    %145 = vector.load %arg1[%c10_234, %c0_235, %c0_236, %c0_237, %c0_238] : memref<14x7x2x2x128xf32, #tpu.memory_space<vmem>>, vector<1x6x1x2x128xf32>
    %146 = vector.shape_cast %145 : vector<1x6x1x2x128xf32> to vector<6x2x128xf32>
    %c10_239 = arith.constant 10 : index
    %c0_240 = arith.constant 0 : index
    %c1_241 = arith.constant 1 : index
    %c0_242 = arith.constant 0 : index
    %c0_243 = arith.constant 0 : index
    %147 = vector.load %arg1[%c10_239, %c0_240, %c1_241, %c0_242, %c0_243] : memref<14x7x2x2x128xf32, #tpu.memory_space<vmem>>, vector<1x6x1x2x128xf32>
    %148 = vector.shape_cast %147 : vector<1x6x1x2x128xf32> to vector<6x2x128xf32>
    %149 = arith.maximumf %146, %148 : vector<6x2x128xf32>
    %c10_244 = arith.constant 10 : index
    %c1_245 = arith.constant 1 : index
    %c0_246 = arith.constant 0 : index
    %c0_247 = arith.constant 0 : index
    %c0_248 = arith.constant 0 : index
    %150 = vector.load %arg1[%c10_244, %c1_245, %c0_246, %c0_247, %c0_248] : memref<14x7x2x2x128xf32, #tpu.memory_space<vmem>>, vector<1x6x1x2x128xf32>
    %151 = vector.shape_cast %150 : vector<1x6x1x2x128xf32> to vector<6x2x128xf32>
    %152 = arith.maximumf %149, %151 : vector<6x2x128xf32>
    %c11 = arith.constant 11 : index
    %c0_249 = arith.constant 0 : index
    %c0_250 = arith.constant 0 : index
    %c0_251 = arith.constant 0 : index
    %c0_252 = arith.constant 0 : index
    %153 = vector.load %arg1[%c11, %c0_249, %c0_250, %c0_251, %c0_252] : memref<14x7x2x2x128xf32, #tpu.memory_space<vmem>>, vector<1x6x1x2x128xf32>
    %154 = vector.shape_cast %153 : vector<1x6x1x2x128xf32> to vector<6x2x128xf32>
    %155 = arith.maximumf %152, %154 : vector<6x2x128xf32>
    %c11_253 = arith.constant 11 : index
    %c0_254 = arith.constant 0 : index
    %c1_255 = arith.constant 1 : index
    %c0_256 = arith.constant 0 : index
    %c0_257 = arith.constant 0 : index
    %156 = vector.load %arg1[%c11_253, %c0_254, %c1_255, %c0_256, %c0_257] : memref<14x7x2x2x128xf32, #tpu.memory_space<vmem>>, vector<1x6x1x2x128xf32>
    %157 = vector.shape_cast %156 : vector<1x6x1x2x128xf32> to vector<6x2x128xf32>
    %158 = arith.maximumf %155, %157 : vector<6x2x128xf32>
    %c11_258 = arith.constant 11 : index
    %c1_259 = arith.constant 1 : index
    %c0_260 = arith.constant 0 : index
    %c0_261 = arith.constant 0 : index
    %c0_262 = arith.constant 0 : index
    %159 = vector.load %arg1[%c11_258, %c1_259, %c0_260, %c0_261, %c0_262] : memref<14x7x2x2x128xf32, #tpu.memory_space<vmem>>, vector<1x6x1x2x128xf32>
    %160 = vector.shape_cast %159 : vector<1x6x1x2x128xf32> to vector<6x2x128xf32>
    %161 = arith.maximumf %158, %160 : vector<6x2x128xf32>
    %c12 = arith.constant 12 : index
    %c0_263 = arith.constant 0 : index
    %c0_264 = arith.constant 0 : index
    %c0_265 = arith.constant 0 : index
    %c0_266 = arith.constant 0 : index
    %162 = vector.load %arg1[%c12, %c0_263, %c0_264, %c0_265, %c0_266] : memref<14x7x2x2x128xf32, #tpu.memory_space<vmem>>, vector<1x6x1x2x128xf32>
    %163 = vector.shape_cast %162 : vector<1x6x1x2x128xf32> to vector<6x2x128xf32>
    %164 = arith.maximumf %161, %163 : vector<6x2x128xf32>
    %c12_267 = arith.constant 12 : index
    %c0_268 = arith.constant 0 : index
    %c1_269 = arith.constant 1 : index
    %c0_270 = arith.constant 0 : index
    %c0_271 = arith.constant 0 : index
    %165 = vector.load %arg1[%c12_267, %c0_268, %c1_269, %c0_270, %c0_271] : memref<14x7x2x2x128xf32, #tpu.memory_space<vmem>>, vector<1x6x1x2x128xf32>
    %166 = vector.shape_cast %165 : vector<1x6x1x2x128xf32> to vector<6x2x128xf32>
    %167 = arith.maximumf %164, %166 : vector<6x2x128xf32>
    %c12_272 = arith.constant 12 : index
    %c1_273 = arith.constant 1 : index
    %c0_274 = arith.constant 0 : index
    %c0_275 = arith.constant 0 : index
    %c0_276 = arith.constant 0 : index
    %168 = vector.load %arg1[%c12_272, %c1_273, %c0_274, %c0_275, %c0_276] : memref<14x7x2x2x128xf32, #tpu.memory_space<vmem>>, vector<1x6x1x2x128xf32>
    %169 = vector.shape_cast %168 : vector<1x6x1x2x128xf32> to vector<6x2x128xf32>
    %170 = arith.maximumf %167, %169 : vector<6x2x128xf32>
    %c5_277 = arith.constant 5 : index
    %c0_278 = arith.constant 0 : index
    %c0_279 = arith.constant 0 : index
    %c0_280 = arith.constant 0 : index
    %171 = vector.load %arg2[%c5_277, %c0_278, %c0_279, %c0_280] : memref<6x6x2x128xf32, #tpu.memory_space<vmem>>, vector<1x6x2x128xf32>
    %172 = vector.shape_cast %171 : vector<1x6x2x128xf32> to vector<6x2x128xf32>
    %173 = vector.shape_cast %170 : vector<6x2x128xf32> to vector<1x6x2x128xf32>
    tpu.vector_store %arg2[%c5_277, %c0_278, %c0_279, %c0_280], %173 {strides = array<i32>} : memref<6x6x2x128xf32, #tpu.memory_space<vmem>>, vector<1x6x2x128xf32>,
    return
  }
  func.func @transform_0(%arg0: i32) -> (i32, i32, i32, i32, i32) {
    %c0_i32 = arith.constant 0 : i32
    %c0_i32_0 = arith.constant 0 : i32
    %c0_i32_1 = arith.constant 0 : i32
    %c0_i32_2 = arith.constant 0 : i32
    %c0_i32_3 = arith.constant 0 : i32
    return %c0_i32, %c0_i32_0, %c0_i32_1, %c0_i32_2, %arg0 : i32, i32, i32, i32, i32
  }
  func.func @transform_1(%arg0: i32) -> (i32, i32, i32, i32) {
    %c0_i32 = arith.constant 0 : i32
    %c0_i32_0 = arith.constant 0 : i32
    %c0_i32_1 = arith.constant 0 : i32
    %c0_i32_2 = arith.constant 0 : i32
    return %c0_i32, %c0_i32_0, %c0_i32_1, %arg0 : i32, i32, i32, i32
  }
}

module attributes {stable_mosaic.version = 11 : i64} {
  func.func @_matmul_bias_relu_kernel(%arg0: i32, %arg1: i32, %arg2: i32, %arg3: memref<72x512xbf16, #tpu.memory_space<vmem>>, %arg4: memref<512x256xbf16, #tpu.memory_space<vmem>>, %arg5: memref<1x256xf32, #tpu.memory_space<vmem>>, %arg6: memref<72x256xf32, #tpu.memory_space<vmem>>, %arg7: memref<72x256xf32, #tpu.memory_space<vmem>>) attributes {dimension_semantics = [#tpu.dimension_semantics<parallel>, #tpu.dimension_semantics<parallel>, #tpu.dimension_semantics<arbitrary>], iteration_bounds = array<i64: 1, 1, 7>, scalar_prefetch = 0 : i64, scratch_operands = 1 : i64, tpu.core_type = #tpu.core_type<tc>, window_params = [{transform_indices = @transform_0, window_bounds = array<i64: 72, 512>}, {transform_indices = @transform_1, window_bounds = array<i64: 512, 256>}, {transform_indices = @transform_2, window_bounds = array<i64: 1, 256>}, {transform_indices = @transform_3, window_bounds = array<i64: 72, 256>}]} {
    %c0_i32 = arith.constant 0 : i32
    %0 = arith.cmpi eq, %arg2, %c0_i32 : i32
    %1 = arith.extui %0 : i1 to i32
    %c0_i32_0 = arith.constant 0 : i32
    %2 = arith.cmpi ne, %1, %c0_i32_0 : i32
    scf.if %2 {
      %cst_9 = arith.constant 0.000000e+00 : f32
      %12 = vector.broadcast %cst_9 : f32 to vector<72x256xf32>
      %c0_10 = arith.constant 0 : index
      %c0_11 = arith.constant 0 : index
      %13 = vector.load %arg7[%c0_10, %c0_11] : memref<72x256xf32, #tpu.memory_space<vmem>>, vector<72x256xf32>
      tpu.vector_store %arg7[%c0_10, %c0_11], %12 {strides = array<i32>} : memref<72x256xf32, #tpu.memory_space<vmem>>, vector<72x256xf32>,
    } else {
    }
    %c0 = arith.constant 0 : index
    %c0_1 = arith.constant 0 : index
    %3 = vector.load %arg7[%c0, %c0_1] : memref<72x256xf32, #tpu.memory_space<vmem>>, vector<72x256xf32>
    %c0_2 = arith.constant 0 : index
    %c0_3 = arith.constant 0 : index
    %4 = vector.load %arg3[%c0_2, %c0_3] : memref<72x512xbf16, #tpu.memory_space<vmem>>, vector<72x512xbf16>
    %c0_4 = arith.constant 0 : index
    %c0_5 = arith.constant 0 : index
    %5 = vector.load %arg4[%c0_4, %c0_5] : memref<512x256xbf16, #tpu.memory_space<vmem>>, vector<512x256xbf16>
    %cst = arith.constant dense<0.000000e+00> : vector<72x256xf32>
    %6 = tpu.matmul %4, %5, %cst {dimension_numbers = #tpu.dot_dimension_numbers<[1], [0], [0], [1], [0, 0, 1, 1], [], []>} : vector<72x512xbf16>, vector<512x256xbf16>, vector<72x256xf32> -> vector<72x256xf32>
    %7 = arith.addf %3, %6 : vector<72x256xf32>
    %c0_6 = arith.constant 0 : index
    %c0_7 = arith.constant 0 : index
    %8 = vector.load %arg7[%c0_6, %c0_7] : memref<72x256xf32, #tpu.memory_space<vmem>>, vector<72x256xf32>
    tpu.vector_store %arg7[%c0_6, %c0_7], %7 {strides = array<i32>} : memref<72x256xf32, #tpu.memory_space<vmem>>, vector<72x256xf32>,
    %c6_i32 = arith.constant 6 : i32
    %9 = arith.cmpi eq, %arg2, %c6_i32 : i32
    %10 = arith.extui %9 : i1 to i32
    %c0_i32_8 = arith.constant 0 : i32
    %11 = arith.cmpi ne, %10, %c0_i32_8 : i32
    scf.if %11 {
      %c0_9 = arith.constant 0 : index
      %c0_10 = arith.constant 0 : index
      %12 = vector.load %arg7[%c0_9, %c0_10] : memref<72x256xf32, #tpu.memory_space<vmem>>, vector<72x256xf32>
      %c0_11 = arith.constant 0 : index
      %c0_12 = arith.constant 0 : index
      %13 = vector.load %arg5[%c0_11, %c0_12] : memref<1x256xf32, #tpu.memory_space<vmem>>, vector<1x256xf32>
      %14 = vector.broadcast %13 : vector<1x256xf32> to vector<72x256xf32>
      %15 = arith.addf %12, %14 : vector<72x256xf32>
      %cst_13 = arith.constant 0.000000e+00 : f32
      %16 = vector.broadcast %cst_13 : f32 to vector<72x256xf32>
      %17 = arith.maximumf %15, %16 : vector<72x256xf32>
      %c0_14 = arith.constant 0 : index
      %c0_15 = arith.constant 0 : index
      %18 = vector.load %arg6[%c0_14, %c0_15] : memref<72x256xf32, #tpu.memory_space<vmem>>, vector<72x256xf32>
      tpu.vector_store %arg6[%c0_14, %c0_15], %17 {strides = array<i32>} : memref<72x256xf32, #tpu.memory_space<vmem>>, vector<72x256xf32>,
    } else {
    }
    return
  }
  func.func @transform_0(%arg0: i32, %arg1: i32, %arg2: i32) -> (i32, i32) {
    %c0_i32 = arith.constant 0 : i32
    return %arg0, %arg2 : i32, i32
  }
  func.func @transform_1(%arg0: i32, %arg1: i32, %arg2: i32) -> (i32, i32) {
    %c0_i32 = arith.constant 0 : i32
    return %arg2, %arg1 : i32, i32
  }
  func.func @transform_2(%arg0: i32, %arg1: i32, %arg2: i32) -> (i32, i32) {
    %c0_i32 = arith.constant 0 : i32
    %c0_i32_0 = arith.constant 0 : i32
    return %c0_i32, %arg1 : i32, i32
  }
  func.func @transform_3(%arg0: i32, %arg1: i32, %arg2: i32) -> (i32, i32) {
    %c0_i32 = arith.constant 0 : i32
    return %arg0, %arg1 : i32, i32
  }
}

module attributes {stable_mosaic.version = 11 : i64} {
  func.func @_maxpool_kernel(%arg0: i32, %arg1: memref<6x3x2x2x128xf32, #tpu.memory_space<vmem>>, %arg2: memref<2x2x2x128xf32, #tpu.memory_space<vmem>>) attributes {dimension_semantics = [#tpu.dimension_semantics<parallel>], iteration_bounds = array<i64: 2>, scalar_prefetch = 0 : i64, scratch_operands = 0 : i64, tpu.core_type = #tpu.core_type<tc>, window_params = [{transform_indices = @transform_0, window_bounds = array<i64: 6, 3, 2, 2, 128>}, {transform_indices = @transform_1, window_bounds = array<i64: 2, 2, 2, 128>}]} {
    %c0 = arith.constant 0 : index
    %c0_0 = arith.constant 0 : index
    %c0_1 = arith.constant 0 : index
    %c0_2 = arith.constant 0 : index
    %c0_3 = arith.constant 0 : index
    %0 = vector.load %arg1[%c0, %c0_0, %c0_1, %c0_2, %c0_3] : memref<6x3x2x2x128xf32, #tpu.memory_space<vmem>>, vector<1x2x1x2x128xf32>
    %1 = vector.shape_cast %0 : vector<1x2x1x2x128xf32> to vector<2x2x128xf32>
    %c0_4 = arith.constant 0 : index
    %c0_5 = arith.constant 0 : index
    %c1 = arith.constant 1 : index
    %c0_6 = arith.constant 0 : index
    %c0_7 = arith.constant 0 : index
    %2 = vector.load %arg1[%c0_4, %c0_5, %c1, %c0_6, %c0_7] : memref<6x3x2x2x128xf32, #tpu.memory_space<vmem>>, vector<1x2x1x2x128xf32>
    %3 = vector.shape_cast %2 : vector<1x2x1x2x128xf32> to vector<2x2x128xf32>
    %4 = arith.maximumf %1, %3 : vector<2x2x128xf32>
    %c0_8 = arith.constant 0 : index
    %c1_9 = arith.constant 1 : index
    %c0_10 = arith.constant 0 : index
    %c0_11 = arith.constant 0 : index
    %c0_12 = arith.constant 0 : index
    %5 = vector.load %arg1[%c0_8, %c1_9, %c0_10, %c0_11, %c0_12] : memref<6x3x2x2x128xf32, #tpu.memory_space<vmem>>, vector<1x2x1x2x128xf32>
    %6 = vector.shape_cast %5 : vector<1x2x1x2x128xf32> to vector<2x2x128xf32>
    %7 = arith.maximumf %4, %6 : vector<2x2x128xf32>
    %c1_13 = arith.constant 1 : index
    %c0_14 = arith.constant 0 : index
    %c0_15 = arith.constant 0 : index
    %c0_16 = arith.constant 0 : index
    %c0_17 = arith.constant 0 : index
    %8 = vector.load %arg1[%c1_13, %c0_14, %c0_15, %c0_16, %c0_17] : memref<6x3x2x2x128xf32, #tpu.memory_space<vmem>>, vector<1x2x1x2x128xf32>
    %9 = vector.shape_cast %8 : vector<1x2x1x2x128xf32> to vector<2x2x128xf32>
    %10 = arith.maximumf %7, %9 : vector<2x2x128xf32>
    %c1_18 = arith.constant 1 : index
    %c0_19 = arith.constant 0 : index
    %c1_20 = arith.constant 1 : index
    %c0_21 = arith.constant 0 : index
    %c0_22 = arith.constant 0 : index
    %11 = vector.load %arg1[%c1_18, %c0_19, %c1_20, %c0_21, %c0_22] : memref<6x3x2x2x128xf32, #tpu.memory_space<vmem>>, vector<1x2x1x2x128xf32>
    %12 = vector.shape_cast %11 : vector<1x2x1x2x128xf32> to vector<2x2x128xf32>
    %13 = arith.maximumf %10, %12 : vector<2x2x128xf32>
    %c1_23 = arith.constant 1 : index
    %c1_24 = arith.constant 1 : index
    %c0_25 = arith.constant 0 : index
    %c0_26 = arith.constant 0 : index
    %c0_27 = arith.constant 0 : index
    %14 = vector.load %arg1[%c1_23, %c1_24, %c0_25, %c0_26, %c0_27] : memref<6x3x2x2x128xf32, #tpu.memory_space<vmem>>, vector<1x2x1x2x128xf32>
    %15 = vector.shape_cast %14 : vector<1x2x1x2x128xf32> to vector<2x2x128xf32>
    %16 = arith.maximumf %13, %15 : vector<2x2x128xf32>
    %c2 = arith.constant 2 : index
    %c0_28 = arith.constant 0 : index
    %c0_29 = arith.constant 0 : index
    %c0_30 = arith.constant 0 : index
    %c0_31 = arith.constant 0 : index
    %17 = vector.load %arg1[%c2, %c0_28, %c0_29, %c0_30, %c0_31] : memref<6x3x2x2x128xf32, #tpu.memory_space<vmem>>, vector<1x2x1x2x128xf32>
    %18 = vector.shape_cast %17 : vector<1x2x1x2x128xf32> to vector<2x2x128xf32>
    %19 = arith.maximumf %16, %18 : vector<2x2x128xf32>
    %c2_32 = arith.constant 2 : index
    %c0_33 = arith.constant 0 : index
    %c1_34 = arith.constant 1 : index
    %c0_35 = arith.constant 0 : index
    %c0_36 = arith.constant 0 : index
    %20 = vector.load %arg1[%c2_32, %c0_33, %c1_34, %c0_35, %c0_36] : memref<6x3x2x2x128xf32, #tpu.memory_space<vmem>>, vector<1x2x1x2x128xf32>
    %21 = vector.shape_cast %20 : vector<1x2x1x2x128xf32> to vector<2x2x128xf32>
    %22 = arith.maximumf %19, %21 : vector<2x2x128xf32>
    %c2_37 = arith.constant 2 : index
    %c1_38 = arith.constant 1 : index
    %c0_39 = arith.constant 0 : index
    %c0_40 = arith.constant 0 : index
    %c0_41 = arith.constant 0 : index
    %23 = vector.load %arg1[%c2_37, %c1_38, %c0_39, %c0_40, %c0_41] : memref<6x3x2x2x128xf32, #tpu.memory_space<vmem>>, vector<1x2x1x2x128xf32>
    %24 = vector.shape_cast %23 : vector<1x2x1x2x128xf32> to vector<2x2x128xf32>
    %25 = arith.maximumf %22, %24 : vector<2x2x128xf32>
    %c0_42 = arith.constant 0 : index
    %c0_43 = arith.constant 0 : index
    %c0_44 = arith.constant 0 : index
    %c0_45 = arith.constant 0 : index
    %26 = vector.load %arg2[%c0_42, %c0_43, %c0_44, %c0_45] : memref<2x2x2x128xf32, #tpu.memory_space<vmem>>, vector<1x2x2x128xf32>
    %27 = vector.shape_cast %26 : vector<1x2x2x128xf32> to vector<2x2x128xf32>
    %28 = vector.shape_cast %25 : vector<2x2x128xf32> to vector<1x2x2x128xf32>
    tpu.vector_store %arg2[%c0_42, %c0_43, %c0_44, %c0_45], %28 {strides = array<i32>} : memref<2x2x2x128xf32, #tpu.memory_space<vmem>>, vector<1x2x2x128xf32>,
    %c2_46 = arith.constant 2 : index
    %c0_47 = arith.constant 0 : index
    %c0_48 = arith.constant 0 : index
    %c0_49 = arith.constant 0 : index
    %c0_50 = arith.constant 0 : index
    %29 = vector.load %arg1[%c2_46, %c0_47, %c0_48, %c0_49, %c0_50] : memref<6x3x2x2x128xf32, #tpu.memory_space<vmem>>, vector<1x2x1x2x128xf32>
    %30 = vector.shape_cast %29 : vector<1x2x1x2x128xf32> to vector<2x2x128xf32>
    %c2_51 = arith.constant 2 : index
    %c0_52 = arith.constant 0 : index
    %c1_53 = arith.constant 1 : index
    %c0_54 = arith.constant 0 : index
    %c0_55 = arith.constant 0 : index
    %31 = vector.load %arg1[%c2_51, %c0_52, %c1_53, %c0_54, %c0_55] : memref<6x3x2x2x128xf32, #tpu.memory_space<vmem>>, vector<1x2x1x2x128xf32>
    %32 = vector.shape_cast %31 : vector<1x2x1x2x128xf32> to vector<2x2x128xf32>
    %33 = arith.maximumf %30, %32 : vector<2x2x128xf32>
    %c2_56 = arith.constant 2 : index
    %c1_57 = arith.constant 1 : index
    %c0_58 = arith.constant 0 : index
    %c0_59 = arith.constant 0 : index
    %c0_60 = arith.constant 0 : index
    %34 = vector.load %arg1[%c2_56, %c1_57, %c0_58, %c0_59, %c0_60] : memref<6x3x2x2x128xf32, #tpu.memory_space<vmem>>, vector<1x2x1x2x128xf32>
    %35 = vector.shape_cast %34 : vector<1x2x1x2x128xf32> to vector<2x2x128xf32>
    %36 = arith.maximumf %33, %35 : vector<2x2x128xf32>
    %c3 = arith.constant 3 : index
    %c0_61 = arith.constant 0 : index
    %c0_62 = arith.constant 0 : index
    %c0_63 = arith.constant 0 : index
    %c0_64 = arith.constant 0 : index
    %37 = vector.load %arg1[%c3, %c0_61, %c0_62, %c0_63, %c0_64] : memref<6x3x2x2x128xf32, #tpu.memory_space<vmem>>, vector<1x2x1x2x128xf32>
    %38 = vector.shape_cast %37 : vector<1x2x1x2x128xf32> to vector<2x2x128xf32>
    %39 = arith.maximumf %36, %38 : vector<2x2x128xf32>
    %c3_65 = arith.constant 3 : index
    %c0_66 = arith.constant 0 : index
    %c1_67 = arith.constant 1 : index
    %c0_68 = arith.constant 0 : index
    %c0_69 = arith.constant 0 : index
    %40 = vector.load %arg1[%c3_65, %c0_66, %c1_67, %c0_68, %c0_69] : memref<6x3x2x2x128xf32, #tpu.memory_space<vmem>>, vector<1x2x1x2x128xf32>
    %41 = vector.shape_cast %40 : vector<1x2x1x2x128xf32> to vector<2x2x128xf32>
    %42 = arith.maximumf %39, %41 : vector<2x2x128xf32>
    %c3_70 = arith.constant 3 : index
    %c1_71 = arith.constant 1 : index
    %c0_72 = arith.constant 0 : index
    %c0_73 = arith.constant 0 : index
    %c0_74 = arith.constant 0 : index
    %43 = vector.load %arg1[%c3_70, %c1_71, %c0_72, %c0_73, %c0_74] : memref<6x3x2x2x128xf32, #tpu.memory_space<vmem>>, vector<1x2x1x2x128xf32>
    %44 = vector.shape_cast %43 : vector<1x2x1x2x128xf32> to vector<2x2x128xf32>
    %45 = arith.maximumf %42, %44 : vector<2x2x128xf32>
    %c4 = arith.constant 4 : index
    %c0_75 = arith.constant 0 : index
    %c0_76 = arith.constant 0 : index
    %c0_77 = arith.constant 0 : index
    %c0_78 = arith.constant 0 : index
    %46 = vector.load %arg1[%c4, %c0_75, %c0_76, %c0_77, %c0_78] : memref<6x3x2x2x128xf32, #tpu.memory_space<vmem>>, vector<1x2x1x2x128xf32>
    %47 = vector.shape_cast %46 : vector<1x2x1x2x128xf32> to vector<2x2x128xf32>
    %48 = arith.maximumf %45, %47 : vector<2x2x128xf32>
    %c4_79 = arith.constant 4 : index
    %c0_80 = arith.constant 0 : index
    %c1_81 = arith.constant 1 : index
    %c0_82 = arith.constant 0 : index
    %c0_83 = arith.constant 0 : index
    %49 = vector.load %arg1[%c4_79, %c0_80, %c1_81, %c0_82, %c0_83] : memref<6x3x2x2x128xf32, #tpu.memory_space<vmem>>, vector<1x2x1x2x128xf32>
    %50 = vector.shape_cast %49 : vector<1x2x1x2x128xf32> to vector<2x2x128xf32>
    %51 = arith.maximumf %48, %50 : vector<2x2x128xf32>
    %c4_84 = arith.constant 4 : index
    %c1_85 = arith.constant 1 : index
    %c0_86 = arith.constant 0 : index
    %c0_87 = arith.constant 0 : index
    %c0_88 = arith.constant 0 : index
    %52 = vector.load %arg1[%c4_84, %c1_85, %c0_86, %c0_87, %c0_88] : memref<6x3x2x2x128xf32, #tpu.memory_space<vmem>>, vector<1x2x1x2x128xf32>
    %53 = vector.shape_cast %52 : vector<1x2x1x2x128xf32> to vector<2x2x128xf32>
    %54 = arith.maximumf %51, %53 : vector<2x2x128xf32>
    %c1_89 = arith.constant 1 : index
    %c0_90 = arith.constant 0 : index
    %c0_91 = arith.constant 0 : index
    %c0_92 = arith.constant 0 : index
    %55 = vector.load %arg2[%c1_89, %c0_90, %c0_91, %c0_92] : memref<2x2x2x128xf32, #tpu.memory_space<vmem>>, vector<1x2x2x128xf32>
    %56 = vector.shape_cast %55 : vector<1x2x2x128xf32> to vector<2x2x128xf32>
    %57 = vector.shape_cast %54 : vector<2x2x128xf32> to vector<1x2x2x128xf32>
    tpu.vector_store %arg2[%c1_89, %c0_90, %c0_91, %c0_92], %57 {strides = array<i32>} : memref<2x2x2x128xf32, #tpu.memory_space<vmem>>, vector<1x2x2x128xf32>,
    return
  }
  func.func @transform_0(%arg0: i32) -> (i32, i32, i32, i32, i32) {
    %c0_i32 = arith.constant 0 : i32
    %c0_i32_0 = arith.constant 0 : i32
    %c0_i32_1 = arith.constant 0 : i32
    %c0_i32_2 = arith.constant 0 : i32
    %c0_i32_3 = arith.constant 0 : i32
    return %c0_i32, %c0_i32_0, %c0_i32_1, %c0_i32_2, %arg0 : i32, i32, i32, i32, i32
  }
  func.func @transform_1(%arg0: i32) -> (i32, i32, i32, i32) {
    %c0_i32 = arith.constant 0 : i32
    %c0_i32_0 = arith.constant 0 : i32
    %c0_i32_1 = arith.constant 0 : i32
    %c0_i32_2 = arith.constant 0 : i32
    return %c0_i32, %c0_i32_0, %c0_i32_1, %arg0 : i32, i32, i32, i32
  }
}

module attributes {stable_mosaic.version = 11 : i64} {
  func.func @_matmul_bias_relu_kernel(%arg0: i32, %arg1: i32, %arg2: i32, %arg3: memref<8x384xbf16, #tpu.memory_space<vmem>>, %arg4: memref<384x384xbf16, #tpu.memory_space<vmem>>, %arg5: memref<1x384xf32, #tpu.memory_space<vmem>>, %arg6: memref<8x384xf32, #tpu.memory_space<vmem>>, %arg7: memref<8x384xf32, #tpu.memory_space<vmem>>) attributes {dimension_semantics = [#tpu.dimension_semantics<parallel>, #tpu.dimension_semantics<parallel>, #tpu.dimension_semantics<arbitrary>], iteration_bounds = array<i64: 1, 1, 6>, scalar_prefetch = 0 : i64, scratch_operands = 1 : i64, tpu.core_type = #tpu.core_type<tc>, window_params = [{transform_indices = @transform_0, window_bounds = array<i64: 8, 384>}, {transform_indices = @transform_1, window_bounds = array<i64: 384, 384>}, {transform_indices = @transform_2, window_bounds = array<i64: 1, 384>}, {transform_indices = @transform_3, window_bounds = array<i64: 8, 384>}]} {
    %c0_i32 = arith.constant 0 : i32
    %0 = arith.cmpi eq, %arg2, %c0_i32 : i32
    %1 = arith.extui %0 : i1 to i32
    %c0_i32_0 = arith.constant 0 : i32
    %2 = arith.cmpi ne, %1, %c0_i32_0 : i32
    scf.if %2 {
      %cst_9 = arith.constant 0.000000e+00 : f32
      %12 = vector.broadcast %cst_9 : f32 to vector<8x384xf32>
      %c0_10 = arith.constant 0 : index
      %c0_11 = arith.constant 0 : index
      %13 = vector.load %arg7[%c0_10, %c0_11] : memref<8x384xf32, #tpu.memory_space<vmem>>, vector<8x384xf32>
      tpu.vector_store %arg7[%c0_10, %c0_11], %12 {strides = array<i32>} : memref<8x384xf32, #tpu.memory_space<vmem>>, vector<8x384xf32>,
    } else {
    }
    %c0 = arith.constant 0 : index
    %c0_1 = arith.constant 0 : index
    %3 = vector.load %arg7[%c0, %c0_1] : memref<8x384xf32, #tpu.memory_space<vmem>>, vector<8x384xf32>
    %c0_2 = arith.constant 0 : index
    %c0_3 = arith.constant 0 : index
    %4 = vector.load %arg3[%c0_2, %c0_3] : memref<8x384xbf16, #tpu.memory_space<vmem>>, vector<8x384xbf16>
    %c0_4 = arith.constant 0 : index
    %c0_5 = arith.constant 0 : index
    %5 = vector.load %arg4[%c0_4, %c0_5] : memref<384x384xbf16, #tpu.memory_space<vmem>>, vector<384x384xbf16>
    %cst = arith.constant dense<0.000000e+00> : vector<8x384xf32>
    %6 = tpu.matmul %4, %5, %cst {dimension_numbers = #tpu.dot_dimension_numbers<[1], [0], [0], [1], [0, 0, 1, 1], [], []>} : vector<8x384xbf16>, vector<384x384xbf16>, vector<8x384xf32> -> vector<8x384xf32>
    %7 = arith.addf %3, %6 : vector<8x384xf32>
    %c0_6 = arith.constant 0 : index
    %c0_7 = arith.constant 0 : index
    %8 = vector.load %arg7[%c0_6, %c0_7] : memref<8x384xf32, #tpu.memory_space<vmem>>, vector<8x384xf32>
    tpu.vector_store %arg7[%c0_6, %c0_7], %7 {strides = array<i32>} : memref<8x384xf32, #tpu.memory_space<vmem>>, vector<8x384xf32>,
    %c5_i32 = arith.constant 5 : i32
    %9 = arith.cmpi eq, %arg2, %c5_i32 : i32
    %10 = arith.extui %9 : i1 to i32
    %c0_i32_8 = arith.constant 0 : i32
    %11 = arith.cmpi ne, %10, %c0_i32_8 : i32
    scf.if %11 {
      %c0_9 = arith.constant 0 : index
      %c0_10 = arith.constant 0 : index
      %12 = vector.load %arg7[%c0_9, %c0_10] : memref<8x384xf32, #tpu.memory_space<vmem>>, vector<8x384xf32>
      %c0_11 = arith.constant 0 : index
      %c0_12 = arith.constant 0 : index
      %13 = vector.load %arg5[%c0_11, %c0_12] : memref<1x384xf32, #tpu.memory_space<vmem>>, vector<1x384xf32>
      %14 = vector.broadcast %13 : vector<1x384xf32> to vector<8x384xf32>
      %15 = arith.addf %12, %14 : vector<8x384xf32>
      %cst_13 = arith.constant 0.000000e+00 : f32
      %16 = vector.broadcast %cst_13 : f32 to vector<8x384xf32>
      %17 = arith.maximumf %15, %16 : vector<8x384xf32>
      %c0_14 = arith.constant 0 : index
      %c0_15 = arith.constant 0 : index
      %18 = vector.load %arg6[%c0_14, %c0_15] : memref<8x384xf32, #tpu.memory_space<vmem>>, vector<8x384xf32>
      tpu.vector_store %arg6[%c0_14, %c0_15], %17 {strides = array<i32>} : memref<8x384xf32, #tpu.memory_space<vmem>>, vector<8x384xf32>,
    } else {
    }
    return
  }
  func.func @transform_0(%arg0: i32, %arg1: i32, %arg2: i32) -> (i32, i32) {
    %c0_i32 = arith.constant 0 : i32
    return %arg0, %arg2 : i32, i32
  }
  func.func @transform_1(%arg0: i32, %arg1: i32, %arg2: i32) -> (i32, i32) {
    %c0_i32 = arith.constant 0 : i32
    return %arg2, %arg1 : i32, i32
  }
  func.func @transform_2(%arg0: i32, %arg1: i32, %arg2: i32) -> (i32, i32) {
    %c0_i32 = arith.constant 0 : i32
    %c0_i32_0 = arith.constant 0 : i32
    return %c0_i32, %arg1 : i32, i32
  }
  func.func @transform_3(%arg0: i32, %arg1: i32, %arg2: i32) -> (i32, i32) {
    %c0_i32 = arith.constant 0 : i32
    return %arg0, %arg1 : i32, i32
  }
}

module attributes {stable_mosaic.version = 11 : i64} {
  func.func @_matmul_bias_relu_kernel(%arg0: i32, %arg1: i32, %arg2: i32, %arg3: memref<8x384xbf16, #tpu.memory_space<vmem>>, %arg4: memref<384x384xbf16, #tpu.memory_space<vmem>>, %arg5: memref<1x384xf32, #tpu.memory_space<vmem>>, %arg6: memref<8x384xf32, #tpu.memory_space<vmem>>, %arg7: memref<8x384xf32, #tpu.memory_space<vmem>>) attributes {dimension_semantics = [#tpu.dimension_semantics<parallel>, #tpu.dimension_semantics<parallel>, #tpu.dimension_semantics<arbitrary>], iteration_bounds = array<i64: 1, 1, 9>, scalar_prefetch = 0 : i64, scratch_operands = 1 : i64, tpu.core_type = #tpu.core_type<tc>, window_params = [{transform_indices = @transform_0, window_bounds = array<i64: 8, 384>}, {transform_indices = @transform_1, window_bounds = array<i64: 384, 384>}, {transform_indices = @transform_2, window_bounds = array<i64: 1, 384>}, {transform_indices = @transform_3, window_bounds = array<i64: 8, 384>}]} {
    %c0_i32 = arith.constant 0 : i32
    %0 = arith.cmpi eq, %arg2, %c0_i32 : i32
    %1 = arith.extui %0 : i1 to i32
    %c0_i32_0 = arith.constant 0 : i32
    %2 = arith.cmpi ne, %1, %c0_i32_0 : i32
    scf.if %2 {
      %cst_9 = arith.constant 0.000000e+00 : f32
      %12 = vector.broadcast %cst_9 : f32 to vector<8x384xf32>
      %c0_10 = arith.constant 0 : index
      %c0_11 = arith.constant 0 : index
      %13 = vector.load %arg7[%c0_10, %c0_11] : memref<8x384xf32, #tpu.memory_space<vmem>>, vector<8x384xf32>
      tpu.vector_store %arg7[%c0_10, %c0_11], %12 {strides = array<i32>} : memref<8x384xf32, #tpu.memory_space<vmem>>, vector<8x384xf32>,
    } else {
    }
    %c0 = arith.constant 0 : index
    %c0_1 = arith.constant 0 : index
    %3 = vector.load %arg7[%c0, %c0_1] : memref<8x384xf32, #tpu.memory_space<vmem>>, vector<8x384xf32>
    %c0_2 = arith.constant 0 : index
    %c0_3 = arith.constant 0 : index
    %4 = vector.load %arg3[%c0_2, %c0_3] : memref<8x384xbf16, #tpu.memory_space<vmem>>, vector<8x384xbf16>
    %c0_4 = arith.constant 0 : index
    %c0_5 = arith.constant 0 : index
    %5 = vector.load %arg4[%c0_4, %c0_5] : memref<384x384xbf16, #tpu.memory_space<vmem>>, vector<384x384xbf16>
    %cst = arith.constant dense<0.000000e+00> : vector<8x384xf32>
    %6 = tpu.matmul %4, %5, %cst {dimension_numbers = #tpu.dot_dimension_numbers<[1], [0], [0], [1], [0, 0, 1, 1], [], []>} : vector<8x384xbf16>, vector<384x384xbf16>, vector<8x384xf32> -> vector<8x384xf32>
    %7 = arith.addf %3, %6 : vector<8x384xf32>
    %c0_6 = arith.constant 0 : index
    %c0_7 = arith.constant 0 : index
    %8 = vector.load %arg7[%c0_6, %c0_7] : memref<8x384xf32, #tpu.memory_space<vmem>>, vector<8x384xf32>
    tpu.vector_store %arg7[%c0_6, %c0_7], %7 {strides = array<i32>} : memref<8x384xf32, #tpu.memory_space<vmem>>, vector<8x384xf32>,
    %c8_i32 = arith.constant 8 : i32
    %9 = arith.cmpi eq, %arg2, %c8_i32 : i32
    %10 = arith.extui %9 : i1 to i32
    %c0_i32_8 = arith.constant 0 : i32
    %11 = arith.cmpi ne, %10, %c0_i32_8 : i32
    scf.if %11 {
      %c0_9 = arith.constant 0 : index
      %c0_10 = arith.constant 0 : index
      %12 = vector.load %arg7[%c0_9, %c0_10] : memref<8x384xf32, #tpu.memory_space<vmem>>, vector<8x384xf32>
      %c0_11 = arith.constant 0 : index
      %c0_12 = arith.constant 0 : index
      %13 = vector.load %arg5[%c0_11, %c0_12] : memref<1x384xf32, #tpu.memory_space<vmem>>, vector<1x384xf32>
      %14 = vector.broadcast %13 : vector<1x384xf32> to vector<8x384xf32>
      %15 = arith.addf %12, %14 : vector<8x384xf32>
      %cst_13 = arith.constant 0.000000e+00 : f32
      %16 = vector.broadcast %cst_13 : f32 to vector<8x384xf32>
      %17 = arith.maximumf %15, %16 : vector<8x384xf32>
      %c0_14 = arith.constant 0 : index
      %c0_15 = arith.constant 0 : index
      %18 = vector.load %arg6[%c0_14, %c0_15] : memref<8x384xf32, #tpu.memory_space<vmem>>, vector<8x384xf32>
      tpu.vector_store %arg6[%c0_14, %c0_15], %17 {strides = array<i32>} : memref<8x384xf32, #tpu.memory_space<vmem>>, vector<8x384xf32>,
    } else {
    }
    return
  }
  func.func @transform_0(%arg0: i32, %arg1: i32, %arg2: i32) -> (i32, i32) {
    %c0_i32 = arith.constant 0 : i32
    return %arg0, %arg2 : i32, i32
  }
  func.func @transform_1(%arg0: i32, %arg1: i32, %arg2: i32) -> (i32, i32) {
    %c0_i32 = arith.constant 0 : i32
    return %arg2, %arg1 : i32, i32
  }
  func.func @transform_2(%arg0: i32, %arg1: i32, %arg2: i32) -> (i32, i32) {
    %c0_i32 = arith.constant 0 : i32
    %c0_i32_0 = arith.constant 0 : i32
    return %c0_i32, %arg1 : i32, i32
  }
  func.func @transform_3(%arg0: i32, %arg1: i32, %arg2: i32) -> (i32, i32) {
    %c0_i32 = arith.constant 0 : i32
    return %arg0, %arg1 : i32, i32
  }
}

module attributes {stable_mosaic.version = 11 : i64} {
  func.func @_matmul_bias_relu_kernel(%arg0: i32, %arg1: i32, %arg2: i32, %arg3: memref<8x384xbf16, #tpu.memory_space<vmem>>, %arg4: memref<384x256xbf16, #tpu.memory_space<vmem>>, %arg5: memref<1x256xf32, #tpu.memory_space<vmem>>, %arg6: memref<8x256xf32, #tpu.memory_space<vmem>>, %arg7: memref<8x256xf32, #tpu.memory_space<vmem>>) attributes {dimension_semantics = [#tpu.dimension_semantics<parallel>, #tpu.dimension_semantics<parallel>, #tpu.dimension_semantics<arbitrary>], iteration_bounds = array<i64: 1, 1, 9>, scalar_prefetch = 0 : i64, scratch_operands = 1 : i64, tpu.core_type = #tpu.core_type<tc>, window_params = [{transform_indices = @transform_0, window_bounds = array<i64: 8, 384>}, {transform_indices = @transform_1, window_bounds = array<i64: 384, 256>}, {transform_indices = @transform_2, window_bounds = array<i64: 1, 256>}, {transform_indices = @transform_3, window_bounds = array<i64: 8, 256>}]} {
    %c0_i32 = arith.constant 0 : i32
    %0 = arith.cmpi eq, %arg2, %c0_i32 : i32
    %1 = arith.extui %0 : i1 to i32
    %c0_i32_0 = arith.constant 0 : i32
    %2 = arith.cmpi ne, %1, %c0_i32_0 : i32
    scf.if %2 {
      %cst_9 = arith.constant 0.000000e+00 : f32
      %12 = vector.broadcast %cst_9 : f32 to vector<8x256xf32>
      %c0_10 = arith.constant 0 : index
      %c0_11 = arith.constant 0 : index
      %13 = vector.load %arg7[%c0_10, %c0_11] : memref<8x256xf32, #tpu.memory_space<vmem>>, vector<8x256xf32>
      tpu.vector_store %arg7[%c0_10, %c0_11], %12 {strides = array<i32>} : memref<8x256xf32, #tpu.memory_space<vmem>>, vector<8x256xf32>,
    } else {
    }
    %c0 = arith.constant 0 : index
    %c0_1 = arith.constant 0 : index
    %3 = vector.load %arg7[%c0, %c0_1] : memref<8x256xf32, #tpu.memory_space<vmem>>, vector<8x256xf32>
    %c0_2 = arith.constant 0 : index
    %c0_3 = arith.constant 0 : index
    %4 = vector.load %arg3[%c0_2, %c0_3] : memref<8x384xbf16, #tpu.memory_space<vmem>>, vector<8x384xbf16>
    %c0_4 = arith.constant 0 : index
    %c0_5 = arith.constant 0 : index
    %5 = vector.load %arg4[%c0_4, %c0_5] : memref<384x256xbf16, #tpu.memory_space<vmem>>, vector<384x256xbf16>
    %cst = arith.constant dense<0.000000e+00> : vector<8x256xf32>
    %6 = tpu.matmul %4, %5, %cst {dimension_numbers = #tpu.dot_dimension_numbers<[1], [0], [0], [1], [0, 0, 1, 1], [], []>} : vector<8x384xbf16>, vector<384x256xbf16>, vector<8x256xf32> -> vector<8x256xf32>
    %7 = arith.addf %3, %6 : vector<8x256xf32>
    %c0_6 = arith.constant 0 : index
    %c0_7 = arith.constant 0 : index
    %8 = vector.load %arg7[%c0_6, %c0_7] : memref<8x256xf32, #tpu.memory_space<vmem>>, vector<8x256xf32>
    tpu.vector_store %arg7[%c0_6, %c0_7], %7 {strides = array<i32>} : memref<8x256xf32, #tpu.memory_space<vmem>>, vector<8x256xf32>,
    %c8_i32 = arith.constant 8 : i32
    %9 = arith.cmpi eq, %arg2, %c8_i32 : i32
    %10 = arith.extui %9 : i1 to i32
    %c0_i32_8 = arith.constant 0 : i32
    %11 = arith.cmpi ne, %10, %c0_i32_8 : i32
    scf.if %11 {
      %c0_9 = arith.constant 0 : index
      %c0_10 = arith.constant 0 : index
      %12 = vector.load %arg7[%c0_9, %c0_10] : memref<8x256xf32, #tpu.memory_space<vmem>>, vector<8x256xf32>
      %c0_11 = arith.constant 0 : index
      %c0_12 = arith.constant 0 : index
      %13 = vector.load %arg5[%c0_11, %c0_12] : memref<1x256xf32, #tpu.memory_space<vmem>>, vector<1x256xf32>
      %14 = vector.broadcast %13 : vector<1x256xf32> to vector<8x256xf32>
      %15 = arith.addf %12, %14 : vector<8x256xf32>
      %cst_13 = arith.constant 0.000000e+00 : f32
      %16 = vector.broadcast %cst_13 : f32 to vector<8x256xf32>
      %17 = arith.maximumf %15, %16 : vector<8x256xf32>
      %c0_14 = arith.constant 0 : index
      %c0_15 = arith.constant 0 : index
      %18 = vector.load %arg6[%c0_14, %c0_15] : memref<8x256xf32, #tpu.memory_space<vmem>>, vector<8x256xf32>
      tpu.vector_store %arg6[%c0_14, %c0_15], %17 {strides = array<i32>} : memref<8x256xf32, #tpu.memory_space<vmem>>, vector<8x256xf32>,
    } else {
    }
    return
  }
  func.func @transform_0(%arg0: i32, %arg1: i32, %arg2: i32) -> (i32, i32) {
    %c0_i32 = arith.constant 0 : i32
    return %arg0, %arg2 : i32, i32
  }
  func.func @transform_1(%arg0: i32, %arg1: i32, %arg2: i32) -> (i32, i32) {
    %c0_i32 = arith.constant 0 : i32
    return %arg2, %arg1 : i32, i32
  }
  func.func @transform_2(%arg0: i32, %arg1: i32, %arg2: i32) -> (i32, i32) {
    %c0_i32 = arith.constant 0 : i32
    %c0_i32_0 = arith.constant 0 : i32
    return %c0_i32, %arg1 : i32, i32
  }
  func.func @transform_3(%arg0: i32, %arg1: i32, %arg2: i32) -> (i32, i32) {
    %c0_i32 = arith.constant 0 : i32
    return %arg0, %arg1 : i32, i32
  }
}

module attributes {stable_mosaic.version = 11 : i64} {
  func.func @_maxpool_kernel(%arg0: i32, %arg1: memref<2x1x2x2x128xf32, #tpu.memory_space<vmem>>, %arg2: memref<1x1x2x128xf32, #tpu.memory_space<vmem>>) attributes {dimension_semantics = [#tpu.dimension_semantics<parallel>], iteration_bounds = array<i64: 2>, scalar_prefetch = 0 : i64, scratch_operands = 0 : i64, tpu.core_type = #tpu.core_type<tc>, window_params = [{transform_indices = @transform_0, window_bounds = array<i64: 2, 1, 2, 2, 128>}, {transform_indices = @transform_1, window_bounds = array<i64: 1, 1, 2, 128>}]} {
    %c0 = arith.constant 0 : index
    %c0_0 = arith.constant 0 : index
    %c0_1 = arith.constant 0 : index
    %c0_2 = arith.constant 0 : index
    %c0_3 = arith.constant 0 : index
    %0 = vector.load %arg1[%c0, %c0_0, %c0_1, %c0_2, %c0_3] : memref<2x1x2x2x128xf32, #tpu.memory_space<vmem>>, vector<1x1x1x2x128xf32>
    %1 = vector.shape_cast %0 : vector<1x1x1x2x128xf32> to vector<1x2x128xf32>
    %c0_4 = arith.constant 0 : index
    %c0_5 = arith.constant 0 : index
    %c1 = arith.constant 1 : index
    %c0_6 = arith.constant 0 : index
    %c0_7 = arith.constant 0 : index
    %2 = vector.load %arg1[%c0_4, %c0_5, %c1, %c0_6, %c0_7] : memref<2x1x2x2x128xf32, #tpu.memory_space<vmem>>, vector<1x1x1x2x128xf32>
    %3 = vector.shape_cast %2 : vector<1x1x1x2x128xf32> to vector<1x2x128xf32>
    %4 = arith.maximumf %1, %3 : vector<1x2x128xf32>
    %c1_8 = arith.constant 1 : index
    %c0_9 = arith.constant 0 : index
    %c0_10 = arith.constant 0 : index
    %c0_11 = arith.constant 0 : index
    %c0_12 = arith.constant 0 : index
    %5 = vector.load %arg1[%c1_8, %c0_9, %c0_10, %c0_11, %c0_12] : memref<2x1x2x2x128xf32, #tpu.memory_space<vmem>>, vector<1x1x1x2x128xf32>
    %6 = vector.shape_cast %5 : vector<1x1x1x2x128xf32> to vector<1x2x128xf32>
    %7 = arith.maximumf %4, %6 : vector<1x2x128xf32>
    %c1_13 = arith.constant 1 : index
    %c0_14 = arith.constant 0 : index
    %c1_15 = arith.constant 1 : index
    %c0_16 = arith.constant 0 : index
    %c0_17 = arith.constant 0 : index
    %8 = vector.load %arg1[%c1_13, %c0_14, %c1_15, %c0_16, %c0_17] : memref<2x1x2x2x128xf32, #tpu.memory_space<vmem>>, vector<1x1x1x2x128xf32>
    %9 = vector.shape_cast %8 : vector<1x1x1x2x128xf32> to vector<1x2x128xf32>
    %10 = arith.maximumf %7, %9 : vector<1x2x128xf32>
    %c0_18 = arith.constant 0 : index
    %c0_19 = arith.constant 0 : index
    %c0_20 = arith.constant 0 : index
    %c0_21 = arith.constant 0 : index
    %11 = vector.load %arg2[%c0_18, %c0_19, %c0_20, %c0_21] : memref<1x1x2x128xf32, #tpu.memory_space<vmem>>, vector<1x1x2x128xf32>
    %12 = vector.shape_cast %11 : vector<1x1x2x128xf32> to vector<1x2x128xf32>
    %13 = vector.shape_cast %10 : vector<1x2x128xf32> to vector<1x1x2x128xf32>
    tpu.vector_store %arg2[%c0_18, %c0_19, %c0_20, %c0_21], %13 {strides = array<i32>} : memref<1x1x2x128xf32, #tpu.memory_space<vmem>>, vector<1x1x2x128xf32>,
    return
  }
  func.func @transform_0(%arg0: i32) -> (i32, i32, i32, i32, i32) {
    %c0_i32 = arith.constant 0 : i32
    %c0_i32_0 = arith.constant 0 : i32
    %c0_i32_1 = arith.constant 0 : i32
    %c0_i32_2 = arith.constant 0 : i32
    %c0_i32_3 = arith.constant 0 : i32
    return %c0_i32, %c0_i32_0, %c0_i32_1, %c0_i32_2, %arg0 : i32, i32, i32, i32, i32
  }
  func.func @transform_1(%arg0: i32) -> (i32, i32, i32, i32) {
    %c0_i32 = arith.constant 0 : i32
    %c0_i32_0 = arith.constant 0 : i32
    %c0_i32_1 = arith.constant 0 : i32
    %c0_i32_2 = arith.constant 0 : i32
    return %c0_i32, %c0_i32_0, %c0_i32_1, %arg0 : i32, i32, i32, i32
  }
}

</mosaic_0001>

<llo_original>
// kernel: encoder_forward.8
$region0: #{encoder_forward.8}
  #allocation0 [shape = 'u32[]', space=smem, size = 0x4, offset = 0x4, fixed_abs, tag = 'smem constant byte address 0x4 - core index']
  #allocation1 [shape = 'u32[144,128]{1,0:T(1,128)}', space=vmem, size = 0x12000, scoped, tag = 'internal scratch']
  #allocation2 [shape = 'f32[392,128]{1,0:T(8,128)}', space=vmem, size = 0x31000, scoped, tag = 'scratch operand']
  %s0 = inlined_call_operand.vmem [shape: bf16[392,384], index: 0, kind: input, shape index: {}]
  %s1 = inlined_call_operand.vmem [shape: bf16[384,128], index: 1, kind: input, shape index: {}]
  %s2 = inlined_call_operand.vmem [shape: f32[1,128], index: 2, kind: input, shape index: {}]
  %s3 = inlined_call_operand.vmem [shape: f32[392,128], index: 3, kind: output, shape index: {}]
  %s4 = sld [smem:[#allocation0]]
  $region30: #{encoder_forward.8} parent=0
    _
  %s6 = ssub.s32 1, %s4
  %s7 = scalar_select 0, %s6, %s4
  // Predicated region
  $region2: #{encoder_forward.8} parent=0 // pred_check
    _
  $region3: #{encoder_forward.8} parent=0 // pred_check_branch
    %9 = sbr.rel (0) target = $region5
  $region4: #{encoder_forward.8} parent=0 // pred_region
    _
  $region5: #{encoder_forward.8} parent=0 // pred_fallthru
    _
  // Predicated region
  $region6: #{encoder_forward.8} parent=0 // pred_check
    _
  $region7: #{encoder_forward.8} parent=0 // pred_check_branch
    %11 = sbr.rel (0) target = $region9
  $region8: #{encoder_forward.8} parent=0 // pred_region
    _
  $region9: #{encoder_forward.8} parent=0 // pred_fallthru
    _
  // Predicated region
  $region10: #{encoder_forward.8} parent=0 // pred_check
    _
  $region11: #{encoder_forward.8} parent=0 // pred_check_branch
    %13 = sbr.rel (0) target = $region13
  $region12: #{encoder_forward.8} parent=0 // pred_region
    _
  $region13: #{encoder_forward.8} parent=0 // pred_fallthru
    _
  %p15 = scmp.eq.s32.totalorder 0, 0
  // Predicated region
  $region14: #{encoder_forward.8} parent=0 // pred_check
    %p16 = pneg %p15
  $region15: #{encoder_forward.8} parent=0 // pred_check_branch
    %18 = sbr.rel (%p16) target = $region17
  $region16: #{encoder_forward.8} parent=0 // pred_region
    %19 = vst [vmem:[#allocation2] sm:$0xff] 0.0
    %20 = vst [vmem:[#allocation2 + $0x8] sm:$0xff] 0.0
    %21 = vst [vmem:[#allocation2 + $0x10] sm:$0xff] 0.0
    %22 = vst [vmem:[#allocation2 + $0x18] sm:$0xff] 0.0
    %23 = vst [vmem:[#allocation2 + $0x20] sm:$0xff] 0.0
    %24 = vst [vmem:[#allocation2 + $0x28] sm:$0xff] 0.0
    %25 = vst [vmem:[#allocation2 + $0x30] sm:$0xff] 0.0
    %26 = vst [vmem:[#allocation2 + $0x38] sm:$0xff] 0.0
    %27 = vst [vmem:[#allocation2 + $0x40] sm:$0xff] 0.0
    %28 = vst [vmem:[#allocation2 + $0x48] sm:$0xff] 0.0
    %29 = vst [vmem:[#allocation2 + $0x50] sm:$0xff] 0.0
    %30 = vst [vmem:[#allocation2 + $0x58] sm:$0xff] 0.0
    %31 = vst [vmem:[#allocation2 + $0x60] sm:$0xff] 0.0
    %32 = vst [vmem:[#allocation2 + $0x68] sm:$0xff] 0.0
    %33 = vst [vmem:[#allocation2 + $0x70] sm:$0xff] 0.0
    %34 = vst [vmem:[#allocation2 + $0x78] sm:$0xff] 0.0
    %35 = vst [vmem:[#allocation2 + $0x80] sm:$0xff] 0.0
    %36 = vst [vmem:[#allocation2 + $0x88] sm:$0xff] 0.0
    %37 = vst [vmem:[#allocation2 + $0x90] sm:$0xff] 0.0
    %38 = vst [vmem:[#allocation2 + $0x98] sm:$0xff] 0.0
    %39 = vst [vmem:[#allocation2 + $0xa0] sm:$0xff] 0.0
    %40 = vst [vmem:[#allocation2 + $0xa8] sm:$0xff] 0.0
    %41 = vst [vmem:[#allocation2 + $0xb0] sm:$0xff] 0.0
    %42 = vst [vmem:[#allocation2 + $0xb8] sm:$0xff] 0.0
    %43 = vst [vmem:[#allocation2 + $0xc0] sm:$0xff] 0.0
    %44 = vst [vmem:[#allocation2 + $0xc8] sm:$0xff] 0.0
    %45 = vst [vmem:[#allocation2 + $0xd0] sm:$0xff] 0.0
    %46 = vst [vmem:[#allocation2 + $0xd8] sm:$0xff] 0.0
    %47 = vst [vmem:[#allocation2 + $0xe0] sm:$0xff] 0.0
    %48 = vst [vmem:[#allocation2 + $0xe8] sm:$0xff] 0.0
    %49 = vst [vmem:[#allocation2 + $0xf0] sm:$0xff] 0.0
    %50 = vst [vmem:[#allocation2 + $0xf8] sm:$0xff] 0.0
    %51 = vst [vmem:[#allocation2 + $0x100] sm:$0xff] 0.0
    %52 = vst [vmem:[#allocation2 + $0x108] sm:$0xff] 0.0
    %53 = vst [vmem:[#allocation2 + $0x110] sm:$0xff] 0.0
    %54 = vst [vmem:[#allocation2 + $0x118] sm:$0xff] 0.0
    %55 = vst [vmem:[#allocation2 + $0x120] sm:$0xff] 0.0
    %56 = vst [vmem:[#allocation2 + $0x128] sm:$0xff] 0.0
    %57 = vst [vmem:[#allocation2 + $0x130] sm:$0xff] 0.0
    %58 = vst [vmem:[#allocation2 + $0x138] sm:$0xff] 0.0
    %59 = vst [vmem:[#allocation2 + $0x140] sm:$0xff] 0.0
    %60 = vst [vmem:[#allocation2 + $0x148] sm:$0xff] 0.0
    %61 = vst [vmem:[#allocation2 + $0x150] sm:$0xff] 0.0
    %62 = vst [vmem:[#allocation2 + $0x158] sm:$0xff] 0.0
    %63 = vst [vmem:[#allocation2 + $0x160] sm:$0xff] 0.0
    %64 = vst [vmem:[#allocation2 + $0x168] sm:$0xff] 0.0
    %65 = vst [vmem:[#allocation2 + $0x170] sm:$0xff] 0.0
    %66 = vst [vmem:[#allocation2 + $0x178] sm:$0xff] 0.0
    %67 = vst [vmem:[#allocation2 + $0x180] sm:$0xff] 0.0
  $region17: #{encoder_forward.8} parent=0 // pred_fallthru
    _
  %v68 = vld [vmem:[#allocation2] sm:$0xff]
  %v69 = vld [vmem:[#allocation2 + $0x8] sm:$0xff]
  %v70 = vld [vmem:[#allocation2 + $0x10] sm:$0xff]
  %v71 = vld [vmem:[#allocation2 + $0x18] sm:$0xff]
  %v72 = vld [vmem:[#allocation2 + $0x20] sm:$0xff]
  %v73 = vld [vmem:[#allocation2 + $0x28] sm:$0xff]
  %v74 = vld [vmem:[#allocation2 + $0x30] sm:$0xff]
  %v75 = vld [vmem:[#allocation2 + $0x38] sm:$0xff]
  %v76 = vld [vmem:[#allocation2 + $0x40] sm:$0xff]
  %v77 = vld [vmem:[#allocation2 + $0x48] sm:$0xff]
  %v78 = vld [vmem:[#allocation2 + $0x50] sm:$0xff]
  %v79 = vld [vmem:[#allocation2 + $0x58] sm:$0xff]
  %v80 = vld [vmem:[#allocation2 + $0x60] sm:$0xff]
  %v81 = vld [vmem:[#allocation2 + $0x68] sm:$0xff]
  %v82 = vld [vmem:[#allocation2 + $0x70] sm:$0xff]
  %v83 = vld [vmem:[#allocation2 + $0x78] sm:$0xff]
  %v84 = vld [vmem:[#allocation2 + $0x80] sm:$0xff]
  %v85 = vld [vmem:[#allocation2 + $0x88] sm:$0xff]
  %v86 = vld [vmem:[#allocation2 + $0x90] sm:$0xff]
  %v87 = vld [vmem:[#allocation2 + $0x98] sm:$0xff]
  %v88 = vld [vmem:[#allocation2 + $0xa0] sm:$0xff]
  %v89 = vld [vmem:[#allocation2 + $0xa8] sm:$0xff]
  %v90 = vld [vmem:[#allocation2 + $0xb0] sm:$0xff]
  %v91 = vld [vmem:[#allocation2 + $0xb8] sm:$0xff]
  %v92 = vld [vmem:[#allocation2 + $0xc0] sm:$0xff]
  %v93 = vld [vmem:[#allocation2 + $0xc8] sm:$0xff]
  %v94 = vld [vmem:[#allocation2 + $0xd0] sm:$0xff]
  %v95 = vld [vmem:[#allocation2 + $0xd8] sm:$0xff]
  %v96 = vld [vmem:[#allocation2 + $0xe0] sm:$0xff]
  %v97 = vld [vmem:[#allocation2 + $0xe8] sm:$0xff]
  %v98 = vld [vmem:[#allocation2 + $0xf0] sm:$0xff]
  %v99 = vld [vmem:[#allocation2 + $0xf8] sm:$0xff]
  %v100 = vld [vmem:[#allocation2 + $0x100] sm:$0xff]
  %v101 = vld [vmem:[#allocation2 + $0x108] sm:$0xff]
  %v102 = vld [vmem:[#allocation2 + $0x110] sm:$0xff]
  %v103 = vld [vmem:[#allocation2 + $0x118] sm:$0xff]
  %v104 = vld [vmem:[#allocation2 + $0x120] sm:$0xff]
  %v105 = vld [vmem:[#allocation2 + $0x128] sm:$0xff]
  %v106 = vld [vmem:[#allocation2 + $0x130] sm:$0xff]
  %v107 = vld [vmem:[#allocation2 + $0x138] sm:$0xff]
  %v108 = vld [vmem:[#allocation2 + $0x140] sm:$0xff]
  %v109 = vld [vmem:[#allocation2 + $0x148] sm:$0xff]
  %v110 = vld [vmem:[#allocation2 + $0x150] sm:$0xff]
  %v111 = vld [vmem:[#allocation2 + $0x158] sm:$0xff]
  %v112 = vld [vmem:[#allocation2 + $0x160] sm:$0xff]
  %v113 = vld [vmem:[#allocation2 + $0x168] sm:$0xff]
  %v114 = vld [vmem:[#allocation2 + $0x170] sm:$0xff]
  %v115 = vld [vmem:[#allocation2 + $0x178] sm:$0xff]
  %v116 = vld [vmem:[#allocation2 + $0x180] sm:$0xff]
  %v117 = vld [vmem:[%s0] sm:$0xff]
  %v118 = vld [vmem:[%s0 + $0x8] sm:$0xf]
  %v119 = vld [vmem:[%s0 + $0xc] sm:$0xff]
  %v120 = vld [vmem:[%s0 + $0x14] sm:$0xf]
  %v121 = vld [vmem:[%s0 + $0x18] sm:$0xff]
  %v122 = vld [vmem:[%s0 + $0x20] sm:$0xf]
  %v123 = vld [vmem:[%s0 + $0x24] sm:$0xff]
  %v124 = vld [vmem:[%s0 + $0x2c] sm:$0xf]
  %v125 = vld [vmem:[%s0 + $0x30] sm:$0xff]
  %v126 = vld [vmem:[%s0 + $0x38] sm:$0xf]
  %v127 = vld [vmem:[%s0 + $0x3c] sm:$0xff]
  %v128 = vld [vmem:[%s0 + $0x44] sm:$0xf]
  %v129 = vld [vmem:[%s0 + $0x48] sm:$0xff]
  %v130 = vld [vmem:[%s0 + $0x50] sm:$0xf]
  %v131 = vld [vmem:[%s0 + $0x54] sm:$0xff]
  %v132 = vld [vmem:[%s0 + $0x5c] sm:$0xf]
  %v133 = vld [vmem:[%s0 + $0x60] sm:$0xff]
  %v134 = vld [vmem:[%s0 + $0x68] sm:$0xf]
  %v135 = vld [vmem:[%s0 + $0x6c] sm:$0xff]
  %v136 = vld [vmem:[%s0 + $0x74] sm:$0xf]
  %v137 = vld [vmem:[%s0 + $0x78] sm:$0xff]
  %v138 = vld [vmem:[%s0 + $0x80] sm:$0xf]
  %v139 = vld [vmem:[%s0 + $0x84] sm:$0xff]
  %v140 = vld [vmem:[%s0 + $0x8c] sm:$0xf]
  %v141 = vld [vmem:[%s0 + $0x90] sm:$0xff]
  %v142 = vld [vmem:[%s0 + $0x98] sm:$0xf]
  %v143 = vld [vmem:[%s0 + $0x9c] sm:$0xff]
  %v144 = vld [vmem:[%s0 + $0xa4] sm:$0xf]
  %v145 = vld [vmem:[%s0 + $0xa8] sm:$0xff]
  %v146 = vld [vmem:[%s0 + $0xb0] sm:$0xf]
  %v147 = vld [vmem:[%s0 + $0xb4] sm:$0xff]
  %v148 = vld [vmem:[%s0 + $0xbc] sm:$0xf]
  %v149 = vld [vmem:[%s0 + $0xc0] sm:$0xff]
  %v150 = vld [vmem:[%s0 + $0xc8] sm:$0xf]
  %v151 = vld [vmem:[%s0 + $0xcc] sm:$0xff]
  %v152 = vld [vmem:[%s0 + $0xd4] sm:$0xf]
  %v153 = vld [vmem:[%s0 + $0xd8] sm:$0xff]
  %v154 = vld [vmem:[%s0 + $0xe0] sm:$0xf]
  %v155 = vld [vmem:[%s0 + $0xe4] sm:$0xff]
  %v156 = vld [vmem:[%s0 + $0xec] sm:$0xf]
  %v157 = vld [vmem:[%s0 + $0xf0] sm:$0xff]
  %v158 = vld [vmem:[%s0 + $0xf8] sm:$0xf]
  %v159 = vld [vmem:[%s0 + $0xfc] sm:$0xff]
  %v160 = vld [vmem:[%s0 + $0x104] sm:$0xf]
  %v161 = vld [vmem:[%s0 + $0x108] sm:$0xff]
  %v162 = vld [vmem:[%s0 + $0x110] sm:$0xf]
  %v163 = vld [vmem:[%s0 + $0x114] sm:$0xff]
  %v164 = vld [vmem:[%s0 + $0x11c] sm:$0xf]
  %v165 = vld [vmem:[%s0 + $0x120] sm:$0xff]
  %v166 = vld [vmem:[%s0 + $0x128] sm:$0xf]
  %v167 = vld [vmem:[%s0 + $0x12c] sm:$0xff]
  %v168 = vld [vmem:[%s0 + $0x134] sm:$0xf]
  %v169 = vld [vmem:[%s0 + $0x138] sm:$0xff]
  %v170 = vld [vmem:[%s0 + $0x140] sm:$0xf]
  %v171 = vld [vmem:[%s0 + $0x144] sm:$0xff]
  %v172 = vld [vmem:[%s0 + $0x14c] sm:$0xf]
  %v173 = vld [vmem:[%s0 + $0x150] sm:$0xff]
  %v174 = vld [vmem:[%s0 + $0x158] sm:$0xf]
  %v175 = vld [vmem:[%s0 + $0x15c] sm:$0xff]
  %v176 = vld [vmem:[%s0 + $0x164] sm:$0xf]
  %v177 = vld [vmem:[%s0 + $0x168] sm:$0xff]
  %v178 = vld [vmem:[%s0 + $0x170] sm:$0xf]
  %v179 = vld [vmem:[%s0 + $0x174] sm:$0xff]
  %v180 = vld [vmem:[%s0 + $0x17c] sm:$0xf]
  %v181 = vld [vmem:[%s0 + $0x180] sm:$0xff]
  %v182 = vld [vmem:[%s0 + $0x188] sm:$0xf]
  %v183 = vld [vmem:[%s0 + $0x18c] sm:$0xff]
  %v184 = vld [vmem:[%s0 + $0x194] sm:$0xf]
  %v185 = vld [vmem:[%s0 + $0x198] sm:$0xff]
  %v186 = vld [vmem:[%s0 + $0x1a0] sm:$0xf]
  %v187 = vld [vmem:[%s0 + $0x1a4] sm:$0xff]
  %v188 = vld [vmem:[%s0 + $0x1ac] sm:$0xf]
  %v189 = vld [vmem:[%s0 + $0x1b0] sm:$0xff]
  %v190 = vld [vmem:[%s0 + $0x1b8] sm:$0xf]
  %v191 = vld [vmem:[%s0 + $0x1bc] sm:$0xff]
  %v192 = vld [vmem:[%s0 + $0x1c4] sm:$0xf]
  %v193 = vld [vmem:[%s0 + $0x1c8] sm:$0xff]
  %v194 = vld [vmem:[%s0 + $0x1d0] sm:$0xf]
  %v195 = vld [vmem:[%s0 + $0x1d4] sm:$0xff]
  %v196 = vld [vmem:[%s0 + $0x1dc] sm:$0xf]
  %v197 = vld [vmem:[%s0 + $0x1e0] sm:$0xff]
  %v198 = vld [vmem:[%s0 + $0x1e8] sm:$0xf]
  %v199 = vld [vmem:[%s0 + $0x1ec] sm:$0xff]
  %v200 = vld [vmem:[%s0 + $0x1f4] sm:$0xf]
  %v201 = vld [vmem:[%s0 + $0x1f8] sm:$0xff]
  %v202 = vld [vmem:[%s0 + $0x200] sm:$0xf]
  %v203 = vld [vmem:[%s0 + $0x204] sm:$0xff]
  %v204 = vld [vmem:[%s0 + $0x20c] sm:$0xf]
  %v205 = vld [vmem:[%s0 + $0x210] sm:$0xff]
  %v206 = vld [vmem:[%s0 + $0x218] sm:$0xf]
  %v207 = vld [vmem:[%s0 + $0x21c] sm:$0xff]
  %v208 = vld [vmem:[%s0 + $0x224] sm:$0xf]
  %v209 = vld [vmem:[%s0 + $0x228] sm:$0xff]
  %v210 = vld [vmem:[%s0 + $0x230] sm:$0xf]
  %v211 = vld [vmem:[%s0 + $0x234] sm:$0xff]
  %v212 = vld [vmem:[%s0 + $0x23c] sm:$0xf]
  %v213 = vld [vmem:[%s0 + $0x240] sm:$0xff]
  %v214 = vld [vmem:[%s0 + $0x248] sm:$0xf]
  %v215 = vld [vmem:[%s1] sm:$0xf]
  %v216 = vld [vmem:[%s1 + $0x4] sm:$0xf]
  %v217 = vld [vmem:[%s1 + $0x8] sm:$0xf]
  %v218 = vld [vmem:[%s1 + $0xc] sm:$0xf]
  %v219 = vld [vmem:[%s1 + $0x10] sm:$0xf]
  %v220 = vld [vmem:[%s1 + $0x14] sm:$0xf]
  %v221 = vld [vmem:[%s1 + $0x18] sm:$0xf]
  %v222 = vld [vmem:[%s1 + $0x1c] sm:$0xf]
  %v223 = vld [vmem:[%s1 + $0x20] sm:$0xf]
  %v224 = vld [vmem:[%s1 + $0x24] sm:$0xf]
  %v225 = vld [vmem:[%s1 + $0x28] sm:$0xf]
  %v226 = vld [vmem:[%s1 + $0x2c] sm:$0xf]
  %v227 = vld [vmem:[%s1 + $0x30] sm:$0xf]
  %v228 = vld [vmem:[%s1 + $0x34] sm:$0xf]
  %v229 = vld [vmem:[%s1 + $0x38] sm:$0xf]
  %v230 = vld [vmem:[%s1 + $0x3c] sm:$0xf]
  %v231 = vld [vmem:[%s1 + $0x40] sm:$0xf]
  %v232 = vld [vmem:[%s1 + $0x44] sm:$0xf]
  %v233 = vld [vmem:[%s1 + $0x48] sm:$0xf]
  %v234 = vld [vmem:[%s1 + $0x4c] sm:$0xf]
  %v235 = vld [vmem:[%s1 + $0x50] sm:$0xf]
  %v236 = vld [vmem:[%s1 + $0x54] sm:$0xf]
  %v237 = vld [vmem:[%s1 + $0x58] sm:$0xf]
  %v238 = vld [vmem:[%s1 + $0x5c] sm:$0xf]
  %v239 = vld [vmem:[%s1 + $0x60] sm:$0xf]
  %v240 = vld [vmem:[%s1 + $0x64] sm:$0xf]
  %v241 = vld [vmem:[%s1 + $0x68] sm:$0xf]
  %v242 = vld [vmem:[%s1 + $0x6c] sm:$0xf]
  %v243 = vld [vmem:[%s1 + $0x70] sm:$0xf]
  %v244 = vld [vmem:[%s1 + $0x74] sm:$0xf]
  %v245 = vld [vmem:[%s1 + $0x78] sm:$0xf]
  %v246 = vld [vmem:[%s1 + $0x7c] sm:$0xf]
  %v247 = vld [vmem:[%s1 + $0x80] sm:$0xf]
  %v248 = vld [vmem:[%s1 + $0x84] sm:$0xf]
  %v249 = vld [vmem:[%s1 + $0x88] sm:$0xf]
  %v250 = vld [vmem:[%s1 + $0x8c] sm:$0xf]
  %v251 = vld [vmem:[%s1 + $0x90] sm:$0xf]
  %v252 = vld [vmem:[%s1 + $0x94] sm:$0xf]
  %v253 = vld [vmem:[%s1 + $0x98] sm:$0xf]
  %v254 = vld [vmem:[%s1 + $0x9c] sm:$0xf]
  %v255 = vld [vmem:[%s1 + $0xa0] sm:$0xf]
  %v256 = vld [vmem:[%s1 + $0xa4] sm:$0xf]
  %v257 = vld [vmem:[%s1 + $0xa8] sm:$0xf]
  %v258 = vld [vmem:[%s1 + $0xac] sm:$0xf]
  %v259 = vld [vmem:[%s1 + $0xb0] sm:$0xf]
  %v260 = vld [vmem:[%s1 + $0xb4] sm:$0xf]
  %v261 = vld [vmem:[%s1 + $0xb8] sm:$0xf]
  %v262 = vld [vmem:[%s1 + $0xbc] sm:$0xf]
  %v361 = vunpack.c.l.b16 %v117
  %v362 = vunpack.c.h.b16 %v117
  %v363 = vunpack.c.l.b16 %v118
  %v364 = vunpack.c.l.b16 %v119
  %v365 = vunpack.c.h.b16 %v119
  %v366 = vunpack.c.l.b16 %v120
  %v367 = vunpack.c.l.b16 %v121
  %v368 = vunpack.c.h.b16 %v121
  %v369 = vunpack.c.l.b16 %v122
  %v370 = vunpack.c.l.b16 %v123
  %v371 = vunpack.c.h.b16 %v123
  %v372 = vunpack.c.l.b16 %v124
  %v373 = vunpack.c.l.b16 %v125
  %v374 = vunpack.c.h.b16 %v125
  %v375 = vunpack.c.l.b16 %v126
  %v376 = vunpack.c.l.b16 %v127
  %v377 = vunpack.c.h.b16 %v127
  %v378 = vunpack.c.l.b16 %v128
  %v379 = vunpack.c.l.b16 %v129
  %v380 = vunpack.c.h.b16 %v129
  %v381 = vunpack.c.l.b16 %v130
  %v382 = vunpack.c.l.b16 %v131
  %v383 = vunpack.c.h.b16 %v131
  %v384 = vunpack.c.l.b16 %v132
  %v385 = vunpack.c.l.b16 %v133
  %v386 = vunpack.c.h.b16 %v133
  %v387 = vunpack.c.l.b16 %v134
  %v388 = vunpack.c.l.b16 %v135
  %v389 = vunpack.c.h.b16 %v135
  %v390 = vunpack.c.l.b16 %v136
  %v391 = vunpack.c.l.b16 %v137
  %v392 = vunpack.c.h.b16 %v137
  %v393 = vunpack.c.l.b16 %v138
  %v394 = vunpack.c.l.b16 %v139
  %v395 = vunpack.c.h.b16 %v139
  %v396 = vunpack.c.l.b16 %v140
  %v397 = vunpack.c.l.b16 %v141
  %v398 = vunpack.c.h.b16 %v141
  %v399 = vunpack.c.l.b16 %v142
  %v400 = vunpack.c.l.b16 %v143
  %v401 = vunpack.c.h.b16 %v143
  %v402 = vunpack.c.l.b16 %v144
  %v403 = vunpack.c.l.b16 %v145
  %v404 = vunpack.c.h.b16 %v145
  %v405 = vunpack.c.l.b16 %v146
  %v406 = vunpack.c.l.b16 %v147
  %v407 = vunpack.c.h.b16 %v147
  %v408 = vunpack.c.l.b16 %v148
  %v409 = vunpack.c.l.b16 %v149
  %v410 = vunpack.c.h.b16 %v149
  %v411 = vunpack.c.l.b16 %v150
  %v412 = vunpack.c.l.b16 %v151
  %v413 = vunpack.c.h.b16 %v151
  %v414 = vunpack.c.l.b16 %v152
  %v415 = vunpack.c.l.b16 %v153
  %v416 = vunpack.c.h.b16 %v153
  %v417 = vunpack.c.l.b16 %v154
  %v418 = vunpack.c.l.b16 %v155
  %v419 = vunpack.c.h.b16 %v155
  %v420 = vunpack.c.l.b16 %v156
  %v421 = vunpack.c.l.b16 %v157
  %v422 = vunpack.c.h.b16 %v157
  %v423 = vunpack.c.l.b16 %v158
  %v424 = vunpack.c.l.b16 %v159
  %v425 = vunpack.c.h.b16 %v159
  %v426 = vunpack.c.l.b16 %v160
  %v427 = vunpack.c.l.b16 %v161
  %v428 = vunpack.c.h.b16 %v161
  %v429 = vunpack.c.l.b16 %v162
  %v430 = vunpack.c.l.b16 %v163
  %v431 = vunpack.c.h.b16 %v163
  %v432 = vunpack.c.l.b16 %v164
  %v433 = vunpack.c.l.b16 %v165
  %v434 = vunpack.c.h.b16 %v165
  %v435 = vunpack.c.l.b16 %v166
  %v436 = vunpack.c.l.b16 %v167
  %v437 = vunpack.c.h.b16 %v167
  %v438 = vunpack.c.l.b16 %v168
  %v439 = vunpack.c.l.b16 %v169
  %v440 = vunpack.c.h.b16 %v169
  %v441 = vunpack.c.l.b16 %v170
  %v442 = vunpack.c.l.b16 %v171
  %v443 = vunpack.c.h.b16 %v171
  %v444 = vunpack.c.l.b16 %v172
  %v445 = vunpack.c.l.b16 %v173
  %v446 = vunpack.c.h.b16 %v173
  %v447 = vunpack.c.l.b16 %v174
  %v448 = vunpack.c.l.b16 %v175
  %v449 = vunpack.c.h.b16 %v175
  %v450 = vunpack.c.l.b16 %v176
  %v451 = vunpack.c.l.b16 %v177
  %v452 = vunpack.c.h.b16 %v177
  %v453 = vunpack.c.l.b16 %v178
  %v454 = vunpack.c.l.b16 %v179
  %v455 = vunpack.c.h.b16 %v179
  %v456 = vunpack.c.l.b16 %v180
  %v457 = vunpack.c.l.b16 %v181
  %v458 = vunpack.c.h.b16 %v181
  %v459 = vunpack.c.l.b16 %v182
  %v460 = vunpack.c.l.b16 %v183
  %v461 = vunpack.c.h.b16 %v183
  %v462 = vunpack.c.l.b16 %v184
  %v463 = vunpack.c.l.b16 %v185
  %v464 = vunpack.c.h.b16 %v185
  %v465 = vunpack.c.l.b16 %v186
  %v466 = vunpack.c.l.b16 %v187
  %v467 = vunpack.c.h.b16 %v187
  %v468 = vunpack.c.l.b16 %v188
  %v469 = vunpack.c.l.b16 %v189
  %v470 = vunpack.c.h.b16 %v189
  %v471 = vunpack.c.l.b16 %v190
  %v472 = vunpack.c.l.b16 %v191
  %v473 = vunpack.c.h.b16 %v191
  %v474 = vunpack.c.l.b16 %v192
  %v475 = vunpack.c.l.b16 %v193
  %v476 = vunpack.c.h.b16 %v193
  %v477 = vunpack.c.l.b16 %v194
  %v478 = vunpack.c.l.b16 %v195
  %v479 = vunpack.c.h.b16 %v195
  %v480 = vunpack.c.l.b16 %v196
  %v481 = vunpack.c.l.b16 %v197
  %v482 = vunpack.c.h.b16 %v197
  %v483 = vunpack.c.l.b16 %v198
  %v484 = vunpack.c.l.b16 %v199
  %v485 = vunpack.c.h.b16 %v199
  %v486 = vunpack.c.l.b16 %v200
  %v487 = vunpack.c.l.b16 %v201
  %v488 = vunpack.c.h.b16 %v201
  %v489 = vunpack.c.l.b16 %v202
  %v490 = vunpack.c.l.b16 %v203
  %v491 = vunpack.c.h.b16 %v203
  %v492 = vunpack.c.l.b16 %v204
  %v493 = vunpack.c.l.b16 %v205
  %v494 = vunpack.c.h.b16 %v205
  %v495 = vunpack.c.l.b16 %v206
  %v496 = vunpack.c.l.b16 %v207
  %v497 = vunpack.c.h.b16 %v207
  %v498 = vunpack.c.l.b16 %v208
  %v499 = vunpack.c.l.b16 %v209
  %v500 = vunpack.c.h.b16 %v209
  %v501 = vunpack.c.l.b16 %v210
  %v502 = vunpack.c.l.b16 %v211
  %v503 = vunpack.c.h.b16 %v211
  %v504 = vunpack.c.l.b16 %v212
  %v505 = vunpack.c.l.b16 %v213
  %v506 = vunpack.c.h.b16 %v213
  %v507 = vunpack.c.l.b16 %v214
  %v508 = vpack.c.b16 %v364, %v361
  %v509 = vpack.c.b16 %v365, %v362
  %v510 = vpack.c.b16 %v366, %v363
  %v511 = vpack.c.b16 %v370, %v367
  %v512 = vpack.c.b16 %v371, %v368
  %v513 = vpack.c.b16 %v372, %v369
  %v514 = vpack.c.b16 %v376, %v373
  %v515 = vpack.c.b16 %v377, %v374
  %v516 = vpack.c.b16 %v378, %v375
  %v517 = vpack.c.b16 %v382, %v379
  %v518 = vpack.c.b16 %v383, %v380
  %v519 = vpack.c.b16 %v384, %v381
  %v520 = vpack.c.b16 %v388, %v385
  %v521 = vpack.c.b16 %v389, %v386
  %v522 = vpack.c.b16 %v390, %v387
  %v523 = vpack.c.b16 %v394, %v391
  %v524 = vpack.c.b16 %v395, %v392
  %v525 = vpack.c.b16 %v396, %v393
  %v526 = vpack.c.b16 %v400, %v397
  %v527 = vpack.c.b16 %v401, %v398
  %v528 = vpack.c.b16 %v402, %v399
  %v529 = vpack.c.b16 %v406, %v403
  %v530 = vpack.c.b16 %v407, %v404
  %v531 = vpack.c.b16 %v408, %v405
  %v532 = vpack.c.b16 %v412, %v409
  %v533 = vpack.c.b16 %v413, %v410
  %v534 = vpack.c.b16 %v414, %v411
  %v535 = vpack.c.b16 %v418, %v415
  %v536 = vpack.c.b16 %v419, %v416
  %v537 = vpack.c.b16 %v420, %v417
  %v538 = vpack.c.b16 %v424, %v421
  %v539 = vpack.c.b16 %v425, %v422
  %v540 = vpack.c.b16 %v426, %v423
  %v541 = vpack.c.b16 %v430, %v427
  %v542 = vpack.c.b16 %v431, %v428
  %v543 = vpack.c.b16 %v432, %v429
  %v544 = vpack.c.b16 %v436, %v433
  %v545 = vpack.c.b16 %v437, %v434
  %v546 = vpack.c.b16 %v438, %v435
  %v547 = vpack.c.b16 %v442, %v439
  %v548 = vpack.c.b16 %v443, %v440
  %v549 = vpack.c.b16 %v444, %v441
  %v550 = vpack.c.b16 %v448, %v445
  %v551 = vpack.c.b16 %v449, %v446
  %v552 = vpack.c.b16 %v450, %v447
  %v553 = vpack.c.b16 %v454, %v451
  %v554 = vpack.c.b16 %v455, %v452
  %v555 = vpack.c.b16 %v456, %v453
  %v556 = vpack.c.b16 %v460, %v457
  %v557 = vpack.c.b16 %v461, %v458
  %v558 = vpack.c.b16 %v462, %v459
  %v559 = vpack.c.b16 %v466, %v463
  %v560 = vpack.c.b16 %v467, %v464
  %v561 = vpack.c.b16 %v468, %v465
  %v562 = vpack.c.b16 %v472, %v469
  %v563 = vpack.c.b16 %v473, %v470
  %v564 = vpack.c.b16 %v474, %v471
  %v565 = vpack.c.b16 %v478, %v475
  %v566 = vpack.c.b16 %v479, %v476
  %v567 = vpack.c.b16 %v480, %v477
  %v568 = vpack.c.b16 %v484, %v481
  %v569 = vpack.c.b16 %v485, %v482
  %v570 = vpack.c.b16 %v486, %v483
  %v571 = vpack.c.b16 %v490, %v487
  %v572 = vpack.c.b16 %v491, %v488
  %v573 = vpack.c.b16 %v492, %v489
  %v574 = vpack.c.b16 %v496, %v493
  %v575 = vpack.c.b16 %v497, %v494
  %v576 = vpack.c.b16 %v498, %v495
  %v577 = vpack.c.b16 %v502, %v499
  %v578 = vpack.c.b16 %v503, %v500
  %v579 = vpack.c.b16 %v504, %v501
  %v580 = vpack.c.b16 %v505, %v505
  %v581 = vpack.c.b16 %v506, %v506
  %v582 = vpack.c.b16 %v507, %v507
  %v706 = vunpack.c.l.b16 %v215
  %v707 = vunpack.c.l.b16 %v216
  %v708 = vunpack.c.l.b16 %v217
  %v709 = vunpack.c.l.b16 %v218
  %v710 = vunpack.c.l.b16 %v219
  %v711 = vunpack.c.l.b16 %v220
  %v712 = vunpack.c.l.b16 %v221
  %v713 = vunpack.c.l.b16 %v222
  %v714 = vunpack.c.l.b16 %v223
  %v715 = vunpack.c.l.b16 %v224
  %v716 = vunpack.c.l.b16 %v225
  %v717 = vunpack.c.l.b16 %v226
  %v718 = vunpack.c.l.b16 %v227
  %v719 = vunpack.c.l.b16 %v228
  %v720 = vunpack.c.l.b16 %v229
  %v721 = vunpack.c.l.b16 %v230
  %v722 = vunpack.c.l.b16 %v231
  %v723 = vunpack.c.l.b16 %v232
  %v724 = vunpack.c.l.b16 %v233
  %v725 = vunpack.c.l.b16 %v234
  %v726 = vunpack.c.l.b16 %v235
  %v727 = vunpack.c.l.b16 %v236
  %v728 = vunpack.c.l.b16 %v237
  %v729 = vunpack.c.l.b16 %v238
  %v730 = vunpack.c.l.b16 %v239
  %v731 = vunpack.c.l.b16 %v240
  %v732 = vunpack.c.l.b16 %v241
  %v733 = vunpack.c.l.b16 %v242
  %v734 = vunpack.c.l.b16 %v243
  %v735 = vunpack.c.l.b16 %v244
  %v736 = vunpack.c.l.b16 %v245
  %v737 = vunpack.c.l.b16 %v246
  %v738 = vunpack.c.l.b16 %v247
  %v739 = vunpack.c.l.b16 %v248
  %v740 = vunpack.c.l.b16 %v249
  %v741 = vunpack.c.l.b16 %v250
  %v742 = vunpack.c.l.b16 %v251
  %v743 = vunpack.c.l.b16 %v252
  %v744 = vunpack.c.l.b16 %v253
  %v745 = vunpack.c.l.b16 %v254
  %v746 = vunpack.c.l.b16 %v255
  %v747 = vunpack.c.l.b16 %v256
  %v748 = vunpack.c.l.b16 %v257
  %v749 = vunpack.c.l.b16 %v258
  %v750 = vunpack.c.l.b16 %v259
  %v751 = vunpack.c.l.b16 %v260
  %v752 = vunpack.c.l.b16 %v261
  %v753 = vunpack.c.l.b16 %v262
  %v754 = vpack.c.b16 %v707, %v706
  %v755 = vpack.c.b16 %v709, %v708
  %v756 = vpack.c.b16 %v711, %v710
  %v757 = vpack.c.b16 %v713, %v712
  %v758 = vpack.c.b16 %v715, %v714
  %v759 = vpack.c.b16 %v717, %v716
  %v760 = vpack.c.b16 %v719, %v718
  %v761 = vpack.c.b16 %v721, %v720
  %v762 = vpack.c.b16 %v723, %v722
  %v763 = vpack.c.b16 %v725, %v724
  %v764 = vpack.c.b16 %v727, %v726
  %v765 = vpack.c.b16 %v729, %v728
  %v766 = vpack.c.b16 %v731, %v730
  %v767 = vpack.c.b16 %v733, %v732
  %v768 = vpack.c.b16 %v735, %v734
  %v769 = vpack.c.b16 %v737, %v736
  %v770 = vpack.c.b16 %v739, %v738
  %v771 = vpack.c.b16 %v741, %v740
  %v772 = vpack.c.b16 %v743, %v742
  %v773 = vpack.c.b16 %v745, %v744
  %v774 = vpack.c.b16 %v747, %v746
  %v775 = vpack.c.b16 %v749, %v748
  %v776 = vpack.c.b16 %v751, %v750
  %v777 = vpack.c.b16 %v753, %v752
  %802 = vmatprep.subr.bf16.mxu0 0
  %803 = vmatpush1.bf16.msra.mxu0 %v754
  %804 = vmatprep.subr.bf16.mxu0 0
  %805 = vmatpush1.bf16.msra.mxu0 %v755
  %806 = vmatprep.subr.bf16.mxu0 0
  %807 = vmatpush1.bf16.msra.mxu0 %v756
  %808 = vmatprep.subr.bf16.mxu0 0
  %809 = vmatpush1.bf16.msra.mxu0 %v757
  %810 = vmatprep.subr.bf16.mxu0 0
  %811 = vmatpush1.bf16.msra.mxu0 %v758
  %812 = vmatprep.subr.bf16.mxu0 0
  %813 = vmatpush1.bf16.msra.mxu0 %v759
  %814 = vmatprep.subr.bf16.mxu0 0
  %815 = vmatpush1.bf16.msra.mxu0 %v760
  %816 = vmatprep.subr.bf16.mxu0 0
  %817 = vmatpush1.bf16.msra.mxu0 %v761
  %818 = vmatprep.subr.bf16.mxu0 0
  %819 = vmatpush1.bf16.msra.mxu0 %v762
  %820 = vmatprep.subr.bf16.mxu0 0
  %821 = vmatpush1.bf16.msra.mxu0 %v763
  %822 = vmatprep.subr.bf16.mxu0 0
  %823 = vmatpush1.bf16.msra.mxu0 %v764
  %824 = vmatprep.subr.bf16.mxu0 0
  %825 = vmatpush1.bf16.msra.mxu0 %v765
  %826 = vmatprep.subr.bf16.mxu0 0
  %827 = vmatpush1.bf16.msra.mxu0 %v766
  %828 = vmatprep.subr.bf16.mxu0 0
  %829 = vmatpush1.bf16.msra.mxu0 %v767
  %830 = vmatprep.subr.bf16.mxu0 0
  %831 = vmatpush1.bf16.msra.mxu0 %v768
  %832 = vmatprep.subr.bf16.mxu0 0
  %833 = vmatpush1.bf16.msra.mxu0 %v769
  %834 = vmatprep.mubr.bf16.mxu0 %v509
  %835 = vmatmul.mubr.bf16.gmra.mrb[0].mxu0 %v508
  %v836 = vpop.f32.mrb[0].mxu0
  %v837 = vadd.f32 0.0, %v836
  %v838 = vpop.f32.mrb[0].mxu0
  %v839 = vpop.f32.mrb[0].mxu0
  %v840 = vadd.f32 0.0, %v839
  %v841 = vpop.f32.mrb[0].mxu0
  %842 = vmatprep.mubr.bf16.mxu0 %v512
  %843 = vmatmul.mubr.bf16.gmra.mrb[0].mxu0 %v511
  %v844 = vpop.f32.mrb[0].mxu0
  %v845 = vadd.f32 0.0, %v844
  %v846 = vpop.f32.mrb[0].mxu0
  %v847 = vpop.f32.mrb[0].mxu0
  %v848 = vadd.f32 0.0, %v847
  %v849 = vpop.f32.mrb[0].mxu0
  %850 = vmatprep.mubr.bf16.mxu0 %v515
  %851 = vmatmul.mubr.bf16.gmra.mrb[0].mxu0 %v514
  %v852 = vpop.f32.mrb[0].mxu0
  %v853 = vadd.f32 0.0, %v852
  %v854 = vpop.f32.mrb[0].mxu0
  %v855 = vpop.f32.mrb[0].mxu0
  %v856 = vadd.f32 0.0, %v855
  %v857 = vpop.f32.mrb[0].mxu0
  %858 = vmatprep.mubr.bf16.mxu0 %v518
  %859 = vmatmul.mubr.bf16.gmra.mrb[0].mxu0 %v517
  %v860 = vpop.f32.mrb[0].mxu0
  %v861 = vadd.f32 0.0, %v860
  %v862 = vpop.f32.mrb[0].mxu0
  %v863 = vpop.f32.mrb[0].mxu0
  %v864 = vadd.f32 0.0, %v863
  %v865 = vpop.f32.mrb[0].mxu0
  %866 = vmatprep.mubr.bf16.mxu0 %v521
  %867 = vmatmul.mubr.bf16.gmra.mrb[0].mxu0 %v520
  %v868 = vpop.f32.mrb[0].mxu0
  %v869 = vadd.f32 0.0, %v868
  %v870 = vpop.f32.mrb[0].mxu0
  %v871 = vpop.f32.mrb[0].mxu0
  %v872 = vadd.f32 0.0, %v871
  %v873 = vpop.f32.mrb[0].mxu0
  %874 = vmatprep.mubr.bf16.mxu0 %v524
  %875 = vmatmul.mubr.bf16.gmra.mrb[0].mxu0 %v523
  %v876 = vpop.f32.mrb[0].mxu0
  %v877 = vadd.f32 0.0, %v876
  %v878 = vpop.f32.mrb[0].mxu0
  %v879 = vpop.f32.mrb[0].mxu0
  %v880 = vadd.f32 0.0, %v879
  %v881 = vpop.f32.mrb[0].mxu0
  %882 = vmatprep.mubr.bf16.mxu0 %v527
  %883 = vmatmul.mubr.bf16.gmra.mrb[0].mxu0 %v526
  %v884 = vpop.f32.mrb[0].mxu0
  %v885 = vadd.f32 0.0, %v884
  %v886 = vpop.f32.mrb[0].mxu0
  %v887 = vpop.f32.mrb[0].mxu0
  %v888 = vadd.f32 0.0, %v887
  %v889 = vpop.f32.mrb[0].mxu0
  %890 = vmatprep.mubr.bf16.mxu0 %v530
  %891 = vmatmul.mubr.bf16.gmra.mrb[0].mxu0 %v529
  %v892 = vpop.f32.mrb[0].mxu0
  %v893 = vadd.f32 0.0, %v892
  %v894 = vpop.f32.mrb[0].mxu0
  %v895 = vpop.f32.mrb[0].mxu0
  %v896 = vadd.f32 0.0, %v895
  %v897 = vpop.f32.mrb[0].mxu0
  %898 = vmatprep.mubr.bf16.mxu0 %v533
  %899 = vmatmul.mubr.bf16.gmra.mrb[0].mxu0 %v532
  %v900 = vpop.f32.mrb[0].mxu0
  %v901 = vadd.f32 0.0, %v900
  %v902 = vpop.f32.mrb[0].mxu0
  %v903 = vpop.f32.mrb[0].mxu0
  %v904 = vadd.f32 0.0, %v903
  %v905 = vpop.f32.mrb[0].mxu0
  %906 = vmatprep.mubr.bf16.mxu0 %v536
  %907 = vmatmul.mubr.bf16.gmra.mrb[0].mxu0 %v535
  %v908 = vpop.f32.mrb[0].mxu0
  %v909 = vadd.f32 0.0, %v908
  %v910 = vpop.f32.mrb[0].mxu0
  %v911 = vpop.f32.mrb[0].mxu0
  %v912 = vadd.f32 0.0, %v911
  %v913 = vpop.f32.mrb[0].mxu0
  %914 = vmatprep.mubr.bf16.mxu0 %v539
  %915 = vmatmul.mubr.bf16.gmra.mrb[0].mxu0 %v538
  %v916 = vpop.f32.mrb[0].mxu0
  %v917 = vadd.f32 0.0, %v916
  %v918 = vpop.f32.mrb[0].mxu0
  %v919 = vpop.f32.mrb[0].mxu0
  %v920 = vadd.f32 0.0, %v919
  %v921 = vpop.f32.mrb[0].mxu0
  %922 = vmatprep.mubr.bf16.mxu0 %v542
  %923 = vmatmul.mubr.bf16.gmra.mrb[0].mxu0 %v541
  %v924 = vpop.f32.mrb[0].mxu0
  %v925 = vadd.f32 0.0, %v924
  %v926 = vpop.f32.mrb[0].mxu0
  %v927 = vpop.f32.mrb[0].mxu0
  %v928 = vadd.f32 0.0, %v927
  %v929 = vpop.f32.mrb[0].mxu0
  %930 = vmatprep.mubr.bf16.mxu0 %v545
  %931 = vmatmul.mubr.bf16.gmra.mrb[0].mxu0 %v544
  %v932 = vpop.f32.mrb[0].mxu0
  %v933 = vadd.f32 0.0, %v932
  %v934 = vpop.f32.mrb[0].mxu0
  %v935 = vpop.f32.mrb[0].mxu0
  %v936 = vadd.f32 0.0, %v935
  %v937 = vpop.f32.mrb[0].mxu0
  %938 = vmatprep.mubr.bf16.mxu0 %v548
  %939 = vmatmul.mubr.bf16.gmra.mrb[0].mxu0 %v547
  %v940 = vpop.f32.mrb[0].mxu0
  %v941 = vadd.f32 0.0, %v940
  %v942 = vpop.f32.mrb[0].mxu0
  %v943 = vpop.f32.mrb[0].mxu0
  %v944 = vadd.f32 0.0, %v943
  %v945 = vpop.f32.mrb[0].mxu0
  %946 = vmatprep.mubr.bf16.mxu0 %v551
  %947 = vmatmul.mubr.bf16.gmra.mrb[0].mxu0 %v550
  %v948 = vpop.f32.mrb[0].mxu0
  %v949 = vadd.f32 0.0, %v948
  %v950 = vpop.f32.mrb[0].mxu0
  %v951 = vpop.f32.mrb[0].mxu0
  %v952 = vadd.f32 0.0, %v951
  %v953 = vpop.f32.mrb[0].mxu0
  %954 = vmatprep.mubr.bf16.mxu0 %v554
  %955 = vmatmul.mubr.bf16.gmra.mrb[0].mxu0 %v553
  %v956 = vpop.f32.mrb[0].mxu0
  %v957 = vadd.f32 0.0, %v956
  %v958 = vpop.f32.mrb[0].mxu0
  %v959 = vpop.f32.mrb[0].mxu0
  %v960 = vadd.f32 0.0, %v959
  %v961 = vpop.f32.mrb[0].mxu0
  %962 = vmatprep.mubr.bf16.mxu0 %v557
  %963 = vmatmul.mubr.bf16.gmra.mrb[0].mxu0 %v556
  %v964 = vpop.f32.mrb[0].mxu0
  %v965 = vadd.f32 0.0, %v964
  %v966 = vpop.f32.mrb[0].mxu0
  %v967 = vpop.f32.mrb[0].mxu0
  %v968 = vadd.f32 0.0, %v967
  %v969 = vpop.f32.mrb[0].mxu0
  %970 = vmatprep.mubr.bf16.mxu0 %v560
  %971 = vmatmul.mubr.bf16.gmra.mrb[0].mxu0 %v559
  %v972 = vpop.f32.mrb[0].mxu0
  %v973 = vadd.f32 0.0, %v972
  %v974 = vpop.f32.mrb[0].mxu0
  %v975 = vpop.f32.mrb[0].mxu0
  %v976 = vadd.f32 0.0, %v975
  %v977 = vpop.f32.mrb[0].mxu0
  %978 = vmatprep.mubr.bf16.mxu0 %v563
  %979 = vmatmul.mubr.bf16.gmra.mrb[0].mxu0 %v562
  %v980 = vpop.f32.mrb[0].mxu0
  %v981 = vadd.f32 0.0, %v980
  %v982 = vpop.f32.mrb[0].mxu0
  %v983 = vpop.f32.mrb[0].mxu0
  %v984 = vadd.f32 0.0, %v983
  %v985 = vpop.f32.mrb[0].mxu0
  %986 = vmatprep.mubr.bf16.mxu0 %v566
  %987 = vmatmul.mubr.bf16.gmra.mrb[0].mxu0 %v565
  %v988 = vpop.f32.mrb[0].mxu0
  %v989 = vadd.f32 0.0, %v988
  %v990 = vpop.f32.mrb[0].mxu0
  %v991 = vpop.f32.mrb[0].mxu0
  %v992 = vadd.f32 0.0, %v991
  %v993 = vpop.f32.mrb[0].mxu0
  %994 = vmatprep.mubr.bf16.mxu0 %v569
  %995 = vmatmul.mubr.bf16.gmra.mrb[0].mxu0 %v568
  %v996 = vpop.f32.mrb[0].mxu0
  %v997 = vadd.f32 0.0, %v996
  %v998 = vpop.f32.mrb[0].mxu0
  %v999 = vpop.f32.mrb[0].mxu0
  %v1000 = vadd.f32 0.0, %v999
  %v1001 = vpop.f32.mrb[0].mxu0
  %1002 = vmatprep.mubr.bf16.mxu0 %v572
  %1003 = vmatmul.mubr.bf16.gmra.mrb[0].mxu0 %v571
  %v1004 = vpop.f32.mrb[0].mxu0
  %v1005 = vadd.f32 0.0, %v1004
  %v1006 = vpop.f32.mrb[0].mxu0
  %v1007 = vpop.f32.mrb[0].mxu0
  %v1008 = vadd.f32 0.0, %v1007
  %v1009 = vpop.f32.mrb[0].mxu0
  %1010 = vmatprep.mubr.bf16.mxu0 %v575
  %1011 = vmatmul.mubr.bf16.gmra.mrb[0].mxu0 %v574
  %v1012 = vpop.f32.mrb[0].mxu0
  %v1013 = vadd.f32 0.0, %v1012
  %v1014 = vpop.f32.mrb[0].mxu0
  %v1015 = vpop.f32.mrb[0].mxu0
  %v1016 = vadd.f32 0.0, %v1015
  %v1017 = vpop.f32.mrb[0].mxu0
  %1018 = vmatprep.mubr.bf16.mxu0 %v578
  %1019 = vmatmul.mubr.bf16.gmra.mrb[0].mxu0 %v577
  %v1020 = vpop.f32.mrb[0].mxu0
  %v1021 = vadd.f32 0.0, %v1020
  %v1022 = vpop.f32.mrb[0].mxu0
  %v1023 = vpop.f32.mrb[0].mxu0
  %v1024 = vadd.f32 0.0, %v1023
  %v1025 = vpop.f32.mrb[0].mxu0
  %1026 = vmatprep.mubr.bf16.mxu0 %v581
  %1027 = vmatmul.mubr.bf16.gmra.mrb[0].mxu0 %v580
  %v1028 = vpop.f32.mrb[0].mxu0
  %v1029 = vadd.f32 0.0, %v1028
  %v1030 = vpop.f32.mrb[0].mxu0
  %v1031 = vpop.f32.mrb[0].mxu0
  %v1032 = vpop.f32.mrb[0].mxu0
  %1033 = vdwg.mxu0
  %1034 = vmatprep.subr.bf16.mxu0 0
  %1035 = vmatpush1.bf16.msra.mxu0 %v770
  %1036 = vmatprep.subr.bf16.mxu0 0
  %1037 = vmatpush1.bf16.msra.mxu0 %v771
  %1038 = vmatprep.subr.bf16.mxu0 0
  %1039 = vmatpush1.bf16.msra.mxu0 %v772
  %1040 = vmatprep.subr.bf16.mxu0 0
  %1041 = vmatpush1.bf16.msra.mxu0 %v773
  %1042 = vmatprep.subr.bf16.mxu0 0
  %1043 = vmatpush1.bf16.msra.mxu0 %v774
  %1044 = vmatprep.subr.bf16.mxu0 0
  %1045 = vmatpush1.bf16.msra.mxu0 %v775
  %1046 = vmatprep.subr.bf16.mxu0 0
  %1047 = vmatpush1.bf16.msra.mxu0 %v776
  %1048 = vmatprep.subr.bf16.mxu0 0
  %1049 = vmatpush1.bf16.msra.mxu0 %v777
  %1050 = vmatprep.subr.bf16.mxu0 0
  %1051 = vmatpush1.bf16.msra.mxu0 0
  %1052 = vmatprep.subr.bf16.mxu0 0
  %1053 = vmatpush1.bf16.msra.mxu0 0
  %1054 = vmatprep.subr.bf16.mxu0 0
  %1055 = vmatpush1.bf16.msra.mxu0 0
  %1056 = vmatprep.subr.bf16.mxu0 0
  %1057 = vmatpush1.bf16.msra.mxu0 0
  %1058 = vmatprep.subr.bf16.mxu0 0
  %1059 = vmatpush1.bf16.msra.mxu0 0
  %1060 = vmatprep.subr.bf16.mxu0 0
  %1061 = vmatpush1.bf16.msra.mxu0 0
  %1062 = vmatprep.subr.bf16.mxu0 0
  %1063 = vmatpush1.bf16.msra.mxu0 0
  %1064 = vmatprep.subr.bf16.mxu0 0
  %1065 = vmatpush1.bf16.msra.mxu0 0
  %1066 = vmatprep.mubr.bf16.mxu0 0
  %1067 = vmatmul.mubr.bf16.gmra.mrb[0].mxu0 %v510
  %v1068 = vpop.f32.mrb[0].mxu0
  %v1069 = vadd.f32 %v837, %v1068
  %v1070 = vpop.f32.mrb[0].mxu0
  %v1071 = vpop.f32.mrb[0].mxu0
  %v1072 = vadd.f32 %v840, %v1071
  %v1073 = vpop.f32.mrb[0].mxu0
  %1074 = vmatprep.mubr.bf16.mxu0 0
  %1075 = vmatmul.mubr.bf16.gmra.mrb[0].mxu0 %v513
  %v1076 = vpop.f32.mrb[0].mxu0
  %v1077 = vadd.f32 %v845, %v1076
  %v1078 = vpop.f32.mrb[0].mxu0
  %v1079 = vpop.f32.mrb[0].mxu0
  %v1080 = vadd.f32 %v848, %v1079
  %v1081 = vpop.f32.mrb[0].mxu0
  %1082 = vmatprep.mubr.bf16.mxu0 0
  %1083 = vmatmul.mubr.bf16.gmra.mrb[0].mxu0 %v516
  %v1084 = vpop.f32.mrb[0].mxu0
  %v1085 = vadd.f32 %v853, %v1084
  %v1086 = vpop.f32.mrb[0].mxu0
  %v1087 = vpop.f32.mrb[0].mxu0
  %v1088 = vadd.f32 %v856, %v1087
  %v1089 = vpop.f32.mrb[0].mxu0
  %1090 = vmatprep.mubr.bf16.mxu0 0
  %1091 = vmatmul.mubr.bf16.gmra.mrb[0].mxu0 %v519
  %v1092 = vpop.f32.mrb[0].mxu0
  %v1093 = vadd.f32 %v861, %v1092
  %v1094 = vpop.f32.mrb[0].mxu0
  %v1095 = vpop.f32.mrb[0].mxu0
  %v1096 = vadd.f32 %v864, %v1095
  %v1097 = vpop.f32.mrb[0].mxu0
  %1098 = vmatprep.mubr.bf16.mxu0 0
  %1099 = vmatmul.mubr.bf16.gmra.mrb[0].mxu0 %v522
  %v1100 = vpop.f32.mrb[0].mxu0
  %v1101 = vadd.f32 %v869, %v1100
  %v1102 = vpop.f32.mrb[0].mxu0
  %v1103 = vpop.f32.mrb[0].mxu0
  %v1104 = vadd.f32 %v872, %v1103
  %v1105 = vpop.f32.mrb[0].mxu0
  %1106 = vmatprep.mubr.bf16.mxu0 0
  %1107 = vmatmul.mubr.bf16.gmra.mrb[0].mxu0 %v525
  %v1108 = vpop.f32.mrb[0].mxu0
  %v1109 = vadd.f32 %v877, %v1108
  %v1110 = vpop.f32.mrb[0].mxu0
  %v1111 = vpop.f32.mrb[0].mxu0
  %v1112 = vadd.f32 %v880, %v1111
  %v1113 = vpop.f32.mrb[0].mxu0
  %1114 = vmatprep.mubr.bf16.mxu0 0
  %1115 = vmatmul.mubr.bf16.gmra.mrb[0].mxu0 %v528
  %v1116 = vpop.f32.mrb[0].mxu0
  %v1117 = vadd.f32 %v885, %v1116
  %v1118 = vpop.f32.mrb[0].mxu0
  %v1119 = vpop.f32.mrb[0].mxu0
  %v1120 = vadd.f32 %v888, %v1119
  %v1121 = vpop.f32.mrb[0].mxu0
  %1122 = vmatprep.mubr.bf16.mxu0 0
  %1123 = vmatmul.mubr.bf16.gmra.mrb[0].mxu0 %v531
  %v1124 = vpop.f32.mrb[0].mxu0
  %v1125 = vadd.f32 %v893, %v1124
  %v1126 = vpop.f32.mrb[0].mxu0
  %v1127 = vpop.f32.mrb[0].mxu0
  %v1128 = vadd.f32 %v896, %v1127
  %v1129 = vpop.f32.mrb[0].mxu0
  %1130 = vmatprep.mubr.bf16.mxu0 0
  %1131 = vmatmul.mubr.bf16.gmra.mrb[0].mxu0 %v534
  %v1132 = vpop.f32.mrb[0].mxu0
  %v1133 = vadd.f32 %v901, %v1132
  %v1134 = vpop.f32.mrb[0].mxu0
  %v1135 = vpop.f32.mrb[0].mxu0
  %v1136 = vadd.f32 %v904, %v1135
  %v1137 = vpop.f32.mrb[0].mxu0
  %1138 = vmatprep.mubr.bf16.mxu0 0
  %1139 = vmatmul.mubr.bf16.gmra.mrb[0].mxu0 %v537
  %v1140 = vpop.f32.mrb[0].mxu0
  %v1141 = vadd.f32 %v909, %v1140
  %v1142 = vpop.f32.mrb[0].mxu0
  %v1143 = vpop.f32.mrb[0].mxu0
  %v1144 = vadd.f32 %v912, %v1143
  %v1145 = vpop.f32.mrb[0].mxu0
  %1146 = vmatprep.mubr.bf16.mxu0 0
  %1147 = vmatmul.mubr.bf16.gmra.mrb[0].mxu0 %v540
  %v1148 = vpop.f32.mrb[0].mxu0
  %v1149 = vadd.f32 %v917, %v1148
  %v1150 = vpop.f32.mrb[0].mxu0
  %v1151 = vpop.f32.mrb[0].mxu0
  %v1152 = vadd.f32 %v920, %v1151
  %v1153 = vpop.f32.mrb[0].mxu0
  %1154 = vmatprep.mubr.bf16.mxu0 0
  %1155 = vmatmul.mubr.bf16.gmra.mrb[0].mxu0 %v543
  %v1156 = vpop.f32.mrb[0].mxu0
  %v1157 = vadd.f32 %v925, %v1156
  %v1158 = vpop.f32.mrb[0].mxu0
  %v1159 = vpop.f32.mrb[0].mxu0
  %v1160 = vadd.f32 %v928, %v1159
  %v1161 = vpop.f32.mrb[0].mxu0
  %1162 = vmatprep.mubr.bf16.mxu0 0
  %1163 = vmatmul.mubr.bf16.gmra.mrb[0].mxu0 %v546
  %v1164 = vpop.f32.mrb[0].mxu0
  %v1165 = vadd.f32 %v933, %v1164
  %v1166 = vpop.f32.mrb[0].mxu0
  %v1167 = vpop.f32.mrb[0].mxu0
  %v1168 = vadd.f32 %v936, %v1167
  %v1169 = vpop.f32.mrb[0].mxu0
  %1170 = vmatprep.mubr.bf16.mxu0 0
  %1171 = vmatmul.mubr.bf16.gmra.mrb[0].mxu0 %v549
  %v1172 = vpop.f32.mrb[0].mxu0
  %v1173 = vadd.f32 %v941, %v1172
  %v1174 = vpop.f32.mrb[0].mxu0
  %v1175 = vpop.f32.mrb[0].mxu0
  %v1176 = vadd.f32 %v944, %v1175
  %v1177 = vpop.f32.mrb[0].mxu0
  %1178 = vmatprep.mubr.bf16.mxu0 0
  %1179 = vmatmul.mubr.bf16.gmra.mrb[0].mxu0 %v552
  %v1180 = vpop.f32.mrb[0].mxu0
  %v1181 = vadd.f32 %v949, %v1180
  %v1182 = vpop.f32.mrb[0].mxu0
  %v1183 = vpop.f32.mrb[0].mxu0
  %v1184 = vadd.f32 %v952, %v1183
  %v1185 = vpop.f32.mrb[0].mxu0
  %1186 = vmatprep.mubr.bf16.mxu0 0
  %1187 = vmatmul.mubr.bf16.gmra.mrb[0].mxu0 %v555
  %v1188 = vpop.f32.mrb[0].mxu0
  %v1189 = vadd.f32 %v957, %v1188
  %v1190 = vpop.f32.mrb[0].mxu0
  %v1191 = vpop.f32.mrb[0].mxu0
  %v1192 = vadd.f32 %v960, %v1191
  %v1193 = vpop.f32.mrb[0].mxu0
  %1194 = vmatprep.mubr.bf16.mxu0 0
  %1195 = vmatmul.mubr.bf16.gmra.mrb[0].mxu0 %v558
  %v1196 = vpop.f32.mrb[0].mxu0
  %v1197 = vadd.f32 %v965, %v1196
  %v1198 = vpop.f32.mrb[0].mxu0
  %v1199 = vpop.f32.mrb[0].mxu0
  %v1200 = vadd.f32 %v968, %v1199
  %v1201 = vpop.f32.mrb[0].mxu0
  %1202 = vmatprep.mubr.bf16.mxu0 0
  %1203 = vmatmul.mubr.bf16.gmra.mrb[0].mxu0 %v561
  %v1204 = vpop.f32.mrb[0].mxu0
  %v1205 = vadd.f32 %v973, %v1204
  %v1206 = vpop.f32.mrb[0].mxu0
  %v1207 = vpop.f32.mrb[0].mxu0
  %v1208 = vadd.f32 %v976, %v1207
  %v1209 = vpop.f32.mrb[0].mxu0
  %1210 = vmatprep.mubr.bf16.mxu0 0
  %1211 = vmatmul.mubr.bf16.gmra.mrb[0].mxu0 %v564
  %v1212 = vpop.f32.mrb[0].mxu0
  %v1213 = vadd.f32 %v981, %v1212
  %v1214 = vpop.f32.mrb[0].mxu0
  %v1215 = vpop.f32.mrb[0].mxu0
  %v1216 = vadd.f32 %v984, %v1215
  %v1217 = vpop.f32.mrb[0].mxu0
  %1218 = vmatprep.mubr.bf16.mxu0 0
  %1219 = vmatmul.mubr.bf16.gmra.mrb[0].mxu0 %v567
  %v1220 = vpop.f32.mrb[0].mxu0
  %v1221 = vadd.f32 %v989, %v1220
  %v1222 = vpop.f32.mrb[0].mxu0
  %v1223 = vpop.f32.mrb[0].mxu0
  %v1224 = vadd.f32 %v992, %v1223
  %v1225 = vpop.f32.mrb[0].mxu0
  %1226 = vmatprep.mubr.bf16.mxu0 0
  %1227 = vmatmul.mubr.bf16.gmra.mrb[0].mxu0 %v570
  %v1228 = vpop.f32.mrb[0].mxu0
  %v1229 = vadd.f32 %v997, %v1228
  %v1230 = vpop.f32.mrb[0].mxu0
  %v1231 = vpop.f32.mrb[0].mxu0
  %v1232 = vadd.f32 %v1000, %v1231
  %v1233 = vpop.f32.mrb[0].mxu0
  %1234 = vmatprep.mubr.bf16.mxu0 0
  %1235 = vmatmul.mubr.bf16.gmra.mrb[0].mxu0 %v573
  %v1236 = vpop.f32.mrb[0].mxu0
  %v1237 = vadd.f32 %v1005, %v1236
  %v1238 = vpop.f32.mrb[0].mxu0
  %v1239 = vpop.f32.mrb[0].mxu0
  %v1240 = vadd.f32 %v1008, %v1239
  %v1241 = vpop.f32.mrb[0].mxu0
  %1242 = vmatprep.mubr.bf16.mxu0 0
  %1243 = vmatmul.mubr.bf16.gmra.mrb[0].mxu0 %v576
  %v1244 = vpop.f32.mrb[0].mxu0
  %v1245 = vadd.f32 %v1013, %v1244
  %v1246 = vpop.f32.mrb[0].mxu0
  %v1247 = vpop.f32.mrb[0].mxu0
  %v1248 = vadd.f32 %v1016, %v1247
  %v1249 = vpop.f32.mrb[0].mxu0
  %1250 = vmatprep.mubr.bf16.mxu0 0
  %1251 = vmatmul.mubr.bf16.gmra.mrb[0].mxu0 %v579
  %v1252 = vpop.f32.mrb[0].mxu0
  %v1253 = vadd.f32 %v1021, %v1252
  %v1254 = vpop.f32.mrb[0].mxu0
  %v1255 = vpop.f32.mrb[0].mxu0
  %v1256 = vadd.f32 %v1024, %v1255
  %v1257 = vpop.f32.mrb[0].mxu0
  %1258 = vmatprep.mubr.bf16.mxu0 0
  %1259 = vmatmul.mubr.bf16.gmra.mrb[0].mxu0 %v582
  %v1260 = vpop.f32.mrb[0].mxu0
  %v1261 = vadd.f32 %v1029, %v1260
  %v1262 = vpop.f32.mrb[0].mxu0
  %v1263 = vpop.f32.mrb[0].mxu0
  %v1264 = vpop.f32.mrb[0].mxu0
  %1265 = vdwg.mxu0
  %v1266 = vadd.f32 %v68, %v1069
  %v1267 = vadd.f32 %v69, %v1072
  %v1268 = vadd.f32 %v70, %v1077
  %v1269 = vadd.f32 %v71, %v1080
  %v1270 = vadd.f32 %v72, %v1085
  %v1271 = vadd.f32 %v73, %v1088
  %v1272 = vadd.f32 %v74, %v1093
  %v1273 = vadd.f32 %v75, %v1096
  %v1274 = vadd.f32 %v76, %v1101
  %v1275 = vadd.f32 %v77, %v1104
  %v1276 = vadd.f32 %v78, %v1109
  %v1277 = vadd.f32 %v79, %v1112
  %v1278 = vadd.f32 %v80, %v1117
  %v1279 = vadd.f32 %v81, %v1120
  %v1280 = vadd.f32 %v82, %v1125
  %v1281 = vadd.f32 %v83, %v1128
  %v1282 = vadd.f32 %v84, %v1133
  %v1283 = vadd.f32 %v85, %v1136
  %v1284 = vadd.f32 %v86, %v1141
  %v1285 = vadd.f32 %v87, %v1144
  %v1286 = vadd.f32 %v88, %v1149
  %v1287 = vadd.f32 %v89, %v1152
  %v1288 = vadd.f32 %v90, %v1157
  %v1289 = vadd.f32 %v91, %v1160
  %v1290 = vadd.f32 %v92, %v1165
  %v1291 = vadd.f32 %v93, %v1168
  %v1292 = vadd.f32 %v94, %v1173
  %v1293 = vadd.f32 %v95, %v1176
  %v1294 = vadd.f32 %v96, %v1181
  %v1295 = vadd.f32 %v97, %v1184
  %v1296 = vadd.f32 %v98, %v1189
  %v1297 = vadd.f32 %v99, %v1192
  %v1298 = vadd.f32 %v100, %v1197
  %v1299 = vadd.f32 %v101, %v1200
  %v1300 = vadd.f32 %v102, %v1205
  %v1301 = vadd.f32 %v103, %v1208
  %v1302 = vadd.f32 %v104, %v1213
  %v1303 = vadd.f32 %v105, %v1216
  %v1304 = vadd.f32 %v106, %v1221
  %v1305 = vadd.f32 %v107, %v1224
  %v1306 = vadd.f32 %v108, %v1229
  %v1307 = vadd.f32 %v109, %v1232
  %v1308 = vadd.f32 %v110, %v1237
  %v1309 = vadd.f32 %v111, %v1240
  %v1310 = vadd.f32 %v112, %v1245
  %v1311 = vadd.f32 %v113, %v1248
  %v1312 = vadd.f32 %v114, %v1253
  %v1313 = vadd.f32 %v115, %v1256
  %v1314 = vadd.f32 %v116, %v1261
  %1315 = vst [vmem:[#allocation2] sm:$0xff] %v1266
  %1316 = vst [vmem:[#allocation2 + $0x8] sm:$0xff] %v1267
  %1317 = vst [vmem:[#allocation2 + $0x10] sm:$0xff] %v1268
  %1318 = vst [vmem:[#allocation2 + $0x18] sm:$0xff] %v1269
  %1319 = vst [vmem:[#allocation2 + $0x20] sm:$0xff] %v1270
  %1320 = vst [vmem:[#allocation2 + $0x28] sm:$0xff] %v1271
  %1321 = vst [vmem:[#allocation2 + $0x30] sm:$0xff] %v1272
  %1322 = vst [vmem:[#allocation2 + $0x38] sm:$0xff] %v1273
  %1323 = vst [vmem:[#allocation2 + $0x40] sm:$0xff] %v1274
  %1324 = vst [vmem:[#allocation2 + $0x48] sm:$0xff] %v1275
  %1325 = vst [vmem:[#allocation2 + $0x50] sm:$0xff] %v1276
  %1326 = vst [vmem:[#allocation2 + $0x58] sm:$0xff] %v1277
  %1327 = vst [vmem:[#allocation2 + $0x60] sm:$0xff] %v1278
  %1328 = vst [vmem:[#allocation2 + $0x68] sm:$0xff] %v1279
  %1329 = vst [vmem:[#allocation2 + $0x70] sm:$0xff] %v1280
  %1330 = vst [vmem:[#allocation2 + $0x78] sm:$0xff] %v1281
  %1331 = vst [vmem:[#allocation2 + $0x80] sm:$0xff] %v1282
  %1332 = vst [vmem:[#allocation2 + $0x88] sm:$0xff] %v1283
  %1333 = vst [vmem:[#allocation2 + $0x90] sm:$0xff] %v1284
  %1334 = vst [vmem:[#allocation2 + $0x98] sm:$0xff] %v1285
  %1335 = vst [vmem:[#allocation2 + $0xa0] sm:$0xff] %v1286
  %1336 = vst [vmem:[#allocation2 + $0xa8] sm:$0xff] %v1287
  %1337 = vst [vmem:[#allocation2 + $0xb0] sm:$0xff] %v1288
  %1338 = vst [vmem:[#allocation2 + $0xb8] sm:$0xff] %v1289
  %1339 = vst [vmem:[#allocation2 + $0xc0] sm:$0xff] %v1290
  %1340 = vst [vmem:[#allocation2 + $0xc8] sm:$0xff] %v1291
  %1341 = vst [vmem:[#allocation2 + $0xd0] sm:$0xff] %v1292
  %1342 = vst [vmem:[#allocation2 + $0xd8] sm:$0xff] %v1293
  %1343 = vst [vmem:[#allocation2 + $0xe0] sm:$0xff] %v1294
  %1344 = vst [vmem:[#allocation2 + $0xe8] sm:$0xff] %v1295
  %1345 = vst [vmem:[#allocation2 + $0xf0] sm:$0xff] %v1296
  %1346 = vst [vmem:[#allocation2 + $0xf8] sm:$0xff] %v1297
  %1347 = vst [vmem:[#allocation2 + $0x100] sm:$0xff] %v1298
  %1348 = vst [vmem:[#allocation2 + $0x108] sm:$0xff] %v1299
  %1349 = vst [vmem:[#allocation2 + $0x110] sm:$0xff] %v1300
  %1350 = vst [vmem:[#allocation2 + $0x118] sm:$0xff] %v1301
  %1351 = vst [vmem:[#allocation2 + $0x120] sm:$0xff] %v1302
  %1352 = vst [vmem:[#allocation2 + $0x128] sm:$0xff] %v1303
  %1353 = vst [vmem:[#allocation2 + $0x130] sm:$0xff] %v1304
  %1354 = vst [vmem:[#allocation2 + $0x138] sm:$0xff] %v1305
  %1355 = vst [vmem:[#allocation2 + $0x140] sm:$0xff] %v1306
  %1356 = vst [vmem:[#allocation2 + $0x148] sm:$0xff] %v1307
  %1357 = vst [vmem:[#allocation2 + $0x150] sm:$0xff] %v1308
  %1358 = vst [vmem:[#allocation2 + $0x158] sm:$0xff] %v1309
  %1359 = vst [vmem:[#allocation2 + $0x160] sm:$0xff] %v1310
  %1360 = vst [vmem:[#allocation2 + $0x168] sm:$0xff] %v1311
  %1361 = vst [vmem:[#allocation2 + $0x170] sm:$0xff] %v1312
  %1362 = vst [vmem:[#allocation2 + $0x178] sm:$0xff] %v1313
  %1363 = vst [vmem:[#allocation2 + $0x180] sm:$0xff] %v1314
  // Predicated region
  $region18: #{encoder_forward.8} parent=0 // pred_check
    %p1364 = pneg %p15
  $region19: #{encoder_forward.8} parent=0 // pred_check_branch
    %1366 = sbr.rel (%p1364) target = $region21
  $region20: #{encoder_forward.8} parent=0 // pred_region
    %v1367 = vld [vmem:[#allocation2] sm:$0xff]
    %v1368 = vld [vmem:[#allocation2 + $0x8] sm:$0xff]
    %v1369 = vld [vmem:[#allocation2 + $0x10] sm:$0xff]
    %v1370 = vld [vmem:[#allocation2 + $0x18] sm:$0xff]
    %v1371 = vld [vmem:[#allocation2 + $0x20] sm:$0xff]
    %v1372 = vld [vmem:[#allocation2 + $0x28] sm:$0xff]
    %v1373 = vld [vmem:[#allocation2 + $0x30] sm:$0xff]
    %v1374 = vld [vmem:[#allocation2 + $0x38] sm:$0xff]
    %v1375 = vld [vmem:[#allocation2 + $0x40] sm:$0xff]
    %v1376 = vld [vmem:[#allocation2 + $0x48] sm:$0xff]
    %v1377 = vld [vmem:[#allocation2 + $0x50] sm:$0xff]
    %v1378 = vld [vmem:[#allocation2 + $0x58] sm:$0xff]
    %v1379 = vld [vmem:[#allocation2 + $0x60] sm:$0xff]
    %v1380 = vld [vmem:[#allocation2 + $0x68] sm:$0xff]
    %v1381 = vld [vmem:[#allocation2 + $0x70] sm:$0xff]
    %v1382 = vld [vmem:[#allocation2 + $0x78] sm:$0xff]
    %v1383 = vld [vmem:[#allocation2 + $0x80] sm:$0xff]
    %v1384 = vld [vmem:[#allocation2 + $0x88] sm:$0xff]
    %v1385 = vld [vmem:[#allocation2 + $0x90] sm:$0xff]
    %v1386 = vld [vmem:[#allocation2 + $0x98] sm:$0xff]
    %v1387 = vld [vmem:[#allocation2 + $0xa0] sm:$0xff]
    %v1388 = vld [vmem:[#allocation2 + $0xa8] sm:$0xff]
    %v1389 = vld [vmem:[#allocation2 + $0xb0] sm:$0xff]
    %v1390 = vld [vmem:[#allocation2 + $0xb8] sm:$0xff]
    %v1391 = vld [vmem:[#allocation2 + $0xc0] sm:$0xff]
    %v1392 = vld [vmem:[#allocation2 + $0xc8] sm:$0xff]
    %v1393 = vld [vmem:[#allocation2 + $0xd0] sm:$0xff]
    %v1394 = vld [vmem:[#allocation2 + $0xd8] sm:$0xff]
    %v1395 = vld [vmem:[#allocation2 + $0xe0] sm:$0xff]
    %v1396 = vld [vmem:[#allocation2 + $0xe8] sm:$0xff]
    %v1397 = vld [vmem:[#allocation2 + $0xf0] sm:$0xff]
    %v1398 = vld [vmem:[#allocation2 + $0xf8] sm:$0xff]
    %v1399 = vld [vmem:[#allocation2 + $0x100] sm:$0xff]
    %v1400 = vld [vmem:[#allocation2 + $0x108] sm:$0xff]
    %v1401 = vld [vmem:[#allocation2 + $0x110] sm:$0xff]
    %v1402 = vld [vmem:[#allocation2 + $0x118] sm:$0xff]
    %v1403 = vld [vmem:[#allocation2 + $0x120] sm:$0xff]
    %v1404 = vld [vmem:[#allocation2 + $0x128] sm:$0xff]
    %v1405 = vld [vmem:[#allocation2 + $0x130] sm:$0xff]
    %v1406 = vld [vmem:[#allocation2 + $0x138] sm:$0xff]
    %v1407 = vld [vmem:[#allocation2 + $0x140] sm:$0xff]
    %v1408 = vld [vmem:[#allocation2 + $0x148] sm:$0xff]
    %v1409 = vld [vmem:[#allocation2 + $0x150] sm:$0xff]
    %v1410 = vld [vmem:[#allocation2 + $0x158] sm:$0xff]
    %v1411 = vld [vmem:[#allocation2 + $0x160] sm:$0xff]
    %v1412 = vld [vmem:[#allocation2 + $0x168] sm:$0xff]
    %v1413 = vld [vmem:[#allocation2 + $0x170] sm:$0xff]
    %v1414 = vld [vmem:[#allocation2 + $0x178] sm:$0xff]
    %v1415 = vld [vmem:[#allocation2 + $0x180] sm:$0xff]
    %v1416 = vld [vmem:[%s2] sm:$0x1]
    %v1418 = vlaneseq
    %v1419 = vshrl.u32 %v1418, 7
    %v1420 = vsub.s32 0, %v1419
    %v1421 = vrot.slane %v1416, %v1420
    %v1423 = vadd.f32 %v1367, %v1421
    %v1424 = vadd.f32 %v1368, %v1421
    %v1425 = vadd.f32 %v1369, %v1421
    %v1426 = vadd.f32 %v1370, %v1421
    %v1427 = vadd.f32 %v1371, %v1421
    %v1428 = vadd.f32 %v1372, %v1421
    %v1429 = vadd.f32 %v1373, %v1421
    %v1430 = vadd.f32 %v1374, %v1421
    %v1431 = vadd.f32 %v1375, %v1421
    %v1432 = vadd.f32 %v1376, %v1421
    %v1433 = vadd.f32 %v1377, %v1421
    %v1434 = vadd.f32 %v1378, %v1421
    %v1435 = vadd.f32 %v1379, %v1421
    %v1436 = vadd.f32 %v1380, %v1421
    %v1437 = vadd.f32 %v1381, %v1421
    %v1438 = vadd.f32 %v1382, %v1421
    %v1439 = vadd.f32 %v1383, %v1421
    %v1440 = vadd.f32 %v1384, %v1421
    %v1441 = vadd.f32 %v1385, %v1421
    %v1442 = vadd.f32 %v1386, %v1421
    %v1443 = vadd.f32 %v1387, %v1421
    %v1444 = vadd.f32 %v1388, %v1421
    %v1445 = vadd.f32 %v1389, %v1421
    %v1446 = vadd.f32 %v1390, %v1421
    %v1447 = vadd.f32 %v1391, %v1421
    %v1448 = vadd.f32 %v1392, %v1421
    %v1449 = vadd.f32 %v1393, %v1421
    %v1450 = vadd.f32 %v1394, %v1421
    %v1451 = vadd.f32 %v1395, %v1421
    %v1452 = vadd.f32 %v1396, %v1421
    %v1453 = vadd.f32 %v1397, %v1421
    %v1454 = vadd.f32 %v1398, %v1421
    %v1455 = vadd.f32 %v1399, %v1421
    %v1456 = vadd.f32 %v1400, %v1421
    %v1457 = vadd.f32 %v1401, %v1421
    %v1458 = vadd.f32 %v1402, %v1421
    %v1459 = vadd.f32 %v1403, %v1421
    %v1460 = vadd.f32 %v1404, %v1421
    %v1461 = vadd.f32 %v1405, %v1421
    %v1462 = vadd.f32 %v1406, %v1421
    %v1463 = vadd.f32 %v1407, %v1421
    %v1464 = vadd.f32 %v1408, %v1421
    %v1465 = vadd.f32 %v1409, %v1421
    %v1466 = vadd.f32 %v1410, %v1421
    %v1467 = vadd.f32 %v1411, %v1421
    %v1468 = vadd.f32 %v1412, %v1421
    %v1469 = vadd.f32 %v1413, %v1421
    %v1470 = vadd.f32 %v1414, %v1421
    %v1471 = vadd.f32 %v1415, %v1421
    %v1472 = vmax.f32 %v1423, 0.0
    %v1473 = vmax.f32 %v1424, 0.0
    %v1474 = vmax.f32 %v1425, 0.0
    %v1475 = vmax.f32 %v1426, 0.0
    %v1476 = vmax.f32 %v1427, 0.0
    %v1477 = vmax.f32 %v1428, 0.0
    %v1478 = vmax.f32 %v1429, 0.0
    %v1479 = vmax.f32 %v1430, 0.0
    %v1480 = vmax.f32 %v1431, 0.0
    %v1481 = vmax.f32 %v1432, 0.0
    %v1482 = vmax.f32 %v1433, 0.0
    %v1483 = vmax.f32 %v1434, 0.0
    %v1484 = vmax.f32 %v1435, 0.0
    %v1485 = vmax.f32 %v1436, 0.0
    %v1486 = vmax.f32 %v1437, 0.0
    %v1487 = vmax.f32 %v1438, 0.0
    %v1488 = vmax.f32 %v1439, 0.0
    %v1489 = vmax.f32 %v1440, 0.0
    %v1490 = vmax.f32 %v1441, 0.0
    %v1491 = vmax.f32 %v1442, 0.0
    %v1492 = vmax.f32 %v1443, 0.0
    %v1493 = vmax.f32 %v1444, 0.0
    %v1494 = vmax.f32 %v1445, 0.0
    %v1495 = vmax.f32 %v1446, 0.0
    %v1496 = vmax.f32 %v1447, 0.0
    %v1497 = vmax.f32 %v1448, 0.0
    %v1498 = vmax.f32 %v1449, 0.0
    %v1499 = vmax.f32 %v1450, 0.0
    %v1500 = vmax.f32 %v1451, 0.0
    %v1501 = vmax.f32 %v1452, 0.0
    %v1502 = vmax.f32 %v1453, 0.0
    %v1503 = vmax.f32 %v1454, 0.0
    %v1504 = vmax.f32 %v1455, 0.0
    %v1505 = vmax.f32 %v1456, 0.0
    %v1506 = vmax.f32 %v1457, 0.0
    %v1507 = vmax.f32 %v1458, 0.0
    %v1508 = vmax.f32 %v1459, 0.0
    %v1509 = vmax.f32 %v1460, 0.0
    %v1510 = vmax.f32 %v1461, 0.0
    %v1511 = vmax.f32 %v1462, 0.0
    %v1512 = vmax.f32 %v1463, 0.0
    %v1513 = vmax.f32 %v1464, 0.0
    %v1514 = vmax.f32 %v1465, 0.0
    %v1515 = vmax.f32 %v1466, 0.0
    %v1516 = vmax.f32 %v1467, 0.0
    %v1517 = vmax.f32 %v1468, 0.0
    %v1518 = vmax.f32 %v1469, 0.0
    %v1519 = vmax.f32 %v1470, 0.0
    %v1520 = vmax.f32 %v1471, 0.0
    %1521 = vst [vmem:[%s3] sm:$0xff] %v1472
    %1522 = vst [vmem:[%s3 + $0x8] sm:$0xff] %v1473
    %1523 = vst [vmem:[%s3 + $0x10] sm:$0xff] %v1474
    %1524 = vst [vmem:[%s3 + $0x18] sm:$0xff] %v1475
    %1525 = vst [vmem:[%s3 + $0x20] sm:$0xff] %v1476
    %1526 = vst [vmem:[%s3 + $0x28] sm:$0xff] %v1477
    %1527 = vst [vmem:[%s3 + $0x30] sm:$0xff] %v1478
    %1528 = vst [vmem:[%s3 + $0x38] sm:$0xff] %v1479
    %1529 = vst [vmem:[%s3 + $0x40] sm:$0xff] %v1480
    %1530 = vst [vmem:[%s3 + $0x48] sm:$0xff] %v1481
    %1531 = vst [vmem:[%s3 + $0x50] sm:$0xff] %v1482
    %1532 = vst [vmem:[%s3 + $0x58] sm:$0xff] %v1483
    %1533 = vst [vmem:[%s3 + $0x60] sm:$0xff] %v1484
    %1534 = vst [vmem:[%s3 + $0x68] sm:$0xff] %v1485
    %1535 = vst [vmem:[%s3 + $0x70] sm:$0xff] %v1486
    %1536 = vst [vmem:[%s3 + $0x78] sm:$0xff] %v1487
    %1537 = vst [vmem:[%s3 + $0x80] sm:$0xff] %v1488
    %1538 = vst [vmem:[%s3 + $0x88] sm:$0xff] %v1489
    %1539 = vst [vmem:[%s3 + $0x90] sm:$0xff] %v1490
    %1540 = vst [vmem:[%s3 + $0x98] sm:$0xff] %v1491
    %1541 = vst [vmem:[%s3 + $0xa0] sm:$0xff] %v1492
    %1542 = vst [vmem:[%s3 + $0xa8] sm:$0xff] %v1493
    %1543 = vst [vmem:[%s3 + $0xb0] sm:$0xff] %v1494
    %1544 = vst [vmem:[%s3 + $0xb8] sm:$0xff] %v1495
    %1545 = vst [vmem:[%s3 + $0xc0] sm:$0xff] %v1496
    %1546 = vst [vmem:[%s3 + $0xc8] sm:$0xff] %v1497
    %1547 = vst [vmem:[%s3 + $0xd0] sm:$0xff] %v1498
    %1548 = vst [vmem:[%s3 + $0xd8] sm:$0xff] %v1499
    %1549 = vst [vmem:[%s3 + $0xe0] sm:$0xff] %v1500
    %1550 = vst [vmem:[%s3 + $0xe8] sm:$0xff] %v1501
    %1551 = vst [vmem:[%s3 + $0xf0] sm:$0xff] %v1502
    %1552 = vst [vmem:[%s3 + $0xf8] sm:$0xff] %v1503
    %1553 = vst [vmem:[%s3 + $0x100] sm:$0xff] %v1504
    %1554 = vst [vmem:[%s3 + $0x108] sm:$0xff] %v1505
    %1555 = vst [vmem:[%s3 + $0x110] sm:$0xff] %v1506
    %1556 = vst [vmem:[%s3 + $0x118] sm:$0xff] %v1507
    %1557 = vst [vmem:[%s3 + $0x120] sm:$0xff] %v1508
    %1558 = vst [vmem:[%s3 + $0x128] sm:$0xff] %v1509
    %1559 = vst [vmem:[%s3 + $0x130] sm:$0xff] %v1510
    %1560 = vst [vmem:[%s3 + $0x138] sm:$0xff] %v1511
    %1561 = vst [vmem:[%s3 + $0x140] sm:$0xff] %v1512
    %1562 = vst [vmem:[%s3 + $0x148] sm:$0xff] %v1513
    %1563 = vst [vmem:[%s3 + $0x150] sm:$0xff] %v1514
    %1564 = vst [vmem:[%s3 + $0x158] sm:$0xff] %v1515
    %1565 = vst [vmem:[%s3 + $0x160] sm:$0xff] %v1516
    %1566 = vst [vmem:[%s3 + $0x168] sm:$0xff] %v1517
    %1567 = vst [vmem:[%s3 + $0x170] sm:$0xff] %v1518
    %1568 = vst [vmem:[%s3 + $0x178] sm:$0xff] %v1519
    %1569 = vst [vmem:[%s3 + $0x180] sm:$0xff] %v1520
  $region21: #{encoder_forward.8} parent=0 // pred_fallthru
    _
  // Predicated region
  $region22: #{encoder_forward.8} parent=0 // pred_check
    _
  $region23: #{encoder_forward.8} parent=0 // pred_check_branch
    %1571 = sbr.rel (0) target = $region25
  $region24: #{encoder_forward.8} parent=0 // pred_region
    _
  $region25: #{encoder_forward.8} parent=0 // pred_fallthru
    _
  // Predicated region
  $region26: #{encoder_forward.8} parent=0 // pred_check
    _
  $region27: #{encoder_forward.8} parent=0 // pred_check_branch
    %1573 = sbr.rel (0) target = $region29
  $region28: #{encoder_forward.8} parent=0 // pred_region
    _
  $region29: #{encoder_forward.8} parent=0 // pred_fallthru
    _

// kernel: encoder_forward.9
$region0: #{encoder_forward.9}
  #allocation0 [shape = 'u32[]', space=smem, size = 0x4, offset = 0x4, fixed_abs, tag = 'smem constant byte address 0x4 - core index']
  #allocation1 [shape = 'u32[144,128]{1,0:T(1,128)}', space=vmem, size = 0x12000, scoped, tag = 'internal scratch']
  %s0 = inlined_call_operand.vmem [shape: f32[14,7,2,2,128], index: 0, kind: input, shape index: {}]
  %s1 = inlined_call_operand.vmem [shape: f32[6,6,2,128], index: 1, kind: output, shape index: {}]
  %s2 = sld [smem:[#allocation0]]
  $region14: #{encoder_forward.9} parent=0
    _
  %s4 = ssub.s32 1, %s2
  %s5 = scalar_select 0, %s4, %s2
  // Predicated region
  $region2: #{encoder_forward.9} parent=0 // pred_check
    _
  $region3: #{encoder_forward.9} parent=0 // pred_check_branch
    %7 = sbr.rel (0) target = $region5
  $region4: #{encoder_forward.9} parent=0 // pred_region
    _
  $region5: #{encoder_forward.9} parent=0 // pred_fallthru
    _
  %v8 = vld [vmem:[%s0] sm:$0x3]
  %v9 = vld [vmem:[%s0 + $0x4] sm:$0x3]
  %v10 = vld [vmem:[%s0 + $0x8] sm:$0x3]
  %v11 = vld [vmem:[%s0 + $0xc] sm:$0x3]
  %v12 = vld [vmem:[%s0 + $0x10] sm:$0x3]
  %v13 = vld [vmem:[%s0 + $0x14] sm:$0x3]
  %s14 = scalar_lea.vmem %s0, 2
  %v15 = vld [vmem:[%s14] sm:$0x3]
  %v16 = vld [vmem:[%s14 + $0x4] sm:$0x3]
  %v17 = vld [vmem:[%s14 + $0x8] sm:$0x3]
  %v18 = vld [vmem:[%s14 + $0xc] sm:$0x3]
  %v19 = vld [vmem:[%s14 + $0x10] sm:$0x3]
  %v20 = vld [vmem:[%s14 + $0x14] sm:$0x3]
  %v21 = vmax.f32 %v8, %v15
  %v22 = vmax.f32 %v9, %v16
  %v23 = vmax.f32 %v10, %v17
  %v24 = vmax.f32 %v11, %v18
  %v25 = vmax.f32 %v12, %v19
  %v26 = vmax.f32 %v13, %v20
  %s27 = scalar_lea.vmem %s0, 4
  %v28 = vld [vmem:[%s27] sm:$0x3]
  %v29 = vld [vmem:[%s27 + $0x4] sm:$0x3]
  %v30 = vld [vmem:[%s27 + $0x8] sm:$0x3]
  %v31 = vld [vmem:[%s27 + $0xc] sm:$0x3]
  %v32 = vld [vmem:[%s27 + $0x10] sm:$0x3]
  %v33 = vld [vmem:[%s27 + $0x14] sm:$0x3]
  %v34 = vmax.f32 %v21, %v28
  %v35 = vmax.f32 %v22, %v29
  %v36 = vmax.f32 %v23, %v30
  %v37 = vmax.f32 %v24, %v31
  %v38 = vmax.f32 %v25, %v32
  %v39 = vmax.f32 %v26, %v33
  %s40 = scalar_lea.vmem %s0, 28
  %v41 = vld [vmem:[%s40] sm:$0x3]
  %v42 = vld [vmem:[%s40 + $0x4] sm:$0x3]
  %v43 = vld [vmem:[%s40 + $0x8] sm:$0x3]
  %v44 = vld [vmem:[%s40 + $0xc] sm:$0x3]
  %v45 = vld [vmem:[%s40 + $0x10] sm:$0x3]
  %v46 = vld [vmem:[%s40 + $0x14] sm:$0x3]
  %v47 = vmax.f32 %v34, %v41
  %v48 = vmax.f32 %v35, %v42
  %v49 = vmax.f32 %v36, %v43
  %v50 = vmax.f32 %v37, %v44
  %v51 = vmax.f32 %v38, %v45
  %v52 = vmax.f32 %v39, %v46
  %s53 = scalar_lea.vmem %s0, 30
  %v54 = vld [vmem:[%s53] sm:$0x3]
  %v55 = vld [vmem:[%s53 + $0x4] sm:$0x3]
  %v56 = vld [vmem:[%s53 + $0x8] sm:$0x3]
  %v57 = vld [vmem:[%s53 + $0xc] sm:$0x3]
  %v58 = vld [vmem:[%s53 + $0x10] sm:$0x3]
  %v59 = vld [vmem:[%s53 + $0x14] sm:$0x3]
  %v60 = vmax.f32 %v47, %v54
  %v61 = vmax.f32 %v48, %v55
  %v62 = vmax.f32 %v49, %v56
  %v63 = vmax.f32 %v50, %v57
  %v64 = vmax.f32 %v51, %v58
  %v65 = vmax.f32 %v52, %v59
  %s66 = scalar_lea.vmem %s0, 32
  %v67 = vld [vmem:[%s66] sm:$0x3]
  %v68 = vld [vmem:[%s66 + $0x4] sm:$0x3]
  %v69 = vld [vmem:[%s66 + $0x8] sm:$0x3]
  %v70 = vld [vmem:[%s66 + $0xc] sm:$0x3]
  %v71 = vld [vmem:[%s66 + $0x10] sm:$0x3]
  %v72 = vld [vmem:[%s66 + $0x14] sm:$0x3]
  %v73 = vmax.f32 %v60, %v67
  %v74 = vmax.f32 %v61, %v68
  %v75 = vmax.f32 %v62, %v69
  %v76 = vmax.f32 %v63, %v70
  %v77 = vmax.f32 %v64, %v71
  %v78 = vmax.f32 %v65, %v72
  %s79 = scalar_lea.vmem %s0, 56
  %v80 = vld [vmem:[%s79] sm:$0x3]
  %v81 = vld [vmem:[%s79 + $0x4] sm:$0x3]
  %v82 = vld [vmem:[%s79 + $0x8] sm:$0x3]
  %v83 = vld [vmem:[%s79 + $0xc] sm:$0x3]
  %v84 = vld [vmem:[%s79 + $0x10] sm:$0x3]
  %v85 = vld [vmem:[%s79 + $0x14] sm:$0x3]
  %v86 = vmax.f32 %v73, %v80
  %v87 = vmax.f32 %v74, %v81
  %v88 = vmax.f32 %v75, %v82
  %v89 = vmax.f32 %v76, %v83
  %v90 = vmax.f32 %v77, %v84
  %v91 = vmax.f32 %v78, %v85
  %s92 = scalar_lea.vmem %s0, 58
  %v93 = vld [vmem:[%s92] sm:$0x3]
  %v94 = vld [vmem:[%s92 + $0x4] sm:$0x3]
  %v95 = vld [vmem:[%s92 + $0x8] sm:$0x3]
  %v96 = vld [vmem:[%s92 + $0xc] sm:$0x3]
  %v97 = vld [vmem:[%s92 + $0x10] sm:$0x3]
  %v98 = vld [vmem:[%s92 + $0x14] sm:$0x3]
  %v99 = vmax.f32 %v86, %v93
  %v100 = vmax.f32 %v87, %v94
  %v101 = vmax.f32 %v88, %v95
  %v102 = vmax.f32 %v89, %v96
  %v103 = vmax.f32 %v90, %v97
  %v104 = vmax.f32 %v91, %v98
  %s105 = scalar_lea.vmem %s0, 60
  %v106 = vld [vmem:[%s105] sm:$0x3]
  %v107 = vld [vmem:[%s105 + $0x4] sm:$0x3]
  %v108 = vld [vmem:[%s105 + $0x8] sm:$0x3]
  %v109 = vld [vmem:[%s105 + $0xc] sm:$0x3]
  %v110 = vld [vmem:[%s105 + $0x10] sm:$0x3]
  %v111 = vld [vmem:[%s105 + $0x14] sm:$0x3]
  %v112 = vmax.f32 %v99, %v106
  %v113 = vmax.f32 %v100, %v107
  %v114 = vmax.f32 %v101, %v108
  %v115 = vmax.f32 %v102, %v109
  %v116 = vmax.f32 %v103, %v110
  %v117 = vmax.f32 %v104, %v111
  %118 = vst [vmem:[%s1] sm:$0x3] %v112
  %119 = vst [vmem:[%s1 + $0x2] sm:$0x3] %v113
  %120 = vst [vmem:[%s1 + $0x4] sm:$0x3] %v114
  %121 = vst [vmem:[%s1 + $0x6] sm:$0x3] %v115
  %122 = vst [vmem:[%s1 + $0x8] sm:$0x3] %v116
  %123 = vst [vmem:[%s1 + $0xa] sm:$0x3] %v117
  %v124 = vld [vmem:[%s79] sm:$0x3]
  %v125 = vld [vmem:[%s79 + $0x4] sm:$0x3]
  %v126 = vld [vmem:[%s79 + $0x8] sm:$0x3]
  %v127 = vld [vmem:[%s79 + $0xc] sm:$0x3]
  %v128 = vld [vmem:[%s79 + $0x10] sm:$0x3]
  %v129 = vld [vmem:[%s79 + $0x14] sm:$0x3]
  %v130 = vld [vmem:[%s92] sm:$0x3]
  %v131 = vld [vmem:[%s92 + $0x4] sm:$0x3]
  %v132 = vld [vmem:[%s92 + $0x8] sm:$0x3]
  %v133 = vld [vmem:[%s92 + $0xc] sm:$0x3]
  %v134 = vld [vmem:[%s92 + $0x10] sm:$0x3]
  %v135 = vld [vmem:[%s92 + $0x14] sm:$0x3]
  %v136 = vmax.f32 %v124, %v130
  %v137 = vmax.f32 %v125, %v131
  %v138 = vmax.f32 %v126, %v132
  %v139 = vmax.f32 %v127, %v133
  %v140 = vmax.f32 %v128, %v134
  %v141 = vmax.f32 %v129, %v135
  %v142 = vld [vmem:[%s105] sm:$0x3]
  %v143 = vld [vmem:[%s105 + $0x4] sm:$0x3]
  %v144 = vld [vmem:[%s105 + $0x8] sm:$0x3]
  %v145 = vld [vmem:[%s105 + $0xc] sm:$0x3]
  %v146 = vld [vmem:[%s105 + $0x10] sm:$0x3]
  %v147 = vld [vmem:[%s105 + $0x14] sm:$0x3]
  %v148 = vmax.f32 %v136, %v142
  %v149 = vmax.f32 %v137, %v143
  %v150 = vmax.f32 %v138, %v144
  %v151 = vmax.f32 %v139, %v145
  %v152 = vmax.f32 %v140, %v146
  %v153 = vmax.f32 %v141, %v147
  %s154 = scalar_lea.vmem %s0, 84
  %v155 = vld [vmem:[%s154] sm:$0x3]
  %v156 = vld [vmem:[%s154 + $0x4] sm:$0x3]
  %v157 = vld [vmem:[%s154 + $0x8] sm:$0x3]
  %v158 = vld [vmem:[%s154 + $0xc] sm:$0x3]
  %v159 = vld [vmem:[%s154 + $0x10] sm:$0x3]
  %v160 = vld [vmem:[%s154 + $0x14] sm:$0x3]
  %v161 = vmax.f32 %v148, %v155
  %v162 = vmax.f32 %v149, %v156
  %v163 = vmax.f32 %v150, %v157
  %v164 = vmax.f32 %v151, %v158
  %v165 = vmax.f32 %v152, %v159
  %v166 = vmax.f32 %v153, %v160
  %s167 = scalar_lea.vmem %s0, 86
  %v168 = vld [vmem:[%s167] sm:$0x3]
  %v169 = vld [vmem:[%s167 + $0x4] sm:$0x3]
  %v170 = vld [vmem:[%s167 + $0x8] sm:$0x3]
  %v171 = vld [vmem:[%s167 + $0xc] sm:$0x3]
  %v172 = vld [vmem:[%s167 + $0x10] sm:$0x3]
  %v173 = vld [vmem:[%s167 + $0x14] sm:$0x3]
  %v174 = vmax.f32 %v161, %v168
  %v175 = vmax.f32 %v162, %v169
  %v176 = vmax.f32 %v163, %v170
  %v177 = vmax.f32 %v164, %v171
  %v178 = vmax.f32 %v165, %v172
  %v179 = vmax.f32 %v166, %v173
  %s180 = scalar_lea.vmem %s0, 88
  %v181 = vld [vmem:[%s180] sm:$0x3]
  %v182 = vld [vmem:[%s180 + $0x4] sm:$0x3]
  %v183 = vld [vmem:[%s180 + $0x8] sm:$0x3]
  %v184 = vld [vmem:[%s180 + $0xc] sm:$0x3]
  %v185 = vld [vmem:[%s180 + $0x10] sm:$0x3]
  %v186 = vld [vmem:[%s180 + $0x14] sm:$0x3]
  %v187 = vmax.f32 %v174, %v181
  %v188 = vmax.f32 %v175, %v182
  %v189 = vmax.f32 %v176, %v183
  %v190 = vmax.f32 %v177, %v184
  %v191 = vmax.f32 %v178, %v185
  %v192 = vmax.f32 %v179, %v186
  %s193 = scalar_lea.vmem %s0, 112
  %v194 = vld [vmem:[%s193] sm:$0x3]
  %v195 = vld [vmem:[%s193 + $0x4] sm:$0x3]
  %v196 = vld [vmem:[%s193 + $0x8] sm:$0x3]
  %v197 = vld [vmem:[%s193 + $0xc] sm:$0x3]
  %v198 = vld [vmem:[%s193 + $0x10] sm:$0x3]
  %v199 = vld [vmem:[%s193 + $0x14] sm:$0x3]
  %v200 = vmax.f32 %v187, %v194
  %v201 = vmax.f32 %v188, %v195
  %v202 = vmax.f32 %v189, %v196
  %v203 = vmax.f32 %v190, %v197
  %v204 = vmax.f32 %v191, %v198
  %v205 = vmax.f32 %v192, %v199
  %s206 = scalar_lea.vmem %s0, 114
  %v207 = vld [vmem:[%s206] sm:$0x3]
  %v208 = vld [vmem:[%s206 + $0x4] sm:$0x3]
  %v209 = vld [vmem:[%s206 + $0x8] sm:$0x3]
  %v210 = vld [vmem:[%s206 + $0xc] sm:$0x3]
  %v211 = vld [vmem:[%s206 + $0x10] sm:$0x3]
  %v212 = vld [vmem:[%s206 + $0x14] sm:$0x3]
  %v213 = vmax.f32 %v200, %v207
  %v214 = vmax.f32 %v201, %v208
  %v215 = vmax.f32 %v202, %v209
  %v216 = vmax.f32 %v203, %v210
  %v217 = vmax.f32 %v204, %v211
  %v218 = vmax.f32 %v205, %v212
  %s219 = scalar_lea.vmem %s0, 116
  %v220 = vld [vmem:[%s219] sm:$0x3]
  %v221 = vld [vmem:[%s219 + $0x4] sm:$0x3]
  %v222 = vld [vmem:[%s219 + $0x8] sm:$0x3]
  %v223 = vld [vmem:[%s219 + $0xc] sm:$0x3]
  %v224 = vld [vmem:[%s219 + $0x10] sm:$0x3]
  %v225 = vld [vmem:[%s219 + $0x14] sm:$0x3]
  %v226 = vmax.f32 %v213, %v220
  %v227 = vmax.f32 %v214, %v221
  %v228 = vmax.f32 %v215, %v222
  %v229 = vmax.f32 %v216, %v223
  %v230 = vmax.f32 %v217, %v224
  %v231 = vmax.f32 %v218, %v225
  %s232 = scalar_lea.vmem %s1, 12
  %233 = vst [vmem:[%s232] sm:$0x3] %v226
  %234 = vst [vmem:[%s232 + $0x2] sm:$0x3] %v227
  %235 = vst [vmem:[%s232 + $0x4] sm:$0x3] %v228
  %236 = vst [vmem:[%s232 + $0x6] sm:$0x3] %v229
  %237 = vst [vmem:[%s232 + $0x8] sm:$0x3] %v230
  %238 = vst [vmem:[%s232 + $0xa] sm:$0x3] %v231
  %v239 = vld [vmem:[%s193] sm:$0x3]
  %v240 = vld [vmem:[%s193 + $0x4] sm:$0x3]
  %v241 = vld [vmem:[%s193 + $0x8] sm:$0x3]
  %v242 = vld [vmem:[%s193 + $0xc] sm:$0x3]
  %v243 = vld [vmem:[%s193 + $0x10] sm:$0x3]
  %v244 = vld [vmem:[%s193 + $0x14] sm:$0x3]
  %v245 = vld [vmem:[%s206] sm:$0x3]
  %v246 = vld [vmem:[%s206 + $0x4] sm:$0x3]
  %v247 = vld [vmem:[%s206 + $0x8] sm:$0x3]
  %v248 = vld [vmem:[%s206 + $0xc] sm:$0x3]
  %v249 = vld [vmem:[%s206 + $0x10] sm:$0x3]
  %v250 = vld [vmem:[%s206 + $0x14] sm:$0x3]
  %v251 = vmax.f32 %v239, %v245
  %v252 = vmax.f32 %v240, %v246
  %v253 = vmax.f32 %v241, %v247
  %v254 = vmax.f32 %v242, %v248
  %v255 = vmax.f32 %v243, %v249
  %v256 = vmax.f32 %v244, %v250
  %v257 = vld [vmem:[%s219] sm:$0x3]
  %v258 = vld [vmem:[%s219 + $0x4] sm:$0x3]
  %v259 = vld [vmem:[%s219 + $0x8] sm:$0x3]
  %v260 = vld [vmem:[%s219 + $0xc] sm:$0x3]
  %v261 = vld [vmem:[%s219 + $0x10] sm:$0x3]
  %v262 = vld [vmem:[%s219 + $0x14] sm:$0x3]
  %v263 = vmax.f32 %v251, %v257
  %v264 = vmax.f32 %v252, %v258
  %v265 = vmax.f32 %v253, %v259
  %v266 = vmax.f32 %v254, %v260
  %v267 = vmax.f32 %v255, %v261
  %v268 = vmax.f32 %v256, %v262
  %s269 = scalar_lea.vmem %s0, 140
  %v270 = vld [vmem:[%s269] sm:$0x3]
  %v271 = vld [vmem:[%s269 + $0x4] sm:$0x3]
  %v272 = vld [vmem:[%s269 + $0x8] sm:$0x3]
  %v273 = vld [vmem:[%s269 + $0xc] sm:$0x3]
  %v274 = vld [vmem:[%s269 + $0x10] sm:$0x3]
  %v275 = vld [vmem:[%s269 + $0x14] sm:$0x3]
  %v276 = vmax.f32 %v263, %v270
  %v277 = vmax.f32 %v264, %v271
  %v278 = vmax.f32 %v265, %v272
  %v279 = vmax.f32 %v266, %v273
  %v280 = vmax.f32 %v267, %v274
  %v281 = vmax.f32 %v268, %v275
  %s282 = scalar_lea.vmem %s0, 142
  %v283 = vld [vmem:[%s282] sm:$0x3]
  %v284 = vld [vmem:[%s282 + $0x4] sm:$0x3]
  %v285 = vld [vmem:[%s282 + $0x8] sm:$0x3]
  %v286 = vld [vmem:[%s282 + $0xc] sm:$0x3]
  %v287 = vld [vmem:[%s282 + $0x10] sm:$0x3]
  %v288 = vld [vmem:[%s282 + $0x14] sm:$0x3]
  %v289 = vmax.f32 %v276, %v283
  %v290 = vmax.f32 %v277, %v284
  %v291 = vmax.f32 %v278, %v285
  %v292 = vmax.f32 %v279, %v286
  %v293 = vmax.f32 %v280, %v287
  %v294 = vmax.f32 %v281, %v288
  %s295 = scalar_lea.vmem %s0, 144
  %v296 = vld [vmem:[%s295] sm:$0x3]
  %v297 = vld [vmem:[%s295 + $0x4] sm:$0x3]
  %v298 = vld [vmem:[%s295 + $0x8] sm:$0x3]
  %v299 = vld [vmem:[%s295 + $0xc] sm:$0x3]
  %v300 = vld [vmem:[%s295 + $0x10] sm:$0x3]
  %v301 = vld [vmem:[%s295 + $0x14] sm:$0x3]
  %v302 = vmax.f32 %v289, %v296
  %v303 = vmax.f32 %v290, %v297
  %v304 = vmax.f32 %v291, %v298
  %v305 = vmax.f32 %v292, %v299
  %v306 = vmax.f32 %v293, %v300
  %v307 = vmax.f32 %v294, %v301
  %s308 = scalar_lea.vmem %s0, 168
  %v309 = vld [vmem:[%s308] sm:$0x3]
  %v310 = vld [vmem:[%s308 + $0x4] sm:$0x3]
  %v311 = vld [vmem:[%s308 + $0x8] sm:$0x3]
  %v312 = vld [vmem:[%s308 + $0xc] sm:$0x3]
  %v313 = vld [vmem:[%s308 + $0x10] sm:$0x3]
  %v314 = vld [vmem:[%s308 + $0x14] sm:$0x3]
  %v315 = vmax.f32 %v302, %v309
  %v316 = vmax.f32 %v303, %v310
  %v317 = vmax.f32 %v304, %v311
  %v318 = vmax.f32 %v305, %v312
  %v319 = vmax.f32 %v306, %v313
  %v320 = vmax.f32 %v307, %v314
  %s321 = scalar_lea.vmem %s0, 170
  %v322 = vld [vmem:[%s321] sm:$0x3]
  %v323 = vld [vmem:[%s321 + $0x4] sm:$0x3]
  %v324 = vld [vmem:[%s321 + $0x8] sm:$0x3]
  %v325 = vld [vmem:[%s321 + $0xc] sm:$0x3]
  %v326 = vld [vmem:[%s321 + $0x10] sm:$0x3]
  %v327 = vld [vmem:[%s321 + $0x14] sm:$0x3]
  %v328 = vmax.f32 %v315, %v322
  %v329 = vmax.f32 %v316, %v323
  %v330 = vmax.f32 %v317, %v324
  %v331 = vmax.f32 %v318, %v325
  %v332 = vmax.f32 %v319, %v326
  %v333 = vmax.f32 %v320, %v327
  %s334 = scalar_lea.vmem %s0, 172
  %v335 = vld [vmem:[%s334] sm:$0x3]
  %v336 = vld [vmem:[%s334 + $0x4] sm:$0x3]
  %v337 = vld [vmem:[%s334 + $0x8] sm:$0x3]
  %v338 = vld [vmem:[%s334 + $0xc] sm:$0x3]
  %v339 = vld [vmem:[%s334 + $0x10] sm:$0x3]
  %v340 = vld [vmem:[%s334 + $0x14] sm:$0x3]
  %v341 = vmax.f32 %v328, %v335
  %v342 = vmax.f32 %v329, %v336
  %v343 = vmax.f32 %v330, %v337
  %v344 = vmax.f32 %v331, %v338
  %v345 = vmax.f32 %v332, %v339
  %v346 = vmax.f32 %v333, %v340
  %s347 = scalar_lea.vmem %s1, 24
  %348 = vst [vmem:[%s347] sm:$0x3] %v341
  %349 = vst [vmem:[%s347 + $0x2] sm:$0x3] %v342
  %350 = vst [vmem:[%s347 + $0x4] sm:$0x3] %v343
  %351 = vst [vmem:[%s347 + $0x6] sm:$0x3] %v344
  %352 = vst [vmem:[%s347 + $0x8] sm:$0x3] %v345
  %353 = vst [vmem:[%s347 + $0xa] sm:$0x3] %v346
  %v354 = vld [vmem:[%s308] sm:$0x3]
  %v355 = vld [vmem:[%s308 + $0x4] sm:$0x3]
  %v356 = vld [vmem:[%s308 + $0x8] sm:$0x3]
  %v357 = vld [vmem:[%s308 + $0xc] sm:$0x3]
  %v358 = vld [vmem:[%s308 + $0x10] sm:$0x3]
  %v359 = vld [vmem:[%s308 + $0x14] sm:$0x3]
  %v360 = vld [vmem:[%s321] sm:$0x3]
  %v361 = vld [vmem:[%s321 + $0x4] sm:$0x3]
  %v362 = vld [vmem:[%s321 + $0x8] sm:$0x3]
  %v363 = vld [vmem:[%s321 + $0xc] sm:$0x3]
  %v364 = vld [vmem:[%s321 + $0x10] sm:$0x3]
  %v365 = vld [vmem:[%s321 + $0x14] sm:$0x3]
  %v366 = vmax.f32 %v354, %v360
  %v367 = vmax.f32 %v355, %v361
  %v368 = vmax.f32 %v356, %v362
  %v369 = vmax.f32 %v357, %v363
  %v370 = vmax.f32 %v358, %v364
  %v371 = vmax.f32 %v359, %v365
  %v372 = vld [vmem:[%s334] sm:$0x3]
  %v373 = vld [vmem:[%s334 + $0x4] sm:$0x3]
  %v374 = vld [vmem:[%s334 + $0x8] sm:$0x3]
  %v375 = vld [vmem:[%s334 + $0xc] sm:$0x3]
  %v376 = vld [vmem:[%s334 + $0x10] sm:$0x3]
  %v377 = vld [vmem:[%s334 + $0x14] sm:$0x3]
  %v378 = vmax.f32 %v366, %v372
  %v379 = vmax.f32 %v367, %v373
  %v380 = vmax.f32 %v368, %v374
  %v381 = vmax.f32 %v369, %v375
  %v382 = vmax.f32 %v370, %v376
  %v383 = vmax.f32 %v371, %v377
  %s384 = scalar_lea.vmem %s0, 196
  %v385 = vld [vmem:[%s384] sm:$0x3]
  %v386 = vld [vmem:[%s384 + $0x4] sm:$0x3]
  %v387 = vld [vmem:[%s384 + $0x8] sm:$0x3]
  %v388 = vld [vmem:[%s384 + $0xc] sm:$0x3]
  %v389 = vld [vmem:[%s384 + $0x10] sm:$0x3]
  %v390 = vld [vmem:[%s384 + $0x14] sm:$0x3]
  %v391 = vmax.f32 %v378, %v385
  %v392 = vmax.f32 %v379, %v386
  %v393 = vmax.f32 %v380, %v387
  %v394 = vmax.f32 %v381, %v388
  %v395 = vmax.f32 %v382, %v389
  %v396 = vmax.f32 %v383, %v390
  %s397 = scalar_lea.vmem %s0, 198
  %v398 = vld [vmem:[%s397] sm:$0x3]
  %v399 = vld [vmem:[%s397 + $0x4] sm:$0x3]
  %v400 = vld [vmem:[%s397 + $0x8] sm:$0x3]
  %v401 = vld [vmem:[%s397 + $0xc] sm:$0x3]
  %v402 = vld [vmem:[%s397 + $0x10] sm:$0x3]
  %v403 = vld [vmem:[%s397 + $0x14] sm:$0x3]
  %v404 = vmax.f32 %v391, %v398
  %v405 = vmax.f32 %v392, %v399
  %v406 = vmax.f32 %v393, %v400
  %v407 = vmax.f32 %v394, %v401
  %v408 = vmax.f32 %v395, %v402
  %v409 = vmax.f32 %v396, %v403
  %s410 = scalar_lea.vmem %s0, 200
  %v411 = vld [vmem:[%s410] sm:$0x3]
  %v412 = vld [vmem:[%s410 + $0x4] sm:$0x3]
  %v413 = vld [vmem:[%s410 + $0x8] sm:$0x3]
  %v414 = vld [vmem:[%s410 + $0xc] sm:$0x3]
  %v415 = vld [vmem:[%s410 + $0x10] sm:$0x3]
  %v416 = vld [vmem:[%s410 + $0x14] sm:$0x3]
  %v417 = vmax.f32 %v404, %v411
  %v418 = vmax.f32 %v405, %v412
  %v419 = vmax.f32 %v406, %v413
  %v420 = vmax.f32 %v407, %v414
  %v421 = vmax.f32 %v408, %v415
  %v422 = vmax.f32 %v409, %v416
  %s423 = scalar_lea.vmem %s0, 224
  %v424 = vld [vmem:[%s423] sm:$0x3]
  %v425 = vld [vmem:[%s423 + $0x4] sm:$0x3]
  %v426 = vld [vmem:[%s423 + $0x8] sm:$0x3]
  %v427 = vld [vmem:[%s423 + $0xc] sm:$0x3]
  %v428 = vld [vmem:[%s423 + $0x10] sm:$0x3]
  %v429 = vld [vmem:[%s423 + $0x14] sm:$0x3]
  %v430 = vmax.f32 %v417, %v424
  %v431 = vmax.f32 %v418, %v425
  %v432 = vmax.f32 %v419, %v426
  %v433 = vmax.f32 %v420, %v427
  %v434 = vmax.f32 %v421, %v428
  %v435 = vmax.f32 %v422, %v429
  %s436 = scalar_lea.vmem %s0, 226
  %v437 = vld [vmem:[%s436] sm:$0x3]
  %v438 = vld [vmem:[%s436 + $0x4] sm:$0x3]
  %v439 = vld [vmem:[%s436 + $0x8] sm:$0x3]
  %v440 = vld [vmem:[%s436 + $0xc] sm:$0x3]
  %v441 = vld [vmem:[%s436 + $0x10] sm:$0x3]
  %v442 = vld [vmem:[%s436 + $0x14] sm:$0x3]
  %v443 = vmax.f32 %v430, %v437
  %v444 = vmax.f32 %v431, %v438
  %v445 = vmax.f32 %v432, %v439
  %v446 = vmax.f32 %v433, %v440
  %v447 = vmax.f32 %v434, %v441
  %v448 = vmax.f32 %v435, %v442
  %s449 = scalar_lea.vmem %s0, 228
  %v450 = vld [vmem:[%s449] sm:$0x3]
  %v451 = vld [vmem:[%s449 + $0x4] sm:$0x3]
  %v452 = vld [vmem:[%s449 + $0x8] sm:$0x3]
  %v453 = vld [vmem:[%s449 + $0xc] sm:$0x3]
  %v454 = vld [vmem:[%s449 + $0x10] sm:$0x3]
  %v455 = vld [vmem:[%s449 + $0x14] sm:$0x3]
  %v456 = vmax.f32 %v443, %v450
  %v457 = vmax.f32 %v444, %v451
  %v458 = vmax.f32 %v445, %v452
  %v459 = vmax.f32 %v446, %v453
  %v460 = vmax.f32 %v447, %v454
  %v461 = vmax.f32 %v448, %v455
  %s462 = scalar_lea.vmem %s1, 36
  %463 = vst [vmem:[%s462] sm:$0x3] %v456
  %464 = vst [vmem:[%s462 + $0x2] sm:$0x3] %v457
  %465 = vst [vmem:[%s462 + $0x4] sm:$0x3] %v458
  %466 = vst [vmem:[%s462 + $0x6] sm:$0x3] %v459
  %467 = vst [vmem:[%s462 + $0x8] sm:$0x3] %v460
  %468 = vst [vmem:[%s462 + $0xa] sm:$0x3] %v461
  %v469 = vld [vmem:[%s423] sm:$0x3]
  %v470 = vld [vmem:[%s423 + $0x4] sm:$0x3]
  %v471 = vld [vmem:[%s423 + $0x8] sm:$0x3]
  %v472 = vld [vmem:[%s423 + $0xc] sm:$0x3]
  %v473 = vld [vmem:[%s423 + $0x10] sm:$0x3]
  %v474 = vld [vmem:[%s423 + $0x14] sm:$0x3]
  %v475 = vld [vmem:[%s436] sm:$0x3]
  %v476 = vld [vmem:[%s436 + $0x4] sm:$0x3]
  %v477 = vld [vmem:[%s436 + $0x8] sm:$0x3]
  %v478 = vld [vmem:[%s436 + $0xc] sm:$0x3]
  %v479 = vld [vmem:[%s436 + $0x10] sm:$0x3]
  %v480 = vld [vmem:[%s436 + $0x14] sm:$0x3]
  %v481 = vmax.f32 %v469, %v475
  %v482 = vmax.f32 %v470, %v476
  %v483 = vmax.f32 %v471, %v477
  %v484 = vmax.f32 %v472, %v478
  %v485 = vmax.f32 %v473, %v479
  %v486 = vmax.f32 %v474, %v480
  %v487 = vld [vmem:[%s449] sm:$0x3]
  %v488 = vld [vmem:[%s449 + $0x4] sm:$0x3]
  %v489 = vld [vmem:[%s449 + $0x8] sm:$0x3]
  %v490 = vld [vmem:[%s449 + $0xc] sm:$0x3]
  %v491 = vld [vmem:[%s449 + $0x10] sm:$0x3]
  %v492 = vld [vmem:[%s449 + $0x14] sm:$0x3]
  %v493 = vmax.f32 %v481, %v487
  %v494 = vmax.f32 %v482, %v488
  %v495 = vmax.f32 %v483, %v489
  %v496 = vmax.f32 %v484, %v490
  %v497 = vmax.f32 %v485, %v491
  %v498 = vmax.f32 %v486, %v492
  %s499 = scalar_lea.vmem %s0, 252
  %v500 = vld [vmem:[%s499] sm:$0x3]
  %v501 = vld [vmem:[%s499 + $0x4] sm:$0x3]
  %v502 = vld [vmem:[%s499 + $0x8] sm:$0x3]
  %v503 = vld [vmem:[%s499 + $0xc] sm:$0x3]
  %v504 = vld [vmem:[%s499 + $0x10] sm:$0x3]
  %v505 = vld [vmem:[%s499 + $0x14] sm:$0x3]
  %v506 = vmax.f32 %v493, %v500
  %v507 = vmax.f32 %v494, %v501
  %v508 = vmax.f32 %v495, %v502
  %v509 = vmax.f32 %v496, %v503
  %v510 = vmax.f32 %v497, %v504
  %v511 = vmax.f32 %v498, %v505
  %s512 = scalar_lea.vmem %s0, 254
  %v513 = vld [vmem:[%s512] sm:$0x3]
  %v514 = vld [vmem:[%s512 + $0x4] sm:$0x3]
  %v515 = vld [vmem:[%s512 + $0x8] sm:$0x3]
  %v516 = vld [vmem:[%s512 + $0xc] sm:$0x3]
  %v517 = vld [vmem:[%s512 + $0x10] sm:$0x3]
  %v518 = vld [vmem:[%s512 + $0x14] sm:$0x3]
  %v519 = vmax.f32 %v506, %v513
  %v520 = vmax.f32 %v507, %v514
  %v521 = vmax.f32 %v508, %v515
  %v522 = vmax.f32 %v509, %v516
  %v523 = vmax.f32 %v510, %v517
  %v524 = vmax.f32 %v511, %v518
  %s525 = scalar_lea.vmem %s0, 256
  %v526 = vld [vmem:[%s525] sm:$0x3]
  %v527 = vld [vmem:[%s525 + $0x4] sm:$0x3]
  %v528 = vld [vmem:[%s525 + $0x8] sm:$0x3]
  %v529 = vld [vmem:[%s525 + $0xc] sm:$0x3]
  %v530 = vld [vmem:[%s525 + $0x10] sm:$0x3]
  %v531 = vld [vmem:[%s525 + $0x14] sm:$0x3]
  %v532 = vmax.f32 %v519, %v526
  %v533 = vmax.f32 %v520, %v527
  %v534 = vmax.f32 %v521, %v528
  %v535 = vmax.f32 %v522, %v529
  %v536 = vmax.f32 %v523, %v530
  %v537 = vmax.f32 %v524, %v531
  %s538 = scalar_lea.vmem %s0, 280
  %v539 = vld [vmem:[%s538] sm:$0x3]
  %v540 = vld [vmem:[%s538 + $0x4] sm:$0x3]
  %v541 = vld [vmem:[%s538 + $0x8] sm:$0x3]
  %v542 = vld [vmem:[%s538 + $0xc] sm:$0x3]
  %v543 = vld [vmem:[%s538 + $0x10] sm:$0x3]
  %v544 = vld [vmem:[%s538 + $0x14] sm:$0x3]
  %v545 = vmax.f32 %v532, %v539
  %v546 = vmax.f32 %v533, %v540
  %v547 = vmax.f32 %v534, %v541
  %v548 = vmax.f32 %v535, %v542
  %v549 = vmax.f32 %v536, %v543
  %v550 = vmax.f32 %v537, %v544
  %s551 = scalar_lea.vmem %s0, 282
  %v552 = vld [vmem:[%s551] sm:$0x3]
  %v553 = vld [vmem:[%s551 + $0x4] sm:$0x3]
  %v554 = vld [vmem:[%s551 + $0x8] sm:$0x3]
  %v555 = vld [vmem:[%s551 + $0xc] sm:$0x3]
  %v556 = vld [vmem:[%s551 + $0x10] sm:$0x3]
  %v557 = vld [vmem:[%s551 + $0x14] sm:$0x3]
  %v558 = vmax.f32 %v545, %v552
  %v559 = vmax.f32 %v546, %v553
  %v560 = vmax.f32 %v547, %v554
  %v561 = vmax.f32 %v548, %v555
  %v562 = vmax.f32 %v549, %v556
  %v563 = vmax.f32 %v550, %v557
  %s564 = scalar_lea.vmem %s0, 284
  %v565 = vld [vmem:[%s564] sm:$0x3]
  %v566 = vld [vmem:[%s564 + $0x4] sm:$0x3]
  %v567 = vld [vmem:[%s564 + $0x8] sm:$0x3]
  %v568 = vld [vmem:[%s564 + $0xc] sm:$0x3]
  %v569 = vld [vmem:[%s564 + $0x10] sm:$0x3]
  %v570 = vld [vmem:[%s564 + $0x14] sm:$0x3]
  %v571 = vmax.f32 %v558, %v565
  %v572 = vmax.f32 %v559, %v566
  %v573 = vmax.f32 %v560, %v567
  %v574 = vmax.f32 %v561, %v568
  %v575 = vmax.f32 %v562, %v569
  %v576 = vmax.f32 %v563, %v570
  %s577 = scalar_lea.vmem %s1, 48
  %578 = vst [vmem:[%s577] sm:$0x3] %v571
  %579 = vst [vmem:[%s577 + $0x2] sm:$0x3] %v572
  %580 = vst [vmem:[%s577 + $0x4] sm:$0x3] %v573
  %581 = vst [vmem:[%s577 + $0x6] sm:$0x3] %v574
  %582 = vst [vmem:[%s577 + $0x8] sm:$0x3] %v575
  %583 = vst [vmem:[%s577 + $0xa] sm:$0x3] %v576
  %v584 = vld [vmem:[%s538] sm:$0x3]
  %v585 = vld [vmem:[%s538 + $0x4] sm:$0x3]
  %v586 = vld [vmem:[%s538 + $0x8] sm:$0x3]
  %v587 = vld [vmem:[%s538 + $0xc] sm:$0x3]
  %v588 = vld [vmem:[%s538 + $0x10] sm:$0x3]
  %v589 = vld [vmem:[%s538 + $0x14] sm:$0x3]
  %v590 = vld [vmem:[%s551] sm:$0x3]
  %v591 = vld [vmem:[%s551 + $0x4] sm:$0x3]
  %v592 = vld [vmem:[%s551 + $0x8] sm:$0x3]
  %v593 = vld [vmem:[%s551 + $0xc] sm:$0x3]
  %v594 = vld [vmem:[%s551 + $0x10] sm:$0x3]
  %v595 = vld [vmem:[%s551 + $0x14] sm:$0x3]
  %v596 = vmax.f32 %v584, %v590
  %v597 = vmax.f32 %v585, %v591
  %v598 = vmax.f32 %v586, %v592
  %v599 = vmax.f32 %v587, %v593
  %v600 = vmax.f32 %v588, %v594
  %v601 = vmax.f32 %v589, %v595
  %v602 = vld [vmem:[%s564] sm:$0x3]
  %v603 = vld [vmem:[%s564 + $0x4] sm:$0x3]
  %v604 = vld [vmem:[%s564 + $0x8] sm:$0x3]
  %v605 = vld [vmem:[%s564 + $0xc] sm:$0x3]
  %v606 = vld [vmem:[%s564 + $0x10] sm:$0x3]
  %v607 = vld [vmem:[%s564 + $0x14] sm:$0x3]
  %v608 = vmax.f32 %v596, %v602
  %v609 = vmax.f32 %v597, %v603
  %v610 = vmax.f32 %v598, %v604
  %v611 = vmax.f32 %v599, %v605
  %v612 = vmax.f32 %v600, %v606
  %v613 = vmax.f32 %v601, %v607
  %s614 = scalar_lea.vmem %s0, 308
  %v615 = vld [vmem:[%s614] sm:$0x3]
  %v616 = vld [vmem:[%s614 + $0x4] sm:$0x3]
  %v617 = vld [vmem:[%s614 + $0x8] sm:$0x3]
  %v618 = vld [vmem:[%s614 + $0xc] sm:$0x3]
  %v619 = vld [vmem:[%s614 + $0x10] sm:$0x3]
  %v620 = vld [vmem:[%s614 + $0x14] sm:$0x3]
  %v621 = vmax.f32 %v608, %v615
  %v622 = vmax.f32 %v609, %v616
  %v623 = vmax.f32 %v610, %v617
  %v624 = vmax.f32 %v611, %v618
  %v625 = vmax.f32 %v612, %v619
  %v626 = vmax.f32 %v613, %v620
  %s627 = scalar_lea.vmem %s0, 310
  %v628 = vld [vmem:[%s627] sm:$0x3]
  %v629 = vld [vmem:[%s627 + $0x4] sm:$0x3]
  %v630 = vld [vmem:[%s627 + $0x8] sm:$0x3]
  %v631 = vld [vmem:[%s627 + $0xc] sm:$0x3]
  %v632 = vld [vmem:[%s627 + $0x10] sm:$0x3]
  %v633 = vld [vmem:[%s627 + $0x14] sm:$0x3]
  %v634 = vmax.f32 %v621, %v628
  %v635 = vmax.f32 %v622, %v629
  %v636 = vmax.f32 %v623, %v630
  %v637 = vmax.f32 %v624, %v631
  %v638 = vmax.f32 %v625, %v632
  %v639 = vmax.f32 %v626, %v633
  %s640 = scalar_lea.vmem %s0, 312
  %v641 = vld [vmem:[%s640] sm:$0x3]
  %v642 = vld [vmem:[%s640 + $0x4] sm:$0x3]
  %v643 = vld [vmem:[%s640 + $0x8] sm:$0x3]
  %v644 = vld [vmem:[%s640 + $0xc] sm:$0x3]
  %v645 = vld [vmem:[%s640 + $0x10] sm:$0x3]
  %v646 = vld [vmem:[%s640 + $0x14] sm:$0x3]
  %v647 = vmax.f32 %v634, %v641
  %v648 = vmax.f32 %v635, %v642
  %v649 = vmax.f32 %v636, %v643
  %v650 = vmax.f32 %v637, %v644
  %v651 = vmax.f32 %v638, %v645
  %v652 = vmax.f32 %v639, %v646
  %s653 = scalar_lea.vmem %s0, 336
  %v654 = vld [vmem:[%s653] sm:$0x3]
  %v655 = vld [vmem:[%s653 + $0x4] sm:$0x3]
  %v656 = vld [vmem:[%s653 + $0x8] sm:$0x3]
  %v657 = vld [vmem:[%s653 + $0xc] sm:$0x3]
  %v658 = vld [vmem:[%s653 + $0x10] sm:$0x3]
  %v659 = vld [vmem:[%s653 + $0x14] sm:$0x3]
  %v660 = vmax.f32 %v647, %v654
  %v661 = vmax.f32 %v648, %v655
  %v662 = vmax.f32 %v649, %v656
  %v663 = vmax.f32 %v650, %v657
  %v664 = vmax.f32 %v651, %v658
  %v665 = vmax.f32 %v652, %v659
  %s666 = scalar_lea.vmem %s0, 338
  %v667 = vld [vmem:[%s666] sm:$0x3]
  %v668 = vld [vmem:[%s666 + $0x4] sm:$0x3]
  %v669 = vld [vmem:[%s666 + $0x8] sm:$0x3]
  %v670 = vld [vmem:[%s666 + $0xc] sm:$0x3]
  %v671 = vld [vmem:[%s666 + $0x10] sm:$0x3]
  %v672 = vld [vmem:[%s666 + $0x14] sm:$0x3]
  %v673 = vmax.f32 %v660, %v667
  %v674 = vmax.f32 %v661, %v668
  %v675 = vmax.f32 %v662, %v669
  %v676 = vmax.f32 %v663, %v670
  %v677 = vmax.f32 %v664, %v671
  %v678 = vmax.f32 %v665, %v672
  %s679 = scalar_lea.vmem %s0, 340
  %v680 = vld [vmem:[%s679] sm:$0x3]
  %v681 = vld [vmem:[%s679 + $0x4] sm:$0x3]
  %v682 = vld [vmem:[%s679 + $0x8] sm:$0x3]
  %v683 = vld [vmem:[%s679 + $0xc] sm:$0x3]
  %v684 = vld [vmem:[%s679 + $0x10] sm:$0x3]
  %v685 = vld [vmem:[%s679 + $0x14] sm:$0x3]
  %v686 = vmax.f32 %v673, %v680
  %v687 = vmax.f32 %v674, %v681
  %v688 = vmax.f32 %v675, %v682
  %v689 = vmax.f32 %v676, %v683
  %v690 = vmax.f32 %v677, %v684
  %v691 = vmax.f32 %v678, %v685
  %s692 = scalar_lea.vmem %s1, 60
  %693 = vst [vmem:[%s692] sm:$0x3] %v686
  %694 = vst [vmem:[%s692 + $0x2] sm:$0x3] %v687
  %695 = vst [vmem:[%s692 + $0x4] sm:$0x3] %v688
  %696 = vst [vmem:[%s692 + $0x6] sm:$0x3] %v689
  %697 = vst [vmem:[%s692 + $0x8] sm:$0x3] %v690
  %698 = vst [vmem:[%s692 + $0xa] sm:$0x3] %v691
  // Predicated region
  $region6: #{encoder_forward.9} parent=0 // pred_check
    _
  $region7: #{encoder_forward.9} parent=0 // pred_check_branch
    %700 = sbr.rel (0) target = $region9
  $region8: #{encoder_forward.9} parent=0 // pred_region
    _
  $region9: #{encoder_forward.9} parent=0 // pred_fallthru
    _
  // Predicated region
  $region10: #{encoder_forward.9} parent=0 // pred_check
    _
  $region11: #{encoder_forward.9} parent=0 // pred_check_branch
    %702 = sbr.rel (0) target = $region13
  $region12: #{encoder_forward.9} parent=0 // pred_region
    _
  $region13: #{encoder_forward.9} parent=0 // pred_fallthru
    _

// kernel: encoder_forward.10
$region0: #{encoder_forward.10}
  #allocation0 [shape = 'u32[]', space=smem, size = 0x4, offset = 0x4, fixed_abs, tag = 'smem constant byte address 0x4 - core index']
  #allocation1 [shape = 'u32[144,128]{1,0:T(1,128)}', space=vmem, size = 0x12000, scoped, tag = 'internal scratch']
  #allocation2 [shape = 'f32[72,256]{1,0:T(8,128)}', space=vmem, size = 0x12000, scoped, tag = 'scratch operand']
  %s0 = inlined_call_operand.vmem [shape: bf16[72,3584], index: 0, kind: input, shape index: {}]
  %s1 = inlined_call_operand.vmem [shape: bf16[3584,256], index: 1, kind: input, shape index: {}]
  %s2 = inlined_call_operand.vmem [shape: f32[1,256], index: 2, kind: input, shape index: {}]
  %s3 = inlined_call_operand.vmem [shape: f32[72,256], index: 3, kind: output, shape index: {}]
  %s4 = sld [smem:[#allocation0]]
  $region76: #{encoder_forward.10} parent=0
    _
  %s6 = ssub.s32 1, %s4
  %s7 = scalar_select 0, %s6, %s4
  $region1: #{encoder_forward.10} parent=0
    #allocation3 [shape = 'u8[147456]{0}', space=vmem, size = 0x24000, scoped, tag = 'input window, operand 0']
    loop: start=0, step=1, limit=9
    $region2: #{encoder_forward.10} parent=1 // loop_pre_header
      _
    $region3: #{encoder_forward.10} parent=1 // loop_header
      %s9 = sphi 0, %s13
      %p10 = scmp.ge.s32.totalorder %s9, 9
      %s16 = sphi 0, %s35
      %s17 = sphi 0, %s31
      %s18 = sphi 0, %s27
      %s19 = sphi 0, %s16
      %s20 = sphi 0, %s17
      %s21 = sphi 0, %s18
      %s22 = sphi 0, %s19
      %s23 = sphi 0, %s20
      %s24 = sphi 0, %s21
      %s40 = sphi 0, %s42
      %s43 = sphi 0, %s40
      %s44 = sphi 0, %s43
      %s60 = sphi 0, %s44
      %s68 = sphi 0, %s70
      %s71 = sphi 0, %s68
      %s72 = sphi 0, %s71
      %s88 = sphi 0, %s72
      %s94 = sphi 0, %s96
      %s97 = sphi 0, %s94
      %s98 = sphi 0, %s97
      %s114 = sphi 0, %s98
      %s122 = sphi 0, %s124
      %s125 = sphi 0, %s122
      %s126 = sphi 0, %s125
      %s142 = sphi 0, %s126
    $region4: #{encoder_forward.10} parent=1 // loop_header_branch
      %12 = sbr.rel (%p10) target = $region8
    $region5: #{encoder_forward.10} parent=1 // loop_body
      %s14 = ssub.s32 %s9, 1
      %s15 = ssub.s32 %s9, 2
      %s25 = sadd.s32 1, %s18
      %p26 = scmp.ge.s32.totalorder %s25, 7
      %s27 = scalar_select %p26, 0, %s25
      %s28 = sadd.s32 1, %s17
      %s29 = scalar_select %p26, %s28, %s17
      %p30 = scmp.ge.s32.totalorder %s29, 1
      %s31 = scalar_select %p30, 0, %s29
      %s32 = sadd.s32 1, %s16
      %s33 = scalar_select %p30, %s32, %s16
      %p34 = scmp.ge.s32.totalorder %s33, 1
      %s35 = scalar_select %p34, 0, %s33
      %s36 = ssub.s32 %s16, %s35
      %s37 = ssub.s32 %s18, %s27
      %s38 = sor.u32 %s36, %s37
      %p39 = scmp.eq.s32.totalorder %s38, 0
      %s41 = sadd.s32 %s40, 1
      %s42 = scalar_select %p39, %s40, %s41
      %p45 = pneg %p39
      %p46 = scmp.eq.s32.totalorder %s9, 6
      %p47 = por %p45, %p46
      %p48 = scmp.ne.s32.totalorder %s40, %s43
      %p49 = scmp.eq.s32.totalorder %s9, 0
      %p50 = por %p48, %p49
      %p51 = scmp.ne.s32.totalorder %s40, %s43
      %p52 = scmp.eq.s32.totalorder %s14, 6
      %p53 = por %p51, %p52
      %p54 = scmp.ne.s32.totalorder %s43, %s44
      %p55 = scmp.eq.s32.totalorder %s14, 0
      %p56 = por %p54, %p55
      %p57 = scmp.ne.s32.totalorder %s43, %s44
      %p58 = scmp.eq.s32.totalorder %s15, 6
      %p59 = por %p57, %p58
      %p61 = scmp.ne.s32.totalorder %s44, %s60
      %p62 = scmp.eq.s32.totalorder %s15, 0
      %p63 = por %p61, %p62
      %s64 = ssub.s32 %s18, %s27
      %s65 = ssub.s32 %s17, %s31
      %s66 = sor.u32 %s64, %s65
      %p67 = scmp.eq.s32.totalorder %s66, 0
      %s69 = sadd.s32 %s68, 1
      %s70 = scalar_select %p67, %s68, %s69
      %p73 = pneg %p67
      %p74 = scmp.eq.s32.totalorder %s9, 6
      %p75 = por %p73, %p74
      %p76 = scmp.ne.s32.totalorder %s68, %s71
      %p77 = scmp.eq.s32.totalorder %s9, 0
      %p78 = por %p76, %p77
      %p79 = scmp.ne.s32.totalorder %s68, %s71
      %p80 = scmp.eq.s32.totalorder %s14, 6
      %p81 = por %p79, %p80
      %p82 = scmp.ne.s32.totalorder %s71, %s72
      %p83 = scmp.eq.s32.totalorder %s14, 0
      %p84 = por %p82, %p83
      %p85 = scmp.ne.s32.totalorder %s71, %s72
      %p86 = scmp.eq.s32.totalorder %s15, 6
      %p87 = por %p85, %p86
      %p89 = scmp.ne.s32.totalorder %s72, %s88
      %p90 = scmp.eq.s32.totalorder %s15, 0
      %p91 = por %p89, %p90
      %s92 = ssub.s32 %s17, %s31
      %p93 = scmp.eq.s32.totalorder %s92, 0
      %s95 = sadd.s32 %s94, 1
      %s96 = scalar_select %p93, %s94, %s95
      %p99 = pneg %p93
      %p100 = scmp.eq.s32.totalorder %s9, 6
      %p101 = por %p99, %p100
      %p102 = scmp.ne.s32.totalorder %s94, %s97
      %p103 = scmp.eq.s32.totalorder %s9, 0
      %p104 = por %p102, %p103
      %p105 = scmp.ne.s32.totalorder %s94, %s97
      %p106 = scmp.eq.s32.totalorder %s14, 6
      %p107 = por %p105, %p106
      %p108 = scmp.ne.s32.totalorder %s97, %s98
      %p109 = scmp.eq.s32.totalorder %s14, 0
      %p110 = por %p108, %p109
      %p111 = scmp.ne.s32.totalorder %s97, %s98
      %p112 = scmp.eq.s32.totalorder %s15, 6
      %p113 = por %p111, %p112
      %p115 = scmp.ne.s32.totalorder %s98, %s114
      %p116 = scmp.eq.s32.totalorder %s15, 0
      %p117 = por %p115, %p116
      %s118 = ssub.s32 %s16, %s35
      %s119 = ssub.s32 %s17, %s31
      %s120 = sor.u32 %s118, %s119
      %p121 = scmp.eq.s32.totalorder %s120, 0
      %s123 = sadd.s32 %s122, 1
      %s124 = scalar_select %p121, %s122, %s123
      %p127 = pneg %p121
      %p128 = scmp.eq.s32.totalorder %s9, 6
      %p129 = por %p127, %p128
      %p130 = scmp.ne.s32.totalorder %s122, %s125
      %p131 = scmp.eq.s32.totalorder %s9, 0
      %p132 = por %p130, %p131
      %p133 = scmp.ne.s32.totalorder %s122, %s125
      %p134 = scmp.eq.s32.totalorder %s14, 6
      %p135 = por %p133, %p134
      %p136 = scmp.ne.s32.totalorder %s125, %s126
      %p137 = scmp.eq.s32.totalorder %s14, 0
      %p138 = por %p136, %p137
      %p139 = scmp.ne.s32.totalorder %s125, %s126
      %p140 = scmp.eq.s32.totalorder %s15, 6
      %p141 = por %p139, %p140
      %p143 = scmp.ne.s32.totalorder %s126, %s142
      %p144 = scmp.eq.s32.totalorder %s15, 0
      %p145 = por %p143, %p144
      %p146 = scmp.le.s32.totalorder 1, %s9
      %p147 = scmp.lt.s32.totalorder %s9, 8
      %p148 = pnand %p146, %p147
      %p149 = pneg %p148
      // Predicated region
      $region9: #{encoder_forward.10} parent=5 // pred_check
        _
      $region10: #{encoder_forward.10} parent=5 // pred_check_branch
        %151 = sbr.rel (%p148) target = $region12
      $region11: #{encoder_forward.10} parent=5 // pred_region
        %s152 = ssub.s32 %s9, 1
        // Predicated region
        $region13: #{encoder_forward.10} parent=11 // pred_check
          %p153 = pneg %p110
        $region14: #{encoder_forward.10} parent=11 // pred_check_branch
          %155 = sbr.rel (%p153) target = $region16
        $region15: #{encoder_forward.10} parent=11 // pred_region
          %s156 = smul.u32 2, %s20
          %p157 = scmp.lt.s32.totalorder %s156, 1
          %s158 = scalar_select %p157, %s156, 1
          %s159 = scalar_lea.vmem %s2, %s158
          %s160 = smul.u32 2, %s20
        $region16: #{encoder_forward.10} parent=11 // pred_fallthru
          _
      $region12: #{encoder_forward.10} parent=5 // pred_fallthru
        _
      %p161 = scmp.lt.s32.totalorder %s9, 7
      // Predicated region
      $region17: #{encoder_forward.10} parent=5 // pred_check
        %p162 = pneg %p161
      $region18: #{encoder_forward.10} parent=5 // pred_check_branch
        %164 = sbr.rel (%p162) target = $region20
      $region19: #{encoder_forward.10} parent=5 // pred_region
        // Predicated region
        $region21: #{encoder_forward.10} parent=19 // pred_check
          %p165 = pneg %p50
        $region22: #{encoder_forward.10} parent=19 // pred_check_branch
          %167 = sbr.rel (%p165) target = $region24
        $region23: #{encoder_forward.10} parent=19 // pred_region
          %s168 = sand.u32 %s40, 1
          %s169 = sand.u32 %s40, 1
          %s170 = smul.addr %s169, 144
          %s171 = scalar_lea.vmem [#allocation3], %s170
          %s172 = smul.u32 9, %s16
          %s173 = smul.u32 4, %s18
          %s174 = smul.addr %s172, 28
          %s175 = sadd.s32 %s173, %s174
          %s176 = smul.addr %s175, 4
          %s177 = scalar_lea.vmem %s0, %s176
          // Predicated region
          $region25: #{encoder_forward.10} parent=23 // pred_check
            _
          $region26: #{encoder_forward.10} parent=23 // pred_check_branch
            %179 = sbr.rel (0) target = $region28
          $region27: #{encoder_forward.10} parent=23 // pred_region
            // Predicated region
            $region29: #{encoder_forward.10} parent=27 // pred_check
              _
            $region30: #{encoder_forward.10} parent=27 // pred_check_branch
              %181 = sbr.rel (0) target = $region32
            $region31: #{encoder_forward.10} parent=27 // pred_region
              loop: start=0, step=1, limit=1
              $region33: #{encoder_forward.10} parent=31 // loop_pre_header
                _
              $region34: #{encoder_forward.10} parent=31 // loop_header
                %s183 = sphi 0, %s187
                %p184 = scmp.ge.s32.totalorder %s183, 1
                %s188 = sphi %s177, %s177
                %s189 = sphi %s171, %s171
              $region35: #{encoder_forward.10} parent=31 // loop_header_branch
                %186 = sbr.rel (%p184) target = $region39
              $region36: #{encoder_forward.10} parent=31 // loop_body
                %v190 = vld [vmem:[%s188] sm:$0xff]
                %191 = vst [vmem:[%s189] sm:$0xff] %v190
                %v192 = vld [vmem:[%s188 + $0x8] sm:$0xff]
                %193 = vst [vmem:[%s189 + $0x8] sm:$0xff] %v192
                %v194 = vld [vmem:[%s188 + $0x70] sm:$0xff]
                %195 = vst [vmem:[%s189 + $0x10] sm:$0xff] %v194
                %v196 = vld [vmem:[%s188 + $0x78] sm:$0xff]
                %197 = vst [vmem:[%s189 + $0x18] sm:$0xff] %v196
                %v198 = vld [vmem:[%s188 + $0xe0] sm:$0xff]
                %199 = vst [vmem:[%s189 + $0x20] sm:$0xff] %v198
                %v200 = vld [vmem:[%s188 + $0xe8] sm:$0xff]
                %201 = vst [vmem:[%s189 + $0x28] sm:$0xff] %v200
                %v202 = vld [vmem:[%s188 + $0x150] sm:$0xff]
                %203 = vst [vmem:[%s189 + $0x30] sm:$0xff] %v202
                %v204 = vld [vmem:[%s188 + $0x158] sm:$0xff]
                %205 = vst [vmem:[%s189 + $0x38] sm:$0xff] %v204
                %v206 = vld [vmem:[%s188 + $0x1c0] sm:$0xff]
                %207 = vst [vmem:[%s189 + $0x40] sm:$0xff] %v206
                %v208 = vld [vmem:[%s188 + $0x1c8] sm:$0xff]
                %209 = vst [vmem:[%s189 + $0x48] sm:$0xff] %v208
                %v210 = vld [vmem:[%s188 + $0x230] sm:$0xff]
                %211 = vst [vmem:[%s189 + $0x50] sm:$0xff] %v210
                %v212 = vld [vmem:[%s188 + $0x238] sm:$0xff]
                %213 = vst [vmem:[%s189 + $0x58] sm:$0xff] %v212
                %v214 = vld [vmem:[%s188 + $0x2a0] sm:$0xff]
                %215 = vst [vmem:[%s189 + $0x60] sm:$0xff] %v214
                %v216 = vld [vmem:[%s188 + $0x2a8] sm:$0xff]
                %217 = vst [vmem:[%s189 + $0x68] sm:$0xff] %v216
                %v218 = vld [vmem:[%s188 + $0x310] sm:$0xff]
                %219 = vst [vmem:[%s189 + $0x70] sm:$0xff] %v218
                %v220 = vld [vmem:[%s188 + $0x318] sm:$0xff]
                %221 = vst [vmem:[%s189 + $0x78] sm:$0xff] %v220
                %v222 = vld [vmem:[%s188 + $0x380] sm:$0xff]
                %223 = vst [vmem:[%s189 + $0x80] sm:$0xff] %v222
                %v224 = vld [vmem:[%s188 + $0x388] sm:$0xff]
                %225 = vst [vmem:[%s189 + $0x88] sm:$0xff] %v224
              $region37: #{encoder_forward.10} parent=31 // loop_footer
                %s187 = sadd.s32 1, %s183
              $region38: #{encoder_forward.10} parent=31 // loop_footer_branch
                %182 = sbr.rel target = $region34
              $region39: #{encoder_forward.10} parent=31 // loop_exit
                _
            $region32: #{encoder_forward.10} parent=27 // pred_fallthru
              _
            // Predicated region
            $region40: #{encoder_forward.10} parent=27 // pred_check
              _
            $region41: #{encoder_forward.10} parent=27 // pred_check_branch
              %227 = sbr.rel target = $region43
            $region42: #{encoder_forward.10} parent=27 // pred_region
              _
            $region43: #{encoder_forward.10} parent=27 // pred_fallthru
              _
          $region28: #{encoder_forward.10} parent=23 // pred_fallthru
            _
          %228 = vnop
        $region24: #{encoder_forward.10} parent=19 // pred_fallthru
          _
        // Predicated region
        $region44: #{encoder_forward.10} parent=19 // pred_check
          %p229 = pneg %p78
        $region45: #{encoder_forward.10} parent=19 // pred_check_branch
          %231 = sbr.rel (%p229) target = $region47
        $region46: #{encoder_forward.10} parent=19 // pred_region
          %s232 = smul.u32 64, %s18
          %s233 = smul.u32 2, %s17
          %p234 = scmp.lt.s32.totalorder %s232, 447
          %s235 = scalar_select %p234, %s232, 447
          %p236 = scmp.lt.s32.totalorder %s233, 1
          %s237 = scalar_select %p236, %s233, 1
          %s238 = smul.addr %s235, 2
          %s239 = sadd.s32 %s237, %s238
          %s240 = smul.addr %s239, 4
          %s241 = scalar_lea.vmem %s1, %s240
          %s242 = smul.u32 64, %s18
          %s243 = smul.u32 2, %s17
        $region47: #{encoder_forward.10} parent=19 // pred_fallthru
          _
      $region20: #{encoder_forward.10} parent=5 // pred_fallthru
        _
      %p244 = scmp.le.s32.totalorder 1, %s9
      %p245 = scmp.lt.s32.totalorder %s9, 8
      %p246 = pnand %p244, %p245
      %p247 = pneg %p246
      // Predicated region
      $region48: #{encoder_forward.10} parent=5 // pred_check
        _
      $region49: #{encoder_forward.10} parent=5 // pred_check_branch
        %249 = sbr.rel (%p246) target = $region51
      $region50: #{encoder_forward.10} parent=5 // pred_region
        %s250 = ssub.s32 %s9, 1
        %s251 = sand.u32 %s43, 1
        %s252 = sand.u32 %s43, 1
        %s253 = smul.addr %s252, 144
        %s254 = scalar_lea.vmem [#allocation3], %s253
        // Predicated region
        $region52: #{encoder_forward.10} parent=50 // pred_check
          %p255 = pneg %p56
        $region53: #{encoder_forward.10} parent=50 // pred_check_branch
          %257 = sbr.rel (%p255) target = $region55
        $region54: #{encoder_forward.10} parent=50 // pred_region
          _
        $region55: #{encoder_forward.10} parent=50 // pred_fallthru
          _
        %s258 = sand.u32 %s43, 1
        %s259 = sand.u32 %s43, 1
        %s260 = smul.addr %s259, 144
        %s261 = scalar_lea.vmem [#allocation3], %s260
        %p262 = pneg %p56
        %p263 = pneg %p53
        %s264 = smul.u32 64, %s21
        %s265 = smul.u32 2, %s20
        %p266 = scmp.lt.s32.totalorder %s264, 447
        %s267 = scalar_select %p266, %s264, 447
        %p268 = scmp.lt.s32.totalorder %s265, 1
        %s269 = scalar_select %p268, %s265, 1
        %s270 = smul.addr %s267, 2
        %s271 = sadd.s32 %s269, %s270
        %s272 = smul.addr %s271, 4
        %s273 = scalar_lea.vmem %s1, %s272
        %p274 = pneg %p84
        %p275 = pneg %p81
        %s276 = smul.u32 2, %s20
        %p277 = scmp.lt.s32.totalorder %s276, 1
        %s278 = scalar_select %p277, %s276, 1
        %s279 = scalar_lea.vmem %s2, %s278
        %p280 = pneg %p110
        %p281 = pneg %p107
        %p282 = pneg %p138
        %p283 = pneg %p135
        %s284 = smul.u32 9, %s19
        %s285 = smul.u32 2, %s20
        %p286 = scmp.lt.s32.totalorder %s284, 8
        %s287 = scalar_select %p286, %s284, 8
        %p288 = scmp.lt.s32.totalorder %s285, 1
        %s289 = scalar_select %p288, %s285, 1
        %s290 = smul.addr %s287, 2
        %s291 = sadd.s32 %s289, %s290
        %s292 = smul.addr %s291, 8
        %s293 = scalar_lea.vmem %s3, %s292
        %s294 = smul.u32 9, %s19
        %s295 = smul.u32 4, %s21
        %s296 = smul.u32 64, %s21
        %s297 = smul.u32 2, %s20
        %p298 = scmp.lt.s32.totalorder %s296, 447
        %s299 = scalar_select %p298, %s296, 447
        %p300 = scmp.lt.s32.totalorder %s297, 1
        %s301 = scalar_select %p300, %s297, 1
        %s302 = smul.addr %s299, 2
        %s303 = sadd.s32 %s301, %s302
        %s304 = smul.addr %s303, 4
        %s305 = scalar_lea.vmem %s1, %s304
        %s306 = smul.u32 64, %s21
        %s307 = smul.u32 2, %s20
        %s308 = smul.u32 2, %s20
        %p309 = scmp.lt.s32.totalorder %s308, 1
        %s310 = scalar_select %p309, %s308, 1
        %s311 = scalar_lea.vmem %s2, %s310
        %s312 = smul.u32 2, %s20
        %s313 = smul.u32 9, %s19
        %s314 = smul.u32 2, %s20
        %p315 = scmp.lt.s32.totalorder %s313, 8
        %s316 = scalar_select %p315, %s313, 8
        %p317 = scmp.lt.s32.totalorder %s314, 1
        %s318 = scalar_select %p317, %s314, 1
        %s319 = smul.addr %s316, 2
        %s320 = sadd.s32 %s318, %s319
        %s321 = smul.addr %s320, 8
        %s322 = scalar_lea.vmem %s3, %s321
        %s323 = smul.u32 9, %s19
        %s324 = smul.u32 2, %s20
        %p325 = scmp.eq.s32.totalorder %s21, 0
        // Predicated region
        $region56: #{encoder_forward.10} parent=50 // pred_check
          %p326 = pneg %p325
        $region57: #{encoder_forward.10} parent=50 // pred_check_branch
          %328 = sbr.rel (%p326) target = $region59
        $region58: #{encoder_forward.10} parent=50 // pred_region
          %329 = vst [vmem:[#allocation2] sm:$0xff] 0.0
          %330 = vst [vmem:[#allocation2 + $0x8] sm:$0xff] 0.0
          %331 = vst [vmem:[#allocation2 + $0x10] sm:$0xff] 0.0
          %332 = vst [vmem:[#allocation2 + $0x18] sm:$0xff] 0.0
          %333 = vst [vmem:[#allocation2 + $0x20] sm:$0xff] 0.0
          %334 = vst [vmem:[#allocation2 + $0x28] sm:$0xff] 0.0
          %335 = vst [vmem:[#allocation2 + $0x30] sm:$0xff] 0.0
          %336 = vst [vmem:[#allocation2 + $0x38] sm:$0xff] 0.0
          %337 = vst [vmem:[#allocation2 + $0x40] sm:$0xff] 0.0
          %338 = vst [vmem:[#allocation2 + $0x48] sm:$0xff] 0.0
          %339 = vst [vmem:[#allocation2 + $0x50] sm:$0xff] 0.0
          %340 = vst [vmem:[#allocation2 + $0x58] sm:$0xff] 0.0
          %341 = vst [vmem:[#allocation2 + $0x60] sm:$0xff] 0.0
          %342 = vst [vmem:[#allocation2 + $0x68] sm:$0xff] 0.0
          %343 = vst [vmem:[#allocation2 + $0x70] sm:$0xff] 0.0
          %344 = vst [vmem:[#allocation2 + $0x78] sm:$0xff] 0.0
          %345 = vst [vmem:[#allocation2 + $0x80] sm:$0xff] 0.0
          %346 = vst [vmem:[#allocation2 + $0x88] sm:$0xff] 0.0
        $region59: #{encoder_forward.10} parent=50 // pred_fallthru
          _
        %v347 = vld [vmem:[#allocation2] sm:$0xff]
        %v348 = vld [vmem:[#allocation2 + $0x8] sm:$0xff]
        %v349 = vld [vmem:[#allocation2 + $0x10] sm:$0xff]
        %v350 = vld [vmem:[#allocation2 + $0x18] sm:$0xff]
        %v351 = vld [vmem:[#allocation2 + $0x20] sm:$0xff]
        %v352 = vld [vmem:[#allocation2 + $0x28] sm:$0xff]
        %v353 = vld [vmem:[#allocation2 + $0x30] sm:$0xff]
        %v354 = vld [vmem:[#allocation2 + $0x38] sm:$0xff]
        %v355 = vld [vmem:[#allocation2 + $0x40] sm:$0xff]
        %v356 = vld [vmem:[#allocation2 + $0x48] sm:$0xff]
        %v357 = vld [vmem:[#allocation2 + $0x50] sm:$0xff]
        %v358 = vld [vmem:[#allocation2 + $0x58] sm:$0xff]
        %v359 = vld [vmem:[#allocation2 + $0x60] sm:$0xff]
        %v360 = vld [vmem:[#allocation2 + $0x68] sm:$0xff]
        %v361 = vld [vmem:[#allocation2 + $0x70] sm:$0xff]
        %v362 = vld [vmem:[#allocation2 + $0x78] sm:$0xff]
        %v363 = vld [vmem:[#allocation2 + $0x80] sm:$0xff]
        %v364 = vld [vmem:[#allocation2 + $0x88] sm:$0xff]
        %v365 = vld [vmem:[%s254] sm:$0xff]
        %v366 = vld [vmem:[%s254 + $0x8] sm:$0xff]
        %v367 = vld [vmem:[%s254 + $0x10] sm:$0xff]
        %v368 = vld [vmem:[%s254 + $0x18] sm:$0xff]
        %v369 = vld [vmem:[%s254 + $0x20] sm:$0xff]
        %v370 = vld [vmem:[%s254 + $0x28] sm:$0xff]
        %v371 = vld [vmem:[%s254 + $0x30] sm:$0xff]
        %v372 = vld [vmem:[%s254 + $0x38] sm:$0xff]
        %v373 = vld [vmem:[%s254 + $0x40] sm:$0xff]
        %v374 = vld [vmem:[%s254 + $0x48] sm:$0xff]
        %v375 = vld [vmem:[%s254 + $0x50] sm:$0xff]
        %v376 = vld [vmem:[%s254 + $0x58] sm:$0xff]
        %v377 = vld [vmem:[%s254 + $0x60] sm:$0xff]
        %v378 = vld [vmem:[%s254 + $0x68] sm:$0xff]
        %v379 = vld [vmem:[%s254 + $0x70] sm:$0xff]
        %v380 = vld [vmem:[%s254 + $0x78] sm:$0xff]
        %v381 = vld [vmem:[%s254 + $0x80] sm:$0xff]
        %v382 = vld [vmem:[%s254 + $0x88] sm:$0xff]
        %v383 = vld [vmem:[%s305] sm:$0xff]
        %v384 = vld [vmem:[%s305 + $0x8] sm:$0xff]
        %v385 = vld [vmem:[%s305 + $0x10] sm:$0xff]
        %v386 = vld [vmem:[%s305 + $0x18] sm:$0xff]
        %v387 = vld [vmem:[%s305 + $0x20] sm:$0xff]
        %v388 = vld [vmem:[%s305 + $0x28] sm:$0xff]
        %v389 = vld [vmem:[%s305 + $0x30] sm:$0xff]
        %v390 = vld [vmem:[%s305 + $0x38] sm:$0xff]
        %v391 = vld [vmem:[%s305 + $0x40] sm:$0xff]
        %v392 = vld [vmem:[%s305 + $0x48] sm:$0xff]
        %v393 = vld [vmem:[%s305 + $0x50] sm:$0xff]
        %v394 = vld [vmem:[%s305 + $0x58] sm:$0xff]
        %v395 = vld [vmem:[%s305 + $0x60] sm:$0xff]
        %v396 = vld [vmem:[%s305 + $0x68] sm:$0xff]
        %v397 = vld [vmem:[%s305 + $0x70] sm:$0xff]
        %v398 = vld [vmem:[%s305 + $0x78] sm:$0xff]
        %v399 = vld [vmem:[%s305 + $0x80] sm:$0xff]
        %v400 = vld [vmem:[%s305 + $0x88] sm:$0xff]
        %v401 = vld [vmem:[%s305 + $0x90] sm:$0xff]
        %v402 = vld [vmem:[%s305 + $0x98] sm:$0xff]
        %v403 = vld [vmem:[%s305 + $0xa0] sm:$0xff]
        %v404 = vld [vmem:[%s305 + $0xa8] sm:$0xff]
        %v405 = vld [vmem:[%s305 + $0xb0] sm:$0xff]
        %v406 = vld [vmem:[%s305 + $0xb8] sm:$0xff]
        %v407 = vld [vmem:[%s305 + $0xc0] sm:$0xff]
        %v408 = vld [vmem:[%s305 + $0xc8] sm:$0xff]
        %v409 = vld [vmem:[%s305 + $0xd0] sm:$0xff]
        %v410 = vld [vmem:[%s305 + $0xd8] sm:$0xff]
        %v411 = vld [vmem:[%s305 + $0xe0] sm:$0xff]
        %v412 = vld [vmem:[%s305 + $0xe8] sm:$0xff]
        %v413 = vld [vmem:[%s305 + $0xf0] sm:$0xff]
        %v414 = vld [vmem:[%s305 + $0xf8] sm:$0xff]
        %v415 = vld [vmem:[%s305 + $0x100] sm:$0xff]
        %v416 = vld [vmem:[%s305 + $0x108] sm:$0xff]
        %v417 = vld [vmem:[%s305 + $0x110] sm:$0xff]
        %v418 = vld [vmem:[%s305 + $0x118] sm:$0xff]
        %v419 = vld [vmem:[%s305 + $0x120] sm:$0xff]
        %v420 = vld [vmem:[%s305 + $0x128] sm:$0xff]
        %v421 = vld [vmem:[%s305 + $0x130] sm:$0xff]
        %v422 = vld [vmem:[%s305 + $0x138] sm:$0xff]
        %v423 = vld [vmem:[%s305 + $0x140] sm:$0xff]
        %v424 = vld [vmem:[%s305 + $0x148] sm:$0xff]
        %v425 = vld [vmem:[%s305 + $0x150] sm:$0xff]
        %v426 = vld [vmem:[%s305 + $0x158] sm:$0xff]
        %v427 = vld [vmem:[%s305 + $0x160] sm:$0xff]
        %v428 = vld [vmem:[%s305 + $0x168] sm:$0xff]
        %v429 = vld [vmem:[%s305 + $0x170] sm:$0xff]
        %v430 = vld [vmem:[%s305 + $0x178] sm:$0xff]
        %v431 = vld [vmem:[%s305 + $0x180] sm:$0xff]
        %v432 = vld [vmem:[%s305 + $0x188] sm:$0xff]
        %v433 = vld [vmem:[%s305 + $0x190] sm:$0xff]
        %v434 = vld [vmem:[%s305 + $0x198] sm:$0xff]
        %v435 = vld [vmem:[%s305 + $0x1a0] sm:$0xff]
        %v436 = vld [vmem:[%s305 + $0x1a8] sm:$0xff]
        %v437 = vld [vmem:[%s305 + $0x1b0] sm:$0xff]
        %v438 = vld [vmem:[%s305 + $0x1b8] sm:$0xff]
        %v439 = vld [vmem:[%s305 + $0x1c0] sm:$0xff]
        %v440 = vld [vmem:[%s305 + $0x1c8] sm:$0xff]
        %v441 = vld [vmem:[%s305 + $0x1d0] sm:$0xff]
        %v442 = vld [vmem:[%s305 + $0x1d8] sm:$0xff]
        %v443 = vld [vmem:[%s305 + $0x1e0] sm:$0xff]
        %v444 = vld [vmem:[%s305 + $0x1e8] sm:$0xff]
        %v445 = vld [vmem:[%s305 + $0x1f0] sm:$0xff]
        %v446 = vld [vmem:[%s305 + $0x1f8] sm:$0xff]
        %v465 = vunpack.c.l.b16 %v365
        %v466 = vunpack.c.h.b16 %v365
        %v467 = vunpack.c.l.b16 %v366
        %v468 = vunpack.c.h.b16 %v366
        %v469 = vunpack.c.l.b16 %v367
        %v470 = vunpack.c.h.b16 %v367
        %v471 = vunpack.c.l.b16 %v368
        %v472 = vunpack.c.h.b16 %v368
        %v473 = vunpack.c.l.b16 %v369
        %v474 = vunpack.c.h.b16 %v369
        %v475 = vunpack.c.l.b16 %v370
        %v476 = vunpack.c.h.b16 %v370
        %v477 = vunpack.c.l.b16 %v371
        %v478 = vunpack.c.h.b16 %v371
        %v479 = vunpack.c.l.b16 %v372
        %v480 = vunpack.c.h.b16 %v372
        %v481 = vunpack.c.l.b16 %v373
        %v482 = vunpack.c.h.b16 %v373
        %v483 = vunpack.c.l.b16 %v374
        %v484 = vunpack.c.h.b16 %v374
        %v485 = vunpack.c.l.b16 %v375
        %v486 = vunpack.c.h.b16 %v375
        %v487 = vunpack.c.l.b16 %v376
        %v488 = vunpack.c.h.b16 %v376
        %v489 = vunpack.c.l.b16 %v377
        %v490 = vunpack.c.h.b16 %v377
        %v491 = vunpack.c.l.b16 %v378
        %v492 = vunpack.c.h.b16 %v378
        %v493 = vunpack.c.l.b16 %v379
        %v494 = vunpack.c.h.b16 %v379
        %v495 = vunpack.c.l.b16 %v380
        %v496 = vunpack.c.h.b16 %v380
        %v497 = vunpack.c.l.b16 %v381
        %v498 = vunpack.c.h.b16 %v381
        %v499 = vunpack.c.l.b16 %v382
        %v500 = vunpack.c.h.b16 %v382
        %v501 = vpack.c.b16 %v469, %v465
        %v502 = vpack.c.b16 %v470, %v466
        %v503 = vpack.c.b16 %v471, %v467
        %v504 = vpack.c.b16 %v472, %v468
        %v505 = vpack.c.b16 %v477, %v473
        %v506 = vpack.c.b16 %v478, %v474
        %v507 = vpack.c.b16 %v479, %v475
        %v508 = vpack.c.b16 %v480, %v476
        %v509 = vpack.c.b16 %v485, %v481
        %v510 = vpack.c.b16 %v486, %v482
        %v511 = vpack.c.b16 %v487, %v483
        %v512 = vpack.c.b16 %v488, %v484
        %v513 = vpack.c.b16 %v493, %v489
        %v514 = vpack.c.b16 %v494, %v490
        %v515 = vpack.c.b16 %v495, %v491
        %v516 = vpack.c.b16 %v496, %v492
        %v517 = vpack.c.b16 %v497, %v497
        %v518 = vpack.c.b16 %v498, %v498
        %v519 = vpack.c.b16 %v499, %v499
        %v520 = vpack.c.b16 %v500, %v500
        %v605 = vunpack.c.l.b16 %v383
        %v606 = vunpack.c.h.b16 %v383
        %v607 = vunpack.c.l.b16 %v384
        %v608 = vunpack.c.h.b16 %v384
        %v609 = vunpack.c.l.b16 %v385
        %v610 = vunpack.c.h.b16 %v385
        %v611 = vunpack.c.l.b16 %v386
        %v612 = vunpack.c.h.b16 %v386
        %v613 = vunpack.c.l.b16 %v387
        %v614 = vunpack.c.h.b16 %v387
        %v615 = vunpack.c.l.b16 %v388
        %v616 = vunpack.c.h.b16 %v388
        %v617 = vunpack.c.l.b16 %v389
        %v618 = vunpack.c.h.b16 %v389
        %v619 = vunpack.c.l.b16 %v390
        %v620 = vunpack.c.h.b16 %v390
        %v621 = vunpack.c.l.b16 %v391
        %v622 = vunpack.c.h.b16 %v391
        %v623 = vunpack.c.l.b16 %v392
        %v624 = vunpack.c.h.b16 %v392
        %v625 = vunpack.c.l.b16 %v393
        %v626 = vunpack.c.h.b16 %v393
        %v627 = vunpack.c.l.b16 %v394
        %v628 = vunpack.c.h.b16 %v394
        %v629 = vunpack.c.l.b16 %v395
        %v630 = vunpack.c.h.b16 %v395
        %v631 = vunpack.c.l.b16 %v396
        %v632 = vunpack.c.h.b16 %v396
        %v633 = vunpack.c.l.b16 %v397
        %v634 = vunpack.c.h.b16 %v397
        %v635 = vunpack.c.l.b16 %v398
        %v636 = vunpack.c.h.b16 %v398
        %v637 = vunpack.c.l.b16 %v399
        %v638 = vunpack.c.h.b16 %v399
        %v639 = vunpack.c.l.b16 %v400
        %v640 = vunpack.c.h.b16 %v400
        %v641 = vunpack.c.l.b16 %v401
        %v642 = vunpack.c.h.b16 %v401
        %v643 = vunpack.c.l.b16 %v402
        %v644 = vunpack.c.h.b16 %v402
        %v645 = vunpack.c.l.b16 %v403
        %v646 = vunpack.c.h.b16 %v403
        %v647 = vunpack.c.l.b16 %v404
        %v648 = vunpack.c.h.b16 %v404
        %v649 = vunpack.c.l.b16 %v405
        %v650 = vunpack.c.h.b16 %v405
        %v651 = vunpack.c.l.b16 %v406
        %v652 = vunpack.c.h.b16 %v406
        %v653 = vunpack.c.l.b16 %v407
        %v654 = vunpack.c.h.b16 %v407
        %v655 = vunpack.c.l.b16 %v408
        %v656 = vunpack.c.h.b16 %v408
        %v657 = vunpack.c.l.b16 %v409
        %v658 = vunpack.c.h.b16 %v409
        %v659 = vunpack.c.l.b16 %v410
        %v660 = vunpack.c.h.b16 %v410
        %v661 = vunpack.c.l.b16 %v411
        %v662 = vunpack.c.h.b16 %v411
        %v663 = vunpack.c.l.b16 %v412
        %v664 = vunpack.c.h.b16 %v412
        %v665 = vunpack.c.l.b16 %v413
        %v666 = vunpack.c.h.b16 %v413
        %v667 = vunpack.c.l.b16 %v414
        %v668 = vunpack.c.h.b16 %v414
        %v669 = vunpack.c.l.b16 %v415
        %v670 = vunpack.c.h.b16 %v415
        %v671 = vunpack.c.l.b16 %v416
        %v672 = vunpack.c.h.b16 %v416
        %v673 = vunpack.c.l.b16 %v417
        %v674 = vunpack.c.h.b16 %v417
        %v675 = vunpack.c.l.b16 %v418
        %v676 = vunpack.c.h.b16 %v418
        %v677 = vunpack.c.l.b16 %v419
        %v678 = vunpack.c.h.b16 %v419
        %v679 = vunpack.c.l.b16 %v420
        %v680 = vunpack.c.h.b16 %v420
        %v681 = vunpack.c.l.b16 %v421
        %v682 = vunpack.c.h.b16 %v421
        %v683 = vunpack.c.l.b16 %v422
        %v684 = vunpack.c.h.b16 %v422
        %v685 = vunpack.c.l.b16 %v423
        %v686 = vunpack.c.h.b16 %v423
        %v687 = vunpack.c.l.b16 %v424
        %v688 = vunpack.c.h.b16 %v424
        %v689 = vunpack.c.l.b16 %v425
        %v690 = vunpack.c.h.b16 %v425
        %v691 = vunpack.c.l.b16 %v426
        %v692 = vunpack.c.h.b16 %v426
        %v693 = vunpack.c.l.b16 %v427
        %v694 = vunpack.c.h.b16 %v427
        %v695 = vunpack.c.l.b16 %v428
        %v696 = vunpack.c.h.b16 %v428
        %v697 = vunpack.c.l.b16 %v429
        %v698 = vunpack.c.h.b16 %v429
        %v699 = vunpack.c.l.b16 %v430
        %v700 = vunpack.c.h.b16 %v430
        %v701 = vunpack.c.l.b16 %v431
        %v702 = vunpack.c.h.b16 %v431
        %v703 = vunpack.c.l.b16 %v432
        %v704 = vunpack.c.h.b16 %v432
        %v705 = vunpack.c.l.b16 %v433
        %v706 = vunpack.c.h.b16 %v433
        %v707 = vunpack.c.l.b16 %v434
        %v708 = vunpack.c.h.b16 %v434
        %v709 = vunpack.c.l.b16 %v435
        %v710 = vunpack.c.h.b16 %v435
        %v711 = vunpack.c.l.b16 %v436
        %v712 = vunpack.c.h.b16 %v436
        %v713 = vunpack.c.l.b16 %v437
        %v714 = vunpack.c.h.b16 %v437
        %v715 = vunpack.c.l.b16 %v438
        %v716 = vunpack.c.h.b16 %v438
        %v717 = vunpack.c.l.b16 %v439
        %v718 = vunpack.c.h.b16 %v439
        %v719 = vunpack.c.l.b16 %v440
        %v720 = vunpack.c.h.b16 %v440
        %v721 = vunpack.c.l.b16 %v441
        %v722 = vunpack.c.h.b16 %v441
        %v723 = vunpack.c.l.b16 %v442
        %v724 = vunpack.c.h.b16 %v442
        %v725 = vunpack.c.l.b16 %v443
        %v726 = vunpack.c.h.b16 %v443
        %v727 = vunpack.c.l.b16 %v444
        %v728 = vunpack.c.h.b16 %v444
        %v729 = vunpack.c.l.b16 %v445
        %v730 = vunpack.c.h.b16 %v445
        %v731 = vunpack.c.l.b16 %v446
        %v732 = vunpack.c.h.b16 %v446
        %v733 = vpack.c.b16 %v607, %v605
        %v734 = vpack.c.b16 %v608, %v606
        %v735 = vpack.c.b16 %v611, %v609
        %v736 = vpack.c.b16 %v612, %v610
        %v737 = vpack.c.b16 %v615, %v613
        %v738 = vpack.c.b16 %v616, %v614
        %v739 = vpack.c.b16 %v619, %v617
        %v740 = vpack.c.b16 %v620, %v618
        %v741 = vpack.c.b16 %v623, %v621
        %v742 = vpack.c.b16 %v624, %v622
        %v743 = vpack.c.b16 %v627, %v625
        %v744 = vpack.c.b16 %v628, %v626
        %v745 = vpack.c.b16 %v631, %v629
        %v746 = vpack.c.b16 %v632, %v630
        %v747 = vpack.c.b16 %v635, %v633
        %v748 = vpack.c.b16 %v636, %v634
        %v749 = vpack.c.b16 %v639, %v637
        %v750 = vpack.c.b16 %v640, %v638
        %v751 = vpack.c.b16 %v643, %v641
        %v752 = vpack.c.b16 %v644, %v642
        %v753 = vpack.c.b16 %v647, %v645
        %v754 = vpack.c.b16 %v648, %v646
        %v755 = vpack.c.b16 %v651, %v649
        %v756 = vpack.c.b16 %v652, %v650
        %v757 = vpack.c.b16 %v655, %v653
        %v758 = vpack.c.b16 %v656, %v654
        %v759 = vpack.c.b16 %v659, %v657
        %v760 = vpack.c.b16 %v660, %v658
        %v761 = vpack.c.b16 %v663, %v661
        %v762 = vpack.c.b16 %v664, %v662
        %v763 = vpack.c.b16 %v667, %v665
        %v764 = vpack.c.b16 %v668, %v666
        %v765 = vpack.c.b16 %v671, %v669
        %v766 = vpack.c.b16 %v672, %v670
        %v767 = vpack.c.b16 %v675, %v673
        %v768 = vpack.c.b16 %v676, %v674
        %v769 = vpack.c.b16 %v679, %v677
        %v770 = vpack.c.b16 %v680, %v678
        %v771 = vpack.c.b16 %v683, %v681
        %v772 = vpack.c.b16 %v684, %v682
        %v773 = vpack.c.b16 %v687, %v685
        %v774 = vpack.c.b16 %v688, %v686
        %v775 = vpack.c.b16 %v691, %v689
        %v776 = vpack.c.b16 %v692, %v690
        %v777 = vpack.c.b16 %v695, %v693
        %v778 = vpack.c.b16 %v696, %v694
        %v779 = vpack.c.b16 %v699, %v697
        %v780 = vpack.c.b16 %v700, %v698
        %v781 = vpack.c.b16 %v703, %v701
        %v782 = vpack.c.b16 %v704, %v702
        %v783 = vpack.c.b16 %v707, %v705
        %v784 = vpack.c.b16 %v708, %v706
        %v785 = vpack.c.b16 %v711, %v709
        %v786 = vpack.c.b16 %v712, %v710
        %v787 = vpack.c.b16 %v715, %v713
        %v788 = vpack.c.b16 %v716, %v714
        %v789 = vpack.c.b16 %v719, %v717
        %v790 = vpack.c.b16 %v720, %v718
        %v791 = vpack.c.b16 %v723, %v721
        %v792 = vpack.c.b16 %v724, %v722
        %v793 = vpack.c.b16 %v727, %v725
        %v794 = vpack.c.b16 %v728, %v726
        %v795 = vpack.c.b16 %v731, %v729
        %v796 = vpack.c.b16 %v732, %v730
        %861 = vmatprep.subr.bf16.mxu0 %v734
        %862 = vmatpush1.bf16.msra.mxu0 %v733
        %863 = vmatprep.subr.bf16.mxu0 %v736
        %864 = vmatpush1.bf16.msra.mxu0 %v735
        %865 = vmatprep.subr.bf16.mxu0 %v738
        %866 = vmatpush1.bf16.msra.mxu0 %v737
        %867 = vmatprep.subr.bf16.mxu0 %v740
        %868 = vmatpush1.bf16.msra.mxu0 %v739
        %869 = vmatprep.subr.bf16.mxu0 %v742
        %870 = vmatpush1.bf16.msra.mxu0 %v741
        %871 = vmatprep.subr.bf16.mxu0 %v744
        %872 = vmatpush1.bf16.msra.mxu0 %v743
        %873 = vmatprep.subr.bf16.mxu0 %v746
        %874 = vmatpush1.bf16.msra.mxu0 %v745
        %875 = vmatprep.subr.bf16.mxu0 %v748
        %876 = vmatpush1.bf16.msra.mxu0 %v747
        %877 = vmatprep.subr.bf16.mxu0 %v750
        %878 = vmatpush1.bf16.msra.mxu0 %v749
        %879 = vmatprep.subr.bf16.mxu0 %v752
        %880 = vmatpush1.bf16.msra.mxu0 %v751
        %881 = vmatprep.subr.bf16.mxu0 %v754
        %882 = vmatpush1.bf16.msra.mxu0 %v753
        %883 = vmatprep.subr.bf16.mxu0 %v756
        %884 = vmatpush1.bf16.msra.mxu0 %v755
        %885 = vmatprep.subr.bf16.mxu0 %v758
        %886 = vmatpush1.bf16.msra.mxu0 %v757
        %887 = vmatprep.subr.bf16.mxu0 %v760
        %888 = vmatpush1.bf16.msra.mxu0 %v759
        %889 = vmatprep.subr.bf16.mxu0 %v762
        %890 = vmatpush1.bf16.msra.mxu0 %v761
        %891 = vmatprep.subr.bf16.mxu0 %v764
        %892 = vmatpush1.bf16.msra.mxu0 %v763
        %893 = vmatprep.mubr.bf16.mxu0 %v502
        %894 = vmatmul.mubr.bf16.gmra.mrb[0].mxu0 %v501
        %v895 = vpop.f32.mrb[0].mxu0
        %v896 = vadd.f32 0.0, %v895
        %v897 = vpop.f32.mrb[0].mxu0
        %v898 = vadd.f32 0.0, %v897
        %v899 = vpop.f32.mrb[0].mxu0
        %v900 = vadd.f32 0.0, %v899
        %v901 = vpop.f32.mrb[0].mxu0
        %v902 = vadd.f32 0.0, %v901
        %903 = vmatprep.mubr.bf16.mxu0 %v506
        %904 = vmatmul.mubr.bf16.gmra.mrb[0].mxu0 %v505
        %v905 = vpop.f32.mrb[0].mxu0
        %v906 = vadd.f32 0.0, %v905
        %v907 = vpop.f32.mrb[0].mxu0
        %v908 = vadd.f32 0.0, %v907
        %v909 = vpop.f32.mrb[0].mxu0
        %v910 = vadd.f32 0.0, %v909
        %v911 = vpop.f32.mrb[0].mxu0
        %v912 = vadd.f32 0.0, %v911
        %913 = vmatprep.mubr.bf16.mxu0 %v510
        %914 = vmatmul.mubr.bf16.gmra.mrb[0].mxu0 %v509
        %v915 = vpop.f32.mrb[0].mxu0
        %v916 = vadd.f32 0.0, %v915
        %v917 = vpop.f32.mrb[0].mxu0
        %v918 = vadd.f32 0.0, %v917
        %v919 = vpop.f32.mrb[0].mxu0
        %v920 = vadd.f32 0.0, %v919
        %v921 = vpop.f32.mrb[0].mxu0
        %v922 = vadd.f32 0.0, %v921
        %923 = vmatprep.mubr.bf16.mxu0 %v514
        %924 = vmatmul.mubr.bf16.gmra.mrb[0].mxu0 %v513
        %v925 = vpop.f32.mrb[0].mxu0
        %v926 = vadd.f32 0.0, %v925
        %v927 = vpop.f32.mrb[0].mxu0
        %v928 = vadd.f32 0.0, %v927
        %v929 = vpop.f32.mrb[0].mxu0
        %v930 = vadd.f32 0.0, %v929
        %v931 = vpop.f32.mrb[0].mxu0
        %v932 = vadd.f32 0.0, %v931
        %933 = vmatprep.mubr.bf16.mxu0 %v518
        %934 = vmatmul.mubr.bf16.gmra.mrb[0].mxu0 %v517
        %v935 = vpop.f32.mrb[0].mxu0
        %v936 = vadd.f32 0.0, %v935
        %v937 = vpop.f32.mrb[0].mxu0
        %v938 = vadd.f32 0.0, %v937
        %v939 = vpop.f32.mrb[0].mxu0
        %v940 = vpop.f32.mrb[0].mxu0
        %941 = vdwg.mxu0
        %942 = vmatprep.subr.bf16.mxu0 %v766
        %943 = vmatpush1.bf16.msra.mxu0 %v765
        %944 = vmatprep.subr.bf16.mxu0 %v768
        %945 = vmatpush1.bf16.msra.mxu0 %v767
        %946 = vmatprep.subr.bf16.mxu0 %v770
        %947 = vmatpush1.bf16.msra.mxu0 %v769
        %948 = vmatprep.subr.bf16.mxu0 %v772
        %949 = vmatpush1.bf16.msra.mxu0 %v771
        %950 = vmatprep.subr.bf16.mxu0 %v774
        %951 = vmatpush1.bf16.msra.mxu0 %v773
        %952 = vmatprep.subr.bf16.mxu0 %v776
        %953 = vmatpush1.bf16.msra.mxu0 %v775
        %954 = vmatprep.subr.bf16.mxu0 %v778
        %955 = vmatpush1.bf16.msra.mxu0 %v777
        %956 = vmatprep.subr.bf16.mxu0 %v780
        %957 = vmatpush1.bf16.msra.mxu0 %v779
        %958 = vmatprep.subr.bf16.mxu0 %v782
        %959 = vmatpush1.bf16.msra.mxu0 %v781
        %960 = vmatprep.subr.bf16.mxu0 %v784
        %961 = vmatpush1.bf16.msra.mxu0 %v783
        %962 = vmatprep.subr.bf16.mxu0 %v786
        %963 = vmatpush1.bf16.msra.mxu0 %v785
        %964 = vmatprep.subr.bf16.mxu0 %v788
        %965 = vmatpush1.bf16.msra.mxu0 %v787
        %966 = vmatprep.subr.bf16.mxu0 %v790
        %967 = vmatpush1.bf16.msra.mxu0 %v789
        %968 = vmatprep.subr.bf16.mxu0 %v792
        %969 = vmatpush1.bf16.msra.mxu0 %v791
        %970 = vmatprep.subr.bf16.mxu0 %v794
        %971 = vmatpush1.bf16.msra.mxu0 %v793
        %972 = vmatprep.subr.bf16.mxu0 %v796
        %973 = vmatpush1.bf16.msra.mxu0 %v795
        %974 = vmatprep.mubr.bf16.mxu0 %v504
        %975 = vmatmul.mubr.bf16.gmra.mrb[0].mxu0 %v503
        %v976 = vpop.f32.mrb[0].mxu0
        %v977 = vadd.f32 %v896, %v976
        %v978 = vpop.f32.mrb[0].mxu0
        %v979 = vadd.f32 %v898, %v978
        %v980 = vpop.f32.mrb[0].mxu0
        %v981 = vadd.f32 %v900, %v980
        %v982 = vpop.f32.mrb[0].mxu0
        %v983 = vadd.f32 %v902, %v982
        %984 = vmatprep.mubr.bf16.mxu0 %v508
        %985 = vmatmul.mubr.bf16.gmra.mrb[0].mxu0 %v507
        %v986 = vpop.f32.mrb[0].mxu0
        %v987 = vadd.f32 %v906, %v986
        %v988 = vpop.f32.mrb[0].mxu0
        %v989 = vadd.f32 %v908, %v988
        %v990 = vpop.f32.mrb[0].mxu0
        %v991 = vadd.f32 %v910, %v990
        %v992 = vpop.f32.mrb[0].mxu0
        %v993 = vadd.f32 %v912, %v992
        %994 = vmatprep.mubr.bf16.mxu0 %v512
        %995 = vmatmul.mubr.bf16.gmra.mrb[0].mxu0 %v511
        %v996 = vpop.f32.mrb[0].mxu0
        %v997 = vadd.f32 %v916, %v996
        %v998 = vpop.f32.mrb[0].mxu0
        %v999 = vadd.f32 %v918, %v998
        %v1000 = vpop.f32.mrb[0].mxu0
        %v1001 = vadd.f32 %v920, %v1000
        %v1002 = vpop.f32.mrb[0].mxu0
        %v1003 = vadd.f32 %v922, %v1002
        %1004 = vmatprep.mubr.bf16.mxu0 %v516
        %1005 = vmatmul.mubr.bf16.gmra.mrb[0].mxu0 %v515
        %v1006 = vpop.f32.mrb[0].mxu0
        %v1007 = vadd.f32 %v926, %v1006
        %v1008 = vpop.f32.mrb[0].mxu0
        %v1009 = vadd.f32 %v928, %v1008
        %v1010 = vpop.f32.mrb[0].mxu0
        %v1011 = vadd.f32 %v930, %v1010
        %v1012 = vpop.f32.mrb[0].mxu0
        %v1013 = vadd.f32 %v932, %v1012
        %1014 = vmatprep.mubr.bf16.mxu0 %v520
        %1015 = vmatmul.mubr.bf16.gmra.mrb[0].mxu0 %v519
        %v1016 = vpop.f32.mrb[0].mxu0
        %v1017 = vadd.f32 %v936, %v1016
        %v1018 = vpop.f32.mrb[0].mxu0
        %v1019 = vadd.f32 %v938, %v1018
        %v1020 = vpop.f32.mrb[0].mxu0
        %v1021 = vpop.f32.mrb[0].mxu0
        %1022 = vdwg.mxu0
        %v1023 = vadd.f32 %v347, %v977
        %v1024 = vadd.f32 %v348, %v979
        %v1025 = vadd.f32 %v349, %v981
        %v1026 = vadd.f32 %v350, %v983
        %v1027 = vadd.f32 %v351, %v987
        %v1028 = vadd.f32 %v352, %v989
        %v1029 = vadd.f32 %v353, %v991
        %v1030 = vadd.f32 %v354, %v993
        %v1031 = vadd.f32 %v355, %v997
        %v1032 = vadd.f32 %v356, %v999
        %v1033 = vadd.f32 %v357, %v1001
        %v1034 = vadd.f32 %v358, %v1003
        %v1035 = vadd.f32 %v359, %v1007
        %v1036 = vadd.f32 %v360, %v1009
        %v1037 = vadd.f32 %v361, %v1011
        %v1038 = vadd.f32 %v362, %v1013
        %v1039 = vadd.f32 %v363, %v1017
        %v1040 = vadd.f32 %v364, %v1019
        %1041 = vst [vmem:[#allocation2] sm:$0xff] %v1023
        %1042 = vst [vmem:[#allocation2 + $0x8] sm:$0xff] %v1024
        %1043 = vst [vmem:[#allocation2 + $0x10] sm:$0xff] %v1025
        %1044 = vst [vmem:[#allocation2 + $0x18] sm:$0xff] %v1026
        %1045 = vst [vmem:[#allocation2 + $0x20] sm:$0xff] %v1027
        %1046 = vst [vmem:[#allocation2 + $0x28] sm:$0xff] %v1028
        %1047 = vst [vmem:[#allocation2 + $0x30] sm:$0xff] %v1029
        %1048 = vst [vmem:[#allocation2 + $0x38] sm:$0xff] %v1030
        %1049 = vst [vmem:[#allocation2 + $0x40] sm:$0xff] %v1031
        %1050 = vst [vmem:[#allocation2 + $0x48] sm:$0xff] %v1032
        %1051 = vst [vmem:[#allocation2 + $0x50] sm:$0xff] %v1033
        %1052 = vst [vmem:[#allocation2 + $0x58] sm:$0xff] %v1034
        %1053 = vst [vmem:[#allocation2 + $0x60] sm:$0xff] %v1035
        %1054 = vst [vmem:[#allocation2 + $0x68] sm:$0xff] %v1036
        %1055 = vst [vmem:[#allocation2 + $0x70] sm:$0xff] %v1037
        %1056 = vst [vmem:[#allocation2 + $0x78] sm:$0xff] %v1038
        %1057 = vst [vmem:[#allocation2 + $0x80] sm:$0xff] %v1039
        %1058 = vst [vmem:[#allocation2 + $0x88] sm:$0xff] %v1040
        %p1059 = scmp.eq.s32.totalorder %s21, 6
        // Predicated region
        $region60: #{encoder_forward.10} parent=50 // pred_check
          %p1060 = pneg %p1059
        $region61: #{encoder_forward.10} parent=50 // pred_check_branch
          %1062 = sbr.rel (%p1060) target = $region63
        $region62: #{encoder_forward.10} parent=50 // pred_region
          %v1063 = vld [vmem:[#allocation2] sm:$0xff]
          %v1064 = vld [vmem:[#allocation2 + $0x8] sm:$0xff]
          %v1065 = vld [vmem:[#allocation2 + $0x10] sm:$0xff]
          %v1066 = vld [vmem:[#allocation2 + $0x18] sm:$0xff]
          %v1067 = vld [vmem:[#allocation2 + $0x20] sm:$0xff]
          %v1068 = vld [vmem:[#allocation2 + $0x28] sm:$0xff]
          %v1069 = vld [vmem:[#allocation2 + $0x30] sm:$0xff]
          %v1070 = vld [vmem:[#allocation2 + $0x38] sm:$0xff]
          %v1071 = vld [vmem:[#allocation2 + $0x40] sm:$0xff]
          %v1072 = vld [vmem:[#allocation2 + $0x48] sm:$0xff]
          %v1073 = vld [vmem:[#allocation2 + $0x50] sm:$0xff]
          %v1074 = vld [vmem:[#allocation2 + $0x58] sm:$0xff]
          %v1075 = vld [vmem:[#allocation2 + $0x60] sm:$0xff]
          %v1076 = vld [vmem:[#allocation2 + $0x68] sm:$0xff]
          %v1077 = vld [vmem:[#allocation2 + $0x70] sm:$0xff]
          %v1078 = vld [vmem:[#allocation2 + $0x78] sm:$0xff]
          %v1079 = vld [vmem:[#allocation2 + $0x80] sm:$0xff]
          %v1080 = vld [vmem:[#allocation2 + $0x88] sm:$0xff]
          %v1081 = vld [vmem:[%s311] sm:$0x3]
          %v1083 = vlaneseq
          %v1084 = vshrl.u32 %v1083, 7
          %v1085 = vsub.s32 0, %v1084
          %v1086 = vrot.slane %v1081, %v1085
          %v1087 = vlaneseq
          %v1088 = vshrl.u32 %v1087, 7
          %v1089 = vsub.s32 1, %v1088
          %v1090 = vrot.slane %v1081, %v1089
          %v1093 = vadd.f32 %v1063, %v1086
          %v1094 = vadd.f32 %v1064, %v1090
          %v1095 = vadd.f32 %v1065, %v1086
          %v1096 = vadd.f32 %v1066, %v1090
          %v1097 = vadd.f32 %v1067, %v1086
          %v1098 = vadd.f32 %v1068, %v1090
          %v1099 = vadd.f32 %v1069, %v1086
          %v1100 = vadd.f32 %v1070, %v1090
          %v1101 = vadd.f32 %v1071, %v1086
          %v1102 = vadd.f32 %v1072, %v1090
          %v1103 = vadd.f32 %v1073, %v1086
          %v1104 = vadd.f32 %v1074, %v1090
          %v1105 = vadd.f32 %v1075, %v1086
          %v1106 = vadd.f32 %v1076, %v1090
          %v1107 = vadd.f32 %v1077, %v1086
          %v1108 = vadd.f32 %v1078, %v1090
          %v1109 = vadd.f32 %v1079, %v1086
          %v1110 = vadd.f32 %v1080, %v1090
          %v1111 = vmax.f32 %v1093, 0.0
          %v1112 = vmax.f32 %v1094, 0.0
          %v1113 = vmax.f32 %v1095, 0.0
          %v1114 = vmax.f32 %v1096, 0.0
          %v1115 = vmax.f32 %v1097, 0.0
          %v1116 = vmax.f32 %v1098, 0.0
          %v1117 = vmax.f32 %v1099, 0.0
          %v1118 = vmax.f32 %v1100, 0.0
          %v1119 = vmax.f32 %v1101, 0.0
          %v1120 = vmax.f32 %v1102, 0.0
          %v1121 = vmax.f32 %v1103, 0.0
          %v1122 = vmax.f32 %v1104, 0.0
          %v1123 = vmax.f32 %v1105, 0.0
          %v1124 = vmax.f32 %v1106, 0.0
          %v1125 = vmax.f32 %v1107, 0.0
          %v1126 = vmax.f32 %v1108, 0.0
          %v1127 = vmax.f32 %v1109, 0.0
          %v1128 = vmax.f32 %v1110, 0.0
          %1129 = vst [vmem:[%s322] sm:$0xff] %v1111
          %1130 = vst [vmem:[%s322 + $0x8] sm:$0xff] %v1112
          %1131 = vst [vmem:[%s322 + $0x10] sm:$0xff] %v1113
          %1132 = vst [vmem:[%s322 + $0x18] sm:$0xff] %v1114
          %1133 = vst [vmem:[%s322 + $0x20] sm:$0xff] %v1115
          %1134 = vst [vmem:[%s322 + $0x28] sm:$0xff] %v1116
          %1135 = vst [vmem:[%s322 + $0x30] sm:$0xff] %v1117
          %1136 = vst [vmem:[%s322 + $0x38] sm:$0xff] %v1118
          %1137 = vst [vmem:[%s322 + $0x40] sm:$0xff] %v1119
          %1138 = vst [vmem:[%s322 + $0x48] sm:$0xff] %v1120
          %1139 = vst [vmem:[%s322 + $0x50] sm:$0xff] %v1121
          %1140 = vst [vmem:[%s322 + $0x58] sm:$0xff] %v1122
          %1141 = vst [vmem:[%s322 + $0x60] sm:$0xff] %v1123
          %1142 = vst [vmem:[%s322 + $0x68] sm:$0xff] %v1124
          %1143 = vst [vmem:[%s322 + $0x70] sm:$0xff] %v1125
          %1144 = vst [vmem:[%s322 + $0x78] sm:$0xff] %v1126
          %1145 = vst [vmem:[%s322 + $0x80] sm:$0xff] %v1127
          %1146 = vst [vmem:[%s322 + $0x88] sm:$0xff] %v1128
        $region63: #{encoder_forward.10} parent=50 // pred_fallthru
          _
        %s1147 = smul.u32 9, %s19
        %s1148 = smul.u32 2, %s20
        %p1149 = scmp.lt.s32.totalorder %s1147, 8
        %s1150 = scalar_select %p1149, %s1147, 8
        %p1151 = scmp.lt.s32.totalorder %s1148, 1
        %s1152 = scalar_select %p1151, %s1148, 1
        %s1153 = smul.addr %s1150, 2
        %s1154 = sadd.s32 %s1152, %s1153
        %s1155 = smul.addr %s1154, 8
        %s1156 = scalar_lea.vmem %s3, %s1155
        // Predicated region
        $region64: #{encoder_forward.10} parent=50 // pred_check
          %p1157 = pneg %p135
        $region65: #{encoder_forward.10} parent=50 // pred_check_branch
          %1159 = sbr.rel (%p1157) target = $region67
        $region66: #{encoder_forward.10} parent=50 // pred_region
          %s1160 = smul.u32 9, %s19
          %s1161 = smul.u32 2, %s20
        $region67: #{encoder_forward.10} parent=50 // pred_fallthru
          _
        // Predicated region
        $region68: #{encoder_forward.10} parent=50 // pred_check
          %p1162 = pneg %p135
        $region69: #{encoder_forward.10} parent=50 // pred_check_branch
          %1164 = sbr.rel (%p1162) target = $region71
        $region70: #{encoder_forward.10} parent=50 // pred_region
          %s1165 = smul.u32 9, %s19
          %s1166 = smul.u32 2, %s20
          %p1167 = scmp.lt.s32.totalorder %s1165, 8
          %s1168 = scalar_select %p1167, %s1165, 8
          %p1169 = scmp.lt.s32.totalorder %s1166, 1
          %s1170 = scalar_select %p1169, %s1166, 1
          %s1171 = smul.addr %s1168, 2
          %s1172 = sadd.s32 %s1170, %s1171
          %s1173 = smul.addr %s1172, 8
          %s1174 = scalar_lea.vmem %s3, %s1173
        $region71: #{encoder_forward.10} parent=50 // pred_fallthru
          _
      $region51: #{encoder_forward.10} parent=5 // pred_fallthru
        _
      %p1175 = scmp.le.s32.totalorder 2, %s9
      // Predicated region
      $region72: #{encoder_forward.10} parent=5 // pred_check
        %p1176 = pneg %p1175
      $region73: #{encoder_forward.10} parent=5 // pred_check_branch
        %1178 = sbr.rel (%p1176) target = $region75
      $region74: #{encoder_forward.10} parent=5 // pred_region
        %s1179 = ssub.s32 %s9, 2
      $region75: #{encoder_forward.10} parent=5 // pred_fallthru
        _
    $region6: #{encoder_forward.10} parent=1 // loop_footer
      %s13 = sadd.s32 1, %s9
    $region7: #{encoder_forward.10} parent=1 // loop_footer_branch
      %8 = sbr.rel target = $region3
    $region8: #{encoder_forward.10} parent=1 // loop_exit
      _

// kernel: encoder_forward.11
$region0: #{encoder_forward.11}
  #allocation0 [shape = 'u32[]', space=smem, size = 0x4, offset = 0x4, fixed_abs, tag = 'smem constant byte address 0x4 - core index']
  #allocation1 [shape = 'u32[144,128]{1,0:T(1,128)}', space=vmem, size = 0x12000, scoped, tag = 'internal scratch']
  %s0 = inlined_call_operand.vmem [shape: f32[6,3,2,2,256], index: 0, kind: input, shape index: {}]
  %s1 = inlined_call_operand.vmem [shape: f32[2,2,2,256], index: 1, kind: output, shape index: {}]
  %s2 = sld [smem:[#allocation0]]
  $region115: #{encoder_forward.11} parent=0
    _
  %s4 = ssub.s32 1, %s2
  %s5 = scalar_select 0, %s4, %s2
  $region1: #{encoder_forward.11} parent=0
    #allocation2 [shape = 'u8[73728]{0}', space=vmem, size = 0x12000, scoped, tag = 'input window, operand 0']
    #allocation3 [shape = 'u8[8192]{0}', space=vmem, size = 0x2000, scoped, tag = 'output window, operand 0']
    loop: start=0, step=1, limit=4
    $region2: #{encoder_forward.11} parent=1 // loop_pre_header
      _
    $region3: #{encoder_forward.11} parent=1 // loop_header
      %s7 = sphi 0, %s11
      %p8 = scmp.ge.s32.totalorder %s7, 4
      %s17 = sphi 0, %s19
      %s20 = sphi 0, %s17
      %s21 = sphi 0, %s20
      %s37 = sphi 0, %s21
      %s43 = sphi 0, %s45
      %s46 = sphi 0, %s43
      %s47 = sphi 0, %s46
      %s63 = sphi 0, %s47
    $region4: #{encoder_forward.11} parent=1 // loop_header_branch
      %10 = sbr.rel (%p8) target = $region8
    $region5: #{encoder_forward.11} parent=1 // loop_body
      %s12 = ssub.s32 %s7, 1
      %s13 = ssub.s32 %s7, 2
      %s14 = sadd.s32 %s7, 1
      %s15 = ssub.s32 %s7, %s14
      %p16 = scmp.eq.s32.totalorder %s15, 0
      %s18 = sadd.s32 %s17, 1
      %s19 = scalar_select %p16, %s17, %s18
      %p22 = pneg %p16
      %p23 = scmp.eq.s32.totalorder %s7, 1
      %p24 = por %p22, %p23
      %p25 = scmp.ne.s32.totalorder %s17, %s20
      %p26 = scmp.eq.s32.totalorder %s7, 0
      %p27 = por %p25, %p26
      %p28 = scmp.ne.s32.totalorder %s17, %s20
      %p29 = scmp.eq.s32.totalorder %s12, 1
      %p30 = por %p28, %p29
      %p31 = scmp.ne.s32.totalorder %s20, %s21
      %p32 = scmp.eq.s32.totalorder %s12, 0
      %p33 = por %p31, %p32
      %p34 = scmp.ne.s32.totalorder %s20, %s21
      %p35 = scmp.eq.s32.totalorder %s13, 1
      %p36 = por %p34, %p35
      %p38 = scmp.ne.s32.totalorder %s21, %s37
      %p39 = scmp.eq.s32.totalorder %s13, 0
      %p40 = por %p38, %p39
      %s41 = ssub.s32 %s7, %s14
      %p42 = scmp.eq.s32.totalorder %s41, 0
      %s44 = sadd.s32 %s43, 1
      %s45 = scalar_select %p42, %s43, %s44
      %p48 = pneg %p42
      %p49 = scmp.eq.s32.totalorder %s7, 1
      %p50 = por %p48, %p49
      %p51 = scmp.ne.s32.totalorder %s43, %s46
      %p52 = scmp.eq.s32.totalorder %s7, 0
      %p53 = por %p51, %p52
      %p54 = scmp.ne.s32.totalorder %s43, %s46
      %p55 = scmp.eq.s32.totalorder %s12, 1
      %p56 = por %p54, %p55
      %p57 = scmp.ne.s32.totalorder %s46, %s47
      %p58 = scmp.eq.s32.totalorder %s12, 0
      %p59 = por %p57, %p58
      %p60 = scmp.ne.s32.totalorder %s46, %s47
      %p61 = scmp.eq.s32.totalorder %s13, 1
      %p62 = por %p60, %p61
      %p64 = scmp.ne.s32.totalorder %s47, %s63
      %p65 = scmp.eq.s32.totalorder %s13, 0
      %p66 = por %p64, %p65
      %p67 = scmp.le.s32.totalorder 1, %s7
      %p68 = scmp.lt.s32.totalorder %s7, 3
      %p69 = pnand %p67, %p68
      %p70 = pneg %p69
      // Predicated region
      $region9: #{encoder_forward.11} parent=5 // pred_check
        _
      $region10: #{encoder_forward.11} parent=5 // pred_check_branch
        %72 = sbr.rel (%p69) target = $region12
      $region11: #{encoder_forward.11} parent=5 // pred_region
        %s73 = ssub.s32 %s7, 1
      $region12: #{encoder_forward.11} parent=5 // pred_fallthru
        _
      %p74 = scmp.lt.s32.totalorder %s7, 2
      // Predicated region
      $region13: #{encoder_forward.11} parent=5 // pred_check
        %p75 = pneg %p74
      $region14: #{encoder_forward.11} parent=5 // pred_check_branch
        %77 = sbr.rel (%p75) target = $region16
      $region15: #{encoder_forward.11} parent=5 // pred_region
        // Predicated region
        $region17: #{encoder_forward.11} parent=15 // pred_check
          %p78 = pneg %p27
        $region18: #{encoder_forward.11} parent=15 // pred_check_branch
          %80 = sbr.rel (%p78) target = $region20
        $region19: #{encoder_forward.11} parent=15 // pred_region
          %s81 = sand.u32 %s17, 1
          %s82 = sand.u32 %s17, 1
          %s83 = smul.addr %s82, 72
          %s84 = scalar_lea.vmem [#allocation2], %s83
          %s85 = smul.addr %s7, 2
          %s86 = scalar_lea.vmem %s0, %s85
          // Predicated region
          $region21: #{encoder_forward.11} parent=19 // pred_check
            _
          $region22: #{encoder_forward.11} parent=19 // pred_check_branch
            %88 = sbr.rel (0) target = $region24
          $region23: #{encoder_forward.11} parent=19 // pred_region
            // Predicated region
            $region25: #{encoder_forward.11} parent=23 // pred_check
              _
            $region26: #{encoder_forward.11} parent=23 // pred_check_branch
              %90 = sbr.rel target = $region28
            $region27: #{encoder_forward.11} parent=23 // pred_region
              // Predicated region
              $region40: #{encoder_forward.11} parent=27 // pred_check
                _
              $region41: #{encoder_forward.11} parent=27 // pred_check_branch
                %175 = sbr.rel (0) target = $region43
              $region42: #{encoder_forward.11} parent=27 // pred_region
                loop: start=0, step=1, limit=1
                $region44: #{encoder_forward.11} parent=42 // loop_pre_header
                  _
                $region45: #{encoder_forward.11} parent=42 // loop_header
                  %s177 = sphi 0, %s181
                  %p178 = scmp.ge.s32.totalorder %s177, 1
                  %s182 = sphi %s86, %s86
                  %s183 = sphi %s84, %s84
                $region46: #{encoder_forward.11} parent=42 // loop_header_branch
                  %180 = sbr.rel (%p178) target = $region50
                $region47: #{encoder_forward.11} parent=42 // loop_body
                  _
                $region48: #{encoder_forward.11} parent=42 // loop_footer
                  %s181 = sadd.s32 1, %s177
                $region49: #{encoder_forward.11} parent=42 // loop_footer_branch
                  %176 = sbr.rel target = $region45
                $region50: #{encoder_forward.11} parent=42 // loop_exit
                  _
                loop: start=0, step=1, limit=1
                $region51: #{encoder_forward.11} parent=42 // loop_pre_header
                  _
                $region52: #{encoder_forward.11} parent=42 // loop_header
                  %s186 = sphi 0, %s190
                  %p187 = scmp.ge.s32.totalorder %s186, 1
                  %s191 = sphi %s86, %s86
                  %s192 = sphi %s84, %s84
                $region53: #{encoder_forward.11} parent=42 // loop_header_branch
                  %189 = sbr.rel (%p187) target = $region57
                $region54: #{encoder_forward.11} parent=42 // loop_body
                  %v193 = vld [vmem:[%s191] sm:$0x3]
                  %194 = vst [vmem:[%s192] sm:$0x3] %v193
                  %v195 = vld [vmem:[%s191 + $0x4] sm:$0x3]
                  %196 = vst [vmem:[%s192 + $0x2] sm:$0x3] %v195
                  %v197 = vld [vmem:[%s191 + $0x8] sm:$0x3]
                  %198 = vst [vmem:[%s192 + $0x4] sm:$0x3] %v197
                  %v199 = vld [vmem:[%s191 + $0xc] sm:$0x3]
                  %200 = vst [vmem:[%s192 + $0x6] sm:$0x3] %v199
                  %v201 = vld [vmem:[%s191 + $0x10] sm:$0x3]
                  %202 = vst [vmem:[%s192 + $0x8] sm:$0x3] %v201
                  %v203 = vld [vmem:[%s191 + $0x14] sm:$0x3]
                  %204 = vst [vmem:[%s192 + $0xa] sm:$0x3] %v203
                  %v205 = vld [vmem:[%s191 + $0x18] sm:$0x3]
                  %206 = vst [vmem:[%s192 + $0xc] sm:$0x3] %v205
                  %v207 = vld [vmem:[%s191 + $0x1c] sm:$0x3]
                  %208 = vst [vmem:[%s192 + $0xe] sm:$0x3] %v207
                  %v209 = vld [vmem:[%s191 + $0x20] sm:$0x3]
                  %210 = vst [vmem:[%s192 + $0x10] sm:$0x3] %v209
                  %v211 = vld [vmem:[%s191 + $0x24] sm:$0x3]
                  %212 = vst [vmem:[%s192 + $0x12] sm:$0x3] %v211
                  %v213 = vld [vmem:[%s191 + $0x28] sm:$0x3]
                  %214 = vst [vmem:[%s192 + $0x14] sm:$0x3] %v213
                  %v215 = vld [vmem:[%s191 + $0x2c] sm:$0x3]
                  %216 = vst [vmem:[%s192 + $0x16] sm:$0x3] %v215
                  %v217 = vld [vmem:[%s191 + $0x30] sm:$0x3]
                  %218 = vst [vmem:[%s192 + $0x18] sm:$0x3] %v217
                  %v219 = vld [vmem:[%s191 + $0x34] sm:$0x3]
                  %220 = vst [vmem:[%s192 + $0x1a] sm:$0x3] %v219
                  %v221 = vld [vmem:[%s191 + $0x38] sm:$0x3]
                  %222 = vst [vmem:[%s192 + $0x1c] sm:$0x3] %v221
                  %v223 = vld [vmem:[%s191 + $0x3c] sm:$0x3]
                  %224 = vst [vmem:[%s192 + $0x1e] sm:$0x3] %v223
                  %v225 = vld [vmem:[%s191 + $0x40] sm:$0x3]
                  %226 = vst [vmem:[%s192 + $0x20] sm:$0x3] %v225
                  %v227 = vld [vmem:[%s191 + $0x44] sm:$0x3]
                  %228 = vst [vmem:[%s192 + $0x22] sm:$0x3] %v227
                  %v229 = vld [vmem:[%s191 + $0x48] sm:$0x3]
                  %230 = vst [vmem:[%s192 + $0x24] sm:$0x3] %v229
                  %v231 = vld [vmem:[%s191 + $0x4c] sm:$0x3]
                  %232 = vst [vmem:[%s192 + $0x26] sm:$0x3] %v231
                  %v233 = vld [vmem:[%s191 + $0x50] sm:$0x3]
                  %234 = vst [vmem:[%s192 + $0x28] sm:$0x3] %v233
                  %v235 = vld [vmem:[%s191 + $0x54] sm:$0x3]
                  %236 = vst [vmem:[%s192 + $0x2a] sm:$0x3] %v235
                  %v237 = vld [vmem:[%s191 + $0x58] sm:$0x3]
                  %238 = vst [vmem:[%s192 + $0x2c] sm:$0x3] %v237
                  %v239 = vld [vmem:[%s191 + $0x5c] sm:$0x3]
                  %240 = vst [vmem:[%s192 + $0x2e] sm:$0x3] %v239
                  %v241 = vld [vmem:[%s191 + $0x60] sm:$0x3]
                  %242 = vst [vmem:[%s192 + $0x30] sm:$0x3] %v241
                  %v243 = vld [vmem:[%s191 + $0x64] sm:$0x3]
                  %244 = vst [vmem:[%s192 + $0x32] sm:$0x3] %v243
                  %v245 = vld [vmem:[%s191 + $0x68] sm:$0x3]
                  %246 = vst [vmem:[%s192 + $0x34] sm:$0x3] %v245
                  %v247 = vld [vmem:[%s191 + $0x6c] sm:$0x3]
                  %248 = vst [vmem:[%s192 + $0x36] sm:$0x3] %v247
                  %v249 = vld [vmem:[%s191 + $0x70] sm:$0x3]
                  %250 = vst [vmem:[%s192 + $0x38] sm:$0x3] %v249
                  %v251 = vld [vmem:[%s191 + $0x74] sm:$0x3]
                  %252 = vst [vmem:[%s192 + $0x3a] sm:$0x3] %v251
                  %v253 = vld [vmem:[%s191 + $0x78] sm:$0x3]
                  %254 = vst [vmem:[%s192 + $0x3c] sm:$0x3] %v253
                  %v255 = vld [vmem:[%s191 + $0x7c] sm:$0x3]
                  %256 = vst [vmem:[%s192 + $0x3e] sm:$0x3] %v255
                  %v257 = vld [vmem:[%s191 + $0x80] sm:$0x3]
                  %258 = vst [vmem:[%s192 + $0x40] sm:$0x3] %v257
                  %v259 = vld [vmem:[%s191 + $0x84] sm:$0x3]
                  %260 = vst [vmem:[%s192 + $0x42] sm:$0x3] %v259
                  %v261 = vld [vmem:[%s191 + $0x88] sm:$0x3]
                  %262 = vst [vmem:[%s192 + $0x44] sm:$0x3] %v261
                  %v263 = vld [vmem:[%s191 + $0x8c] sm:$0x3]
                  %264 = vst [vmem:[%s192 + $0x46] sm:$0x3] %v263
                $region55: #{encoder_forward.11} parent=42 // loop_footer
                  %s190 = sadd.s32 1, %s186
                $region56: #{encoder_forward.11} parent=42 // loop_footer_branch
                  %185 = sbr.rel target = $region52
                $region57: #{encoder_forward.11} parent=42 // loop_exit
                  _
              $region43: #{encoder_forward.11} parent=27 // pred_fallthru
                _
            $region28: #{encoder_forward.11} parent=23 // pred_fallthru
              _
            // Predicated region
            $region29: #{encoder_forward.11} parent=23 // pred_check
              _
            $region30: #{encoder_forward.11} parent=23 // pred_check_branch
              %92 = sbr.rel (0) target = $region32
            $region31: #{encoder_forward.11} parent=23 // pred_region
              loop: start=0, step=1, limit=1
              $region33: #{encoder_forward.11} parent=31 // loop_pre_header
                _
              $region34: #{encoder_forward.11} parent=31 // loop_header
                %s95 = sphi 0, %s99
                %p96 = scmp.ge.s32.totalorder %s95, 1
                %s100 = sphi %s86, %s86
                %s101 = sphi %s84, %s84
              $region35: #{encoder_forward.11} parent=31 // loop_header_branch
                %98 = sbr.rel (%p96) target = $region39
              $region36: #{encoder_forward.11} parent=31 // loop_body
                %v102 = vld [vmem:[%s100] sm:$0x3]
                %103 = vst [vmem:[%s101] sm:$0x3] %v102
                %v104 = vld [vmem:[%s100 + $0x4] sm:$0x3]
                %105 = vst [vmem:[%s101 + $0x2] sm:$0x3] %v104
                %v106 = vld [vmem:[%s100 + $0x8] sm:$0x3]
                %107 = vst [vmem:[%s101 + $0x4] sm:$0x3] %v106
                %v108 = vld [vmem:[%s100 + $0xc] sm:$0x3]
                %109 = vst [vmem:[%s101 + $0x6] sm:$0x3] %v108
                %v110 = vld [vmem:[%s100 + $0x10] sm:$0x3]
                %111 = vst [vmem:[%s101 + $0x8] sm:$0x3] %v110
                %v112 = vld [vmem:[%s100 + $0x14] sm:$0x3]
                %113 = vst [vmem:[%s101 + $0xa] sm:$0x3] %v112
                %v114 = vld [vmem:[%s100 + $0x18] sm:$0x3]
                %115 = vst [vmem:[%s101 + $0xc] sm:$0x3] %v114
                %v116 = vld [vmem:[%s100 + $0x1c] sm:$0x3]
                %117 = vst [vmem:[%s101 + $0xe] sm:$0x3] %v116
                %v118 = vld [vmem:[%s100 + $0x20] sm:$0x3]
                %119 = vst [vmem:[%s101 + $0x10] sm:$0x3] %v118
                %v120 = vld [vmem:[%s100 + $0x24] sm:$0x3]
                %121 = vst [vmem:[%s101 + $0x12] sm:$0x3] %v120
                %v122 = vld [vmem:[%s100 + $0x28] sm:$0x3]
                %123 = vst [vmem:[%s101 + $0x14] sm:$0x3] %v122
                %v124 = vld [vmem:[%s100 + $0x2c] sm:$0x3]
                %125 = vst [vmem:[%s101 + $0x16] sm:$0x3] %v124
                %v126 = vld [vmem:[%s100 + $0x30] sm:$0x3]
                %127 = vst [vmem:[%s101 + $0x18] sm:$0x3] %v126
                %v128 = vld [vmem:[%s100 + $0x34] sm:$0x3]
                %129 = vst [vmem:[%s101 + $0x1a] sm:$0x3] %v128
                %v130 = vld [vmem:[%s100 + $0x38] sm:$0x3]
                %131 = vst [vmem:[%s101 + $0x1c] sm:$0x3] %v130
                %v132 = vld [vmem:[%s100 + $0x3c] sm:$0x3]
                %133 = vst [vmem:[%s101 + $0x1e] sm:$0x3] %v132
                %v134 = vld [vmem:[%s100 + $0x40] sm:$0x3]
                %135 = vst [vmem:[%s101 + $0x20] sm:$0x3] %v134
                %v136 = vld [vmem:[%s100 + $0x44] sm:$0x3]
                %137 = vst [vmem:[%s101 + $0x22] sm:$0x3] %v136
                %v138 = vld [vmem:[%s100 + $0x48] sm:$0x3]
                %139 = vst [vmem:[%s101 + $0x24] sm:$0x3] %v138
                %v140 = vld [vmem:[%s100 + $0x4c] sm:$0x3]
                %141 = vst [vmem:[%s101 + $0x26] sm:$0x3] %v140
                %v142 = vld [vmem:[%s100 + $0x50] sm:$0x3]
                %143 = vst [vmem:[%s101 + $0x28] sm:$0x3] %v142
                %v144 = vld [vmem:[%s100 + $0x54] sm:$0x3]
                %145 = vst [vmem:[%s101 + $0x2a] sm:$0x3] %v144
                %v146 = vld [vmem:[%s100 + $0x58] sm:$0x3]
                %147 = vst [vmem:[%s101 + $0x2c] sm:$0x3] %v146
                %v148 = vld [vmem:[%s100 + $0x5c] sm:$0x3]
                %149 = vst [vmem:[%s101 + $0x2e] sm:$0x3] %v148
                %v150 = vld [vmem:[%s100 + $0x60] sm:$0x3]
                %151 = vst [vmem:[%s101 + $0x30] sm:$0x3] %v150
                %v152 = vld [vmem:[%s100 + $0x64] sm:$0x3]
                %153 = vst [vmem:[%s101 + $0x32] sm:$0x3] %v152
                %v154 = vld [vmem:[%s100 + $0x68] sm:$0x3]
                %155 = vst [vmem:[%s101 + $0x34] sm:$0x3] %v154
                %v156 = vld [vmem:[%s100 + $0x6c] sm:$0x3]
                %157 = vst [vmem:[%s101 + $0x36] sm:$0x3] %v156
                %v158 = vld [vmem:[%s100 + $0x70] sm:$0x3]
                %159 = vst [vmem:[%s101 + $0x38] sm:$0x3] %v158
                %v160 = vld [vmem:[%s100 + $0x74] sm:$0x3]
                %161 = vst [vmem:[%s101 + $0x3a] sm:$0x3] %v160
                %v162 = vld [vmem:[%s100 + $0x78] sm:$0x3]
                %163 = vst [vmem:[%s101 + $0x3c] sm:$0x3] %v162
                %v164 = vld [vmem:[%s100 + $0x7c] sm:$0x3]
                %165 = vst [vmem:[%s101 + $0x3e] sm:$0x3] %v164
                %v166 = vld [vmem:[%s100 + $0x80] sm:$0x3]
                %167 = vst [vmem:[%s101 + $0x40] sm:$0x3] %v166
                %v168 = vld [vmem:[%s100 + $0x84] sm:$0x3]
                %169 = vst [vmem:[%s101 + $0x42] sm:$0x3] %v168
                %v170 = vld [vmem:[%s100 + $0x88] sm:$0x3]
                %171 = vst [vmem:[%s101 + $0x44] sm:$0x3] %v170
                %v172 = vld [vmem:[%s100 + $0x8c] sm:$0x3]
                %173 = vst [vmem:[%s101 + $0x46] sm:$0x3] %v172
              $region37: #{encoder_forward.11} parent=31 // loop_footer
                %s99 = sadd.s32 1, %s95
              $region38: #{encoder_forward.11} parent=31 // loop_footer_branch
                %94 = sbr.rel target = $region34
              $region39: #{encoder_forward.11} parent=31 // loop_exit
                _
            $region32: #{encoder_forward.11} parent=23 // pred_fallthru
              _
          $region24: #{encoder_forward.11} parent=19 // pred_fallthru
            _
          %265 = vnop
        $region20: #{encoder_forward.11} parent=15 // pred_fallthru
          _
      $region16: #{encoder_forward.11} parent=5 // pred_fallthru
        _
      %p266 = scmp.le.s32.totalorder 1, %s7
      %p267 = scmp.lt.s32.totalorder %s7, 3
      %p268 = pnand %p266, %p267
      %p269 = pneg %p268
      // Predicated region
      $region58: #{encoder_forward.11} parent=5 // pred_check
        _
      $region59: #{encoder_forward.11} parent=5 // pred_check_branch
        %271 = sbr.rel (%p268) target = $region61
      $region60: #{encoder_forward.11} parent=5 // pred_region
        %s272 = ssub.s32 %s7, 1
        %s273 = sand.u32 %s20, 1
        %s274 = sand.u32 %s20, 1
        %s275 = smul.addr %s274, 72
        %s276 = scalar_lea.vmem [#allocation2], %s275
        // Predicated region
        $region62: #{encoder_forward.11} parent=60 // pred_check
          %p277 = pneg %p33
        $region63: #{encoder_forward.11} parent=60 // pred_check_branch
          %279 = sbr.rel (%p277) target = $region65
        $region64: #{encoder_forward.11} parent=60 // pred_region
          _
        $region65: #{encoder_forward.11} parent=60 // pred_fallthru
          _
        %s280 = sand.u32 %s20, 1
        %s281 = sand.u32 %s20, 1
        %s282 = smul.addr %s281, 72
        %s283 = scalar_lea.vmem [#allocation2], %s282
        %p284 = pneg %p33
        %p285 = pneg %p30
        %p286 = pneg %p59
        %p287 = pneg %p56
        %s288 = sand.u32 %s46, 1
        %s289 = sand.u32 %s46, 1
        %s290 = smul.addr %s289, 8
        %s291 = scalar_lea.vmem [#allocation3], %s290
        %v292 = vld [vmem:[%s276] sm:$0x3]
        %v293 = vld [vmem:[%s276 + $0x4] sm:$0x3]
        %s294 = scalar_lea.vmem %s276, 2 [#allocation2]
        %v295 = vld [vmem:[%s294] sm:$0x3]
        %v296 = vld [vmem:[%s294 + $0x4] sm:$0x3]
        %v297 = vmax.f32 %v292, %v295
        %v298 = vmax.f32 %v293, %v296
        %s299 = scalar_lea.vmem %s276, 4 [#allocation2]
        %v300 = vld [vmem:[%s299] sm:$0x3]
        %v301 = vld [vmem:[%s299 + $0x4] sm:$0x3]
        %v302 = vmax.f32 %v297, %v300
        %v303 = vmax.f32 %v298, %v301
        %s304 = scalar_lea.vmem %s276, 12 [#allocation2]
        %v305 = vld [vmem:[%s304] sm:$0x3]
        %v306 = vld [vmem:[%s304 + $0x4] sm:$0x3]
        %v307 = vmax.f32 %v302, %v305
        %v308 = vmax.f32 %v303, %v306
        %s309 = scalar_lea.vmem %s276, 14 [#allocation2]
        %v310 = vld [vmem:[%s309] sm:$0x3]
        %v311 = vld [vmem:[%s309 + $0x4] sm:$0x3]
        %v312 = vmax.f32 %v307, %v310
        %v313 = vmax.f32 %v308, %v311
        %s314 = scalar_lea.vmem %s276, 16 [#allocation2]
        %v315 = vld [vmem:[%s314] sm:$0x3]
        %v316 = vld [vmem:[%s314 + $0x4] sm:$0x3]
        %v317 = vmax.f32 %v312, %v315
        %v318 = vmax.f32 %v313, %v316
        %s319 = scalar_lea.vmem %s276, 24 [#allocation2]
        %v320 = vld [vmem:[%s319] sm:$0x3]
        %v321 = vld [vmem:[%s319 + $0x4] sm:$0x3]
        %v322 = vmax.f32 %v317, %v320
        %v323 = vmax.f32 %v318, %v321
        %s324 = scalar_lea.vmem %s276, 26 [#allocation2]
        %v325 = vld [vmem:[%s324] sm:$0x3]
        %v326 = vld [vmem:[%s324 + $0x4] sm:$0x3]
        %v327 = vmax.f32 %v322, %v325
        %v328 = vmax.f32 %v323, %v326
        %s329 = scalar_lea.vmem %s276, 28 [#allocation2]
        %v330 = vld [vmem:[%s329] sm:$0x3]
        %v331 = vld [vmem:[%s329 + $0x4] sm:$0x3]
        %v332 = vmax.f32 %v327, %v330
        %v333 = vmax.f32 %v328, %v331
        %334 = vst [vmem:[%s291] sm:$0x3] %v332
        %335 = vst [vmem:[%s291 + $0x2] sm:$0x3] %v333
        %v336 = vld [vmem:[%s319] sm:$0x3]
        %v337 = vld [vmem:[%s319 + $0x4] sm:$0x3]
        %v338 = vld [vmem:[%s324] sm:$0x3]
        %v339 = vld [vmem:[%s324 + $0x4] sm:$0x3]
        %v340 = vmax.f32 %v336, %v338
        %v341 = vmax.f32 %v337, %v339
        %v342 = vld [vmem:[%s329] sm:$0x3]
        %v343 = vld [vmem:[%s329 + $0x4] sm:$0x3]
        %v344 = vmax.f32 %v340, %v342
        %v345 = vmax.f32 %v341, %v343
        %s346 = scalar_lea.vmem %s276, 36 [#allocation2]
        %v347 = vld [vmem:[%s346] sm:$0x3]
        %v348 = vld [vmem:[%s346 + $0x4] sm:$0x3]
        %v349 = vmax.f32 %v344, %v347
        %v350 = vmax.f32 %v345, %v348
        %s351 = scalar_lea.vmem %s276, 38 [#allocation2]
        %v352 = vld [vmem:[%s351] sm:$0x3]
        %v353 = vld [vmem:[%s351 + $0x4] sm:$0x3]
        %v354 = vmax.f32 %v349, %v352
        %v355 = vmax.f32 %v350, %v353
        %s356 = scalar_lea.vmem %s276, 40 [#allocation2]
        %v357 = vld [vmem:[%s356] sm:$0x3]
        %v358 = vld [vmem:[%s356 + $0x4] sm:$0x3]
        %v359 = vmax.f32 %v354, %v357
        %v360 = vmax.f32 %v355, %v358
        %s361 = scalar_lea.vmem %s276, 48 [#allocation2]
        %v362 = vld [vmem:[%s361] sm:$0x3]
        %v363 = vld [vmem:[%s361 + $0x4] sm:$0x3]
        %v364 = vmax.f32 %v359, %v362
        %v365 = vmax.f32 %v360, %v363
        %s366 = scalar_lea.vmem %s276, 50 [#allocation2]
        %v367 = vld [vmem:[%s366] sm:$0x3]
        %v368 = vld [vmem:[%s366 + $0x4] sm:$0x3]
        %v369 = vmax.f32 %v364, %v367
        %v370 = vmax.f32 %v365, %v368
        %s371 = scalar_lea.vmem %s276, 52 [#allocation2]
        %v372 = vld [vmem:[%s371] sm:$0x3]
        %v373 = vld [vmem:[%s371 + $0x4] sm:$0x3]
        %v374 = vmax.f32 %v369, %v372
        %v375 = vmax.f32 %v370, %v373
        %s376 = scalar_lea.vmem %s291, 4 [#allocation3]
        %377 = vst [vmem:[%s376] sm:$0x3] %v374
        %378 = vst [vmem:[%s376 + $0x2] sm:$0x3] %v375
        %s379 = sand.u32 %s46, 1
        %s380 = sand.u32 %s46, 1
        %s381 = smul.addr %s380, 8
        %s382 = scalar_lea.vmem [#allocation3], %s381
        // Predicated region
        $region66: #{encoder_forward.11} parent=60 // pred_check
          %p383 = pneg %p56
        $region67: #{encoder_forward.11} parent=60 // pred_check_branch
          %385 = sbr.rel (%p383) target = $region69
        $region68: #{encoder_forward.11} parent=60 // pred_region
          %s386 = smul.addr %s12, 2
          %s387 = scalar_lea.vmem %s1, %s386
          // Predicated region
          $region70: #{encoder_forward.11} parent=68 // pred_check
            _
          $region71: #{encoder_forward.11} parent=68 // pred_check_branch
            %389 = sbr.rel (0) target = $region73
          $region72: #{encoder_forward.11} parent=68 // pred_region
            // Predicated region
            $region74: #{encoder_forward.11} parent=72 // pred_check
              _
            $region75: #{encoder_forward.11} parent=72 // pred_check_branch
              %391 = sbr.rel target = $region77
            $region76: #{encoder_forward.11} parent=72 // pred_region
              // Predicated region
              $region89: #{encoder_forward.11} parent=76 // pred_check
                _
              $region90: #{encoder_forward.11} parent=76 // pred_check_branch
                %412 = sbr.rel (0) target = $region92
              $region91: #{encoder_forward.11} parent=76 // pred_region
                loop: start=0, step=1, limit=1
                $region93: #{encoder_forward.11} parent=91 // loop_pre_header
                  _
                $region94: #{encoder_forward.11} parent=91 // loop_header
                  %s414 = sphi 0, %s418
                  %p415 = scmp.ge.s32.totalorder %s414, 1
                  %s419 = sphi %s382, %s382
                  %s420 = sphi %s387, %s387
                $region95: #{encoder_forward.11} parent=91 // loop_header_branch
                  %417 = sbr.rel (%p415) target = $region99
                $region96: #{encoder_forward.11} parent=91 // loop_body
                  _
                $region97: #{encoder_forward.11} parent=91 // loop_footer
                  %s418 = sadd.s32 1, %s414
                $region98: #{encoder_forward.11} parent=91 // loop_footer_branch
                  %413 = sbr.rel target = $region94
                $region99: #{encoder_forward.11} parent=91 // loop_exit
                  _
                loop: start=0, step=1, limit=1
                $region100: #{encoder_forward.11} parent=91 // loop_pre_header
                  _
                $region101: #{encoder_forward.11} parent=91 // loop_header
                  %s423 = sphi 0, %s427
                  %p424 = scmp.ge.s32.totalorder %s423, 1
                  %s428 = sphi %s382, %s382
                  %s429 = sphi %s387, %s387
                $region102: #{encoder_forward.11} parent=91 // loop_header_branch
                  %426 = sbr.rel (%p424) target = $region106
                $region103: #{encoder_forward.11} parent=91 // loop_body
                  %v430 = vld [vmem:[%s428] sm:$0x3]
                  %431 = vst [vmem:[%s429] sm:$0x3] %v430
                  %v432 = vld [vmem:[%s428 + $0x2] sm:$0x3]
                  %433 = vst [vmem:[%s429 + $0x4] sm:$0x3] %v432
                  %v434 = vld [vmem:[%s428 + $0x4] sm:$0x3]
                  %435 = vst [vmem:[%s429 + $0x8] sm:$0x3] %v434
                  %v436 = vld [vmem:[%s428 + $0x6] sm:$0x3]
                  %437 = vst [vmem:[%s429 + $0xc] sm:$0x3] %v436
                $region104: #{encoder_forward.11} parent=91 // loop_footer
                  %s427 = sadd.s32 1, %s423
                $region105: #{encoder_forward.11} parent=91 // loop_footer_branch
                  %422 = sbr.rel target = $region101
                $region106: #{encoder_forward.11} parent=91 // loop_exit
                  _
              $region92: #{encoder_forward.11} parent=76 // pred_fallthru
                _
            $region77: #{encoder_forward.11} parent=72 // pred_fallthru
              _
            // Predicated region
            $region78: #{encoder_forward.11} parent=72 // pred_check
              _
            $region79: #{encoder_forward.11} parent=72 // pred_check_branch
              %393 = sbr.rel (0) target = $region81
            $region80: #{encoder_forward.11} parent=72 // pred_region
              loop: start=0, step=1, limit=1
              $region82: #{encoder_forward.11} parent=80 // loop_pre_header
                _
              $region83: #{encoder_forward.11} parent=80 // loop_header
                %s396 = sphi 0, %s400
                %p397 = scmp.ge.s32.totalorder %s396, 1
                %s401 = sphi %s382, %s382
                %s402 = sphi %s387, %s387
              $region84: #{encoder_forward.11} parent=80 // loop_header_branch
                %399 = sbr.rel (%p397) target = $region88
              $region85: #{encoder_forward.11} parent=80 // loop_body
                %v403 = vld [vmem:[%s401] sm:$0x3]
                %404 = vst [vmem:[%s402] sm:$0x3] %v403
                %v405 = vld [vmem:[%s401 + $0x2] sm:$0x3]
                %406 = vst [vmem:[%s402 + $0x4] sm:$0x3] %v405
                %v407 = vld [vmem:[%s401 + $0x4] sm:$0x3]
                %408 = vst [vmem:[%s402 + $0x8] sm:$0x3] %v407
                %v409 = vld [vmem:[%s401 + $0x6] sm:$0x3]
                %410 = vst [vmem:[%s402 + $0xc] sm:$0x3] %v409
              $region86: #{encoder_forward.11} parent=80 // loop_footer
                %s400 = sadd.s32 1, %s396
              $region87: #{encoder_forward.11} parent=80 // loop_footer_branch
                %395 = sbr.rel target = $region83
              $region88: #{encoder_forward.11} parent=80 // loop_exit
                _
            $region81: #{encoder_forward.11} parent=72 // pred_fallthru
              _
          $region73: #{encoder_forward.11} parent=68 // pred_fallthru
            _
          %438 = vnop
        $region69: #{encoder_forward.11} parent=60 // pred_fallthru
          _
      $region61: #{encoder_forward.11} parent=5 // pred_fallthru
        _
      %p439 = scmp.le.s32.totalorder 2, %s7
      // Predicated region
      $region107: #{encoder_forward.11} parent=5 // pred_check
        %p440 = pneg %p439
      $region108: #{encoder_forward.11} parent=5 // pred_check_branch
        %442 = sbr.rel (%p440) target = $region110
      $region109: #{encoder_forward.11} parent=5 // pred_region
        %s443 = ssub.s32 %s7, 2
        // Predicated region
        $region111: #{encoder_forward.11} parent=109 // pred_check
          %p444 = pneg %p62
        $region112: #{encoder_forward.11} parent=109 // pred_check_branch
          %446 = sbr.rel (%p444) target = $region114
        $region113: #{encoder_forward.11} parent=109 // pred_region
          %s447 = sand.u32 %s47, 1
          %s448 = sand.u32 %s47, 1
          %s449 = smul.addr %s448, 8
          %s450 = scalar_lea.vmem [#allocation3], %s449
        $region114: #{encoder_forward.11} parent=109 // pred_fallthru
          _
      $region110: #{encoder_forward.11} parent=5 // pred_fallthru
        _
    $region6: #{encoder_forward.11} parent=1 // loop_footer
      %s11 = sadd.s32 1, %s7
    $region7: #{encoder_forward.11} parent=1 // loop_footer_branch
      %6 = sbr.rel target = $region3
    $region8: #{encoder_forward.11} parent=1 // loop_exit
      _

// kernel: encoder_forward.12
$region0: #{encoder_forward.12}
  #allocation0 [shape = 'u32[]', space=smem, size = 0x4, offset = 0x4, fixed_abs, tag = 'smem constant byte address 0x4 - core index']
  #allocation1 [shape = 'u32[144,128]{1,0:T(1,128)}', space=vmem, size = 0x12000, scoped, tag = 'internal scratch']
  #allocation2 [shape = 'f32[8,384]{1,0:T(8,128)}', space=vmem, size = 0x3000, scoped, tag = 'scratch operand']
  %s0 = inlined_call_operand.vmem [shape: bf16[8,2304], index: 0, kind: input, shape index: {}]
  %s1 = inlined_call_operand.vmem [shape: bf16[2304,384], index: 1, kind: input, shape index: {}]
  %s2 = inlined_call_operand.vmem [shape: f32[1,384], index: 2, kind: input, shape index: {}]
  %s3 = inlined_call_operand.vmem [shape: f32[8,384], index: 3, kind: output, shape index: {}]
  %s4 = sld [smem:[#allocation0]]
  $region53: #{encoder_forward.12} parent=0
    _
  %s6 = ssub.s32 1, %s4
  %s7 = scalar_select 0, %s6, %s4
  loop: start=0, step=1, limit=8
  $region2: #{encoder_forward.12} parent=0 // loop_pre_header
    _
  $region3: #{encoder_forward.12} parent=0 // loop_header
    %s9 = sphi 0, %s13
    %p10 = scmp.ge.s32.totalorder %s9, 8
    %s16 = sphi 0, %s35
    %s17 = sphi 0, %s31
    %s18 = sphi 0, %s27
    %s19 = sphi 0, %s16
    %s20 = sphi 0, %s17
    %s21 = sphi 0, %s18
    %s22 = sphi 0, %s19
    %s23 = sphi 0, %s20
    %s24 = sphi 0, %s21
    %s40 = sphi 0, %s42
    %s43 = sphi 0, %s40
    %s44 = sphi 0, %s43
    %s60 = sphi 0, %s44
    %s68 = sphi 0, %s70
    %s71 = sphi 0, %s68
    %s72 = sphi 0, %s71
    %s88 = sphi 0, %s72
    %s94 = sphi 0, %s96
    %s97 = sphi 0, %s94
    %s98 = sphi 0, %s97
    %s114 = sphi 0, %s98
    %s122 = sphi 0, %s124
    %s125 = sphi 0, %s122
    %s126 = sphi 0, %s125
    %s142 = sphi 0, %s126
  $region4: #{encoder_forward.12} parent=0 // loop_header_branch
    %12 = sbr.rel (%p10) target = $region8
  $region5: #{encoder_forward.12} parent=0 // loop_body
    %s14 = ssub.s32 %s9, 1
    %s15 = ssub.s32 %s9, 2
    %s25 = sadd.s32 1, %s18
    %p26 = scmp.ge.s32.totalorder %s25, 6
    %s27 = scalar_select %p26, 0, %s25
    %s28 = sadd.s32 1, %s17
    %s29 = scalar_select %p26, %s28, %s17
    %p30 = scmp.ge.s32.totalorder %s29, 1
    %s31 = scalar_select %p30, 0, %s29
    %s32 = sadd.s32 1, %s16
    %s33 = scalar_select %p30, %s32, %s16
    %p34 = scmp.ge.s32.totalorder %s33, 1
    %s35 = scalar_select %p34, 0, %s33
    %s36 = ssub.s32 %s16, %s35
    %s37 = ssub.s32 %s18, %s27
    %s38 = sor.u32 %s36, %s37
    %p39 = scmp.eq.s32.totalorder %s38, 0
    %s41 = sadd.s32 %s40, 1
    %s42 = scalar_select %p39, %s40, %s41
    %p45 = pneg %p39
    %p46 = scmp.eq.s32.totalorder %s9, 5
    %p47 = por %p45, %p46
    %p48 = scmp.ne.s32.totalorder %s40, %s43
    %p49 = scmp.eq.s32.totalorder %s9, 0
    %p50 = por %p48, %p49
    %p51 = scmp.ne.s32.totalorder %s40, %s43
    %p52 = scmp.eq.s32.totalorder %s14, 5
    %p53 = por %p51, %p52
    %p54 = scmp.ne.s32.totalorder %s43, %s44
    %p55 = scmp.eq.s32.totalorder %s14, 0
    %p56 = por %p54, %p55
    %p57 = scmp.ne.s32.totalorder %s43, %s44
    %p58 = scmp.eq.s32.totalorder %s15, 5
    %p59 = por %p57, %p58
    %p61 = scmp.ne.s32.totalorder %s44, %s60
    %p62 = scmp.eq.s32.totalorder %s15, 0
    %p63 = por %p61, %p62
    %s64 = ssub.s32 %s18, %s27
    %s65 = ssub.s32 %s17, %s31
    %s66 = sor.u32 %s64, %s65
    %p67 = scmp.eq.s32.totalorder %s66, 0
    %s69 = sadd.s32 %s68, 1
    %s70 = scalar_select %p67, %s68, %s69
    %p73 = pneg %p67
    %p74 = scmp.eq.s32.totalorder %s9, 5
    %p75 = por %p73, %p74
    %p76 = scmp.ne.s32.totalorder %s68, %s71
    %p77 = scmp.eq.s32.totalorder %s9, 0
    %p78 = por %p76, %p77
    %p79 = scmp.ne.s32.totalorder %s68, %s71
    %p80 = scmp.eq.s32.totalorder %s14, 5
    %p81 = por %p79, %p80
    %p82 = scmp.ne.s32.totalorder %s71, %s72
    %p83 = scmp.eq.s32.totalorder %s14, 0
    %p84 = por %p82, %p83
    %p85 = scmp.ne.s32.totalorder %s71, %s72
    %p86 = scmp.eq.s32.totalorder %s15, 5
    %p87 = por %p85, %p86
    %p89 = scmp.ne.s32.totalorder %s72, %s88
    %p90 = scmp.eq.s32.totalorder %s15, 0
    %p91 = por %p89, %p90
    %s92 = ssub.s32 %s17, %s31
    %p93 = scmp.eq.s32.totalorder %s92, 0
    %s95 = sadd.s32 %s94, 1
    %s96 = scalar_select %p93, %s94, %s95
    %p99 = pneg %p93
    %p100 = scmp.eq.s32.totalorder %s9, 5
    %p101 = por %p99, %p100
    %p102 = scmp.ne.s32.totalorder %s94, %s97
    %p103 = scmp.eq.s32.totalorder %s9, 0
    %p104 = por %p102, %p103
    %p105 = scmp.ne.s32.totalorder %s94, %s97
    %p106 = scmp.eq.s32.totalorder %s14, 5
    %p107 = por %p105, %p106
    %p108 = scmp.ne.s32.totalorder %s97, %s98
    %p109 = scmp.eq.s32.totalorder %s14, 0
    %p110 = por %p108, %p109
    %p111 = scmp.ne.s32.totalorder %s97, %s98
    %p112 = scmp.eq.s32.totalorder %s15, 5
    %p113 = por %p111, %p112
    %p115 = scmp.ne.s32.totalorder %s98, %s114
    %p116 = scmp.eq.s32.totalorder %s15, 0
    %p117 = por %p115, %p116
    %s118 = ssub.s32 %s16, %s35
    %s119 = ssub.s32 %s17, %s31
    %s120 = sor.u32 %s118, %s119
    %p121 = scmp.eq.s32.totalorder %s120, 0
    %s123 = sadd.s32 %s122, 1
    %s124 = scalar_select %p121, %s122, %s123
    %p127 = pneg %p121
    %p128 = scmp.eq.s32.totalorder %s9, 5
    %p129 = por %p127, %p128
    %p130 = scmp.ne.s32.totalorder %s122, %s125
    %p131 = scmp.eq.s32.totalorder %s9, 0
    %p132 = por %p130, %p131
    %p133 = scmp.ne.s32.totalorder %s122, %s125
    %p134 = scmp.eq.s32.totalorder %s14, 5
    %p135 = por %p133, %p134
    %p136 = scmp.ne.s32.totalorder %s125, %s126
    %p137 = scmp.eq.s32.totalorder %s14, 0
    %p138 = por %p136, %p137
    %p139 = scmp.ne.s32.totalorder %s125, %s126
    %p140 = scmp.eq.s32.totalorder %s15, 5
    %p141 = por %p139, %p140
    %p143 = scmp.ne.s32.totalorder %s126, %s142
    %p144 = scmp.eq.s32.totalorder %s15, 0
    %p145 = por %p143, %p144
    %p146 = scmp.le.s32.totalorder 1, %s9
    %p147 = scmp.lt.s32.totalorder %s9, 7
    %p148 = pnand %p146, %p147
    %p149 = pneg %p148
    // Predicated region
    $region9: #{encoder_forward.12} parent=5 // pred_check
      _
    $region10: #{encoder_forward.12} parent=5 // pred_check_branch
      %151 = sbr.rel (%p148) target = $region12
    $region11: #{encoder_forward.12} parent=5 // pred_region
      %s152 = ssub.s32 %s9, 1
      // Predicated region
      $region13: #{encoder_forward.12} parent=11 // pred_check
        %p153 = pneg %p110
      $region14: #{encoder_forward.12} parent=11 // pred_check_branch
        %155 = sbr.rel (%p153) target = $region16
      $region15: #{encoder_forward.12} parent=11 // pred_region
        %s156 = smul.u32 3, %s20
        %p157 = scmp.lt.s32.totalorder %s156, 2
        %s158 = scalar_select %p157, %s156, 2
        %s159 = scalar_lea.vmem %s2, %s158
        %s160 = smul.u32 3, %s20
      $region16: #{encoder_forward.12} parent=11 // pred_fallthru
        _
    $region12: #{encoder_forward.12} parent=5 // pred_fallthru
      _
    %p161 = scmp.lt.s32.totalorder %s9, 6
    // Predicated region
    $region17: #{encoder_forward.12} parent=5 // pred_check
      %p162 = pneg %p161
    $region18: #{encoder_forward.12} parent=5 // pred_check_branch
      %164 = sbr.rel (%p162) target = $region20
    $region19: #{encoder_forward.12} parent=5 // pred_region
      // Predicated region
      $region21: #{encoder_forward.12} parent=19 // pred_check
        %p165 = pneg %p50
      $region22: #{encoder_forward.12} parent=19 // pred_check_branch
        %167 = sbr.rel (%p165) target = $region24
      $region23: #{encoder_forward.12} parent=19 // pred_region
        %s168 = smul.u32 3, %s18
        %p169 = scmp.lt.s32.totalorder %s16, 0
        %s170 = scalar_select %p169, %s16, 0
        %p171 = scmp.lt.s32.totalorder %s168, 17
        %s172 = scalar_select %p171, %s168, 17
        %s173 = smul.addr %s170, 18
        %s174 = sadd.s32 %s172, %s173
        %s175 = smul.addr %s174, 4
        %s176 = scalar_lea.vmem %s0, %s175
        %s177 = smul.u32 3, %s18
      $region24: #{encoder_forward.12} parent=19 // pred_fallthru
        _
      // Predicated region
      $region25: #{encoder_forward.12} parent=19 // pred_check
        %p178 = pneg %p78
      $region26: #{encoder_forward.12} parent=19 // pred_check_branch
        %180 = sbr.rel (%p178) target = $region28
      $region27: #{encoder_forward.12} parent=19 // pred_region
        %s181 = smul.u32 48, %s18
        %s182 = smul.u32 3, %s17
        %p183 = scmp.lt.s32.totalorder %s181, 287
        %s184 = scalar_select %p183, %s181, 287
        %p185 = scmp.lt.s32.totalorder %s182, 2
        %s186 = scalar_select %p185, %s182, 2
        %s187 = smul.addr %s184, 3
        %s188 = sadd.s32 %s186, %s187
        %s189 = smul.addr %s188, 4
        %s190 = scalar_lea.vmem %s1, %s189
        %s191 = smul.u32 48, %s18
        %s192 = smul.u32 3, %s17
      $region28: #{encoder_forward.12} parent=19 // pred_fallthru
        _
    $region20: #{encoder_forward.12} parent=5 // pred_fallthru
      _
    %p193 = scmp.le.s32.totalorder 1, %s9
    %p194 = scmp.lt.s32.totalorder %s9, 7
    %p195 = pnand %p193, %p194
    %p196 = pneg %p195
    // Predicated region
    $region29: #{encoder_forward.12} parent=5 // pred_check
      _
    $region30: #{encoder_forward.12} parent=5 // pred_check_branch
      %198 = sbr.rel (%p195) target = $region32
    $region31: #{encoder_forward.12} parent=5 // pred_region
      %s199 = ssub.s32 %s9, 1
      %s200 = smul.u32 3, %s21
      %p201 = scmp.lt.s32.totalorder %s19, 0
      %s202 = scalar_select %p201, %s19, 0
      %p203 = scmp.lt.s32.totalorder %s200, 17
      %s204 = scalar_select %p203, %s200, 17
      %s205 = smul.addr %s202, 18
      %s206 = sadd.s32 %s204, %s205
      %s207 = smul.addr %s206, 4
      %s208 = scalar_lea.vmem %s0, %s207
      %p209 = pneg %p56
      %p210 = pneg %p53
      %s211 = smul.u32 48, %s21
      %s212 = smul.u32 3, %s20
      %p213 = scmp.lt.s32.totalorder %s211, 287
      %s214 = scalar_select %p213, %s211, 287
      %p215 = scmp.lt.s32.totalorder %s212, 2
      %s216 = scalar_select %p215, %s212, 2
      %s217 = smul.addr %s214, 3
      %s218 = sadd.s32 %s216, %s217
      %s219 = smul.addr %s218, 4
      %s220 = scalar_lea.vmem %s1, %s219
      %p221 = pneg %p84
      %p222 = pneg %p81
      %s223 = smul.u32 3, %s20
      %p224 = scmp.lt.s32.totalorder %s223, 2
      %s225 = scalar_select %p224, %s223, 2
      %s226 = scalar_lea.vmem %s2, %s225
      %p227 = pneg %p110
      %p228 = pneg %p107
      %p229 = pneg %p138
      %p230 = pneg %p135
      %s231 = smul.u32 3, %s20
      %p232 = scmp.lt.s32.totalorder %s19, 0
      %s233 = scalar_select %p232, %s19, 0
      %p234 = scmp.lt.s32.totalorder %s231, 2
      %s235 = scalar_select %p234, %s231, 2
      %s236 = smul.addr %s233, 3
      %s237 = sadd.s32 %s235, %s236
      %s238 = smul.addr %s237, 8
      %s239 = scalar_lea.vmem %s3, %s238
      %s240 = smul.u32 3, %s21
      %p241 = scmp.lt.s32.totalorder %s19, 0
      %s242 = scalar_select %p241, %s19, 0
      %p243 = scmp.lt.s32.totalorder %s240, 17
      %s244 = scalar_select %p243, %s240, 17
      %s245 = smul.addr %s242, 18
      %s246 = sadd.s32 %s244, %s245
      %s247 = smul.addr %s246, 4
      %s248 = scalar_lea.vmem %s0, %s247
      %s249 = smul.u32 3, %s21
      %s250 = smul.u32 48, %s21
      %s251 = smul.u32 3, %s20
      %p252 = scmp.lt.s32.totalorder %s250, 287
      %s253 = scalar_select %p252, %s250, 287
      %p254 = scmp.lt.s32.totalorder %s251, 2
      %s255 = scalar_select %p254, %s251, 2
      %s256 = smul.addr %s253, 3
      %s257 = sadd.s32 %s255, %s256
      %s258 = smul.addr %s257, 4
      %s259 = scalar_lea.vmem %s1, %s258
      %s260 = smul.u32 48, %s21
      %s261 = smul.u32 3, %s20
      %s262 = smul.u32 3, %s20
      %p263 = scmp.lt.s32.totalorder %s262, 2
      %s264 = scalar_select %p263, %s262, 2
      %s265 = scalar_lea.vmem %s2, %s264
      %s266 = smul.u32 3, %s20
      %s267 = smul.u32 3, %s20
      %p268 = scmp.lt.s32.totalorder %s19, 0
      %s269 = scalar_select %p268, %s19, 0
      %p270 = scmp.lt.s32.totalorder %s267, 2
      %s271 = scalar_select %p270, %s267, 2
      %s272 = smul.addr %s269, 3
      %s273 = sadd.s32 %s271, %s272
      %s274 = smul.addr %s273, 8
      %s275 = scalar_lea.vmem %s3, %s274
      %s276 = smul.u32 3, %s20
      %p278 = scmp.eq.s32.totalorder %s21, 0
      // Predicated region
      $region33: #{encoder_forward.12} parent=31 // pred_check
        %p279 = pneg %p278
      $region34: #{encoder_forward.12} parent=31 // pred_check_branch
        %281 = sbr.rel (%p279) target = $region36
      $region35: #{encoder_forward.12} parent=31 // pred_region
        %282 = vst [vmem:[#allocation2] sm:$0xff] 0.0
        %283 = vst [vmem:[#allocation2 + $0x8] sm:$0xff] 0.0
        %284 = vst [vmem:[#allocation2 + $0x10] sm:$0xff] 0.0
      $region36: #{encoder_forward.12} parent=31 // pred_fallthru
        _
      %v285 = vld [vmem:[#allocation2] sm:$0xff]
      %v286 = vld [vmem:[#allocation2 + $0x8] sm:$0xff]
      %v287 = vld [vmem:[#allocation2 + $0x10] sm:$0xff]
      %v288 = vld [vmem:[%s248] sm:$0xff]
      %v289 = vld [vmem:[%s248 + $0x8] sm:$0xf]
      %v290 = vld [vmem:[%s259] sm:$0xff]
      %v291 = vld [vmem:[%s259 + $0x8] sm:$0xf]
      %v292 = vld [vmem:[%s259 + $0xc] sm:$0xff]
      %v293 = vld [vmem:[%s259 + $0x14] sm:$0xf]
      %v294 = vld [vmem:[%s259 + $0x18] sm:$0xff]
      %v295 = vld [vmem:[%s259 + $0x20] sm:$0xf]
      %v296 = vld [vmem:[%s259 + $0x24] sm:$0xff]
      %v297 = vld [vmem:[%s259 + $0x2c] sm:$0xf]
      %v298 = vld [vmem:[%s259 + $0x30] sm:$0xff]
      %v299 = vld [vmem:[%s259 + $0x38] sm:$0xf]
      %v300 = vld [vmem:[%s259 + $0x3c] sm:$0xff]
      %v301 = vld [vmem:[%s259 + $0x44] sm:$0xf]
      %v302 = vld [vmem:[%s259 + $0x48] sm:$0xff]
      %v303 = vld [vmem:[%s259 + $0x50] sm:$0xf]
      %v304 = vld [vmem:[%s259 + $0x54] sm:$0xff]
      %v305 = vld [vmem:[%s259 + $0x5c] sm:$0xf]
      %v306 = vld [vmem:[%s259 + $0x60] sm:$0xff]
      %v307 = vld [vmem:[%s259 + $0x68] sm:$0xf]
      %v308 = vld [vmem:[%s259 + $0x6c] sm:$0xff]
      %v309 = vld [vmem:[%s259 + $0x74] sm:$0xf]
      %v310 = vld [vmem:[%s259 + $0x78] sm:$0xff]
      %v311 = vld [vmem:[%s259 + $0x80] sm:$0xf]
      %v312 = vld [vmem:[%s259 + $0x84] sm:$0xff]
      %v313 = vld [vmem:[%s259 + $0x8c] sm:$0xf]
      %v314 = vld [vmem:[%s259 + $0x90] sm:$0xff]
      %v315 = vld [vmem:[%s259 + $0x98] sm:$0xf]
      %v316 = vld [vmem:[%s259 + $0x9c] sm:$0xff]
      %v317 = vld [vmem:[%s259 + $0xa4] sm:$0xf]
      %v318 = vld [vmem:[%s259 + $0xa8] sm:$0xff]
      %v319 = vld [vmem:[%s259 + $0xb0] sm:$0xf]
      %v320 = vld [vmem:[%s259 + $0xb4] sm:$0xff]
      %v321 = vld [vmem:[%s259 + $0xbc] sm:$0xf]
      %v322 = vld [vmem:[%s259 + $0xc0] sm:$0xff]
      %v323 = vld [vmem:[%s259 + $0xc8] sm:$0xf]
      %v324 = vld [vmem:[%s259 + $0xcc] sm:$0xff]
      %v325 = vld [vmem:[%s259 + $0xd4] sm:$0xf]
      %v326 = vld [vmem:[%s259 + $0xd8] sm:$0xff]
      %v327 = vld [vmem:[%s259 + $0xe0] sm:$0xf]
      %v328 = vld [vmem:[%s259 + $0xe4] sm:$0xff]
      %v329 = vld [vmem:[%s259 + $0xec] sm:$0xf]
      %v330 = vld [vmem:[%s259 + $0xf0] sm:$0xff]
      %v331 = vld [vmem:[%s259 + $0xf8] sm:$0xf]
      %v332 = vld [vmem:[%s259 + $0xfc] sm:$0xff]
      %v333 = vld [vmem:[%s259 + $0x104] sm:$0xf]
      %v334 = vld [vmem:[%s259 + $0x108] sm:$0xff]
      %v335 = vld [vmem:[%s259 + $0x110] sm:$0xf]
      %v336 = vld [vmem:[%s259 + $0x114] sm:$0xff]
      %v337 = vld [vmem:[%s259 + $0x11c] sm:$0xf]
      %v338 = vld [vmem:[%s259 + $0x120] sm:$0xff]
      %v339 = vld [vmem:[%s259 + $0x128] sm:$0xf]
      %v340 = vld [vmem:[%s259 + $0x12c] sm:$0xff]
      %v341 = vld [vmem:[%s259 + $0x134] sm:$0xf]
      %v342 = vld [vmem:[%s259 + $0x138] sm:$0xff]
      %v343 = vld [vmem:[%s259 + $0x140] sm:$0xf]
      %v344 = vld [vmem:[%s259 + $0x144] sm:$0xff]
      %v345 = vld [vmem:[%s259 + $0x14c] sm:$0xf]
      %v346 = vld [vmem:[%s259 + $0x150] sm:$0xff]
      %v347 = vld [vmem:[%s259 + $0x158] sm:$0xf]
      %v348 = vld [vmem:[%s259 + $0x15c] sm:$0xff]
      %v349 = vld [vmem:[%s259 + $0x164] sm:$0xf]
      %v350 = vld [vmem:[%s259 + $0x168] sm:$0xff]
      %v351 = vld [vmem:[%s259 + $0x170] sm:$0xf]
      %v352 = vld [vmem:[%s259 + $0x174] sm:$0xff]
      %v353 = vld [vmem:[%s259 + $0x17c] sm:$0xf]
      %v354 = vld [vmem:[%s259 + $0x180] sm:$0xff]
      %v355 = vld [vmem:[%s259 + $0x188] sm:$0xf]
      %v356 = vld [vmem:[%s259 + $0x18c] sm:$0xff]
      %v357 = vld [vmem:[%s259 + $0x194] sm:$0xf]
      %v358 = vld [vmem:[%s259 + $0x198] sm:$0xff]
      %v359 = vld [vmem:[%s259 + $0x1a0] sm:$0xf]
      %v360 = vld [vmem:[%s259 + $0x1a4] sm:$0xff]
      %v361 = vld [vmem:[%s259 + $0x1ac] sm:$0xf]
      %v362 = vld [vmem:[%s259 + $0x1b0] sm:$0xff]
      %v363 = vld [vmem:[%s259 + $0x1b8] sm:$0xf]
      %v364 = vld [vmem:[%s259 + $0x1bc] sm:$0xff]
      %v365 = vld [vmem:[%s259 + $0x1c4] sm:$0xf]
      %v366 = vld [vmem:[%s259 + $0x1c8] sm:$0xff]
      %v367 = vld [vmem:[%s259 + $0x1d0] sm:$0xf]
      %v368 = vld [vmem:[%s259 + $0x1d4] sm:$0xff]
      %v369 = vld [vmem:[%s259 + $0x1dc] sm:$0xf]
      %v370 = vld [vmem:[%s259 + $0x1e0] sm:$0xff]
      %v371 = vld [vmem:[%s259 + $0x1e8] sm:$0xf]
      %v372 = vld [vmem:[%s259 + $0x1ec] sm:$0xff]
      %v373 = vld [vmem:[%s259 + $0x1f4] sm:$0xf]
      %v374 = vld [vmem:[%s259 + $0x1f8] sm:$0xff]
      %v375 = vld [vmem:[%s259 + $0x200] sm:$0xf]
      %v376 = vld [vmem:[%s259 + $0x204] sm:$0xff]
      %v377 = vld [vmem:[%s259 + $0x20c] sm:$0xf]
      %v378 = vld [vmem:[%s259 + $0x210] sm:$0xff]
      %v379 = vld [vmem:[%s259 + $0x218] sm:$0xf]
      %v380 = vld [vmem:[%s259 + $0x21c] sm:$0xff]
      %v381 = vld [vmem:[%s259 + $0x224] sm:$0xf]
      %v382 = vld [vmem:[%s259 + $0x228] sm:$0xff]
      %v383 = vld [vmem:[%s259 + $0x230] sm:$0xf]
      %v384 = vld [vmem:[%s259 + $0x234] sm:$0xff]
      %v385 = vld [vmem:[%s259 + $0x23c] sm:$0xf]
      %v388 = vunpack.c.l.b16 %v288
      %v389 = vunpack.c.h.b16 %v288
      %v390 = vunpack.c.l.b16 %v289
      %v391 = vpack.c.b16 %v388, %v388
      %v392 = vpack.c.b16 %v389, %v389
      %v393 = vpack.c.b16 %v390, %v390
      %v493 = vunpack.c.l.b16 %v290
      %v494 = vunpack.c.h.b16 %v290
      %v495 = vunpack.c.l.b16 %v291
      %v496 = vunpack.c.l.b16 %v292
      %v497 = vunpack.c.h.b16 %v292
      %v498 = vunpack.c.l.b16 %v293
      %v499 = vunpack.c.l.b16 %v294
      %v500 = vunpack.c.h.b16 %v294
      %v501 = vunpack.c.l.b16 %v295
      %v502 = vunpack.c.l.b16 %v296
      %v503 = vunpack.c.h.b16 %v296
      %v504 = vunpack.c.l.b16 %v297
      %v505 = vunpack.c.l.b16 %v298
      %v506 = vunpack.c.h.b16 %v298
      %v507 = vunpack.c.l.b16 %v299
      %v508 = vunpack.c.l.b16 %v300
      %v509 = vunpack.c.h.b16 %v300
      %v510 = vunpack.c.l.b16 %v301
      %v511 = vunpack.c.l.b16 %v302
      %v512 = vunpack.c.h.b16 %v302
      %v513 = vunpack.c.l.b16 %v303
      %v514 = vunpack.c.l.b16 %v304
      %v515 = vunpack.c.h.b16 %v304
      %v516 = vunpack.c.l.b16 %v305
      %v517 = vunpack.c.l.b16 %v306
      %v518 = vunpack.c.h.b16 %v306
      %v519 = vunpack.c.l.b16 %v307
      %v520 = vunpack.c.l.b16 %v308
      %v521 = vunpack.c.h.b16 %v308
      %v522 = vunpack.c.l.b16 %v309
      %v523 = vunpack.c.l.b16 %v310
      %v524 = vunpack.c.h.b16 %v310
      %v525 = vunpack.c.l.b16 %v311
      %v526 = vunpack.c.l.b16 %v312
      %v527 = vunpack.c.h.b16 %v312
      %v528 = vunpack.c.l.b16 %v313
      %v529 = vunpack.c.l.b16 %v314
      %v530 = vunpack.c.h.b16 %v314
      %v531 = vunpack.c.l.b16 %v315
      %v532 = vunpack.c.l.b16 %v316
      %v533 = vunpack.c.h.b16 %v316
      %v534 = vunpack.c.l.b16 %v317
      %v535 = vunpack.c.l.b16 %v318
      %v536 = vunpack.c.h.b16 %v318
      %v537 = vunpack.c.l.b16 %v319
      %v538 = vunpack.c.l.b16 %v320
      %v539 = vunpack.c.h.b16 %v320
      %v540 = vunpack.c.l.b16 %v321
      %v541 = vunpack.c.l.b16 %v322
      %v542 = vunpack.c.h.b16 %v322
      %v543 = vunpack.c.l.b16 %v323
      %v544 = vunpack.c.l.b16 %v324
      %v545 = vunpack.c.h.b16 %v324
      %v546 = vunpack.c.l.b16 %v325
      %v547 = vunpack.c.l.b16 %v326
      %v548 = vunpack.c.h.b16 %v326
      %v549 = vunpack.c.l.b16 %v327
      %v550 = vunpack.c.l.b16 %v328
      %v551 = vunpack.c.h.b16 %v328
      %v552 = vunpack.c.l.b16 %v329
      %v553 = vunpack.c.l.b16 %v330
      %v554 = vunpack.c.h.b16 %v330
      %v555 = vunpack.c.l.b16 %v331
      %v556 = vunpack.c.l.b16 %v332
      %v557 = vunpack.c.h.b16 %v332
      %v558 = vunpack.c.l.b16 %v333
      %v559 = vunpack.c.l.b16 %v334
      %v560 = vunpack.c.h.b16 %v334
      %v561 = vunpack.c.l.b16 %v335
      %v562 = vunpack.c.l.b16 %v336
      %v563 = vunpack.c.h.b16 %v336
      %v564 = vunpack.c.l.b16 %v337
      %v565 = vunpack.c.l.b16 %v338
      %v566 = vunpack.c.h.b16 %v338
      %v567 = vunpack.c.l.b16 %v339
      %v568 = vunpack.c.l.b16 %v340
      %v569 = vunpack.c.h.b16 %v340
      %v570 = vunpack.c.l.b16 %v341
      %v571 = vunpack.c.l.b16 %v342
      %v572 = vunpack.c.h.b16 %v342
      %v573 = vunpack.c.l.b16 %v343
      %v574 = vunpack.c.l.b16 %v344
      %v575 = vunpack.c.h.b16 %v344
      %v576 = vunpack.c.l.b16 %v345
      %v577 = vunpack.c.l.b16 %v346
      %v578 = vunpack.c.h.b16 %v346
      %v579 = vunpack.c.l.b16 %v347
      %v580 = vunpack.c.l.b16 %v348
      %v581 = vunpack.c.h.b16 %v348
      %v582 = vunpack.c.l.b16 %v349
      %v583 = vunpack.c.l.b16 %v350
      %v584 = vunpack.c.h.b16 %v350
      %v585 = vunpack.c.l.b16 %v351
      %v586 = vunpack.c.l.b16 %v352
      %v587 = vunpack.c.h.b16 %v352
      %v588 = vunpack.c.l.b16 %v353
      %v589 = vunpack.c.l.b16 %v354
      %v590 = vunpack.c.h.b16 %v354
      %v591 = vunpack.c.l.b16 %v355
      %v592 = vunpack.c.l.b16 %v356
      %v593 = vunpack.c.h.b16 %v356
      %v594 = vunpack.c.l.b16 %v357
      %v595 = vunpack.c.l.b16 %v358
      %v596 = vunpack.c.h.b16 %v358
      %v597 = vunpack.c.l.b16 %v359
      %v598 = vunpack.c.l.b16 %v360
      %v599 = vunpack.c.h.b16 %v360
      %v600 = vunpack.c.l.b16 %v361
      %v601 = vunpack.c.l.b16 %v362
      %v602 = vunpack.c.h.b16 %v362
      %v603 = vunpack.c.l.b16 %v363
      %v604 = vunpack.c.l.b16 %v364
      %v605 = vunpack.c.h.b16 %v364
      %v606 = vunpack.c.l.b16 %v365
      %v607 = vunpack.c.l.b16 %v366
      %v608 = vunpack.c.h.b16 %v366
      %v609 = vunpack.c.l.b16 %v367
      %v610 = vunpack.c.l.b16 %v368
      %v611 = vunpack.c.h.b16 %v368
      %v612 = vunpack.c.l.b16 %v369
      %v613 = vunpack.c.l.b16 %v370
      %v614 = vunpack.c.h.b16 %v370
      %v615 = vunpack.c.l.b16 %v371
      %v616 = vunpack.c.l.b16 %v372
      %v617 = vunpack.c.h.b16 %v372
      %v618 = vunpack.c.l.b16 %v373
      %v619 = vunpack.c.l.b16 %v374
      %v620 = vunpack.c.h.b16 %v374
      %v621 = vunpack.c.l.b16 %v375
      %v622 = vunpack.c.l.b16 %v376
      %v623 = vunpack.c.h.b16 %v376
      %v624 = vunpack.c.l.b16 %v377
      %v625 = vunpack.c.l.b16 %v378
      %v626 = vunpack.c.h.b16 %v378
      %v627 = vunpack.c.l.b16 %v379
      %v628 = vunpack.c.l.b16 %v380
      %v629 = vunpack.c.h.b16 %v380
      %v630 = vunpack.c.l.b16 %v381
      %v631 = vunpack.c.l.b16 %v382
      %v632 = vunpack.c.h.b16 %v382
      %v633 = vunpack.c.l.b16 %v383
      %v634 = vunpack.c.l.b16 %v384
      %v635 = vunpack.c.h.b16 %v384
      %v636 = vunpack.c.l.b16 %v385
      %v637 = vpack.c.b16 %v496, %v493
      %v638 = vpack.c.b16 %v497, %v494
      %v639 = vpack.c.b16 %v498, %v495
      %v640 = vpack.c.b16 %v502, %v499
      %v641 = vpack.c.b16 %v503, %v500
      %v642 = vpack.c.b16 %v504, %v501
      %v643 = vpack.c.b16 %v508, %v505
      %v644 = vpack.c.b16 %v509, %v506
      %v645 = vpack.c.b16 %v510, %v507
      %v646 = vpack.c.b16 %v514, %v511
      %v647 = vpack.c.b16 %v515, %v512
      %v648 = vpack.c.b16 %v516, %v513
      %v649 = vpack.c.b16 %v520, %v517
      %v650 = vpack.c.b16 %v521, %v518
      %v651 = vpack.c.b16 %v522, %v519
      %v652 = vpack.c.b16 %v526, %v523
      %v653 = vpack.c.b16 %v527, %v524
      %v654 = vpack.c.b16 %v528, %v525
      %v655 = vpack.c.b16 %v532, %v529
      %v656 = vpack.c.b16 %v533, %v530
      %v657 = vpack.c.b16 %v534, %v531
      %v658 = vpack.c.b16 %v538, %v535
      %v659 = vpack.c.b16 %v539, %v536
      %v660 = vpack.c.b16 %v540, %v537
      %v661 = vpack.c.b16 %v544, %v541
      %v662 = vpack.c.b16 %v545, %v542
      %v663 = vpack.c.b16 %v546, %v543
      %v664 = vpack.c.b16 %v550, %v547
      %v665 = vpack.c.b16 %v551, %v548
      %v666 = vpack.c.b16 %v552, %v549
      %v667 = vpack.c.b16 %v556, %v553
      %v668 = vpack.c.b16 %v557, %v554
      %v669 = vpack.c.b16 %v558, %v555
      %v670 = vpack.c.b16 %v562, %v559
      %v671 = vpack.c.b16 %v563, %v560
      %v672 = vpack.c.b16 %v564, %v561
      %v673 = vpack.c.b16 %v568, %v565
      %v674 = vpack.c.b16 %v569, %v566
      %v675 = vpack.c.b16 %v570, %v567
      %v676 = vpack.c.b16 %v574, %v571
      %v677 = vpack.c.b16 %v575, %v572
      %v678 = vpack.c.b16 %v576, %v573
      %v679 = vpack.c.b16 %v580, %v577
      %v680 = vpack.c.b16 %v581, %v578
      %v681 = vpack.c.b16 %v582, %v579
      %v682 = vpack.c.b16 %v586, %v583
      %v683 = vpack.c.b16 %v587, %v584
      %v684 = vpack.c.b16 %v588, %v585
      %v685 = vpack.c.b16 %v592, %v589
      %v686 = vpack.c.b16 %v593, %v590
      %v687 = vpack.c.b16 %v594, %v591
      %v688 = vpack.c.b16 %v598, %v595
      %v689 = vpack.c.b16 %v599, %v596
      %v690 = vpack.c.b16 %v600, %v597
      %v691 = vpack.c.b16 %v604, %v601
      %v692 = vpack.c.b16 %v605, %v602
      %v693 = vpack.c.b16 %v606, %v603
      %v694 = vpack.c.b16 %v610, %v607
      %v695 = vpack.c.b16 %v611, %v608
      %v696 = vpack.c.b16 %v612, %v609
      %v697 = vpack.c.b16 %v616, %v613
      %v698 = vpack.c.b16 %v617, %v614
      %v699 = vpack.c.b16 %v618, %v615
      %v700 = vpack.c.b16 %v622, %v619
      %v701 = vpack.c.b16 %v623, %v620
      %v702 = vpack.c.b16 %v624, %v621
      %v703 = vpack.c.b16 %v628, %v625
      %v704 = vpack.c.b16 %v629, %v626
      %v705 = vpack.c.b16 %v630, %v627
      %v706 = vpack.c.b16 %v634, %v631
      %v707 = vpack.c.b16 %v635, %v632
      %v708 = vpack.c.b16 %v636, %v633
      %781 = vmatprep.subr.bf16.mxu0 %v638
      %782 = vmatpush1.bf16.msra.mxu0 %v637
      %783 = vmatprep.subr.bf16.mxu0 %v641
      %784 = vmatpush1.bf16.msra.mxu0 %v640
      %785 = vmatprep.subr.bf16.mxu0 %v644
      %786 = vmatpush1.bf16.msra.mxu0 %v643
      %787 = vmatprep.subr.bf16.mxu0 %v647
      %788 = vmatpush1.bf16.msra.mxu0 %v646
      %789 = vmatprep.subr.bf16.mxu0 %v650
      %790 = vmatpush1.bf16.msra.mxu0 %v649
      %791 = vmatprep.subr.bf16.mxu0 %v653
      %792 = vmatpush1.bf16.msra.mxu0 %v652
      %793 = vmatprep.subr.bf16.mxu0 %v656
      %794 = vmatpush1.bf16.msra.mxu0 %v655
      %795 = vmatprep.subr.bf16.mxu0 %v659
      %796 = vmatpush1.bf16.msra.mxu0 %v658
      %797 = vmatprep.subr.bf16.mxu0 %v662
      %798 = vmatpush1.bf16.msra.mxu0 %v661
      %799 = vmatprep.subr.bf16.mxu0 %v665
      %800 = vmatpush1.bf16.msra.mxu0 %v664
      %801 = vmatprep.subr.bf16.mxu0 %v668
      %802 = vmatpush1.bf16.msra.mxu0 %v667
      %803 = vmatprep.subr.bf16.mxu0 %v671
      %804 = vmatpush1.bf16.msra.mxu0 %v670
      %805 = vmatprep.subr.bf16.mxu0 %v674
      %806 = vmatpush1.bf16.msra.mxu0 %v673
      %807 = vmatprep.subr.bf16.mxu0 %v677
      %808 = vmatpush1.bf16.msra.mxu0 %v676
      %809 = vmatprep.subr.bf16.mxu0 %v680
      %810 = vmatpush1.bf16.msra.mxu0 %v679
      %811 = vmatprep.subr.bf16.mxu0 %v683
      %812 = vmatpush1.bf16.msra.mxu0 %v682
      %813 = vmatprep.mubr.bf16.mxu0 %v392
      %814 = vmatmul.mubr.bf16.gmra.mrb[0].mxu0 %v391
      %v815 = vpop.f32.mrb[0].mxu0
      %v816 = vadd.f32 0.0, %v815
      %v817 = vpop.f32.mrb[0].mxu0
      %v818 = vadd.f32 0.0, %v817
      %v819 = vpop.f32.mrb[0].mxu0
      %v820 = vpop.f32.mrb[0].mxu0
      %821 = vdwg.mxu0
      %822 = vmatprep.subr.bf16.mxu0 %v686
      %823 = vmatpush1.bf16.msra.mxu0 %v685
      %824 = vmatprep.subr.bf16.mxu0 %v689
      %825 = vmatpush1.bf16.msra.mxu0 %v688
      %826 = vmatprep.subr.bf16.mxu0 %v692
      %827 = vmatpush1.bf16.msra.mxu0 %v691
      %828 = vmatprep.subr.bf16.mxu0 %v695
      %829 = vmatpush1.bf16.msra.mxu0 %v694
      %830 = vmatprep.subr.bf16.mxu0 %v698
      %831 = vmatpush1.bf16.msra.mxu0 %v697
      %832 = vmatprep.subr.bf16.mxu0 %v701
      %833 = vmatpush1.bf16.msra.mxu0 %v700
      %834 = vmatprep.subr.bf16.mxu0 %v704
      %835 = vmatpush1.bf16.msra.mxu0 %v703
      %836 = vmatprep.subr.bf16.mxu0 %v707
      %837 = vmatpush1.bf16.msra.mxu0 %v706
      %838 = vmatprep.subr.bf16.mxu0 0
      %839 = vmatpush1.bf16.msra.mxu0 0
      %840 = vmatprep.subr.bf16.mxu0 0
      %841 = vmatpush1.bf16.msra.mxu0 0
      %842 = vmatprep.subr.bf16.mxu0 0
      %843 = vmatpush1.bf16.msra.mxu0 0
      %844 = vmatprep.subr.bf16.mxu0 0
      %845 = vmatpush1.bf16.msra.mxu0 0
      %846 = vmatprep.subr.bf16.mxu0 0
      %847 = vmatpush1.bf16.msra.mxu0 0
      %848 = vmatprep.subr.bf16.mxu0 0
      %849 = vmatpush1.bf16.msra.mxu0 0
      %850 = vmatprep.subr.bf16.mxu0 0
      %851 = vmatpush1.bf16.msra.mxu0 0
      %852 = vmatprep.subr.bf16.mxu0 0
      %853 = vmatpush1.bf16.msra.mxu0 0
      %854 = vmatprep.mubr.bf16.mxu0 0
      %855 = vmatmul.mubr.bf16.gmra.mrb[0].mxu0 %v393
      %v856 = vpop.f32.mrb[0].mxu0
      %v857 = vadd.f32 %v816, %v856
      %v858 = vpop.f32.mrb[0].mxu0
      %v859 = vadd.f32 %v818, %v858
      %v860 = vpop.f32.mrb[0].mxu0
      %v861 = vpop.f32.mrb[0].mxu0
      %862 = vdwg.mxu0
      %863 = vmatprep.subr.bf16.mxu0 0
      %864 = vmatpush1.bf16.msra.mxu0 %v639
      %865 = vmatprep.subr.bf16.mxu0 0
      %866 = vmatpush1.bf16.msra.mxu0 %v642
      %867 = vmatprep.subr.bf16.mxu0 0
      %868 = vmatpush1.bf16.msra.mxu0 %v645
      %869 = vmatprep.subr.bf16.mxu0 0
      %870 = vmatpush1.bf16.msra.mxu0 %v648
      %871 = vmatprep.subr.bf16.mxu0 0
      %872 = vmatpush1.bf16.msra.mxu0 %v651
      %873 = vmatprep.subr.bf16.mxu0 0
      %874 = vmatpush1.bf16.msra.mxu0 %v654
      %875 = vmatprep.subr.bf16.mxu0 0
      %876 = vmatpush1.bf16.msra.mxu0 %v657
      %877 = vmatprep.subr.bf16.mxu0 0
      %878 = vmatpush1.bf16.msra.mxu0 %v660
      %879 = vmatprep.subr.bf16.mxu0 0
      %880 = vmatpush1.bf16.msra.mxu0 %v663
      %881 = vmatprep.subr.bf16.mxu0 0
      %882 = vmatpush1.bf16.msra.mxu0 %v666
      %883 = vmatprep.subr.bf16.mxu0 0
      %884 = vmatpush1.bf16.msra.mxu0 %v669
      %885 = vmatprep.subr.bf16.mxu0 0
      %886 = vmatpush1.bf16.msra.mxu0 %v672
      %887 = vmatprep.subr.bf16.mxu0 0
      %888 = vmatpush1.bf16.msra.mxu0 %v675
      %889 = vmatprep.subr.bf16.mxu0 0
      %890 = vmatpush1.bf16.msra.mxu0 %v678
      %891 = vmatprep.subr.bf16.mxu0 0
      %892 = vmatpush1.bf16.msra.mxu0 %v681
      %893 = vmatprep.subr.bf16.mxu0 0
      %894 = vmatpush1.bf16.msra.mxu0 %v684
      %895 = vmatprep.mubr.bf16.mxu0 %v392
      %896 = vmatmul.mubr.bf16.gmra.mrb[0].mxu0 %v391
      %v897 = vpop.f32.mrb[0].mxu0
      %v898 = vadd.f32 0.0, %v897
      %v899 = vpop.f32.mrb[0].mxu0
      %v900 = vpop.f32.mrb[0].mxu0
      %v901 = vpop.f32.mrb[0].mxu0
      %902 = vdwg.mxu0
      %903 = vmatprep.subr.bf16.mxu0 0
      %904 = vmatpush1.bf16.msra.mxu0 %v687
      %905 = vmatprep.subr.bf16.mxu0 0
      %906 = vmatpush1.bf16.msra.mxu0 %v690
      %907 = vmatprep.subr.bf16.mxu0 0
      %908 = vmatpush1.bf16.msra.mxu0 %v693
      %909 = vmatprep.subr.bf16.mxu0 0
      %910 = vmatpush1.bf16.msra.mxu0 %v696
      %911 = vmatprep.subr.bf16.mxu0 0
      %912 = vmatpush1.bf16.msra.mxu0 %v699
      %913 = vmatprep.subr.bf16.mxu0 0
      %914 = vmatpush1.bf16.msra.mxu0 %v702
      %915 = vmatprep.subr.bf16.mxu0 0
      %916 = vmatpush1.bf16.msra.mxu0 %v705
      %917 = vmatprep.subr.bf16.mxu0 0
      %918 = vmatpush1.bf16.msra.mxu0 %v708
      %919 = vmatprep.subr.bf16.mxu0 0
      %920 = vmatpush1.bf16.msra.mxu0 0
      %921 = vmatprep.subr.bf16.mxu0 0
      %922 = vmatpush1.bf16.msra.mxu0 0
      %923 = vmatprep.subr.bf16.mxu0 0
      %924 = vmatpush1.bf16.msra.mxu0 0
      %925 = vmatprep.subr.bf16.mxu0 0
      %926 = vmatpush1.bf16.msra.mxu0 0
      %927 = vmatprep.subr.bf16.mxu0 0
      %928 = vmatpush1.bf16.msra.mxu0 0
      %929 = vmatprep.subr.bf16.mxu0 0
      %930 = vmatpush1.bf16.msra.mxu0 0
      %931 = vmatprep.subr.bf16.mxu0 0
      %932 = vmatpush1.bf16.msra.mxu0 0
      %933 = vmatprep.subr.bf16.mxu0 0
      %934 = vmatpush1.bf16.msra.mxu0 0
      %935 = vmatprep.mubr.bf16.mxu0 0
      %936 = vmatmul.mubr.bf16.gmra.mrb[0].mxu0 %v393
      %v937 = vpop.f32.mrb[0].mxu0
      %v938 = vadd.f32 %v898, %v937
      %v939 = vpop.f32.mrb[0].mxu0
      %v940 = vpop.f32.mrb[0].mxu0
      %v941 = vpop.f32.mrb[0].mxu0
      %942 = vdwg.mxu0
      %v943 = vadd.f32 %v285, %v857
      %v944 = vadd.f32 %v286, %v859
      %v945 = vadd.f32 %v287, %v938
      %946 = vst [vmem:[#allocation2] sm:$0xff] %v943
      %947 = vst [vmem:[#allocation2 + $0x8] sm:$0xff] %v944
      %948 = vst [vmem:[#allocation2 + $0x10] sm:$0xff] %v945
      %p949 = scmp.eq.s32.totalorder %s21, 5
      // Predicated region
      $region37: #{encoder_forward.12} parent=31 // pred_check
        %p950 = pneg %p949
      $region38: #{encoder_forward.12} parent=31 // pred_check_branch
        %952 = sbr.rel (%p950) target = $region40
      $region39: #{encoder_forward.12} parent=31 // pred_region
        %v953 = vld [vmem:[#allocation2] sm:$0xff]
        %v954 = vld [vmem:[#allocation2 + $0x8] sm:$0xff]
        %v955 = vld [vmem:[#allocation2 + $0x10] sm:$0xff]
        %v956 = vld [vmem:[%s265] sm:$0x7]
        %v958 = vlaneseq
        %v959 = vshrl.u32 %v958, 7
        %v960 = vsub.s32 0, %v959
        %v961 = vrot.slane %v956, %v960
        %v962 = vlaneseq
        %v963 = vshrl.u32 %v962, 7
        %v964 = vsub.s32 1, %v963
        %v965 = vrot.slane %v956, %v964
        %v966 = vlaneseq
        %v967 = vshrl.u32 %v966, 7
        %v968 = vsub.s32 2, %v967
        %v969 = vrot.slane %v956, %v968
        %v973 = vadd.f32 %v953, %v961
        %v974 = vadd.f32 %v954, %v965
        %v975 = vadd.f32 %v955, %v969
        %v976 = vmax.f32 %v973, 0.0
        %v977 = vmax.f32 %v974, 0.0
        %v978 = vmax.f32 %v975, 0.0
        %979 = vst [vmem:[%s275] sm:$0xff] %v976
        %980 = vst [vmem:[%s275 + $0x8] sm:$0xff] %v977
        %981 = vst [vmem:[%s275 + $0x10] sm:$0xff] %v978
      $region40: #{encoder_forward.12} parent=31 // pred_fallthru
        _
      %s982 = smul.u32 3, %s20
      %p983 = scmp.lt.s32.totalorder %s19, 0
      %s984 = scalar_select %p983, %s19, 0
      %p985 = scmp.lt.s32.totalorder %s982, 2
      %s986 = scalar_select %p985, %s982, 2
      %s987 = smul.addr %s984, 3
      %s988 = sadd.s32 %s986, %s987
      %s989 = smul.addr %s988, 8
      %s990 = scalar_lea.vmem %s3, %s989
      // Predicated region
      $region41: #{encoder_forward.12} parent=31 // pred_check
        %p991 = pneg %p135
      $region42: #{encoder_forward.12} parent=31 // pred_check_branch
        %993 = sbr.rel (%p991) target = $region44
      $region43: #{encoder_forward.12} parent=31 // pred_region
        %s994 = smul.u32 3, %s20
      $region44: #{encoder_forward.12} parent=31 // pred_fallthru
        _
      // Predicated region
      $region45: #{encoder_forward.12} parent=31 // pred_check
        %p995 = pneg %p135
      $region46: #{encoder_forward.12} parent=31 // pred_check_branch
        %997 = sbr.rel (%p995) target = $region48
      $region47: #{encoder_forward.12} parent=31 // pred_region
        %s998 = smul.u32 3, %s20
        %p999 = scmp.lt.s32.totalorder %s19, 0
        %s1000 = scalar_select %p999, %s19, 0
        %p1001 = scmp.lt.s32.totalorder %s998, 2
        %s1002 = scalar_select %p1001, %s998, 2
        %s1003 = smul.addr %s1000, 3
        %s1004 = sadd.s32 %s1002, %s1003
        %s1005 = smul.addr %s1004, 8
        %s1006 = scalar_lea.vmem %s3, %s1005
      $region48: #{encoder_forward.12} parent=31 // pred_fallthru
        _
    $region32: #{encoder_forward.12} parent=5 // pred_fallthru
      _
    %p1007 = scmp.le.s32.totalorder 2, %s9
    // Predicated region
    $region49: #{encoder_forward.12} parent=5 // pred_check
      %p1008 = pneg %p1007
    $region50: #{encoder_forward.12} parent=5 // pred_check_branch
      %1010 = sbr.rel (%p1008) target = $region52
    $region51: #{encoder_forward.12} parent=5 // pred_region
      %s1011 = ssub.s32 %s9, 2
    $region52: #{encoder_forward.12} parent=5 // pred_fallthru
      _
  $region6: #{encoder_forward.12} parent=0 // loop_footer
    %s13 = sadd.s32 1, %s9
  $region7: #{encoder_forward.12} parent=0 // loop_footer_branch
    %8 = sbr.rel target = $region3
  $region8: #{encoder_forward.12} parent=0 // loop_exit
    _

// kernel: encoder_forward.13
$region0: #{encoder_forward.13}
  #allocation0 [shape = 'u32[]', space=smem, size = 0x4, offset = 0x4, fixed_abs, tag = 'smem constant byte address 0x4 - core index']
  #allocation1 [shape = 'u32[144,128]{1,0:T(1,128)}', space=vmem, size = 0x12000, scoped, tag = 'internal scratch']
  #allocation2 [shape = 'f32[8,384]{1,0:T(8,128)}', space=vmem, size = 0x3000, scoped, tag = 'scratch operand']
  %s0 = inlined_call_operand.vmem [shape: bf16[8,3456], index: 0, kind: input, shape index: {}]
  %s1 = inlined_call_operand.vmem [shape: bf16[3456,384], index: 1, kind: input, shape index: {}]
  %s2 = inlined_call_operand.vmem [shape: f32[1,384], index: 2, kind: input, shape index: {}]
  %s3 = inlined_call_operand.vmem [shape: f32[8,384], index: 3, kind: output, shape index: {}]
  %s4 = sld [smem:[#allocation0]]
  $region53: #{encoder_forward.13} parent=0
    _
  %s6 = ssub.s32 1, %s4
  %s7 = scalar_select 0, %s6, %s4
  loop: start=0, step=1, limit=11
  $region2: #{encoder_forward.13} parent=0 // loop_pre_header
    _
  $region3: #{encoder_forward.13} parent=0 // loop_header
    %s9 = sphi 0, %s13
    %p10 = scmp.ge.s32.totalorder %s9, 11
    %s16 = sphi 0, %s35
    %s17 = sphi 0, %s31
    %s18 = sphi 0, %s27
    %s19 = sphi 0, %s16
    %s20 = sphi 0, %s17
    %s21 = sphi 0, %s18
    %s22 = sphi 0, %s19
    %s23 = sphi 0, %s20
    %s24 = sphi 0, %s21
    %s40 = sphi 0, %s42
    %s43 = sphi 0, %s40
    %s44 = sphi 0, %s43
    %s60 = sphi 0, %s44
    %s68 = sphi 0, %s70
    %s71 = sphi 0, %s68
    %s72 = sphi 0, %s71
    %s88 = sphi 0, %s72
    %s94 = sphi 0, %s96
    %s97 = sphi 0, %s94
    %s98 = sphi 0, %s97
    %s114 = sphi 0, %s98
    %s122 = sphi 0, %s124
    %s125 = sphi 0, %s122
    %s126 = sphi 0, %s125
    %s142 = sphi 0, %s126
  $region4: #{encoder_forward.13} parent=0 // loop_header_branch
    %12 = sbr.rel (%p10) target = $region8
  $region5: #{encoder_forward.13} parent=0 // loop_body
    %s14 = ssub.s32 %s9, 1
    %s15 = ssub.s32 %s9, 2
    %s25 = sadd.s32 1, %s18
    %p26 = scmp.ge.s32.totalorder %s25, 9
    %s27 = scalar_select %p26, 0, %s25
    %s28 = sadd.s32 1, %s17
    %s29 = scalar_select %p26, %s28, %s17
    %p30 = scmp.ge.s32.totalorder %s29, 1
    %s31 = scalar_select %p30, 0, %s29
    %s32 = sadd.s32 1, %s16
    %s33 = scalar_select %p30, %s32, %s16
    %p34 = scmp.ge.s32.totalorder %s33, 1
    %s35 = scalar_select %p34, 0, %s33
    %s36 = ssub.s32 %s16, %s35
    %s37 = ssub.s32 %s18, %s27
    %s38 = sor.u32 %s36, %s37
    %p39 = scmp.eq.s32.totalorder %s38, 0
    %s41 = sadd.s32 %s40, 1
    %s42 = scalar_select %p39, %s40, %s41
    %p45 = pneg %p39
    %p46 = scmp.eq.s32.totalorder %s9, 8
    %p47 = por %p45, %p46
    %p48 = scmp.ne.s32.totalorder %s40, %s43
    %p49 = scmp.eq.s32.totalorder %s9, 0
    %p50 = por %p48, %p49
    %p51 = scmp.ne.s32.totalorder %s40, %s43
    %p52 = scmp.eq.s32.totalorder %s14, 8
    %p53 = por %p51, %p52
    %p54 = scmp.ne.s32.totalorder %s43, %s44
    %p55 = scmp.eq.s32.totalorder %s14, 0
    %p56 = por %p54, %p55
    %p57 = scmp.ne.s32.totalorder %s43, %s44
    %p58 = scmp.eq.s32.totalorder %s15, 8
    %p59 = por %p57, %p58
    %p61 = scmp.ne.s32.totalorder %s44, %s60
    %p62 = scmp.eq.s32.totalorder %s15, 0
    %p63 = por %p61, %p62
    %s64 = ssub.s32 %s18, %s27
    %s65 = ssub.s32 %s17, %s31
    %s66 = sor.u32 %s64, %s65
    %p67 = scmp.eq.s32.totalorder %s66, 0
    %s69 = sadd.s32 %s68, 1
    %s70 = scalar_select %p67, %s68, %s69
    %p73 = pneg %p67
    %p74 = scmp.eq.s32.totalorder %s9, 8
    %p75 = por %p73, %p74
    %p76 = scmp.ne.s32.totalorder %s68, %s71
    %p77 = scmp.eq.s32.totalorder %s9, 0
    %p78 = por %p76, %p77
    %p79 = scmp.ne.s32.totalorder %s68, %s71
    %p80 = scmp.eq.s32.totalorder %s14, 8
    %p81 = por %p79, %p80
    %p82 = scmp.ne.s32.totalorder %s71, %s72
    %p83 = scmp.eq.s32.totalorder %s14, 0
    %p84 = por %p82, %p83
    %p85 = scmp.ne.s32.totalorder %s71, %s72
    %p86 = scmp.eq.s32.totalorder %s15, 8
    %p87 = por %p85, %p86
    %p89 = scmp.ne.s32.totalorder %s72, %s88
    %p90 = scmp.eq.s32.totalorder %s15, 0
    %p91 = por %p89, %p90
    %s92 = ssub.s32 %s17, %s31
    %p93 = scmp.eq.s32.totalorder %s92, 0
    %s95 = sadd.s32 %s94, 1
    %s96 = scalar_select %p93, %s94, %s95
    %p99 = pneg %p93
    %p100 = scmp.eq.s32.totalorder %s9, 8
    %p101 = por %p99, %p100
    %p102 = scmp.ne.s32.totalorder %s94, %s97
    %p103 = scmp.eq.s32.totalorder %s9, 0
    %p104 = por %p102, %p103
    %p105 = scmp.ne.s32.totalorder %s94, %s97
    %p106 = scmp.eq.s32.totalorder %s14, 8
    %p107 = por %p105, %p106
    %p108 = scmp.ne.s32.totalorder %s97, %s98
    %p109 = scmp.eq.s32.totalorder %s14, 0
    %p110 = por %p108, %p109
    %p111 = scmp.ne.s32.totalorder %s97, %s98
    %p112 = scmp.eq.s32.totalorder %s15, 8
    %p113 = por %p111, %p112
    %p115 = scmp.ne.s32.totalorder %s98, %s114
    %p116 = scmp.eq.s32.totalorder %s15, 0
    %p117 = por %p115, %p116
    %s118 = ssub.s32 %s16, %s35
    %s119 = ssub.s32 %s17, %s31
    %s120 = sor.u32 %s118, %s119
    %p121 = scmp.eq.s32.totalorder %s120, 0
    %s123 = sadd.s32 %s122, 1
    %s124 = scalar_select %p121, %s122, %s123
    %p127 = pneg %p121
    %p128 = scmp.eq.s32.totalorder %s9, 8
    %p129 = por %p127, %p128
    %p130 = scmp.ne.s32.totalorder %s122, %s125
    %p131 = scmp.eq.s32.totalorder %s9, 0
    %p132 = por %p130, %p131
    %p133 = scmp.ne.s32.totalorder %s122, %s125
    %p134 = scmp.eq.s32.totalorder %s14, 8
    %p135 = por %p133, %p134
    %p136 = scmp.ne.s32.totalorder %s125, %s126
    %p137 = scmp.eq.s32.totalorder %s14, 0
    %p138 = por %p136, %p137
    %p139 = scmp.ne.s32.totalorder %s125, %s126
    %p140 = scmp.eq.s32.totalorder %s15, 8
    %p141 = por %p139, %p140
    %p143 = scmp.ne.s32.totalorder %s126, %s142
    %p144 = scmp.eq.s32.totalorder %s15, 0
    %p145 = por %p143, %p144
    %p146 = scmp.le.s32.totalorder 1, %s9
    %p147 = scmp.lt.s32.totalorder %s9, 10
    %p148 = pnand %p146, %p147
    %p149 = pneg %p148
    // Predicated region
    $region9: #{encoder_forward.13} parent=5 // pred_check
      _
    $region10: #{encoder_forward.13} parent=5 // pred_check_branch
      %151 = sbr.rel (%p148) target = $region12
    $region11: #{encoder_forward.13} parent=5 // pred_region
      %s152 = ssub.s32 %s9, 1
      // Predicated region
      $region13: #{encoder_forward.13} parent=11 // pred_check
        %p153 = pneg %p110
      $region14: #{encoder_forward.13} parent=11 // pred_check_branch
        %155 = sbr.rel (%p153) target = $region16
      $region15: #{encoder_forward.13} parent=11 // pred_region
        %s156 = smul.u32 3, %s20
        %p157 = scmp.lt.s32.totalorder %s156, 2
        %s158 = scalar_select %p157, %s156, 2
        %s159 = scalar_lea.vmem %s2, %s158
        %s160 = smul.u32 3, %s20
      $region16: #{encoder_forward.13} parent=11 // pred_fallthru
        _
    $region12: #{encoder_forward.13} parent=5 // pred_fallthru
      _
    %p161 = scmp.lt.s32.totalorder %s9, 9
    // Predicated region
    $region17: #{encoder_forward.13} parent=5 // pred_check
      %p162 = pneg %p161
    $region18: #{encoder_forward.13} parent=5 // pred_check_branch
      %164 = sbr.rel (%p162) target = $region20
    $region19: #{encoder_forward.13} parent=5 // pred_region
      // Predicated region
      $region21: #{encoder_forward.13} parent=19 // pred_check
        %p165 = pneg %p50
      $region22: #{encoder_forward.13} parent=19 // pred_check_branch
        %167 = sbr.rel (%p165) target = $region24
      $region23: #{encoder_forward.13} parent=19 // pred_region
        %s168 = smul.u32 3, %s18
        %p169 = scmp.lt.s32.totalorder %s16, 0
        %s170 = scalar_select %p169, %s16, 0
        %p171 = scmp.lt.s32.totalorder %s168, 26
        %s172 = scalar_select %p171, %s168, 26
        %s173 = smul.addr %s170, 27
        %s174 = sadd.s32 %s172, %s173
        %s175 = smul.addr %s174, 4
        %s176 = scalar_lea.vmem %s0, %s175
        %s177 = smul.u32 3, %s18
      $region24: #{encoder_forward.13} parent=19 // pred_fallthru
        _
      // Predicated region
      $region25: #{encoder_forward.13} parent=19 // pred_check
        %p178 = pneg %p78
      $region26: #{encoder_forward.13} parent=19 // pred_check_branch
        %180 = sbr.rel (%p178) target = $region28
      $region27: #{encoder_forward.13} parent=19 // pred_region
        %s181 = smul.u32 48, %s18
        %s182 = smul.u32 3, %s17
        %p183 = scmp.lt.s32.totalorder %s181, 431
        %s184 = scalar_select %p183, %s181, 431
        %p185 = scmp.lt.s32.totalorder %s182, 2
        %s186 = scalar_select %p185, %s182, 2
        %s187 = smul.addr %s184, 3
        %s188 = sadd.s32 %s186, %s187
        %s189 = smul.addr %s188, 4
        %s190 = scalar_lea.vmem %s1, %s189
        %s191 = smul.u32 48, %s18
        %s192 = smul.u32 3, %s17
      $region28: #{encoder_forward.13} parent=19 // pred_fallthru
        _
    $region20: #{encoder_forward.13} parent=5 // pred_fallthru
      _
    %p193 = scmp.le.s32.totalorder 1, %s9
    %p194 = scmp.lt.s32.totalorder %s9, 10
    %p195 = pnand %p193, %p194
    %p196 = pneg %p195
    // Predicated region
    $region29: #{encoder_forward.13} parent=5 // pred_check
      _
    $region30: #{encoder_forward.13} parent=5 // pred_check_branch
      %198 = sbr.rel (%p195) target = $region32
    $region31: #{encoder_forward.13} parent=5 // pred_region
      %s199 = ssub.s32 %s9, 1
      %s200 = smul.u32 3, %s21
      %p201 = scmp.lt.s32.totalorder %s19, 0
      %s202 = scalar_select %p201, %s19, 0
      %p203 = scmp.lt.s32.totalorder %s200, 26
      %s204 = scalar_select %p203, %s200, 26
      %s205 = smul.addr %s202, 27
      %s206 = sadd.s32 %s204, %s205
      %s207 = smul.addr %s206, 4
      %s208 = scalar_lea.vmem %s0, %s207
      %p209 = pneg %p56
      %p210 = pneg %p53
      %s211 = smul.u32 48, %s21
      %s212 = smul.u32 3, %s20
      %p213 = scmp.lt.s32.totalorder %s211, 431
      %s214 = scalar_select %p213, %s211, 431
      %p215 = scmp.lt.s32.totalorder %s212, 2
      %s216 = scalar_select %p215, %s212, 2
      %s217 = smul.addr %s214, 3
      %s218 = sadd.s32 %s216, %s217
      %s219 = smul.addr %s218, 4
      %s220 = scalar_lea.vmem %s1, %s219
      %p221 = pneg %p84
      %p222 = pneg %p81
      %s223 = smul.u32 3, %s20
      %p224 = scmp.lt.s32.totalorder %s223, 2
      %s225 = scalar_select %p224, %s223, 2
      %s226 = scalar_lea.vmem %s2, %s225
      %p227 = pneg %p110
      %p228 = pneg %p107
      %p229 = pneg %p138
      %p230 = pneg %p135
      %s231 = smul.u32 3, %s20
      %p232 = scmp.lt.s32.totalorder %s19, 0
      %s233 = scalar_select %p232, %s19, 0
      %p234 = scmp.lt.s32.totalorder %s231, 2
      %s235 = scalar_select %p234, %s231, 2
      %s236 = smul.addr %s233, 3
      %s237 = sadd.s32 %s235, %s236
      %s238 = smul.addr %s237, 8
      %s239 = scalar_lea.vmem %s3, %s238
      %s240 = smul.u32 3, %s21
      %p241 = scmp.lt.s32.totalorder %s19, 0
      %s242 = scalar_select %p241, %s19, 0
      %p243 = scmp.lt.s32.totalorder %s240, 26
      %s244 = scalar_select %p243, %s240, 26
      %s245 = smul.addr %s242, 27
      %s246 = sadd.s32 %s244, %s245
      %s247 = smul.addr %s246, 4
      %s248 = scalar_lea.vmem %s0, %s247
      %s249 = smul.u32 3, %s21
      %s250 = smul.u32 48, %s21
      %s251 = smul.u32 3, %s20
      %p252 = scmp.lt.s32.totalorder %s250, 431
      %s253 = scalar_select %p252, %s250, 431
      %p254 = scmp.lt.s32.totalorder %s251, 2
      %s255 = scalar_select %p254, %s251, 2
      %s256 = smul.addr %s253, 3
      %s257 = sadd.s32 %s255, %s256
      %s258 = smul.addr %s257, 4
      %s259 = scalar_lea.vmem %s1, %s258
      %s260 = smul.u32 48, %s21
      %s261 = smul.u32 3, %s20
      %s262 = smul.u32 3, %s20
      %p263 = scmp.lt.s32.totalorder %s262, 2
      %s264 = scalar_select %p263, %s262, 2
      %s265 = scalar_lea.vmem %s2, %s264
      %s266 = smul.u32 3, %s20
      %s267 = smul.u32 3, %s20
      %p268 = scmp.lt.s32.totalorder %s19, 0
      %s269 = scalar_select %p268, %s19, 0
      %p270 = scmp.lt.s32.totalorder %s267, 2
      %s271 = scalar_select %p270, %s267, 2
      %s272 = smul.addr %s269, 3
      %s273 = sadd.s32 %s271, %s272
      %s274 = smul.addr %s273, 8
      %s275 = scalar_lea.vmem %s3, %s274
      %s276 = smul.u32 3, %s20
      %p278 = scmp.eq.s32.totalorder %s21, 0
      // Predicated region
      $region33: #{encoder_forward.13} parent=31 // pred_check
        %p279 = pneg %p278
      $region34: #{encoder_forward.13} parent=31 // pred_check_branch
        %281 = sbr.rel (%p279) target = $region36
      $region35: #{encoder_forward.13} parent=31 // pred_region
        %282 = vst [vmem:[#allocation2] sm:$0xff] 0.0
        %283 = vst [vmem:[#allocation2 + $0x8] sm:$0xff] 0.0
        %284 = vst [vmem:[#allocation2 + $0x10] sm:$0xff] 0.0
      $region36: #{encoder_forward.13} parent=31 // pred_fallthru
        _
      %v285 = vld [vmem:[#allocation2] sm:$0xff]
      %v286 = vld [vmem:[#allocation2 + $0x8] sm:$0xff]
      %v287 = vld [vmem:[#allocation2 + $0x10] sm:$0xff]
      %v288 = vld [vmem:[%s248] sm:$0xff]
      %v289 = vld [vmem:[%s248 + $0x8] sm:$0xf]
      %v290 = vld [vmem:[%s259] sm:$0xff]
      %v291 = vld [vmem:[%s259 + $0x8] sm:$0xf]
      %v292 = vld [vmem:[%s259 + $0xc] sm:$0xff]
      %v293 = vld [vmem:[%s259 + $0x14] sm:$0xf]
      %v294 = vld [vmem:[%s259 + $0x18] sm:$0xff]
      %v295 = vld [vmem:[%s259 + $0x20] sm:$0xf]
      %v296 = vld [vmem:[%s259 + $0x24] sm:$0xff]
      %v297 = vld [vmem:[%s259 + $0x2c] sm:$0xf]
      %v298 = vld [vmem:[%s259 + $0x30] sm:$0xff]
      %v299 = vld [vmem:[%s259 + $0x38] sm:$0xf]
      %v300 = vld [vmem:[%s259 + $0x3c] sm:$0xff]
      %v301 = vld [vmem:[%s259 + $0x44] sm:$0xf]
      %v302 = vld [vmem:[%s259 + $0x48] sm:$0xff]
      %v303 = vld [vmem:[%s259 + $0x50] sm:$0xf]
      %v304 = vld [vmem:[%s259 + $0x54] sm:$0xff]
      %v305 = vld [vmem:[%s259 + $0x5c] sm:$0xf]
      %v306 = vld [vmem:[%s259 + $0x60] sm:$0xff]
      %v307 = vld [vmem:[%s259 + $0x68] sm:$0xf]
      %v308 = vld [vmem:[%s259 + $0x6c] sm:$0xff]
      %v309 = vld [vmem:[%s259 + $0x74] sm:$0xf]
      %v310 = vld [vmem:[%s259 + $0x78] sm:$0xff]
      %v311 = vld [vmem:[%s259 + $0x80] sm:$0xf]
      %v312 = vld [vmem:[%s259 + $0x84] sm:$0xff]
      %v313 = vld [vmem:[%s259 + $0x8c] sm:$0xf]
      %v314 = vld [vmem:[%s259 + $0x90] sm:$0xff]
      %v315 = vld [vmem:[%s259 + $0x98] sm:$0xf]
      %v316 = vld [vmem:[%s259 + $0x9c] sm:$0xff]
      %v317 = vld [vmem:[%s259 + $0xa4] sm:$0xf]
      %v318 = vld [vmem:[%s259 + $0xa8] sm:$0xff]
      %v319 = vld [vmem:[%s259 + $0xb0] sm:$0xf]
      %v320 = vld [vmem:[%s259 + $0xb4] sm:$0xff]
      %v321 = vld [vmem:[%s259 + $0xbc] sm:$0xf]
      %v322 = vld [vmem:[%s259 + $0xc0] sm:$0xff]
      %v323 = vld [vmem:[%s259 + $0xc8] sm:$0xf]
      %v324 = vld [vmem:[%s259 + $0xcc] sm:$0xff]
      %v325 = vld [vmem:[%s259 + $0xd4] sm:$0xf]
      %v326 = vld [vmem:[%s259 + $0xd8] sm:$0xff]
      %v327 = vld [vmem:[%s259 + $0xe0] sm:$0xf]
      %v328 = vld [vmem:[%s259 + $0xe4] sm:$0xff]
      %v329 = vld [vmem:[%s259 + $0xec] sm:$0xf]
      %v330 = vld [vmem:[%s259 + $0xf0] sm:$0xff]
      %v331 = vld [vmem:[%s259 + $0xf8] sm:$0xf]
      %v332 = vld [vmem:[%s259 + $0xfc] sm:$0xff]
      %v333 = vld [vmem:[%s259 + $0x104] sm:$0xf]
      %v334 = vld [vmem:[%s259 + $0x108] sm:$0xff]
      %v335 = vld [vmem:[%s259 + $0x110] sm:$0xf]
      %v336 = vld [vmem:[%s259 + $0x114] sm:$0xff]
      %v337 = vld [vmem:[%s259 + $0x11c] sm:$0xf]
      %v338 = vld [vmem:[%s259 + $0x120] sm:$0xff]
      %v339 = vld [vmem:[%s259 + $0x128] sm:$0xf]
      %v340 = vld [vmem:[%s259 + $0x12c] sm:$0xff]
      %v341 = vld [vmem:[%s259 + $0x134] sm:$0xf]
      %v342 = vld [vmem:[%s259 + $0x138] sm:$0xff]
      %v343 = vld [vmem:[%s259 + $0x140] sm:$0xf]
      %v344 = vld [vmem:[%s259 + $0x144] sm:$0xff]
      %v345 = vld [vmem:[%s259 + $0x14c] sm:$0xf]
      %v346 = vld [vmem:[%s259 + $0x150] sm:$0xff]
      %v347 = vld [vmem:[%s259 + $0x158] sm:$0xf]
      %v348 = vld [vmem:[%s259 + $0x15c] sm:$0xff]
      %v349 = vld [vmem:[%s259 + $0x164] sm:$0xf]
      %v350 = vld [vmem:[%s259 + $0x168] sm:$0xff]
      %v351 = vld [vmem:[%s259 + $0x170] sm:$0xf]
      %v352 = vld [vmem:[%s259 + $0x174] sm:$0xff]
      %v353 = vld [vmem:[%s259 + $0x17c] sm:$0xf]
      %v354 = vld [vmem:[%s259 + $0x180] sm:$0xff]
      %v355 = vld [vmem:[%s259 + $0x188] sm:$0xf]
      %v356 = vld [vmem:[%s259 + $0x18c] sm:$0xff]
      %v357 = vld [vmem:[%s259 + $0x194] sm:$0xf]
      %v358 = vld [vmem:[%s259 + $0x198] sm:$0xff]
      %v359 = vld [vmem:[%s259 + $0x1a0] sm:$0xf]
      %v360 = vld [vmem:[%s259 + $0x1a4] sm:$0xff]
      %v361 = vld [vmem:[%s259 + $0x1ac] sm:$0xf]
      %v362 = vld [vmem:[%s259 + $0x1b0] sm:$0xff]
      %v363 = vld [vmem:[%s259 + $0x1b8] sm:$0xf]
      %v364 = vld [vmem:[%s259 + $0x1bc] sm:$0xff]
      %v365 = vld [vmem:[%s259 + $0x1c4] sm:$0xf]
      %v366 = vld [vmem:[%s259 + $0x1c8] sm:$0xff]
      %v367 = vld [vmem:[%s259 + $0x1d0] sm:$0xf]
      %v368 = vld [vmem:[%s259 + $0x1d4] sm:$0xff]
      %v369 = vld [vmem:[%s259 + $0x1dc] sm:$0xf]
      %v370 = vld [vmem:[%s259 + $0x1e0] sm:$0xff]
      %v371 = vld [vmem:[%s259 + $0x1e8] sm:$0xf]
      %v372 = vld [vmem:[%s259 + $0x1ec] sm:$0xff]
      %v373 = vld [vmem:[%s259 + $0x1f4] sm:$0xf]
      %v374 = vld [vmem:[%s259 + $0x1f8] sm:$0xff]
      %v375 = vld [vmem:[%s259 + $0x200] sm:$0xf]
      %v376 = vld [vmem:[%s259 + $0x204] sm:$0xff]
      %v377 = vld [vmem:[%s259 + $0x20c] sm:$0xf]
      %v378 = vld [vmem:[%s259 + $0x210] sm:$0xff]
      %v379 = vld [vmem:[%s259 + $0x218] sm:$0xf]
      %v380 = vld [vmem:[%s259 + $0x21c] sm:$0xff]
      %v381 = vld [vmem:[%s259 + $0x224] sm:$0xf]
      %v382 = vld [vmem:[%s259 + $0x228] sm:$0xff]
      %v383 = vld [vmem:[%s259 + $0x230] sm:$0xf]
      %v384 = vld [vmem:[%s259 + $0x234] sm:$0xff]
      %v385 = vld [vmem:[%s259 + $0x23c] sm:$0xf]
      %v388 = vunpack.c.l.b16 %v288
      %v389 = vunpack.c.h.b16 %v288
      %v390 = vunpack.c.l.b16 %v289
      %v391 = vpack.c.b16 %v388, %v388
      %v392 = vpack.c.b16 %v389, %v389
      %v393 = vpack.c.b16 %v390, %v390
      %v493 = vunpack.c.l.b16 %v290
      %v494 = vunpack.c.h.b16 %v290
      %v495 = vunpack.c.l.b16 %v291
      %v496 = vunpack.c.l.b16 %v292
      %v497 = vunpack.c.h.b16 %v292
      %v498 = vunpack.c.l.b16 %v293
      %v499 = vunpack.c.l.b16 %v294
      %v500 = vunpack.c.h.b16 %v294
      %v501 = vunpack.c.l.b16 %v295
      %v502 = vunpack.c.l.b16 %v296
      %v503 = vunpack.c.h.b16 %v296
      %v504 = vunpack.c.l.b16 %v297
      %v505 = vunpack.c.l.b16 %v298
      %v506 = vunpack.c.h.b16 %v298
      %v507 = vunpack.c.l.b16 %v299
      %v508 = vunpack.c.l.b16 %v300
      %v509 = vunpack.c.h.b16 %v300
      %v510 = vunpack.c.l.b16 %v301
      %v511 = vunpack.c.l.b16 %v302
      %v512 = vunpack.c.h.b16 %v302
      %v513 = vunpack.c.l.b16 %v303
      %v514 = vunpack.c.l.b16 %v304
      %v515 = vunpack.c.h.b16 %v304
      %v516 = vunpack.c.l.b16 %v305
      %v517 = vunpack.c.l.b16 %v306
      %v518 = vunpack.c.h.b16 %v306
      %v519 = vunpack.c.l.b16 %v307
      %v520 = vunpack.c.l.b16 %v308
      %v521 = vunpack.c.h.b16 %v308
      %v522 = vunpack.c.l.b16 %v309
      %v523 = vunpack.c.l.b16 %v310
      %v524 = vunpack.c.h.b16 %v310
      %v525 = vunpack.c.l.b16 %v311
      %v526 = vunpack.c.l.b16 %v312
      %v527 = vunpack.c.h.b16 %v312
      %v528 = vunpack.c.l.b16 %v313
      %v529 = vunpack.c.l.b16 %v314
      %v530 = vunpack.c.h.b16 %v314
      %v531 = vunpack.c.l.b16 %v315
      %v532 = vunpack.c.l.b16 %v316
      %v533 = vunpack.c.h.b16 %v316
      %v534 = vunpack.c.l.b16 %v317
      %v535 = vunpack.c.l.b16 %v318
      %v536 = vunpack.c.h.b16 %v318
      %v537 = vunpack.c.l.b16 %v319
      %v538 = vunpack.c.l.b16 %v320
      %v539 = vunpack.c.h.b16 %v320
      %v540 = vunpack.c.l.b16 %v321
      %v541 = vunpack.c.l.b16 %v322
      %v542 = vunpack.c.h.b16 %v322
      %v543 = vunpack.c.l.b16 %v323
      %v544 = vunpack.c.l.b16 %v324
      %v545 = vunpack.c.h.b16 %v324
      %v546 = vunpack.c.l.b16 %v325
      %v547 = vunpack.c.l.b16 %v326
      %v548 = vunpack.c.h.b16 %v326
      %v549 = vunpack.c.l.b16 %v327
      %v550 = vunpack.c.l.b16 %v328
      %v551 = vunpack.c.h.b16 %v328
      %v552 = vunpack.c.l.b16 %v329
      %v553 = vunpack.c.l.b16 %v330
      %v554 = vunpack.c.h.b16 %v330
      %v555 = vunpack.c.l.b16 %v331
      %v556 = vunpack.c.l.b16 %v332
      %v557 = vunpack.c.h.b16 %v332
      %v558 = vunpack.c.l.b16 %v333
      %v559 = vunpack.c.l.b16 %v334
      %v560 = vunpack.c.h.b16 %v334
      %v561 = vunpack.c.l.b16 %v335
      %v562 = vunpack.c.l.b16 %v336
      %v563 = vunpack.c.h.b16 %v336
      %v564 = vunpack.c.l.b16 %v337
      %v565 = vunpack.c.l.b16 %v338
      %v566 = vunpack.c.h.b16 %v338
      %v567 = vunpack.c.l.b16 %v339
      %v568 = vunpack.c.l.b16 %v340
      %v569 = vunpack.c.h.b16 %v340
      %v570 = vunpack.c.l.b16 %v341
      %v571 = vunpack.c.l.b16 %v342
      %v572 = vunpack.c.h.b16 %v342
      %v573 = vunpack.c.l.b16 %v343
      %v574 = vunpack.c.l.b16 %v344
      %v575 = vunpack.c.h.b16 %v344
      %v576 = vunpack.c.l.b16 %v345
      %v577 = vunpack.c.l.b16 %v346
      %v578 = vunpack.c.h.b16 %v346
      %v579 = vunpack.c.l.b16 %v347
      %v580 = vunpack.c.l.b16 %v348
      %v581 = vunpack.c.h.b16 %v348
      %v582 = vunpack.c.l.b16 %v349
      %v583 = vunpack.c.l.b16 %v350
      %v584 = vunpack.c.h.b16 %v350
      %v585 = vunpack.c.l.b16 %v351
      %v586 = vunpack.c.l.b16 %v352
      %v587 = vunpack.c.h.b16 %v352
      %v588 = vunpack.c.l.b16 %v353
      %v589 = vunpack.c.l.b16 %v354
      %v590 = vunpack.c.h.b16 %v354
      %v591 = vunpack.c.l.b16 %v355
      %v592 = vunpack.c.l.b16 %v356
      %v593 = vunpack.c.h.b16 %v356
      %v594 = vunpack.c.l.b16 %v357
      %v595 = vunpack.c.l.b16 %v358
      %v596 = vunpack.c.h.b16 %v358
      %v597 = vunpack.c.l.b16 %v359
      %v598 = vunpack.c.l.b16 %v360
      %v599 = vunpack.c.h.b16 %v360
      %v600 = vunpack.c.l.b16 %v361
      %v601 = vunpack.c.l.b16 %v362
      %v602 = vunpack.c.h.b16 %v362
      %v603 = vunpack.c.l.b16 %v363
      %v604 = vunpack.c.l.b16 %v364
      %v605 = vunpack.c.h.b16 %v364
      %v606 = vunpack.c.l.b16 %v365
      %v607 = vunpack.c.l.b16 %v366
      %v608 = vunpack.c.h.b16 %v366
      %v609 = vunpack.c.l.b16 %v367
      %v610 = vunpack.c.l.b16 %v368
      %v611 = vunpack.c.h.b16 %v368
      %v612 = vunpack.c.l.b16 %v369
      %v613 = vunpack.c.l.b16 %v370
      %v614 = vunpack.c.h.b16 %v370
      %v615 = vunpack.c.l.b16 %v371
      %v616 = vunpack.c.l.b16 %v372
      %v617 = vunpack.c.h.b16 %v372
      %v618 = vunpack.c.l.b16 %v373
      %v619 = vunpack.c.l.b16 %v374
      %v620 = vunpack.c.h.b16 %v374
      %v621 = vunpack.c.l.b16 %v375
      %v622 = vunpack.c.l.b16 %v376
      %v623 = vunpack.c.h.b16 %v376
      %v624 = vunpack.c.l.b16 %v377
      %v625 = vunpack.c.l.b16 %v378
      %v626 = vunpack.c.h.b16 %v378
      %v627 = vunpack.c.l.b16 %v379
      %v628 = vunpack.c.l.b16 %v380
      %v629 = vunpack.c.h.b16 %v380
      %v630 = vunpack.c.l.b16 %v381
      %v631 = vunpack.c.l.b16 %v382
      %v632 = vunpack.c.h.b16 %v382
      %v633 = vunpack.c.l.b16 %v383
      %v634 = vunpack.c.l.b16 %v384
      %v635 = vunpack.c.h.b16 %v384
      %v636 = vunpack.c.l.b16 %v385
      %v637 = vpack.c.b16 %v496, %v493
      %v638 = vpack.c.b16 %v497, %v494
      %v639 = vpack.c.b16 %v498, %v495
      %v640 = vpack.c.b16 %v502, %v499
      %v641 = vpack.c.b16 %v503, %v500
      %v642 = vpack.c.b16 %v504, %v501
      %v643 = vpack.c.b16 %v508, %v505
      %v644 = vpack.c.b16 %v509, %v506
      %v645 = vpack.c.b16 %v510, %v507
      %v646 = vpack.c.b16 %v514, %v511
      %v647 = vpack.c.b16 %v515, %v512
      %v648 = vpack.c.b16 %v516, %v513
      %v649 = vpack.c.b16 %v520, %v517
      %v650 = vpack.c.b16 %v521, %v518
      %v651 = vpack.c.b16 %v522, %v519
      %v652 = vpack.c.b16 %v526, %v523
      %v653 = vpack.c.b16 %v527, %v524
      %v654 = vpack.c.b16 %v528, %v525
      %v655 = vpack.c.b16 %v532, %v529
      %v656 = vpack.c.b16 %v533, %v530
      %v657 = vpack.c.b16 %v534, %v531
      %v658 = vpack.c.b16 %v538, %v535
      %v659 = vpack.c.b16 %v539, %v536
      %v660 = vpack.c.b16 %v540, %v537
      %v661 = vpack.c.b16 %v544, %v541
      %v662 = vpack.c.b16 %v545, %v542
      %v663 = vpack.c.b16 %v546, %v543
      %v664 = vpack.c.b16 %v550, %v547
      %v665 = vpack.c.b16 %v551, %v548
      %v666 = vpack.c.b16 %v552, %v549
      %v667 = vpack.c.b16 %v556, %v553
      %v668 = vpack.c.b16 %v557, %v554
      %v669 = vpack.c.b16 %v558, %v555
      %v670 = vpack.c.b16 %v562, %v559
      %v671 = vpack.c.b16 %v563, %v560
      %v672 = vpack.c.b16 %v564, %v561
      %v673 = vpack.c.b16 %v568, %v565
      %v674 = vpack.c.b16 %v569, %v566
      %v675 = vpack.c.b16 %v570, %v567
      %v676 = vpack.c.b16 %v574, %v571
      %v677 = vpack.c.b16 %v575, %v572
      %v678 = vpack.c.b16 %v576, %v573
      %v679 = vpack.c.b16 %v580, %v577
      %v680 = vpack.c.b16 %v581, %v578
      %v681 = vpack.c.b16 %v582, %v579
      %v682 = vpack.c.b16 %v586, %v583
      %v683 = vpack.c.b16 %v587, %v584
      %v684 = vpack.c.b16 %v588, %v585
      %v685 = vpack.c.b16 %v592, %v589
      %v686 = vpack.c.b16 %v593, %v590
      %v687 = vpack.c.b16 %v594, %v591
      %v688 = vpack.c.b16 %v598, %v595
      %v689 = vpack.c.b16 %v599, %v596
      %v690 = vpack.c.b16 %v600, %v597
      %v691 = vpack.c.b16 %v604, %v601
      %v692 = vpack.c.b16 %v605, %v602
      %v693 = vpack.c.b16 %v606, %v603
      %v694 = vpack.c.b16 %v610, %v607
      %v695 = vpack.c.b16 %v611, %v608
      %v696 = vpack.c.b16 %v612, %v609
      %v697 = vpack.c.b16 %v616, %v613
      %v698 = vpack.c.b16 %v617, %v614
      %v699 = vpack.c.b16 %v618, %v615
      %v700 = vpack.c.b16 %v622, %v619
      %v701 = vpack.c.b16 %v623, %v620
      %v702 = vpack.c.b16 %v624, %v621
      %v703 = vpack.c.b16 %v628, %v625
      %v704 = vpack.c.b16 %v629, %v626
      %v705 = vpack.c.b16 %v630, %v627
      %v706 = vpack.c.b16 %v634, %v631
      %v707 = vpack.c.b16 %v635, %v632
      %v708 = vpack.c.b16 %v636, %v633
      %781 = vmatprep.subr.bf16.mxu0 %v638
      %782 = vmatpush1.bf16.msra.mxu0 %v637
      %783 = vmatprep.subr.bf16.mxu0 %v641
      %784 = vmatpush1.bf16.msra.mxu0 %v640
      %785 = vmatprep.subr.bf16.mxu0 %v644
      %786 = vmatpush1.bf16.msra.mxu0 %v643
      %787 = vmatprep.subr.bf16.mxu0 %v647
      %788 = vmatpush1.bf16.msra.mxu0 %v646
      %789 = vmatprep.subr.bf16.mxu0 %v650
      %790 = vmatpush1.bf16.msra.mxu0 %v649
      %791 = vmatprep.subr.bf16.mxu0 %v653
      %792 = vmatpush1.bf16.msra.mxu0 %v652
      %793 = vmatprep.subr.bf16.mxu0 %v656
      %794 = vmatpush1.bf16.msra.mxu0 %v655
      %795 = vmatprep.subr.bf16.mxu0 %v659
      %796 = vmatpush1.bf16.msra.mxu0 %v658
      %797 = vmatprep.subr.bf16.mxu0 %v662
      %798 = vmatpush1.bf16.msra.mxu0 %v661
      %799 = vmatprep.subr.bf16.mxu0 %v665
      %800 = vmatpush1.bf16.msra.mxu0 %v664
      %801 = vmatprep.subr.bf16.mxu0 %v668
      %802 = vmatpush1.bf16.msra.mxu0 %v667
      %803 = vmatprep.subr.bf16.mxu0 %v671
      %804 = vmatpush1.bf16.msra.mxu0 %v670
      %805 = vmatprep.subr.bf16.mxu0 %v674
      %806 = vmatpush1.bf16.msra.mxu0 %v673
      %807 = vmatprep.subr.bf16.mxu0 %v677
      %808 = vmatpush1.bf16.msra.mxu0 %v676
      %809 = vmatprep.subr.bf16.mxu0 %v680
      %810 = vmatpush1.bf16.msra.mxu0 %v679
      %811 = vmatprep.subr.bf16.mxu0 %v683
      %812 = vmatpush1.bf16.msra.mxu0 %v682
      %813 = vmatprep.mubr.bf16.mxu0 %v392
      %814 = vmatmul.mubr.bf16.gmra.mrb[0].mxu0 %v391
      %v815 = vpop.f32.mrb[0].mxu0
      %v816 = vadd.f32 0.0, %v815
      %v817 = vpop.f32.mrb[0].mxu0
      %v818 = vadd.f32 0.0, %v817
      %v819 = vpop.f32.mrb[0].mxu0
      %v820 = vpop.f32.mrb[0].mxu0
      %821 = vdwg.mxu0
      %822 = vmatprep.subr.bf16.mxu0 %v686
      %823 = vmatpush1.bf16.msra.mxu0 %v685
      %824 = vmatprep.subr.bf16.mxu0 %v689
      %825 = vmatpush1.bf16.msra.mxu0 %v688
      %826 = vmatprep.subr.bf16.mxu0 %v692
      %827 = vmatpush1.bf16.msra.mxu0 %v691
      %828 = vmatprep.subr.bf16.mxu0 %v695
      %829 = vmatpush1.bf16.msra.mxu0 %v694
      %830 = vmatprep.subr.bf16.mxu0 %v698
      %831 = vmatpush1.bf16.msra.mxu0 %v697
      %832 = vmatprep.subr.bf16.mxu0 %v701
      %833 = vmatpush1.bf16.msra.mxu0 %v700
      %834 = vmatprep.subr.bf16.mxu0 %v704
      %835 = vmatpush1.bf16.msra.mxu0 %v703
      %836 = vmatprep.subr.bf16.mxu0 %v707
      %837 = vmatpush1.bf16.msra.mxu0 %v706
      %838 = vmatprep.subr.bf16.mxu0 0
      %839 = vmatpush1.bf16.msra.mxu0 0
      %840 = vmatprep.subr.bf16.mxu0 0
      %841 = vmatpush1.bf16.msra.mxu0 0
      %842 = vmatprep.subr.bf16.mxu0 0
      %843 = vmatpush1.bf16.msra.mxu0 0
      %844 = vmatprep.subr.bf16.mxu0 0
      %845 = vmatpush1.bf16.msra.mxu0 0
      %846 = vmatprep.subr.bf16.mxu0 0
      %847 = vmatpush1.bf16.msra.mxu0 0
      %848 = vmatprep.subr.bf16.mxu0 0
      %849 = vmatpush1.bf16.msra.mxu0 0
      %850 = vmatprep.subr.bf16.mxu0 0
      %851 = vmatpush1.bf16.msra.mxu0 0
      %852 = vmatprep.subr.bf16.mxu0 0
      %853 = vmatpush1.bf16.msra.mxu0 0
      %854 = vmatprep.mubr.bf16.mxu0 0
      %855 = vmatmul.mubr.bf16.gmra.mrb[0].mxu0 %v393
      %v856 = vpop.f32.mrb[0].mxu0
      %v857 = vadd.f32 %v816, %v856
      %v858 = vpop.f32.mrb[0].mxu0
      %v859 = vadd.f32 %v818, %v858
      %v860 = vpop.f32.mrb[0].mxu0
      %v861 = vpop.f32.mrb[0].mxu0
      %862 = vdwg.mxu0
      %863 = vmatprep.subr.bf16.mxu0 0
      %864 = vmatpush1.bf16.msra.mxu0 %v639
      %865 = vmatprep.subr.bf16.mxu0 0
      %866 = vmatpush1.bf16.msra.mxu0 %v642
      %867 = vmatprep.subr.bf16.mxu0 0
      %868 = vmatpush1.bf16.msra.mxu0 %v645
      %869 = vmatprep.subr.bf16.mxu0 0
      %870 = vmatpush1.bf16.msra.mxu0 %v648
      %871 = vmatprep.subr.bf16.mxu0 0
      %872 = vmatpush1.bf16.msra.mxu0 %v651
      %873 = vmatprep.subr.bf16.mxu0 0
      %874 = vmatpush1.bf16.msra.mxu0 %v654
      %875 = vmatprep.subr.bf16.mxu0 0
      %876 = vmatpush1.bf16.msra.mxu0 %v657
      %877 = vmatprep.subr.bf16.mxu0 0
      %878 = vmatpush1.bf16.msra.mxu0 %v660
      %879 = vmatprep.subr.bf16.mxu0 0
      %880 = vmatpush1.bf16.msra.mxu0 %v663
      %881 = vmatprep.subr.bf16.mxu0 0
      %882 = vmatpush1.bf16.msra.mxu0 %v666
      %883 = vmatprep.subr.bf16.mxu0 0
      %884 = vmatpush1.bf16.msra.mxu0 %v669
      %885 = vmatprep.subr.bf16.mxu0 0
      %886 = vmatpush1.bf16.msra.mxu0 %v672
      %887 = vmatprep.subr.bf16.mxu0 0
      %888 = vmatpush1.bf16.msra.mxu0 %v675
      %889 = vmatprep.subr.bf16.mxu0 0
      %890 = vmatpush1.bf16.msra.mxu0 %v678
      %891 = vmatprep.subr.bf16.mxu0 0
      %892 = vmatpush1.bf16.msra.mxu0 %v681
      %893 = vmatprep.subr.bf16.mxu0 0
      %894 = vmatpush1.bf16.msra.mxu0 %v684
      %895 = vmatprep.mubr.bf16.mxu0 %v392
      %896 = vmatmul.mubr.bf16.gmra.mrb[0].mxu0 %v391
      %v897 = vpop.f32.mrb[0].mxu0
      %v898 = vadd.f32 0.0, %v897
      %v899 = vpop.f32.mrb[0].mxu0
      %v900 = vpop.f32.mrb[0].mxu0
      %v901 = vpop.f32.mrb[0].mxu0
      %902 = vdwg.mxu0
      %903 = vmatprep.subr.bf16.mxu0 0
      %904 = vmatpush1.bf16.msra.mxu0 %v687
      %905 = vmatprep.subr.bf16.mxu0 0
      %906 = vmatpush1.bf16.msra.mxu0 %v690
      %907 = vmatprep.subr.bf16.mxu0 0
      %908 = vmatpush1.bf16.msra.mxu0 %v693
      %909 = vmatprep.subr.bf16.mxu0 0
      %910 = vmatpush1.bf16.msra.mxu0 %v696
      %911 = vmatprep.subr.bf16.mxu0 0
      %912 = vmatpush1.bf16.msra.mxu0 %v699
      %913 = vmatprep.subr.bf16.mxu0 0
      %914 = vmatpush1.bf16.msra.mxu0 %v702
      %915 = vmatprep.subr.bf16.mxu0 0
      %916 = vmatpush1.bf16.msra.mxu0 %v705
      %917 = vmatprep.subr.bf16.mxu0 0
      %918 = vmatpush1.bf16.msra.mxu0 %v708
      %919 = vmatprep.subr.bf16.mxu0 0
      %920 = vmatpush1.bf16.msra.mxu0 0
      %921 = vmatprep.subr.bf16.mxu0 0
      %922 = vmatpush1.bf16.msra.mxu0 0
      %923 = vmatprep.subr.bf16.mxu0 0
      %924 = vmatpush1.bf16.msra.mxu0 0
      %925 = vmatprep.subr.bf16.mxu0 0
      %926 = vmatpush1.bf16.msra.mxu0 0
      %927 = vmatprep.subr.bf16.mxu0 0
      %928 = vmatpush1.bf16.msra.mxu0 0
      %929 = vmatprep.subr.bf16.mxu0 0
      %930 = vmatpush1.bf16.msra.mxu0 0
      %931 = vmatprep.subr.bf16.mxu0 0
      %932 = vmatpush1.bf16.msra.mxu0 0
      %933 = vmatprep.subr.bf16.mxu0 0
      %934 = vmatpush1.bf16.msra.mxu0 0
      %935 = vmatprep.mubr.bf16.mxu0 0
      %936 = vmatmul.mubr.bf16.gmra.mrb[0].mxu0 %v393
      %v937 = vpop.f32.mrb[0].mxu0
      %v938 = vadd.f32 %v898, %v937
      %v939 = vpop.f32.mrb[0].mxu0
      %v940 = vpop.f32.mrb[0].mxu0
      %v941 = vpop.f32.mrb[0].mxu0
      %942 = vdwg.mxu0
      %v943 = vadd.f32 %v285, %v857
      %v944 = vadd.f32 %v286, %v859
      %v945 = vadd.f32 %v287, %v938
      %946 = vst [vmem:[#allocation2] sm:$0xff] %v943
      %947 = vst [vmem:[#allocation2 + $0x8] sm:$0xff] %v944
      %948 = vst [vmem:[#allocation2 + $0x10] sm:$0xff] %v945
      %p949 = scmp.eq.s32.totalorder %s21, 8
      // Predicated region
      $region37: #{encoder_forward.13} parent=31 // pred_check
        %p950 = pneg %p949
      $region38: #{encoder_forward.13} parent=31 // pred_check_branch
        %952 = sbr.rel (%p950) target = $region40
      $region39: #{encoder_forward.13} parent=31 // pred_region
        %v953 = vld [vmem:[#allocation2] sm:$0xff]
        %v954 = vld [vmem:[#allocation2 + $0x8] sm:$0xff]
        %v955 = vld [vmem:[#allocation2 + $0x10] sm:$0xff]
        %v956 = vld [vmem:[%s265] sm:$0x7]
        %v958 = vlaneseq
        %v959 = vshrl.u32 %v958, 7
        %v960 = vsub.s32 0, %v959
        %v961 = vrot.slane %v956, %v960
        %v962 = vlaneseq
        %v963 = vshrl.u32 %v962, 7
        %v964 = vsub.s32 1, %v963
        %v965 = vrot.slane %v956, %v964
        %v966 = vlaneseq
        %v967 = vshrl.u32 %v966, 7
        %v968 = vsub.s32 2, %v967
        %v969 = vrot.slane %v956, %v968
        %v973 = vadd.f32 %v953, %v961
        %v974 = vadd.f32 %v954, %v965
        %v975 = vadd.f32 %v955, %v969
        %v976 = vmax.f32 %v973, 0.0
        %v977 = vmax.f32 %v974, 0.0
        %v978 = vmax.f32 %v975, 0.0
        %979 = vst [vmem:[%s275] sm:$0xff] %v976
        %980 = vst [vmem:[%s275 + $0x8] sm:$0xff] %v977
        %981 = vst [vmem:[%s275 + $0x10] sm:$0xff] %v978
      $region40: #{encoder_forward.13} parent=31 // pred_fallthru
        _
      %s982 = smul.u32 3, %s20
      %p983 = scmp.lt.s32.totalorder %s19, 0
      %s984 = scalar_select %p983, %s19, 0
      %p985 = scmp.lt.s32.totalorder %s982, 2
      %s986 = scalar_select %p985, %s982, 2
      %s987 = smul.addr %s984, 3
      %s988 = sadd.s32 %s986, %s987
      %s989 = smul.addr %s988, 8
      %s990 = scalar_lea.vmem %s3, %s989
      // Predicated region
      $region41: #{encoder_forward.13} parent=31 // pred_check
        %p991 = pneg %p135
      $region42: #{encoder_forward.13} parent=31 // pred_check_branch
        %993 = sbr.rel (%p991) target = $region44
      $region43: #{encoder_forward.13} parent=31 // pred_region
        %s994 = smul.u32 3, %s20
      $region44: #{encoder_forward.13} parent=31 // pred_fallthru
        _
      // Predicated region
      $region45: #{encoder_forward.13} parent=31 // pred_check
        %p995 = pneg %p135
      $region46: #{encoder_forward.13} parent=31 // pred_check_branch
        %997 = sbr.rel (%p995) target = $region48
      $region47: #{encoder_forward.13} parent=31 // pred_region
        %s998 = smul.u32 3, %s20
        %p999 = scmp.lt.s32.totalorder %s19, 0
        %s1000 = scalar_select %p999, %s19, 0
        %p1001 = scmp.lt.s32.totalorder %s998, 2
        %s1002 = scalar_select %p1001, %s998, 2
        %s1003 = smul.addr %s1000, 3
        %s1004 = sadd.s32 %s1002, %s1003
        %s1005 = smul.addr %s1004, 8
        %s1006 = scalar_lea.vmem %s3, %s1005
      $region48: #{encoder_forward.13} parent=31 // pred_fallthru
        _
    $region32: #{encoder_forward.13} parent=5 // pred_fallthru
      _
    %p1007 = scmp.le.s32.totalorder 2, %s9
    // Predicated region
    $region49: #{encoder_forward.13} parent=5 // pred_check
      %p1008 = pneg %p1007
    $region50: #{encoder_forward.13} parent=5 // pred_check_branch
      %1010 = sbr.rel (%p1008) target = $region52
    $region51: #{encoder_forward.13} parent=5 // pred_region
      %s1011 = ssub.s32 %s9, 2
    $region52: #{encoder_forward.13} parent=5 // pred_fallthru
      _
  $region6: #{encoder_forward.13} parent=0 // loop_footer
    %s13 = sadd.s32 1, %s9
  $region7: #{encoder_forward.13} parent=0 // loop_footer_branch
    %8 = sbr.rel target = $region3
  $region8: #{encoder_forward.13} parent=0 // loop_exit
    _

// kernel: encoder_forward.14
$region0: #{encoder_forward.14}
  #allocation0 [shape = 'u32[]', space=smem, size = 0x4, offset = 0x4, fixed_abs, tag = 'smem constant byte address 0x4 - core index']
  #allocation1 [shape = 'u32[144,128]{1,0:T(1,128)}', space=vmem, size = 0x12000, scoped, tag = 'internal scratch']
  #allocation2 [shape = 'f32[8,256]{1,0:T(8,128)}', space=vmem, size = 0x2000, scoped, tag = 'scratch operand']
  %s0 = inlined_call_operand.vmem [shape: bf16[8,3456], index: 0, kind: input, shape index: {}]
  %s1 = inlined_call_operand.vmem [shape: bf16[3456,256], index: 1, kind: input, shape index: {}]
  %s2 = inlined_call_operand.vmem [shape: f32[1,256], index: 2, kind: input, shape index: {}]
  %s3 = inlined_call_operand.vmem [shape: f32[8,256], index: 3, kind: output, shape index: {}]
  %s4 = sld [smem:[#allocation0]]
  $region53: #{encoder_forward.14} parent=0
    _
  %s6 = ssub.s32 1, %s4
  %s7 = scalar_select 0, %s6, %s4
  loop: start=0, step=1, limit=11
  $region2: #{encoder_forward.14} parent=0 // loop_pre_header
    _
  $region3: #{encoder_forward.14} parent=0 // loop_header
    %s9 = sphi 0, %s13
    %p10 = scmp.ge.s32.totalorder %s9, 11
    %s16 = sphi 0, %s35
    %s17 = sphi 0, %s31
    %s18 = sphi 0, %s27
    %s19 = sphi 0, %s16
    %s20 = sphi 0, %s17
    %s21 = sphi 0, %s18
    %s22 = sphi 0, %s19
    %s23 = sphi 0, %s20
    %s24 = sphi 0, %s21
    %s40 = sphi 0, %s42
    %s43 = sphi 0, %s40
    %s44 = sphi 0, %s43
    %s60 = sphi 0, %s44
    %s68 = sphi 0, %s70
    %s71 = sphi 0, %s68
    %s72 = sphi 0, %s71
    %s88 = sphi 0, %s72
    %s94 = sphi 0, %s96
    %s97 = sphi 0, %s94
    %s98 = sphi 0, %s97
    %s114 = sphi 0, %s98
    %s122 = sphi 0, %s124
    %s125 = sphi 0, %s122
    %s126 = sphi 0, %s125
    %s142 = sphi 0, %s126
  $region4: #{encoder_forward.14} parent=0 // loop_header_branch
    %12 = sbr.rel (%p10) target = $region8
  $region5: #{encoder_forward.14} parent=0 // loop_body
    %s14 = ssub.s32 %s9, 1
    %s15 = ssub.s32 %s9, 2
    %s25 = sadd.s32 1, %s18
    %p26 = scmp.ge.s32.totalorder %s25, 9
    %s27 = scalar_select %p26, 0, %s25
    %s28 = sadd.s32 1, %s17
    %s29 = scalar_select %p26, %s28, %s17
    %p30 = scmp.ge.s32.totalorder %s29, 1
    %s31 = scalar_select %p30, 0, %s29
    %s32 = sadd.s32 1, %s16
    %s33 = scalar_select %p30, %s32, %s16
    %p34 = scmp.ge.s32.totalorder %s33, 1
    %s35 = scalar_select %p34, 0, %s33
    %s36 = ssub.s32 %s16, %s35
    %s37 = ssub.s32 %s18, %s27
    %s38 = sor.u32 %s36, %s37
    %p39 = scmp.eq.s32.totalorder %s38, 0
    %s41 = sadd.s32 %s40, 1
    %s42 = scalar_select %p39, %s40, %s41
    %p45 = pneg %p39
    %p46 = scmp.eq.s32.totalorder %s9, 8
    %p47 = por %p45, %p46
    %p48 = scmp.ne.s32.totalorder %s40, %s43
    %p49 = scmp.eq.s32.totalorder %s9, 0
    %p50 = por %p48, %p49
    %p51 = scmp.ne.s32.totalorder %s40, %s43
    %p52 = scmp.eq.s32.totalorder %s14, 8
    %p53 = por %p51, %p52
    %p54 = scmp.ne.s32.totalorder %s43, %s44
    %p55 = scmp.eq.s32.totalorder %s14, 0
    %p56 = por %p54, %p55
    %p57 = scmp.ne.s32.totalorder %s43, %s44
    %p58 = scmp.eq.s32.totalorder %s15, 8
    %p59 = por %p57, %p58
    %p61 = scmp.ne.s32.totalorder %s44, %s60
    %p62 = scmp.eq.s32.totalorder %s15, 0
    %p63 = por %p61, %p62
    %s64 = ssub.s32 %s18, %s27
    %s65 = ssub.s32 %s17, %s31
    %s66 = sor.u32 %s64, %s65
    %p67 = scmp.eq.s32.totalorder %s66, 0
    %s69 = sadd.s32 %s68, 1
    %s70 = scalar_select %p67, %s68, %s69
    %p73 = pneg %p67
    %p74 = scmp.eq.s32.totalorder %s9, 8
    %p75 = por %p73, %p74
    %p76 = scmp.ne.s32.totalorder %s68, %s71
    %p77 = scmp.eq.s32.totalorder %s9, 0
    %p78 = por %p76, %p77
    %p79 = scmp.ne.s32.totalorder %s68, %s71
    %p80 = scmp.eq.s32.totalorder %s14, 8
    %p81 = por %p79, %p80
    %p82 = scmp.ne.s32.totalorder %s71, %s72
    %p83 = scmp.eq.s32.totalorder %s14, 0
    %p84 = por %p82, %p83
    %p85 = scmp.ne.s32.totalorder %s71, %s72
    %p86 = scmp.eq.s32.totalorder %s15, 8
    %p87 = por %p85, %p86
    %p89 = scmp.ne.s32.totalorder %s72, %s88
    %p90 = scmp.eq.s32.totalorder %s15, 0
    %p91 = por %p89, %p90
    %s92 = ssub.s32 %s17, %s31
    %p93 = scmp.eq.s32.totalorder %s92, 0
    %s95 = sadd.s32 %s94, 1
    %s96 = scalar_select %p93, %s94, %s95
    %p99 = pneg %p93
    %p100 = scmp.eq.s32.totalorder %s9, 8
    %p101 = por %p99, %p100
    %p102 = scmp.ne.s32.totalorder %s94, %s97
    %p103 = scmp.eq.s32.totalorder %s9, 0
    %p104 = por %p102, %p103
    %p105 = scmp.ne.s32.totalorder %s94, %s97
    %p106 = scmp.eq.s32.totalorder %s14, 8
    %p107 = por %p105, %p106
    %p108 = scmp.ne.s32.totalorder %s97, %s98
    %p109 = scmp.eq.s32.totalorder %s14, 0
    %p110 = por %p108, %p109
    %p111 = scmp.ne.s32.totalorder %s97, %s98
    %p112 = scmp.eq.s32.totalorder %s15, 8
    %p113 = por %p111, %p112
    %p115 = scmp.ne.s32.totalorder %s98, %s114
    %p116 = scmp.eq.s32.totalorder %s15, 0
    %p117 = por %p115, %p116
    %s118 = ssub.s32 %s16, %s35
    %s119 = ssub.s32 %s17, %s31
    %s120 = sor.u32 %s118, %s119
    %p121 = scmp.eq.s32.totalorder %s120, 0
    %s123 = sadd.s32 %s122, 1
    %s124 = scalar_select %p121, %s122, %s123
    %p127 = pneg %p121
    %p128 = scmp.eq.s32.totalorder %s9, 8
    %p129 = por %p127, %p128
    %p130 = scmp.ne.s32.totalorder %s122, %s125
    %p131 = scmp.eq.s32.totalorder %s9, 0
    %p132 = por %p130, %p131
    %p133 = scmp.ne.s32.totalorder %s122, %s125
    %p134 = scmp.eq.s32.totalorder %s14, 8
    %p135 = por %p133, %p134
    %p136 = scmp.ne.s32.totalorder %s125, %s126
    %p137 = scmp.eq.s32.totalorder %s14, 0
    %p138 = por %p136, %p137
    %p139 = scmp.ne.s32.totalorder %s125, %s126
    %p140 = scmp.eq.s32.totalorder %s15, 8
    %p141 = por %p139, %p140
    %p143 = scmp.ne.s32.totalorder %s126, %s142
    %p144 = scmp.eq.s32.totalorder %s15, 0
    %p145 = por %p143, %p144
    %p146 = scmp.le.s32.totalorder 1, %s9
    %p147 = scmp.lt.s32.totalorder %s9, 10
    %p148 = pnand %p146, %p147
    %p149 = pneg %p148
    // Predicated region
    $region9: #{encoder_forward.14} parent=5 // pred_check
      _
    $region10: #{encoder_forward.14} parent=5 // pred_check_branch
      %151 = sbr.rel (%p148) target = $region12
    $region11: #{encoder_forward.14} parent=5 // pred_region
      %s152 = ssub.s32 %s9, 1
      // Predicated region
      $region13: #{encoder_forward.14} parent=11 // pred_check
        %p153 = pneg %p110
      $region14: #{encoder_forward.14} parent=11 // pred_check_branch
        %155 = sbr.rel (%p153) target = $region16
      $region15: #{encoder_forward.14} parent=11 // pred_region
        %s156 = smul.u32 2, %s20
        %p157 = scmp.lt.s32.totalorder %s156, 1
        %s158 = scalar_select %p157, %s156, 1
        %s159 = scalar_lea.vmem %s2, %s158
        %s160 = smul.u32 2, %s20
      $region16: #{encoder_forward.14} parent=11 // pred_fallthru
        _
    $region12: #{encoder_forward.14} parent=5 // pred_fallthru
      _
    %p161 = scmp.lt.s32.totalorder %s9, 9
    // Predicated region
    $region17: #{encoder_forward.14} parent=5 // pred_check
      %p162 = pneg %p161
    $region18: #{encoder_forward.14} parent=5 // pred_check_branch
      %164 = sbr.rel (%p162) target = $region20
    $region19: #{encoder_forward.14} parent=5 // pred_region
      // Predicated region
      $region21: #{encoder_forward.14} parent=19 // pred_check
        %p165 = pneg %p50
      $region22: #{encoder_forward.14} parent=19 // pred_check_branch
        %167 = sbr.rel (%p165) target = $region24
      $region23: #{encoder_forward.14} parent=19 // pred_region
        %s168 = smul.u32 3, %s18
        %p169 = scmp.lt.s32.totalorder %s16, 0
        %s170 = scalar_select %p169, %s16, 0
        %p171 = scmp.lt.s32.totalorder %s168, 26
        %s172 = scalar_select %p171, %s168, 26
        %s173 = smul.addr %s170, 27
        %s174 = sadd.s32 %s172, %s173
        %s175 = smul.addr %s174, 4
        %s176 = scalar_lea.vmem %s0, %s175
        %s177 = smul.u32 3, %s18
      $region24: #{encoder_forward.14} parent=19 // pred_fallthru
        _
      // Predicated region
      $region25: #{encoder_forward.14} parent=19 // pred_check
        %p178 = pneg %p78
      $region26: #{encoder_forward.14} parent=19 // pred_check_branch
        %180 = sbr.rel (%p178) target = $region28
      $region27: #{encoder_forward.14} parent=19 // pred_region
        %s181 = smul.u32 48, %s18
        %s182 = smul.u32 2, %s17
        %p183 = scmp.lt.s32.totalorder %s181, 431
        %s184 = scalar_select %p183, %s181, 431
        %p185 = scmp.lt.s32.totalorder %s182, 1
        %s186 = scalar_select %p185, %s182, 1
        %s187 = smul.addr %s184, 2
        %s188 = sadd.s32 %s186, %s187
        %s189 = smul.addr %s188, 4
        %s190 = scalar_lea.vmem %s1, %s189
        %s191 = smul.u32 48, %s18
        %s192 = smul.u32 2, %s17
      $region28: #{encoder_forward.14} parent=19 // pred_fallthru
        _
    $region20: #{encoder_forward.14} parent=5 // pred_fallthru
      _
    %p193 = scmp.le.s32.totalorder 1, %s9
    %p194 = scmp.lt.s32.totalorder %s9, 10
    %p195 = pnand %p193, %p194
    %p196 = pneg %p195
    // Predicated region
    $region29: #{encoder_forward.14} parent=5 // pred_check
      _
    $region30: #{encoder_forward.14} parent=5 // pred_check_branch
      %198 = sbr.rel (%p195) target = $region32
    $region31: #{encoder_forward.14} parent=5 // pred_region
      %s199 = ssub.s32 %s9, 1
      %s200 = smul.u32 3, %s21
      %p201 = scmp.lt.s32.totalorder %s19, 0
      %s202 = scalar_select %p201, %s19, 0
      %p203 = scmp.lt.s32.totalorder %s200, 26
      %s204 = scalar_select %p203, %s200, 26
      %s205 = smul.addr %s202, 27
      %s206 = sadd.s32 %s204, %s205
      %s207 = smul.addr %s206, 4
      %s208 = scalar_lea.vmem %s0, %s207
      %p209 = pneg %p56
      %p210 = pneg %p53
      %s211 = smul.u32 48, %s21
      %s212 = smul.u32 2, %s20
      %p213 = scmp.lt.s32.totalorder %s211, 431
      %s214 = scalar_select %p213, %s211, 431
      %p215 = scmp.lt.s32.totalorder %s212, 1
      %s216 = scalar_select %p215, %s212, 1
      %s217 = smul.addr %s214, 2
      %s218 = sadd.s32 %s216, %s217
      %s219 = smul.addr %s218, 4
      %s220 = scalar_lea.vmem %s1, %s219
      %p221 = pneg %p84
      %p222 = pneg %p81
      %s223 = smul.u32 2, %s20
      %p224 = scmp.lt.s32.totalorder %s223, 1
      %s225 = scalar_select %p224, %s223, 1
      %s226 = scalar_lea.vmem %s2, %s225
      %p227 = pneg %p110
      %p228 = pneg %p107
      %p229 = pneg %p138
      %p230 = pneg %p135
      %s231 = smul.u32 2, %s20
      %p232 = scmp.lt.s32.totalorder %s19, 0
      %s233 = scalar_select %p232, %s19, 0
      %p234 = scmp.lt.s32.totalorder %s231, 1
      %s235 = scalar_select %p234, %s231, 1
      %s236 = smul.addr %s233, 2
      %s237 = sadd.s32 %s235, %s236
      %s238 = smul.addr %s237, 8
      %s239 = scalar_lea.vmem %s3, %s238
      %s240 = smul.u32 3, %s21
      %p241 = scmp.lt.s32.totalorder %s19, 0
      %s242 = scalar_select %p241, %s19, 0
      %p243 = scmp.lt.s32.totalorder %s240, 26
      %s244 = scalar_select %p243, %s240, 26
      %s245 = smul.addr %s242, 27
      %s246 = sadd.s32 %s244, %s245
      %s247 = smul.addr %s246, 4
      %s248 = scalar_lea.vmem %s0, %s247
      %s249 = smul.u32 3, %s21
      %s250 = smul.u32 48, %s21
      %s251 = smul.u32 2, %s20
      %p252 = scmp.lt.s32.totalorder %s250, 431
      %s253 = scalar_select %p252, %s250, 431
      %p254 = scmp.lt.s32.totalorder %s251, 1
      %s255 = scalar_select %p254, %s251, 1
      %s256 = smul.addr %s253, 2
      %s257 = sadd.s32 %s255, %s256
      %s258 = smul.addr %s257, 4
      %s259 = scalar_lea.vmem %s1, %s258
      %s260 = smul.u32 48, %s21
      %s261 = smul.u32 2, %s20
      %s262 = smul.u32 2, %s20
      %p263 = scmp.lt.s32.totalorder %s262, 1
      %s264 = scalar_select %p263, %s262, 1
      %s265 = scalar_lea.vmem %s2, %s264
      %s266 = smul.u32 2, %s20
      %s267 = smul.u32 2, %s20
      %p268 = scmp.lt.s32.totalorder %s19, 0
      %s269 = scalar_select %p268, %s19, 0
      %p270 = scmp.lt.s32.totalorder %s267, 1
      %s271 = scalar_select %p270, %s267, 1
      %s272 = smul.addr %s269, 2
      %s273 = sadd.s32 %s271, %s272
      %s274 = smul.addr %s273, 8
      %s275 = scalar_lea.vmem %s3, %s274
      %s276 = smul.u32 2, %s20
      %p278 = scmp.eq.s32.totalorder %s21, 0
      // Predicated region
      $region33: #{encoder_forward.14} parent=31 // pred_check
        %p279 = pneg %p278
      $region34: #{encoder_forward.14} parent=31 // pred_check_branch
        %281 = sbr.rel (%p279) target = $region36
      $region35: #{encoder_forward.14} parent=31 // pred_region
        %282 = vst [vmem:[#allocation2] sm:$0xff] 0.0
        %283 = vst [vmem:[#allocation2 + $0x8] sm:$0xff] 0.0
      $region36: #{encoder_forward.14} parent=31 // pred_fallthru
        _
      %v284 = vld [vmem:[#allocation2] sm:$0xff]
      %v285 = vld [vmem:[#allocation2 + $0x8] sm:$0xff]
      %v286 = vld [vmem:[%s248] sm:$0xff]
      %v287 = vld [vmem:[%s248 + $0x8] sm:$0xf]
      %v288 = vld [vmem:[%s259] sm:$0xff]
      %v289 = vld [vmem:[%s259 + $0x8] sm:$0xff]
      %v290 = vld [vmem:[%s259 + $0x10] sm:$0xff]
      %v291 = vld [vmem:[%s259 + $0x18] sm:$0xff]
      %v292 = vld [vmem:[%s259 + $0x20] sm:$0xff]
      %v293 = vld [vmem:[%s259 + $0x28] sm:$0xff]
      %v294 = vld [vmem:[%s259 + $0x30] sm:$0xff]
      %v295 = vld [vmem:[%s259 + $0x38] sm:$0xff]
      %v296 = vld [vmem:[%s259 + $0x40] sm:$0xff]
      %v297 = vld [vmem:[%s259 + $0x48] sm:$0xff]
      %v298 = vld [vmem:[%s259 + $0x50] sm:$0xff]
      %v299 = vld [vmem:[%s259 + $0x58] sm:$0xff]
      %v300 = vld [vmem:[%s259 + $0x60] sm:$0xff]
      %v301 = vld [vmem:[%s259 + $0x68] sm:$0xff]
      %v302 = vld [vmem:[%s259 + $0x70] sm:$0xff]
      %v303 = vld [vmem:[%s259 + $0x78] sm:$0xff]
      %v304 = vld [vmem:[%s259 + $0x80] sm:$0xff]
      %v305 = vld [vmem:[%s259 + $0x88] sm:$0xff]
      %v306 = vld [vmem:[%s259 + $0x90] sm:$0xff]
      %v307 = vld [vmem:[%s259 + $0x98] sm:$0xff]
      %v308 = vld [vmem:[%s259 + $0xa0] sm:$0xff]
      %v309 = vld [vmem:[%s259 + $0xa8] sm:$0xff]
      %v310 = vld [vmem:[%s259 + $0xb0] sm:$0xff]
      %v311 = vld [vmem:[%s259 + $0xb8] sm:$0xff]
      %v312 = vld [vmem:[%s259 + $0xc0] sm:$0xff]
      %v313 = vld [vmem:[%s259 + $0xc8] sm:$0xff]
      %v314 = vld [vmem:[%s259 + $0xd0] sm:$0xff]
      %v315 = vld [vmem:[%s259 + $0xd8] sm:$0xff]
      %v316 = vld [vmem:[%s259 + $0xe0] sm:$0xff]
      %v317 = vld [vmem:[%s259 + $0xe8] sm:$0xff]
      %v318 = vld [vmem:[%s259 + $0xf0] sm:$0xff]
      %v319 = vld [vmem:[%s259 + $0xf8] sm:$0xff]
      %v320 = vld [vmem:[%s259 + $0x100] sm:$0xff]
      %v321 = vld [vmem:[%s259 + $0x108] sm:$0xff]
      %v322 = vld [vmem:[%s259 + $0x110] sm:$0xff]
      %v323 = vld [vmem:[%s259 + $0x118] sm:$0xff]
      %v324 = vld [vmem:[%s259 + $0x120] sm:$0xff]
      %v325 = vld [vmem:[%s259 + $0x128] sm:$0xff]
      %v326 = vld [vmem:[%s259 + $0x130] sm:$0xff]
      %v327 = vld [vmem:[%s259 + $0x138] sm:$0xff]
      %v328 = vld [vmem:[%s259 + $0x140] sm:$0xff]
      %v329 = vld [vmem:[%s259 + $0x148] sm:$0xff]
      %v330 = vld [vmem:[%s259 + $0x150] sm:$0xff]
      %v331 = vld [vmem:[%s259 + $0x158] sm:$0xff]
      %v332 = vld [vmem:[%s259 + $0x160] sm:$0xff]
      %v333 = vld [vmem:[%s259 + $0x168] sm:$0xff]
      %v334 = vld [vmem:[%s259 + $0x170] sm:$0xff]
      %v335 = vld [vmem:[%s259 + $0x178] sm:$0xff]
      %v338 = vunpack.c.l.b16 %v286
      %v339 = vunpack.c.h.b16 %v286
      %v340 = vunpack.c.l.b16 %v287
      %v341 = vpack.c.b16 %v338, %v338
      %v342 = vpack.c.b16 %v339, %v339
      %v343 = vpack.c.b16 %v340, %v340
      %v395 = vunpack.c.l.b16 %v288
      %v396 = vunpack.c.h.b16 %v288
      %v397 = vunpack.c.l.b16 %v289
      %v398 = vunpack.c.h.b16 %v289
      %v399 = vunpack.c.l.b16 %v290
      %v400 = vunpack.c.h.b16 %v290
      %v401 = vunpack.c.l.b16 %v291
      %v402 = vunpack.c.h.b16 %v291
      %v403 = vunpack.c.l.b16 %v292
      %v404 = vunpack.c.h.b16 %v292
      %v405 = vunpack.c.l.b16 %v293
      %v406 = vunpack.c.h.b16 %v293
      %v407 = vunpack.c.l.b16 %v294
      %v408 = vunpack.c.h.b16 %v294
      %v409 = vunpack.c.l.b16 %v295
      %v410 = vunpack.c.h.b16 %v295
      %v411 = vunpack.c.l.b16 %v296
      %v412 = vunpack.c.h.b16 %v296
      %v413 = vunpack.c.l.b16 %v297
      %v414 = vunpack.c.h.b16 %v297
      %v415 = vunpack.c.l.b16 %v298
      %v416 = vunpack.c.h.b16 %v298
      %v417 = vunpack.c.l.b16 %v299
      %v418 = vunpack.c.h.b16 %v299
      %v419 = vunpack.c.l.b16 %v300
      %v420 = vunpack.c.h.b16 %v300
      %v421 = vunpack.c.l.b16 %v301
      %v422 = vunpack.c.h.b16 %v301
      %v423 = vunpack.c.l.b16 %v302
      %v424 = vunpack.c.h.b16 %v302
      %v425 = vunpack.c.l.b16 %v303
      %v426 = vunpack.c.h.b16 %v303
      %v427 = vunpack.c.l.b16 %v304
      %v428 = vunpack.c.h.b16 %v304
      %v429 = vunpack.c.l.b16 %v305
      %v430 = vunpack.c.h.b16 %v305
      %v431 = vunpack.c.l.b16 %v306
      %v432 = vunpack.c.h.b16 %v306
      %v433 = vunpack.c.l.b16 %v307
      %v434 = vunpack.c.h.b16 %v307
      %v435 = vunpack.c.l.b16 %v308
      %v436 = vunpack.c.h.b16 %v308
      %v437 = vunpack.c.l.b16 %v309
      %v438 = vunpack.c.h.b16 %v309
      %v439 = vunpack.c.l.b16 %v310
      %v440 = vunpack.c.h.b16 %v310
      %v441 = vunpack.c.l.b16 %v311
      %v442 = vunpack.c.h.b16 %v311
      %v443 = vunpack.c.l.b16 %v312
      %v444 = vunpack.c.h.b16 %v312
      %v445 = vunpack.c.l.b16 %v313
      %v446 = vunpack.c.h.b16 %v313
      %v447 = vunpack.c.l.b16 %v314
      %v448 = vunpack.c.h.b16 %v314
      %v449 = vunpack.c.l.b16 %v315
      %v450 = vunpack.c.h.b16 %v315
      %v451 = vunpack.c.l.b16 %v316
      %v452 = vunpack.c.h.b16 %v316
      %v453 = vunpack.c.l.b16 %v317
      %v454 = vunpack.c.h.b16 %v317
      %v455 = vunpack.c.l.b16 %v318
      %v456 = vunpack.c.h.b16 %v318
      %v457 = vunpack.c.l.b16 %v319
      %v458 = vunpack.c.h.b16 %v319
      %v459 = vunpack.c.l.b16 %v320
      %v460 = vunpack.c.h.b16 %v320
      %v461 = vunpack.c.l.b16 %v321
      %v462 = vunpack.c.h.b16 %v321
      %v463 = vunpack.c.l.b16 %v322
      %v464 = vunpack.c.h.b16 %v322
      %v465 = vunpack.c.l.b16 %v323
      %v466 = vunpack.c.h.b16 %v323
      %v467 = vunpack.c.l.b16 %v324
      %v468 = vunpack.c.h.b16 %v324
      %v469 = vunpack.c.l.b16 %v325
      %v470 = vunpack.c.h.b16 %v325
      %v471 = vunpack.c.l.b16 %v326
      %v472 = vunpack.c.h.b16 %v326
      %v473 = vunpack.c.l.b16 %v327
      %v474 = vunpack.c.h.b16 %v327
      %v475 = vunpack.c.l.b16 %v328
      %v476 = vunpack.c.h.b16 %v328
      %v477 = vunpack.c.l.b16 %v329
      %v478 = vunpack.c.h.b16 %v329
      %v479 = vunpack.c.l.b16 %v330
      %v480 = vunpack.c.h.b16 %v330
      %v481 = vunpack.c.l.b16 %v331
      %v482 = vunpack.c.h.b16 %v331
      %v483 = vunpack.c.l.b16 %v332
      %v484 = vunpack.c.h.b16 %v332
      %v485 = vunpack.c.l.b16 %v333
      %v486 = vunpack.c.h.b16 %v333
      %v487 = vunpack.c.l.b16 %v334
      %v488 = vunpack.c.h.b16 %v334
      %v489 = vunpack.c.l.b16 %v335
      %v490 = vunpack.c.h.b16 %v335
      %v491 = vpack.c.b16 %v397, %v395
      %v492 = vpack.c.b16 %v398, %v396
      %v493 = vpack.c.b16 %v401, %v399
      %v494 = vpack.c.b16 %v402, %v400
      %v495 = vpack.c.b16 %v405, %v403
      %v496 = vpack.c.b16 %v406, %v404
      %v497 = vpack.c.b16 %v409, %v407
      %v498 = vpack.c.b16 %v410, %v408
      %v499 = vpack.c.b16 %v413, %v411
      %v500 = vpack.c.b16 %v414, %v412
      %v501 = vpack.c.b16 %v417, %v415
      %v502 = vpack.c.b16 %v418, %v416
      %v503 = vpack.c.b16 %v421, %v419
      %v504 = vpack.c.b16 %v422, %v420
      %v505 = vpack.c.b16 %v425, %v423
      %v506 = vpack.c.b16 %v426, %v424
      %v507 = vpack.c.b16 %v429, %v427
      %v508 = vpack.c.b16 %v430, %v428
      %v509 = vpack.c.b16 %v433, %v431
      %v510 = vpack.c.b16 %v434, %v432
      %v511 = vpack.c.b16 %v437, %v435
      %v512 = vpack.c.b16 %v438, %v436
      %v513 = vpack.c.b16 %v441, %v439
      %v514 = vpack.c.b16 %v442, %v440
      %v515 = vpack.c.b16 %v445, %v443
      %v516 = vpack.c.b16 %v446, %v444
      %v517 = vpack.c.b16 %v449, %v447
      %v518 = vpack.c.b16 %v450, %v448
      %v519 = vpack.c.b16 %v453, %v451
      %v520 = vpack.c.b16 %v454, %v452
      %v521 = vpack.c.b16 %v457, %v455
      %v522 = vpack.c.b16 %v458, %v456
      %v523 = vpack.c.b16 %v461, %v459
      %v524 = vpack.c.b16 %v462, %v460
      %v525 = vpack.c.b16 %v465, %v463
      %v526 = vpack.c.b16 %v466, %v464
      %v527 = vpack.c.b16 %v469, %v467
      %v528 = vpack.c.b16 %v470, %v468
      %v529 = vpack.c.b16 %v473, %v471
      %v530 = vpack.c.b16 %v474, %v472
      %v531 = vpack.c.b16 %v477, %v475
      %v532 = vpack.c.b16 %v478, %v476
      %v533 = vpack.c.b16 %v481, %v479
      %v534 = vpack.c.b16 %v482, %v480
      %v535 = vpack.c.b16 %v485, %v483
      %v536 = vpack.c.b16 %v486, %v484
      %v537 = vpack.c.b16 %v489, %v487
      %v538 = vpack.c.b16 %v490, %v488
      %587 = vmatprep.subr.bf16.mxu0 %v492
      %588 = vmatpush1.bf16.msra.mxu0 %v491
      %589 = vmatprep.subr.bf16.mxu0 %v494
      %590 = vmatpush1.bf16.msra.mxu0 %v493
      %591 = vmatprep.subr.bf16.mxu0 %v496
      %592 = vmatpush1.bf16.msra.mxu0 %v495
      %593 = vmatprep.subr.bf16.mxu0 %v498
      %594 = vmatpush1.bf16.msra.mxu0 %v497
      %595 = vmatprep.subr.bf16.mxu0 %v500
      %596 = vmatpush1.bf16.msra.mxu0 %v499
      %597 = vmatprep.subr.bf16.mxu0 %v502
      %598 = vmatpush1.bf16.msra.mxu0 %v501
      %599 = vmatprep.subr.bf16.mxu0 %v504
      %600 = vmatpush1.bf16.msra.mxu0 %v503
      %601 = vmatprep.subr.bf16.mxu0 %v506
      %602 = vmatpush1.bf16.msra.mxu0 %v505
      %603 = vmatprep.subr.bf16.mxu0 %v508
      %604 = vmatpush1.bf16.msra.mxu0 %v507
      %605 = vmatprep.subr.bf16.mxu0 %v510
      %606 = vmatpush1.bf16.msra.mxu0 %v509
      %607 = vmatprep.subr.bf16.mxu0 %v512
      %608 = vmatpush1.bf16.msra.mxu0 %v511
      %609 = vmatprep.subr.bf16.mxu0 %v514
      %610 = vmatpush1.bf16.msra.mxu0 %v513
      %611 = vmatprep.subr.bf16.mxu0 %v516
      %612 = vmatpush1.bf16.msra.mxu0 %v515
      %613 = vmatprep.subr.bf16.mxu0 %v518
      %614 = vmatpush1.bf16.msra.mxu0 %v517
      %615 = vmatprep.subr.bf16.mxu0 %v520
      %616 = vmatpush1.bf16.msra.mxu0 %v519
      %617 = vmatprep.subr.bf16.mxu0 %v522
      %618 = vmatpush1.bf16.msra.mxu0 %v521
      %619 = vmatprep.mubr.bf16.mxu0 %v342
      %620 = vmatmul.mubr.bf16.gmra.mrb[0].mxu0 %v341
      %v621 = vpop.f32.mrb[0].mxu0
      %v622 = vadd.f32 0.0, %v621
      %v623 = vpop.f32.mrb[0].mxu0
      %v624 = vadd.f32 0.0, %v623
      %v625 = vpop.f32.mrb[0].mxu0
      %v626 = vpop.f32.mrb[0].mxu0
      %627 = vdwg.mxu0
      %628 = vmatprep.subr.bf16.mxu0 %v524
      %629 = vmatpush1.bf16.msra.mxu0 %v523
      %630 = vmatprep.subr.bf16.mxu0 %v526
      %631 = vmatpush1.bf16.msra.mxu0 %v525
      %632 = vmatprep.subr.bf16.mxu0 %v528
      %633 = vmatpush1.bf16.msra.mxu0 %v527
      %634 = vmatprep.subr.bf16.mxu0 %v530
      %635 = vmatpush1.bf16.msra.mxu0 %v529
      %636 = vmatprep.subr.bf16.mxu0 %v532
      %637 = vmatpush1.bf16.msra.mxu0 %v531
      %638 = vmatprep.subr.bf16.mxu0 %v534
      %639 = vmatpush1.bf16.msra.mxu0 %v533
      %640 = vmatprep.subr.bf16.mxu0 %v536
      %641 = vmatpush1.bf16.msra.mxu0 %v535
      %642 = vmatprep.subr.bf16.mxu0 %v538
      %643 = vmatpush1.bf16.msra.mxu0 %v537
      %644 = vmatprep.subr.bf16.mxu0 0
      %645 = vmatpush1.bf16.msra.mxu0 0
      %646 = vmatprep.subr.bf16.mxu0 0
      %647 = vmatpush1.bf16.msra.mxu0 0
      %648 = vmatprep.subr.bf16.mxu0 0
      %649 = vmatpush1.bf16.msra.mxu0 0
      %650 = vmatprep.subr.bf16.mxu0 0
      %651 = vmatpush1.bf16.msra.mxu0 0
      %652 = vmatprep.subr.bf16.mxu0 0
      %653 = vmatpush1.bf16.msra.mxu0 0
      %654 = vmatprep.subr.bf16.mxu0 0
      %655 = vmatpush1.bf16.msra.mxu0 0
      %656 = vmatprep.subr.bf16.mxu0 0
      %657 = vmatpush1.bf16.msra.mxu0 0
      %658 = vmatprep.subr.bf16.mxu0 0
      %659 = vmatpush1.bf16.msra.mxu0 0
      %660 = vmatprep.mubr.bf16.mxu0 0
      %661 = vmatmul.mubr.bf16.gmra.mrb[0].mxu0 %v343
      %v662 = vpop.f32.mrb[0].mxu0
      %v663 = vadd.f32 %v622, %v662
      %v664 = vpop.f32.mrb[0].mxu0
      %v665 = vadd.f32 %v624, %v664
      %v666 = vpop.f32.mrb[0].mxu0
      %v667 = vpop.f32.mrb[0].mxu0
      %668 = vdwg.mxu0
      %v669 = vadd.f32 %v284, %v663
      %v670 = vadd.f32 %v285, %v665
      %671 = vst [vmem:[#allocation2] sm:$0xff] %v669
      %672 = vst [vmem:[#allocation2 + $0x8] sm:$0xff] %v670
      %p673 = scmp.eq.s32.totalorder %s21, 8
      // Predicated region
      $region37: #{encoder_forward.14} parent=31 // pred_check
        %p674 = pneg %p673
      $region38: #{encoder_forward.14} parent=31 // pred_check_branch
        %676 = sbr.rel (%p674) target = $region40
      $region39: #{encoder_forward.14} parent=31 // pred_region
        %v677 = vld [vmem:[#allocation2] sm:$0xff]
        %v678 = vld [vmem:[#allocation2 + $0x8] sm:$0xff]
        %v679 = vld [vmem:[%s265] sm:$0x3]
        %v681 = vlaneseq
        %v682 = vshrl.u32 %v681, 7
        %v683 = vsub.s32 0, %v682
        %v684 = vrot.slane %v679, %v683
        %v685 = vlaneseq
        %v686 = vshrl.u32 %v685, 7
        %v687 = vsub.s32 1, %v686
        %v688 = vrot.slane %v679, %v687
        %v691 = vadd.f32 %v677, %v684
        %v692 = vadd.f32 %v678, %v688
        %v693 = vmax.f32 %v691, 0.0
        %v694 = vmax.f32 %v692, 0.0
        %695 = vst [vmem:[%s275] sm:$0xff] %v693
        %696 = vst [vmem:[%s275 + $0x8] sm:$0xff] %v694
      $region40: #{encoder_forward.14} parent=31 // pred_fallthru
        _
      %s697 = smul.u32 2, %s20
      %p698 = scmp.lt.s32.totalorder %s19, 0
      %s699 = scalar_select %p698, %s19, 0
      %p700 = scmp.lt.s32.totalorder %s697, 1
      %s701 = scalar_select %p700, %s697, 1
      %s702 = smul.addr %s699, 2
      %s703 = sadd.s32 %s701, %s702
      %s704 = smul.addr %s703, 8
      %s705 = scalar_lea.vmem %s3, %s704
      // Predicated region
      $region41: #{encoder_forward.14} parent=31 // pred_check
        %p706 = pneg %p135
      $region42: #{encoder_forward.14} parent=31 // pred_check_branch
        %708 = sbr.rel (%p706) target = $region44
      $region43: #{encoder_forward.14} parent=31 // pred_region
        %s709 = smul.u32 2, %s20
      $region44: #{encoder_forward.14} parent=31 // pred_fallthru
        _
      // Predicated region
      $region45: #{encoder_forward.14} parent=31 // pred_check
        %p710 = pneg %p135
      $region46: #{encoder_forward.14} parent=31 // pred_check_branch
        %712 = sbr.rel (%p710) target = $region48
      $region47: #{encoder_forward.14} parent=31 // pred_region
        %s713 = smul.u32 2, %s20
        %p714 = scmp.lt.s32.totalorder %s19, 0
        %s715 = scalar_select %p714, %s19, 0
        %p716 = scmp.lt.s32.totalorder %s713, 1
        %s717 = scalar_select %p716, %s713, 1
        %s718 = smul.addr %s715, 2
        %s719 = sadd.s32 %s717, %s718
        %s720 = smul.addr %s719, 8
        %s721 = scalar_lea.vmem %s3, %s720
      $region48: #{encoder_forward.14} parent=31 // pred_fallthru
        _
    $region32: #{encoder_forward.14} parent=5 // pred_fallthru
      _
    %p722 = scmp.le.s32.totalorder 2, %s9
    // Predicated region
    $region49: #{encoder_forward.14} parent=5 // pred_check
      %p723 = pneg %p722
    $region50: #{encoder_forward.14} parent=5 // pred_check_branch
      %725 = sbr.rel (%p723) target = $region52
    $region51: #{encoder_forward.14} parent=5 // pred_region
      %s726 = ssub.s32 %s9, 2
    $region52: #{encoder_forward.14} parent=5 // pred_fallthru
      _
  $region6: #{encoder_forward.14} parent=0 // loop_footer
    %s13 = sadd.s32 1, %s9
  $region7: #{encoder_forward.14} parent=0 // loop_footer_branch
    %8 = sbr.rel target = $region3
  $region8: #{encoder_forward.14} parent=0 // loop_exit
    _

// kernel: encoder_forward.15
$region0: #{encoder_forward.15}
  #allocation0 [shape = 'u32[]', space=smem, size = 0x4, offset = 0x4, fixed_abs, tag = 'smem constant byte address 0x4 - core index']
  #allocation1 [shape = 'u32[144,128]{1,0:T(1,128)}', space=vmem, size = 0x12000, scoped, tag = 'internal scratch']
  %s0 = inlined_call_operand.vmem [shape: f32[2,1,2,2,256], index: 0, kind: input, shape index: {}]
  %s1 = inlined_call_operand.vmem [shape: f32[1,1,2,256], index: 1, kind: output, shape index: {}]
  %s2 = sld [smem:[#allocation0]]
  $region78: #{encoder_forward.15} parent=0
    _
  %s4 = ssub.s32 1, %s2
  %s5 = scalar_select 0, %s4, %s2
  $region1: #{encoder_forward.15} parent=0
    #allocation2 [shape = 'u8[8192]{0}', space=vmem, size = 0x2000, scoped, tag = 'input window, operand 0']
    loop: start=0, step=1, limit=4
    $region2: #{encoder_forward.15} parent=1 // loop_pre_header
      _
    $region3: #{encoder_forward.15} parent=1 // loop_header
      %s7 = sphi 0, %s11
      %p8 = scmp.ge.s32.totalorder %s7, 4
      %s17 = sphi 0, %s19
      %s20 = sphi 0, %s17
      %s21 = sphi 0, %s20
      %s37 = sphi 0, %s21
      %s43 = sphi 0, %s45
      %s46 = sphi 0, %s43
      %s47 = sphi 0, %s46
      %s63 = sphi 0, %s47
    $region4: #{encoder_forward.15} parent=1 // loop_header_branch
      %10 = sbr.rel (%p8) target = $region8
    $region5: #{encoder_forward.15} parent=1 // loop_body
      %s12 = ssub.s32 %s7, 1
      %s13 = ssub.s32 %s7, 2
      %s14 = sadd.s32 %s7, 1
      %s15 = ssub.s32 %s7, %s14
      %p16 = scmp.eq.s32.totalorder %s15, 0
      %s18 = sadd.s32 %s17, 1
      %s19 = scalar_select %p16, %s17, %s18
      %p22 = pneg %p16
      %p23 = scmp.eq.s32.totalorder %s7, 1
      %p24 = por %p22, %p23
      %p25 = scmp.ne.s32.totalorder %s17, %s20
      %p26 = scmp.eq.s32.totalorder %s7, 0
      %p27 = por %p25, %p26
      %p28 = scmp.ne.s32.totalorder %s17, %s20
      %p29 = scmp.eq.s32.totalorder %s12, 1
      %p30 = por %p28, %p29
      %p31 = scmp.ne.s32.totalorder %s20, %s21
      %p32 = scmp.eq.s32.totalorder %s12, 0
      %p33 = por %p31, %p32
      %p34 = scmp.ne.s32.totalorder %s20, %s21
      %p35 = scmp.eq.s32.totalorder %s13, 1
      %p36 = por %p34, %p35
      %p38 = scmp.ne.s32.totalorder %s21, %s37
      %p39 = scmp.eq.s32.totalorder %s13, 0
      %p40 = por %p38, %p39
      %s41 = ssub.s32 %s7, %s14
      %p42 = scmp.eq.s32.totalorder %s41, 0
      %s44 = sadd.s32 %s43, 1
      %s45 = scalar_select %p42, %s43, %s44
      %p48 = pneg %p42
      %p49 = scmp.eq.s32.totalorder %s7, 1
      %p50 = por %p48, %p49
      %p51 = scmp.ne.s32.totalorder %s43, %s46
      %p52 = scmp.eq.s32.totalorder %s7, 0
      %p53 = por %p51, %p52
      %p54 = scmp.ne.s32.totalorder %s43, %s46
      %p55 = scmp.eq.s32.totalorder %s12, 1
      %p56 = por %p54, %p55
      %p57 = scmp.ne.s32.totalorder %s46, %s47
      %p58 = scmp.eq.s32.totalorder %s12, 0
      %p59 = por %p57, %p58
      %p60 = scmp.ne.s32.totalorder %s46, %s47
      %p61 = scmp.eq.s32.totalorder %s13, 1
      %p62 = por %p60, %p61
      %p64 = scmp.ne.s32.totalorder %s47, %s63
      %p65 = scmp.eq.s32.totalorder %s13, 0
      %p66 = por %p64, %p65
      %p67 = scmp.le.s32.totalorder 1, %s7
      %p68 = scmp.lt.s32.totalorder %s7, 3
      %p69 = pnand %p67, %p68
      %p70 = pneg %p69
      // Predicated region
      $region9: #{encoder_forward.15} parent=5 // pred_check
        _
      $region10: #{encoder_forward.15} parent=5 // pred_check_branch
        %72 = sbr.rel (%p69) target = $region12
      $region11: #{encoder_forward.15} parent=5 // pred_region
        %s73 = ssub.s32 %s7, 1
      $region12: #{encoder_forward.15} parent=5 // pred_fallthru
        _
      %p74 = scmp.lt.s32.totalorder %s7, 2
      // Predicated region
      $region13: #{encoder_forward.15} parent=5 // pred_check
        %p75 = pneg %p74
      $region14: #{encoder_forward.15} parent=5 // pred_check_branch
        %77 = sbr.rel (%p75) target = $region16
      $region15: #{encoder_forward.15} parent=5 // pred_region
        // Predicated region
        $region17: #{encoder_forward.15} parent=15 // pred_check
          %p78 = pneg %p27
        $region18: #{encoder_forward.15} parent=15 // pred_check_branch
          %80 = sbr.rel (%p78) target = $region20
        $region19: #{encoder_forward.15} parent=15 // pred_region
          %s81 = sand.u32 %s17, 1
          %s82 = sand.u32 %s17, 1
          %s83 = smul.addr %s82, 8
          %s84 = scalar_lea.vmem [#allocation2], %s83
          %s85 = smul.addr %s7, 2
          %s86 = scalar_lea.vmem %s0, %s85
          // Predicated region
          $region21: #{encoder_forward.15} parent=19 // pred_check
            _
          $region22: #{encoder_forward.15} parent=19 // pred_check_branch
            %88 = sbr.rel (0) target = $region24
          $region23: #{encoder_forward.15} parent=19 // pred_region
            // Predicated region
            $region25: #{encoder_forward.15} parent=23 // pred_check
              _
            $region26: #{encoder_forward.15} parent=23 // pred_check_branch
              %90 = sbr.rel target = $region28
            $region27: #{encoder_forward.15} parent=23 // pred_region
              // Predicated region
              $region40: #{encoder_forward.15} parent=27 // pred_check
                _
              $region41: #{encoder_forward.15} parent=27 // pred_check_branch
                %111 = sbr.rel (0) target = $region43
              $region42: #{encoder_forward.15} parent=27 // pred_region
                loop: start=0, step=1, limit=1
                $region44: #{encoder_forward.15} parent=42 // loop_pre_header
                  _
                $region45: #{encoder_forward.15} parent=42 // loop_header
                  %s113 = sphi 0, %s117
                  %p114 = scmp.ge.s32.totalorder %s113, 1
                  %s118 = sphi %s86, %s86
                  %s119 = sphi %s84, %s84
                $region46: #{encoder_forward.15} parent=42 // loop_header_branch
                  %116 = sbr.rel (%p114) target = $region50
                $region47: #{encoder_forward.15} parent=42 // loop_body
                  _
                $region48: #{encoder_forward.15} parent=42 // loop_footer
                  %s117 = sadd.s32 1, %s113
                $region49: #{encoder_forward.15} parent=42 // loop_footer_branch
                  %112 = sbr.rel target = $region45
                $region50: #{encoder_forward.15} parent=42 // loop_exit
                  _
                loop: start=0, step=1, limit=1
                $region51: #{encoder_forward.15} parent=42 // loop_pre_header
                  _
                $region52: #{encoder_forward.15} parent=42 // loop_header
                  %s122 = sphi 0, %s126
                  %p123 = scmp.ge.s32.totalorder %s122, 1
                  %s127 = sphi %s86, %s86
                  %s128 = sphi %s84, %s84
                $region53: #{encoder_forward.15} parent=42 // loop_header_branch
                  %125 = sbr.rel (%p123) target = $region57
                $region54: #{encoder_forward.15} parent=42 // loop_body
                  %v129 = vld [vmem:[%s127] sm:$0x3]
                  %130 = vst [vmem:[%s128] sm:$0x3] %v129
                  %v131 = vld [vmem:[%s127 + $0x4] sm:$0x3]
                  %132 = vst [vmem:[%s128 + $0x2] sm:$0x3] %v131
                  %v133 = vld [vmem:[%s127 + $0x8] sm:$0x3]
                  %134 = vst [vmem:[%s128 + $0x4] sm:$0x3] %v133
                  %v135 = vld [vmem:[%s127 + $0xc] sm:$0x3]
                  %136 = vst [vmem:[%s128 + $0x6] sm:$0x3] %v135
                $region55: #{encoder_forward.15} parent=42 // loop_footer
                  %s126 = sadd.s32 1, %s122
                $region56: #{encoder_forward.15} parent=42 // loop_footer_branch
                  %121 = sbr.rel target = $region52
                $region57: #{encoder_forward.15} parent=42 // loop_exit
                  _
              $region43: #{encoder_forward.15} parent=27 // pred_fallthru
                _
            $region28: #{encoder_forward.15} parent=23 // pred_fallthru
              _
            // Predicated region
            $region29: #{encoder_forward.15} parent=23 // pred_check
              _
            $region30: #{encoder_forward.15} parent=23 // pred_check_branch
              %92 = sbr.rel (0) target = $region32
            $region31: #{encoder_forward.15} parent=23 // pred_region
              loop: start=0, step=1, limit=1
              $region33: #{encoder_forward.15} parent=31 // loop_pre_header
                _
              $region34: #{encoder_forward.15} parent=31 // loop_header
                %s95 = sphi 0, %s99
                %p96 = scmp.ge.s32.totalorder %s95, 1
                %s100 = sphi %s86, %s86
                %s101 = sphi %s84, %s84
              $region35: #{encoder_forward.15} parent=31 // loop_header_branch
                %98 = sbr.rel (%p96) target = $region39
              $region36: #{encoder_forward.15} parent=31 // loop_body
                %v102 = vld [vmem:[%s100] sm:$0x3]
                %103 = vst [vmem:[%s101] sm:$0x3] %v102
                %v104 = vld [vmem:[%s100 + $0x4] sm:$0x3]
                %105 = vst [vmem:[%s101 + $0x2] sm:$0x3] %v104
                %v106 = vld [vmem:[%s100 + $0x8] sm:$0x3]
                %107 = vst [vmem:[%s101 + $0x4] sm:$0x3] %v106
                %v108 = vld [vmem:[%s100 + $0xc] sm:$0x3]
                %109 = vst [vmem:[%s101 + $0x6] sm:$0x3] %v108
              $region37: #{encoder_forward.15} parent=31 // loop_footer
                %s99 = sadd.s32 1, %s95
              $region38: #{encoder_forward.15} parent=31 // loop_footer_branch
                %94 = sbr.rel target = $region34
              $region39: #{encoder_forward.15} parent=31 // loop_exit
                _
            $region32: #{encoder_forward.15} parent=23 // pred_fallthru
              _
          $region24: #{encoder_forward.15} parent=19 // pred_fallthru
            _
          %137 = vnop
        $region20: #{encoder_forward.15} parent=15 // pred_fallthru
          _
      $region16: #{encoder_forward.15} parent=5 // pred_fallthru
        _
      %p138 = scmp.le.s32.totalorder 1, %s7
      %p139 = scmp.lt.s32.totalorder %s7, 3
      %p140 = pnand %p138, %p139
      %p141 = pneg %p140
      // Predicated region
      $region58: #{encoder_forward.15} parent=5 // pred_check
        _
      $region59: #{encoder_forward.15} parent=5 // pred_check_branch
        %143 = sbr.rel (%p140) target = $region61
      $region60: #{encoder_forward.15} parent=5 // pred_region
        %s144 = ssub.s32 %s7, 1
        %s145 = sand.u32 %s20, 1
        %s146 = sand.u32 %s20, 1
        %s147 = smul.addr %s146, 8
        %s148 = scalar_lea.vmem [#allocation2], %s147
        // Predicated region
        $region62: #{encoder_forward.15} parent=60 // pred_check
          %p149 = pneg %p33
        $region63: #{encoder_forward.15} parent=60 // pred_check_branch
          %151 = sbr.rel (%p149) target = $region65
        $region64: #{encoder_forward.15} parent=60 // pred_region
          _
        $region65: #{encoder_forward.15} parent=60 // pred_fallthru
          _
        %s152 = sand.u32 %s20, 1
        %s153 = sand.u32 %s20, 1
        %s154 = smul.addr %s153, 8
        %s155 = scalar_lea.vmem [#allocation2], %s154
        %p156 = pneg %p33
        %p157 = pneg %p30
        %p158 = pneg %p59
        %p159 = pneg %p56
        %p160 = scmp.lt.s32.totalorder %s12, 1
        %s161 = scalar_select %p160, %s12, 1
        %s162 = smul.addr %s161, 2
        %s163 = scalar_lea.vmem %s1, %s162
        %p164 = scmp.lt.s32.totalorder %s12, 1
        %s165 = scalar_select %p164, %s12, 1
        %s166 = smul.addr %s165, 2
        %s167 = scalar_lea.vmem %s1, %s166
        %v168 = vld [vmem:[%s148] sm:$0x3]
        %s169 = scalar_lea.vmem %s148, 2 [#allocation2]
        %v170 = vld [vmem:[%s169] sm:$0x3]
        %v171 = vmax.f32 %v168, %v170
        %s172 = scalar_lea.vmem %s148, 4 [#allocation2]
        %v173 = vld [vmem:[%s172] sm:$0x3]
        %v174 = vmax.f32 %v171, %v173
        %s175 = scalar_lea.vmem %s148, 6 [#allocation2]
        %v176 = vld [vmem:[%s175] sm:$0x3]
        %v177 = vmax.f32 %v174, %v176
        %178 = vst [vmem:[%s167] sm:$0x3] %v177
        %p179 = scmp.lt.s32.totalorder %s12, 1
        %s180 = scalar_select %p179, %s12, 1
        %s181 = smul.addr %s180, 2
        %s182 = scalar_lea.vmem %s1, %s181
        // Predicated region
        $region66: #{encoder_forward.15} parent=60 // pred_check
          %p183 = pneg %p56
        $region67: #{encoder_forward.15} parent=60 // pred_check_branch
          %185 = sbr.rel (%p183) target = $region69
        $region68: #{encoder_forward.15} parent=60 // pred_region
          _
        $region69: #{encoder_forward.15} parent=60 // pred_fallthru
          _
      $region61: #{encoder_forward.15} parent=5 // pred_fallthru
        _
      %p186 = scmp.le.s32.totalorder 2, %s7
      // Predicated region
      $region70: #{encoder_forward.15} parent=5 // pred_check
        %p187 = pneg %p186
      $region71: #{encoder_forward.15} parent=5 // pred_check_branch
        %189 = sbr.rel (%p187) target = $region73
      $region72: #{encoder_forward.15} parent=5 // pred_region
        %s190 = ssub.s32 %s7, 2
        // Predicated region
        $region74: #{encoder_forward.15} parent=72 // pred_check
          %p191 = pneg %p62
        $region75: #{encoder_forward.15} parent=72 // pred_check_branch
          %193 = sbr.rel (%p191) target = $region77
        $region76: #{encoder_forward.15} parent=72 // pred_region
          %p194 = scmp.lt.s32.totalorder %s13, 1
          %s195 = scalar_select %p194, %s13, 1
          %s196 = smul.addr %s195, 2
          %s197 = scalar_lea.vmem %s1, %s196
        $region77: #{encoder_forward.15} parent=72 // pred_fallthru
          _
      $region73: #{encoder_forward.15} parent=5 // pred_fallthru
        _
    $region6: #{encoder_forward.15} parent=1 // loop_footer
      %s11 = sadd.s32 1, %s7
    $region7: #{encoder_forward.15} parent=1 // loop_footer_branch
      %6 = sbr.rel target = $region3
    $region8: #{encoder_forward.15} parent=1 // loop_exit
      _

</llo_original>
